<compile_context>
chip_gen: v7x
topology: tpu7x:2x2x1
jax: 0.10.0
libtpu: 0.0.40
codegen_flags: <defaults>
</compile_context>

<pallas_src>
import math
import functools
import numpy as np
import jax
import jax.numpy as jnp
from jax import lax
from jax.experimental import pallas as pl
from jax.experimental.pallas import tpu as pltpu

jax.config.update("jax_default_matmul_precision", "highest")

# ----------------------------- configuration --------------------------------
TASK_DIMS = {'disch_24h': 10, 'disch_48h': 10, 'Final Acuity Outcome': 12,
             'tasks_binary_multilabel': 3, 'next_timepoint': 15,
             'next_timepoint_was_measured': 15, 'masked_imputation': 30,
             'mort_24h': 1, 'mort_48h': 1, 'LOS': 1}
SIGMOID_TASKS = ('tasks_binary_multilabel', 'mort_24h', 'mort_48h', 'LOS')

TASK = 'disch_24h'
B = 2                 # batch
SEQ_LEN = 8           # sequence length (module default 25; small for the demo)
TS_DIM = 165          # fixed by the module: Linear(165, input_features)
STATICS_DIM = 15      # fixed by the module: Linear(15, input_features)
INPUT_FEATURES = 32   # module default 128
D_MODEL = 32          # module default 256
N_HEADS = 4           # module default 8
N_LAYERS = 1
FACTOR = 4            # dense-interpolation factor (module default 10)
N_CLASS = TASK_DIMS[TASK]
C_PAD = 128           # lane-dense padded width of the classifier output
LN_EPS = 1e-5
BN_EPS = 1e-5


# ------------------------------ Pallas kernel --------------------------------
def sand_fused_kernel(ts_ref, st_ref, bE_ref, wts_ref, wst_ref, bcomb_ref,
                      wemb_ref, bemb_ref, pe_ref, amaskh_ref, hmask_ref,
                      wqkv_ref, bqkv_ref, wo_ref, bo_ref, g1_ref, b1_ref,
                      w1_ref, c1_ref, w2_ref, c2_ref, g2_ref, b2_ref,
                      wint_ref, wfc_ref, bfc_ref, out_ref,
                      *, n_heads, n_layers, factor, batch, apply_sigmoid):
    """Entire SAnD forward for the whole batch, folded as (B*SEQ_LEN, D) slabs."""
    f32 = jnp.float32

    # ---- projectors (+combined bias) + statics broadcast via (N, B) indicator ----
    st = jnp.dot(st_ref[...], wst_ref[...], preferred_element_type=f32)
    h = (jnp.dot(ts_ref[...], wts_ref[...], preferred_element_type=f32)
         + jnp.dot(bE_ref[...], st, preferred_element_type=f32)
         + bcomb_ref[...])

    # ---- Conv1d(k=1) embedding; BN(eval) + sqrt(d_model) folded into W/b on host;
    #      ReLU is positively homogeneous so the fold is exact. Then + positional enc.
    x = jnp.maximum(jnp.dot(h, wemb_ref[...], preferred_element_type=f32)
                    + bemb_ref[...], 0.0) + pe_ref[...]

    n_rows = x.shape[0]
    d_model = x.shape[-1]
    dh = d_model // n_heads
    scale = np.float32(1.0 / math.sqrt(dh))

    hm_all = hmask_ref[...]           # (H, 1, D) per-head lane masks
    amask_h = amaskh_ref[...]         # (H*N, N) head-replicated block-diag additive mask

    # ---- transformer encoder blocks (static unroll over layers) ----
    for l in range(n_layers):
        qkv = jnp.dot(x, wqkv_ref[l], preferred_element_type=f32) + bqkv_ref[l]
        q = qkv[:, :d_model]
        k = qkv[:, d_model:2 * d_model]
        v = qkv[:, 2 * d_model:]

        # head-stacked scores: rows ordered (head-major, query-minor); a single
        # (H*N, D) @ (D, N) matmul and a single softmax pass over all heads.
        qs = jnp.concatenate([q * hm_all[hh] for hh in range(n_heads)], axis=0)
        s = lax.dot_general(qs, k, (((1,), (1,)), ((), ())),
                            preferred_element_type=f32) * scale + amask_h
        s = s - jnp.max(s, axis=-1, keepdims=True)
        p = jnp.exp(s)
        p = p / jnp.sum(p, axis=-1, keepdims=True)

        # per-head PV: masked V puts each head's output in its natural lane slots,
        # so the sum over heads is exactly the concatenated multi-head output.
        heads = jnp.zeros((n_rows, d_model), f32)
        for hh in range(n_heads):
            heads = heads + jnp.dot(p[hh * n_rows:(hh + 1) * n_rows, :],
                                    v * hm_all[hh], preferred_element_type=f32)
        attn = jnp.dot(heads, wo_ref[l], preferred_element_type=f32) + bo_ref[l]

        # residual + LayerNorm 1
        h1 = x + attn
        mu = jnp.mean(h1, axis=-1, keepdims=True)
        var = jnp.mean((h1 - mu) ** 2, axis=-1, keepdims=True)
        h1 = (h1 - mu) * lax.rsqrt(var + LN_EPS) * g1_ref[l] + b1_ref[l]

        # position-wise FFN (Conv1d k=1 -> ReLU -> Conv1d k=1)
        f = jnp.maximum(jnp.dot(h1, w1_ref[l], preferred_element_type=f32) + c1_ref[l], 0.0)
        f = jnp.dot(f, w2_ref[l], preferred_element_type=f32) + c2_ref[l]

        # residual + LayerNorm 2
        h2 = h1 + f
        mu2 = jnp.mean(h2, axis=-1, keepdims=True)
        var2 = jnp.mean((h2 - mu2) ** 2, axis=-1, keepdims=True)
        x = (h2 - mu2) * lax.rsqrt(var2 + LN_EPS) * g2_ref[l] + b2_ref[l]

    # ---- dense interpolation + classification head ----
    # block-diagonal interpolation operator, rows ordered (factor-major, batch-minor)
    u = jnp.dot(wint_ref[...], x, preferred_element_type=f32)      # (factor*B, D)
    acc = jnp.zeros((batch, out_ref.shape[-1]), f32)
    for fct in range(factor):
        acc = acc + jnp.dot(u[fct * batch:(fct + 1) * batch, :], wfc_ref[fct],
                            preferred_element_type=f32)
    acc = acc + bfc_ref[...]
    if apply_sigmoid:
        acc = 1.0 / (1.0 + jnp.exp(-acc))
    out_ref[...] = acc                                              # lane-dense (B, 128)


# ------------------------------ call wrapper ----------------------------------
def sand_forward(ts, statics, P):
    Bn, S, _ = ts.shape
    ts2 = ts.reshape(Bn * S, TS_DIM)                                # fold batch into rows

    kernel = functools.partial(
        sand_fused_kernel, n_heads=N_HEADS, n_layers=N_LAYERS, factor=FACTOR,
        batch=Bn, apply_sigmoid=TASK in SIGMOID_TASKS)

    # Single grid-less invocation; all operands are whole-array (default BlockSpecs)
    # and land in VMEM -- the whole working set is < 1 MiB on every TPU generation,
    # and keeping everything on one TensorCore avoids splitting a tiny problem
    # across the v7x megacore.
    out_pad = pl.pallas_call(
        kernel,
        out_shape=jax.ShapeDtypeStruct((Bn, C_PAD), jnp.float32),
    )(ts2, statics, P['bE'], P['wts'], P['wst'], P['bcomb'],
      P['wemb_f'], P['bemb_f'], P['pe_tiled'], P['amask_h'], P['hmask'],
      P['k_wqkv'], P['k_bqkv'], P['k_wo'], P['k_bo'], P['k_g1'], P['k_b1'],
      P['k_w1'], P['k_c1'], P['k_w2'], P['k_c2'], P['k_g2'], P['k_b2'],
      P['wint_bd'], P['wfc_pad'], P['bfc_pad'])
    return out_pad[:, :N_CLASS]


# ------------------------------ reference (plain JAX) -------------------------
def sand_reference(ts, statics, P):
    x = ts @ P['wts'] + P['bts']
    st = statics @ P['wst'] + P['bst']
    x = x + st[:, None, :]
    x = x @ P['wemb'] + P['bemb']
    x = x * P['bn_scale'] + P['bn_shift']
    x = jnp.maximum(x, 0.0)
    x = x * math.sqrt(D_MODEL) + P['pe'][None]

    def layer_norm(h, g, b):
        mu = jnp.mean(h, axis=-1, keepdims=True)
        var = jnp.mean((h - mu) ** 2, axis=-1, keepdims=True)
        return (h - mu) * lax.rsqrt(var + LN_EPS) * g + b

    for lp in P['layers']:
        dh = D_MODEL // N_HEADS
        q = (x @ lp['wq'] + lp['bq']).reshape(B, SEQ_LEN, N_HEADS, dh).transpose(0, 2, 1, 3)
        k = (x @ lp['wk'] + lp['bk']).reshape(B, SEQ_LEN, N_HEADS, dh).transpose(0, 2, 1, 3)
        v = (x @ lp['wv'] + lp['bv']).reshape(B, SEQ_LEN, N_HEADS, dh).transpose(0, 2, 1, 3)
        s = jnp.einsum('bhqd,bhkd->bhqk', q, k) / math.sqrt(dh)
        p = jax.nn.softmax(s, axis=-1)
        o = jnp.einsum('bhqk,bhkd->bhqd', p, v).transpose(0, 2, 1, 3).reshape(B, SEQ_LEN, D_MODEL)
        attn = o @ lp['wo'] + lp['bo']
        h1 = layer_norm(x + attn, lp['ln1_g'], lp['ln1_b'])
        f = jnp.maximum(h1 @ lp['w1'] + lp['c1'], 0.0) @ lp['w2'] + lp['c2']
        x = layer_norm(h1 + f, lp['ln2_g'], lp['ln2_b'])

    u = jnp.einsum('fs,bsd->bfd', P['wint'], x)            # (B, F, D)
    flat = u.transpose(0, 2, 1).reshape(B, D_MODEL * FACTOR)
    out = flat @ P['fc_w'].T + P['bfc']
    if TASK in SIGMOID_TASKS:
        out = jax.nn.sigmoid(out)
    return out


# ------------------------------ parameter init --------------------------------
def init_linear(key, fan_in, fan_out):
    kw, kb = jax.random.split(key)
    bound = 1.0 / math.sqrt(fan_in)
    w = jax.random.uniform(kw, (fan_in, fan_out), jnp.float32, -bound, bound)
    b = jax.random.uniform(kb, (1, fan_out), jnp.float32, -bound, bound)
    return w, b


def build_params(key):
    keys = jax.random.split(key, 16)
    P = {}
    P['wts'], P['bts'] = init_linear(keys[0], TS_DIM, INPUT_FEATURES)
    P['wst'], P['bst'] = init_linear(keys[1], STATICS_DIM, INPUT_FEATURES)
    # Conv1d(input_features, d_model, 1) == per-timestep linear
    P['wemb'], P['bemb'] = init_linear(keys[2], INPUT_FEATURES, D_MODEL)

    # BatchNorm1d (eval mode) -> fold into scale/shift
    gamma = 1.0 + 0.1 * jax.random.normal(keys[3], (1, D_MODEL), jnp.float32)
    beta = 0.1 * jax.random.normal(keys[4], (1, D_MODEL), jnp.float32)
    r_mean = 0.05 * jax.random.normal(keys[5], (1, D_MODEL), jnp.float32)
    r_var = 1.0 + 0.1 * jnp.abs(jax.random.normal(keys[6], (1, D_MODEL), jnp.float32))
    P['bn_scale'] = gamma / jnp.sqrt(r_var + BN_EPS)
    P['bn_shift'] = beta - r_mean * P['bn_scale']

    # SAnD positional encoding table
    pe = np.zeros((SEQ_LEN, D_MODEL), dtype=np.float32)
    for pos in range(SEQ_LEN):
        for i in range(0, D_MODEL, 2):
            pe[pos, i] = math.sin(pos / (10000 ** ((2 * i) / D_MODEL)))
            pe[pos, i + 1] = math.cos(pos / (10000 ** ((2 * (i + 1)) / D_MODEL)))
    P['pe'] = jnp.asarray(pe)

    # encoder blocks
    layers = []
    lkeys = jax.random.split(keys[7], N_LAYERS)
    for li in range(N_LAYERS):
        sk = jax.random.split(lkeys[li], 8)
        lp = {}
        lp['wq'], lp['bq'] = init_linear(sk[0], D_MODEL, D_MODEL)
        lp['wk'], lp['bk'] = init_linear(sk[1], D_MODEL, D_MODEL)
        lp['wv'], lp['bv'] = init_linear(sk[2], D_MODEL, D_MODEL)
        lp['wo'], lp['bo'] = init_linear(sk[3], D_MODEL, D_MODEL)
        lp['ln1_g'] = 1.0 + 0.05 * jax.random.normal(sk[4], (1, D_MODEL), jnp.float32)
        lp['ln1_b'] = 0.05 * jax.random.normal(sk[5], (1, D_MODEL), jnp.float32)
        lp['w1'], lp['c1'] = init_linear(sk[6], D_MODEL, 2 * D_MODEL)
        lp['w2'], lp['c2'] = init_linear(sk[7], 2 * D_MODEL, D_MODEL)
        lp['ln2_g'] = 1.0 + 0.05 * jax.random.normal(sk[4], (1, D_MODEL), jnp.float32) * 0.5
        lp['ln2_b'] = 0.05 * jax.random.normal(sk[5], (1, D_MODEL), jnp.float32) * 0.5
        layers.append(lp)
    P['layers'] = layers

    # DenseInterpolation matrix W (factor, seq_len)
    Wint = np.zeros((FACTOR, SEQ_LEN), dtype=np.float32)
    for t in range(SEQ_LEN):
        s = FACTOR * (t + 1) / SEQ_LEN
        for m in range(FACTOR):
            tmp = 1.0 - abs(s - (1 + m)) / FACTOR
            Wint[m, t] = tmp ** 2
    P['wint'] = jnp.asarray(Wint)

    # ClassificationModule: weight ~ N(0, 0.02), bias = 0
    fc_w = 0.02 * jax.random.normal(keys[8], (N_CLASS, D_MODEL * FACTOR), jnp.float32)
    P['fc_w'] = fc_w
    P['bfc'] = jnp.zeros((1, N_CLASS), jnp.float32)

    # ------------------ kernel-layout (fused, batch-folded) params ------------------
    N = B * SEQ_LEN
    dh = D_MODEL // N_HEADS
    sqrt_d = math.sqrt(D_MODEL)

    # combined projector bias (both projector biases are per-feature constants)
    P['bcomb'] = P['bts'] + P['bst']

    # fold BatchNorm(eval) and the sqrt(d_model) scale into the Conv1d(k=1) weights;
    # exact because ReLU is positively homogeneous and sqrt(d_model) > 0.
    P['wemb_f'] = P['wemb'] * P['bn_scale'] * sqrt_d
    P['bemb_f'] = (P['bemb'] * P['bn_scale'] + P['bn_shift']) * sqrt_d

    # statics-broadcast indicator: (N, B), row n picks batch n // SEQ_LEN
    bE = np.zeros((N, B), np.float32)
    for b in range(B):
        bE[b * SEQ_LEN:(b + 1) * SEQ_LEN, b] = 1.0
    P['bE'] = jnp.asarray(bE)

    # positional encoding tiled over the folded batch axis
    P['pe_tiled'] = jnp.asarray(np.tile(pe, (B, 1)))

    # block-diagonal additive attention mask (0 within a batch, -1e9 across batches),
    # replicated per head for the head-stacked score slab (H*N, N)
    am = np.full((N, N), -1e9, np.float32)
    for b in range(B):
        am[b * SEQ_LEN:(b + 1) * SEQ_LEN, b * SEQ_LEN:(b + 1) * SEQ_LEN] = 0.0
    P['amask_h'] = jnp.asarray(np.tile(am, (N_HEADS, 1)))

    # per-head lane masks
    hm = np.zeros((N_HEADS, 1, D_MODEL), np.float32)
    for h in range(N_HEADS):
        hm[h, 0, h * dh:(h + 1) * dh] = 1.0
    P['hmask'] = jnp.asarray(hm)

    # stacked per-layer weights (leading layer axis), fused QKV
    P['k_wqkv'] = jnp.stack([jnp.concatenate([lp['wq'], lp['wk'], lp['wv']], axis=1)
                             for lp in layers])
    P['k_bqkv'] = jnp.stack([jnp.concatenate([lp['bq'], lp['bk'], lp['bv']], axis=1)
                             for lp in layers])
    P['k_wo'] = jnp.stack([lp['wo'] for lp in layers])
    P['k_bo'] = jnp.stack([lp['bo'] for lp in layers])
    P['k_g1'] = jnp.stack([lp['ln1_g'] for lp in layers])
    P['k_b1'] = jnp.stack([lp['ln1_b'] for lp in layers])
    P['k_w1'] = jnp.stack([lp['w1'] for lp in layers])
    P['k_c1'] = jnp.stack([lp['c1'] for lp in layers])
    P['k_w2'] = jnp.stack([lp['w2'] for lp in layers])
    P['k_c2'] = jnp.stack([lp['c2'] for lp in layers])
    P['k_g2'] = jnp.stack([lp['ln2_g'] for lp in layers])
    P['k_b2'] = jnp.stack([lp['ln2_b'] for lp in layers])

    # block-diagonal dense-interpolation operator, rows ordered (factor-major, batch)
    Wbd = np.zeros((FACTOR * B, N), np.float32)
    for f in range(FACTOR):
        for b in range(B):
            Wbd[f * B + b, b * SEQ_LEN:(b + 1) * SEQ_LEN] = Wint[f]
    P['wint_bd'] = jnp.asarray(Wbd)

    # classifier weights rearranged to (factor, d_model, n_class) matching the
    # PyTorch view(-1, factor*d_model) flatten order of (d_model, factor),
    # zero-padded to 128 lanes for a lane-dense final store.
    wfc_r = fc_w.reshape(N_CLASS, D_MODEL, FACTOR).transpose(2, 1, 0)    # (F, D, C)
    P['wfc_pad'] = jnp.zeros((FACTOR, D_MODEL, C_PAD), jnp.float32).at[..., :N_CLASS].set(wfc_r)
    P['bfc_pad'] = jnp.zeros((1, C_PAD), jnp.float32).at[:, :N_CLASS].set(P['bfc'])
    return P


# ------------------------------------ main -------------------------------------
if __name__ == "__main__":
    key = jax.random.PRNGKey(0)
    kts, kst, kp = jax.random.split(key, 3)
    ts_continuous = jax.random.normal(kts, (B, SEQ_LEN, TS_DIM), jnp.float32)
    statics = jax.random.normal(kst, (B, STATICS_DIM), jnp.float32)
    params = build_params(kp)

    out = sand_forward(ts_continuous, statics, params)
    out = jax.block_until_ready(out)

    ref = jax.block_until_ready(sand_reference(ts_continuous, statics, params))
    np.testing.assert_allclose(np.asarray(out), np.asarray(ref), rtol=1e-3, atol=1e-3)
    assert out.shape == (B, N_CLASS) and np.all(np.isfinite(np.asarray(out)))

    print("KERNEL_OK")
</pallas_src>

<mosaic_0001>
module attributes {stable_mosaic.version = 11 : i64} {
  func.func @sand_fused_kernel(%arg0: memref<16x165xf32, #tpu.memory_space<vmem>>, %arg1: memref<2x15xf32, #tpu.memory_space<vmem>>, %arg2: memref<16x2xf32, #tpu.memory_space<vmem>>, %arg3: memref<165x32xf32, #tpu.memory_space<vmem>>, %arg4: memref<15x32xf32, #tpu.memory_space<vmem>>, %arg5: memref<1x32xf32, #tpu.memory_space<vmem>>, %arg6: memref<32x32xf32, #tpu.memory_space<vmem>>, %arg7: memref<1x32xf32, #tpu.memory_space<vmem>>, %arg8: memref<16x32xf32, #tpu.memory_space<vmem>>, %arg9: memref<64x16xf32, #tpu.memory_space<vmem>>, %arg10: memref<4x1x32xf32, #tpu.memory_space<vmem>>, %arg11: memref<1x32x96xf32, #tpu.memory_space<vmem>>, %arg12: memref<1x1x96xf32, #tpu.memory_space<vmem>>, %arg13: memref<1x32x32xf32, #tpu.memory_space<vmem>>, %arg14: memref<1x1x32xf32, #tpu.memory_space<vmem>>, %arg15: memref<1x1x32xf32, #tpu.memory_space<vmem>>, %arg16: memref<1x1x32xf32, #tpu.memory_space<vmem>>, %arg17: memref<1x32x64xf32, #tpu.memory_space<vmem>>, %arg18: memref<1x1x64xf32, #tpu.memory_space<vmem>>, %arg19: memref<1x64x32xf32, #tpu.memory_space<vmem>>, %arg20: memref<1x1x32xf32, #tpu.memory_space<vmem>>, %arg21: memref<1x1x32xf32, #tpu.memory_space<vmem>>, %arg22: memref<1x1x32xf32, #tpu.memory_space<vmem>>, %arg23: memref<8x16xf32, #tpu.memory_space<vmem>>, %arg24: memref<4x32x128xf32, #tpu.memory_space<vmem>>, %arg25: memref<1x128xf32, #tpu.memory_space<vmem>>, %arg26: memref<2x128xf32, #tpu.memory_space<vmem>>) attributes {dimension_semantics = [], scalar_prefetch = 0 : i64, scratch_operands = 0 : i64, tpu.core_type = #tpu.core_type<tc>} {
    %c0 = arith.constant 0 : index
    %c0_0 = arith.constant 0 : index
    %0 = vector.load %arg1[%c0, %c0_0] : memref<2x15xf32, #tpu.memory_space<vmem>>, vector<2x15xf32>
    %c0_1 = arith.constant 0 : index
    %c0_2 = arith.constant 0 : index
    %1 = vector.load %arg4[%c0_1, %c0_2] : memref<15x32xf32, #tpu.memory_space<vmem>>, vector<15x32xf32>
    %cst = arith.constant dense<0.000000e+00> : vector<2x32xf32>
    %2 = tpu.matmul %0, %1, %cst {dimension_numbers = #tpu.dot_dimension_numbers<[1], [0], [0], [1], [0, 0, 1, 1], [], []>, precision = #tpu.contract_precision<fp32>} : vector<2x15xf32>, vector<15x32xf32>, vector<2x32xf32> -> vector<2x32xf32>
    %c0_3 = arith.constant 0 : index
    %c0_4 = arith.constant 0 : index
    %3 = vector.load %arg0[%c0_3, %c0_4] : memref<16x165xf32, #tpu.memory_space<vmem>>, vector<16x165xf32>
    %c0_5 = arith.constant 0 : index
    %c0_6 = arith.constant 0 : index
    %4 = vector.load %arg3[%c0_5, %c0_6] : memref<165x32xf32, #tpu.memory_space<vmem>>, vector<165x32xf32>
    %cst_7 = arith.constant dense<0.000000e+00> : vector<16x32xf32>
    %5 = tpu.matmul %3, %4, %cst_7 {dimension_numbers = #tpu.dot_dimension_numbers<[1], [0], [0], [1], [0, 0, 1, 1], [], []>, precision = #tpu.contract_precision<fp32>} : vector<16x165xf32>, vector<165x32xf32>, vector<16x32xf32> -> vector<16x32xf32>
    %c0_8 = arith.constant 0 : index
    %c0_9 = arith.constant 0 : index
    %6 = vector.load %arg2[%c0_8, %c0_9] : memref<16x2xf32, #tpu.memory_space<vmem>>, vector<16x2xf32>
    %cst_10 = arith.constant dense<0.000000e+00> : vector<16x32xf32>
    %7 = tpu.matmul %6, %2, %cst_10 {dimension_numbers = #tpu.dot_dimension_numbers<[1], [0], [0], [1], [0, 0, 1, 1], [], []>, precision = #tpu.contract_precision<fp32>} : vector<16x2xf32>, vector<2x32xf32>, vector<16x32xf32> -> vector<16x32xf32>
    %8 = arith.addf %5, %7 : vector<16x32xf32>
    %c0_11 = arith.constant 0 : index
    %c0_12 = arith.constant 0 : index
    %9 = vector.load %arg5[%c0_11, %c0_12] : memref<1x32xf32, #tpu.memory_space<vmem>>, vector<1x32xf32>
    %10 = vector.broadcast %9 : vector<1x32xf32> to vector<16x32xf32>
    %11 = arith.addf %8, %10 : vector<16x32xf32>
    %c0_13 = arith.constant 0 : index
    %c0_14 = arith.constant 0 : index
    %12 = vector.load %arg6[%c0_13, %c0_14] : memref<32x32xf32, #tpu.memory_space<vmem>>, vector<32x32xf32>
    %cst_15 = arith.constant dense<0.000000e+00> : vector<16x32xf32>
    %13 = tpu.matmul %11, %12, %cst_15 {dimension_numbers = #tpu.dot_dimension_numbers<[1], [0], [0], [1], [0, 0, 1, 1], [], []>, precision = #tpu.contract_precision<fp32>} : vector<16x32xf32>, vector<32x32xf32>, vector<16x32xf32> -> vector<16x32xf32>
    %c0_16 = arith.constant 0 : index
    %c0_17 = arith.constant 0 : index
    %14 = vector.load %arg7[%c0_16, %c0_17] : memref<1x32xf32, #tpu.memory_space<vmem>>, vector<1x32xf32>
    %15 = vector.broadcast %14 : vector<1x32xf32> to vector<16x32xf32>
    %16 = arith.addf %13, %15 : vector<16x32xf32>
    %cst_18 = arith.constant 0.000000e+00 : f32
    %17 = vector.broadcast %cst_18 : f32 to vector<16x32xf32>
    %18 = arith.maximumf %16, %17 : vector<16x32xf32>
    %c0_19 = arith.constant 0 : index
    %c0_20 = arith.constant 0 : index
    %19 = vector.load %arg8[%c0_19, %c0_20] : memref<16x32xf32, #tpu.memory_space<vmem>>, vector<16x32xf32>
    %20 = arith.addf %18, %19 : vector<16x32xf32>
    %c0_21 = arith.constant 0 : index
    %c0_22 = arith.constant 0 : index
    %c0_23 = arith.constant 0 : index
    %21 = vector.load %arg10[%c0_21, %c0_22, %c0_23] : memref<4x1x32xf32, #tpu.memory_space<vmem>>, vector<4x1x32xf32>
    %c0_24 = arith.constant 0 : index
    %c0_25 = arith.constant 0 : index
    %22 = vector.load %arg9[%c0_24, %c0_25] : memref<64x16xf32, #tpu.memory_space<vmem>>, vector<64x16xf32>
    %c0_26 = arith.constant 0 : index
    %c0_27 = arith.constant 0 : index
    %c0_28 = arith.constant 0 : index
    %23 = vector.load %arg11[%c0_26, %c0_27, %c0_28] : memref<1x32x96xf32, #tpu.memory_space<vmem>>, vector<1x32x96xf32>
    %24 = vector.shape_cast %23 : vector<1x32x96xf32> to vector<32x96xf32>
    %cst_29 = arith.constant dense<0.000000e+00> : vector<16x96xf32>
    %25 = tpu.matmul %20, %24, %cst_29 {dimension_numbers = #tpu.dot_dimension_numbers<[1], [0], [0], [1], [0, 0, 1, 1], [], []>, precision = #tpu.contract_precision<fp32>} : vector<16x32xf32>, vector<32x96xf32>, vector<16x96xf32> -> vector<16x96xf32>
    %c0_30 = arith.constant 0 : index
    %c0_31 = arith.constant 0 : index
    %c0_32 = arith.constant 0 : index
    %26 = vector.load %arg12[%c0_30, %c0_31, %c0_32] : memref<1x1x96xf32, #tpu.memory_space<vmem>>, vector<1x1x96xf32>
    %27 = vector.shape_cast %26 : vector<1x1x96xf32> to vector<1x96xf32>
    %28 = vector.broadcast %27 : vector<1x96xf32> to vector<16x96xf32>
    %29 = arith.addf %25, %28 : vector<16x96xf32>
    %30 = vector.extract_strided_slice %29 {offsets = [0, 0], sizes = [16, 32], strides = [1, 1]} : vector<16x96xf32> to vector<16x32xf32>
    %31 = vector.extract_strided_slice %29 {offsets = [0, 32], sizes = [16, 32], strides = [1, 1]} : vector<16x96xf32> to vector<16x32xf32>
    %32 = vector.extract_strided_slice %29 {offsets = [0, 64], sizes = [16, 32], strides = [1, 1]} : vector<16x96xf32> to vector<16x32xf32>
    %33 = vector.extract_strided_slice %21 {offsets = [0, 0, 0], sizes = [1, 1, 32], strides = [1, 1, 1]} : vector<4x1x32xf32> to vector<1x1x32xf32>
    %34 = vector.shape_cast %33 : vector<1x1x32xf32> to vector<1x32xf32>
    %35 = vector.broadcast %34 : vector<1x32xf32> to vector<16x32xf32>
    %36 = arith.mulf %30, %35 : vector<16x32xf32>
    %37 = vector.extract_strided_slice %21 {offsets = [1, 0, 0], sizes = [1, 1, 32], strides = [1, 1, 1]} : vector<4x1x32xf32> to vector<1x1x32xf32>
    %38 = vector.shape_cast %37 : vector<1x1x32xf32> to vector<1x32xf32>
    %39 = vector.broadcast %38 : vector<1x32xf32> to vector<16x32xf32>
    %40 = arith.mulf %30, %39 : vector<16x32xf32>
    %41 = vector.extract_strided_slice %21 {offsets = [2, 0, 0], sizes = [1, 1, 32], strides = [1, 1, 1]} : vector<4x1x32xf32> to vector<1x1x32xf32>
    %42 = vector.shape_cast %41 : vector<1x1x32xf32> to vector<1x32xf32>
    %43 = vector.broadcast %42 : vector<1x32xf32> to vector<16x32xf32>
    %44 = arith.mulf %30, %43 : vector<16x32xf32>
    %45 = vector.extract_strided_slice %21 {offsets = [3, 0, 0], sizes = [1, 1, 32], strides = [1, 1, 1]} : vector<4x1x32xf32> to vector<1x1x32xf32>
    %46 = vector.shape_cast %45 : vector<1x1x32xf32> to vector<1x32xf32>
    %47 = vector.broadcast %46 : vector<1x32xf32> to vector<16x32xf32>
    %48 = arith.mulf %30, %47 : vector<16x32xf32>
    %49 = tpu.concatenate %36, %40, %44, %48 in 0 : vector<16x32xf32>, vector<16x32xf32>, vector<16x32xf32>, vector<16x32xf32> -> vector<64x32xf32>
    %cst_33 = arith.constant dense<0.000000e+00> : vector<64x16xf32>
    %50 = tpu.matmul %49, %31, %cst_33 {dimension_numbers = #tpu.dot_dimension_numbers<[1], [1], [0], [0], [0, 0, 1, 0], [], []>, precision = #tpu.contract_precision<fp32>} : vector<64x32xf32>, vector<16x32xf32>, vector<64x16xf32> -> vector<64x16xf32>
    %cst_34 = arith.constant 0.353553385 : f32
    %51 = vector.broadcast %cst_34 : f32 to vector<64x16xf32>
    %52 = arith.mulf %50, %51 : vector<64x16xf32>
    %53 = arith.addf %52, %22 : vector<64x16xf32>
    %cst_35 = arith.constant dense<0xFF800000> : vector<64xf32>
    %54 = vector.multi_reduction <maximumf>, %53, %cst_35 [1] : vector<64x16xf32> to vector<64xf32>
    %55 = vector.shape_cast %54 : vector<64xf32> to vector<64x1xf32>
    %56 = vector.broadcast %55 : vector<64x1xf32> to vector<64x16xf32>
    %57 = arith.subf %53, %56 : vector<64x16xf32>
    %58 = math.exp %57 : vector<64x16xf32>
    %cst_36 = arith.constant dense<0.000000e+00> : vector<64xf32>
    %59 = vector.multi_reduction <add>, %58, %cst_36 [1] : vector<64x16xf32> to vector<64xf32>
    %60 = vector.shape_cast %59 : vector<64xf32> to vector<64x1xf32>
    %61 = vector.broadcast %60 : vector<64x1xf32> to vector<64x16xf32>
    %62 = arith.divf %58, %61 : vector<64x16xf32>
    %cst_37 = arith.constant 0.000000e+00 : f32
    %63 = vector.broadcast %cst_37 : f32 to vector<16x32xf32>
    %64 = vector.extract_strided_slice %62 {offsets = [0, 0], sizes = [16, 16], strides = [1, 1]} : vector<64x16xf32> to vector<16x16xf32>
    %65 = vector.extract_strided_slice %21 {offsets = [0, 0, 0], sizes = [1, 1, 32], strides = [1, 1, 1]} : vector<4x1x32xf32> to vector<1x1x32xf32>
    %66 = vector.shape_cast %65 : vector<1x1x32xf32> to vector<1x32xf32>
    %67 = vector.broadcast %66 : vector<1x32xf32> to vector<16x32xf32>
    %68 = arith.mulf %32, %67 : vector<16x32xf32>
    %cst_38 = arith.constant dense<0.000000e+00> : vector<16x32xf32>
    %69 = tpu.matmul %64, %68, %cst_38 {dimension_numbers = #tpu.dot_dimension_numbers<[1], [0], [0], [1], [0, 0, 1, 1], [], []>, precision = #tpu.contract_precision<fp32>} : vector<16x16xf32>, vector<16x32xf32>, vector<16x32xf32> -> vector<16x32xf32>
    %70 = arith.addf %63, %69 : vector<16x32xf32>
    %71 = vector.extract_strided_slice %62 {offsets = [16, 0], sizes = [16, 16], strides = [1, 1]} : vector<64x16xf32> to vector<16x16xf32>
    %72 = vector.extract_strided_slice %21 {offsets = [1, 0, 0], sizes = [1, 1, 32], strides = [1, 1, 1]} : vector<4x1x32xf32> to vector<1x1x32xf32>
    %73 = vector.shape_cast %72 : vector<1x1x32xf32> to vector<1x32xf32>
    %74 = vector.broadcast %73 : vector<1x32xf32> to vector<16x32xf32>
    %75 = arith.mulf %32, %74 : vector<16x32xf32>
    %cst_39 = arith.constant dense<0.000000e+00> : vector<16x32xf32>
    %76 = tpu.matmul %71, %75, %cst_39 {dimension_numbers = #tpu.dot_dimension_numbers<[1], [0], [0], [1], [0, 0, 1, 1], [], []>, precision = #tpu.contract_precision<fp32>} : vector<16x16xf32>, vector<16x32xf32>, vector<16x32xf32> -> vector<16x32xf32>
    %77 = arith.addf %70, %76 : vector<16x32xf32>
    %78 = vector.extract_strided_slice %62 {offsets = [32, 0], sizes = [16, 16], strides = [1, 1]} : vector<64x16xf32> to vector<16x16xf32>
    %79 = vector.extract_strided_slice %21 {offsets = [2, 0, 0], sizes = [1, 1, 32], strides = [1, 1, 1]} : vector<4x1x32xf32> to vector<1x1x32xf32>
    %80 = vector.shape_cast %79 : vector<1x1x32xf32> to vector<1x32xf32>
    %81 = vector.broadcast %80 : vector<1x32xf32> to vector<16x32xf32>
    %82 = arith.mulf %32, %81 : vector<16x32xf32>
    %cst_40 = arith.constant dense<0.000000e+00> : vector<16x32xf32>
    %83 = tpu.matmul %78, %82, %cst_40 {dimension_numbers = #tpu.dot_dimension_numbers<[1], [0], [0], [1], [0, 0, 1, 1], [], []>, precision = #tpu.contract_precision<fp32>} : vector<16x16xf32>, vector<16x32xf32>, vector<16x32xf32> -> vector<16x32xf32>
    %84 = arith.addf %77, %83 : vector<16x32xf32>
    %85 = vector.extract_strided_slice %62 {offsets = [48, 0], sizes = [16, 16], strides = [1, 1]} : vector<64x16xf32> to vector<16x16xf32>
    %86 = vector.extract_strided_slice %21 {offsets = [3, 0, 0], sizes = [1, 1, 32], strides = [1, 1, 1]} : vector<4x1x32xf32> to vector<1x1x32xf32>
    %87 = vector.shape_cast %86 : vector<1x1x32xf32> to vector<1x32xf32>
    %88 = vector.broadcast %87 : vector<1x32xf32> to vector<16x32xf32>
    %89 = arith.mulf %32, %88 : vector<16x32xf32>
    %cst_41 = arith.constant dense<0.000000e+00> : vector<16x32xf32>
    %90 = tpu.matmul %85, %89, %cst_41 {dimension_numbers = #tpu.dot_dimension_numbers<[1], [0], [0], [1], [0, 0, 1, 1], [], []>, precision = #tpu.contract_precision<fp32>} : vector<16x16xf32>, vector<16x32xf32>, vector<16x32xf32> -> vector<16x32xf32>
    %91 = arith.addf %84, %90 : vector<16x32xf32>
    %c0_42 = arith.constant 0 : index
    %c0_43 = arith.constant 0 : index
    %c0_44 = arith.constant 0 : index
    %92 = vector.load %arg13[%c0_42, %c0_43, %c0_44] : memref<1x32x32xf32, #tpu.memory_space<vmem>>, vector<1x32x32xf32>
    %93 = vector.shape_cast %92 : vector<1x32x32xf32> to vector<32x32xf32>
    %cst_45 = arith.constant dense<0.000000e+00> : vector<16x32xf32>
    %94 = tpu.matmul %91, %93, %cst_45 {dimension_numbers = #tpu.dot_dimension_numbers<[1], [0], [0], [1], [0, 0, 1, 1], [], []>, precision = #tpu.contract_precision<fp32>} : vector<16x32xf32>, vector<32x32xf32>, vector<16x32xf32> -> vector<16x32xf32>
    %c0_46 = arith.constant 0 : index
    %c0_47 = arith.constant 0 : index
    %c0_48 = arith.constant 0 : index
    %95 = vector.load %arg14[%c0_46, %c0_47, %c0_48] : memref<1x1x32xf32, #tpu.memory_space<vmem>>, vector<1x1x32xf32>
    %96 = vector.shape_cast %95 : vector<1x1x32xf32> to vector<1x32xf32>
    %97 = vector.broadcast %96 : vector<1x32xf32> to vector<16x32xf32>
    %98 = arith.addf %94, %97 : vector<16x32xf32>
    %99 = arith.addf %20, %98 : vector<16x32xf32>
    %cst_49 = arith.constant dense<0.000000e+00> : vector<16xf32>
    %100 = vector.multi_reduction <add>, %99, %cst_49 [1] : vector<16x32xf32> to vector<16xf32>
    %101 = vector.shape_cast %100 : vector<16xf32> to vector<16x1xf32>
    %cst_50 = arith.constant 3.200000e+01 : f32
    %102 = vector.broadcast %cst_50 : f32 to vector<16x1xf32>
    %103 = arith.divf %101, %102 : vector<16x1xf32>
    %104 = vector.broadcast %103 : vector<16x1xf32> to vector<16x32xf32>
    %105 = arith.subf %99, %104 : vector<16x32xf32>
    %106 = arith.mulf %105, %105 : vector<16x32xf32>
    %cst_51 = arith.constant dense<0.000000e+00> : vector<16xf32>
    %107 = vector.multi_reduction <add>, %106, %cst_51 [1] : vector<16x32xf32> to vector<16xf32>
    %108 = vector.shape_cast %107 : vector<16xf32> to vector<16x1xf32>
    %cst_52 = arith.constant 3.200000e+01 : f32
    %109 = vector.broadcast %cst_52 : f32 to vector<16x1xf32>
    %110 = arith.divf %108, %109 : vector<16x1xf32>
    %111 = vector.broadcast %103 : vector<16x1xf32> to vector<16x32xf32>
    %112 = arith.subf %99, %111 : vector<16x32xf32>
    %cst_53 = arith.constant 9.99999974E-6 : f32
    %113 = vector.broadcast %cst_53 : f32 to vector<16x1xf32>
    %114 = arith.addf %110, %113 : vector<16x1xf32>
    %115 = math.rsqrt %114 : vector<16x1xf32>
    %116 = vector.broadcast %115 : vector<16x1xf32> to vector<16x32xf32>
    %117 = arith.mulf %112, %116 : vector<16x32xf32>
    %c0_54 = arith.constant 0 : index
    %c0_55 = arith.constant 0 : index
    %c0_56 = arith.constant 0 : index
    %118 = vector.load %arg15[%c0_54, %c0_55, %c0_56] : memref<1x1x32xf32, #tpu.memory_space<vmem>>, vector<1x1x32xf32>
    %119 = vector.shape_cast %118 : vector<1x1x32xf32> to vector<1x32xf32>
    %120 = vector.broadcast %119 : vector<1x32xf32> to vector<16x32xf32>
    %121 = arith.mulf %117, %120 : vector<16x32xf32>
    %c0_57 = arith.constant 0 : index
    %c0_58 = arith.constant 0 : index
    %c0_59 = arith.constant 0 : index
    %122 = vector.load %arg16[%c0_57, %c0_58, %c0_59] : memref<1x1x32xf32, #tpu.memory_space<vmem>>, vector<1x1x32xf32>
    %123 = vector.shape_cast %122 : vector<1x1x32xf32> to vector<1x32xf32>
    %124 = vector.broadcast %123 : vector<1x32xf32> to vector<16x32xf32>
    %125 = arith.addf %121, %124 : vector<16x32xf32>
    %c0_60 = arith.constant 0 : index
    %c0_61 = arith.constant 0 : index
    %c0_62 = arith.constant 0 : index
    %126 = vector.load %arg17[%c0_60, %c0_61, %c0_62] : memref<1x32x64xf32, #tpu.memory_space<vmem>>, vector<1x32x64xf32>
    %127 = vector.shape_cast %126 : vector<1x32x64xf32> to vector<32x64xf32>
    %cst_63 = arith.constant dense<0.000000e+00> : vector<16x64xf32>
    %128 = tpu.matmul %125, %127, %cst_63 {dimension_numbers = #tpu.dot_dimension_numbers<[1], [0], [0], [1], [0, 0, 1, 1], [], []>, precision = #tpu.contract_precision<fp32>} : vector<16x32xf32>, vector<32x64xf32>, vector<16x64xf32> -> vector<16x64xf32>
    %c0_64 = arith.constant 0 : index
    %c0_65 = arith.constant 0 : index
    %c0_66 = arith.constant 0 : index
    %129 = vector.load %arg18[%c0_64, %c0_65, %c0_66] : memref<1x1x64xf32, #tpu.memory_space<vmem>>, vector<1x1x64xf32>
    %130 = vector.shape_cast %129 : vector<1x1x64xf32> to vector<1x64xf32>
    %131 = vector.broadcast %130 : vector<1x64xf32> to vector<16x64xf32>
    %132 = arith.addf %128, %131 : vector<16x64xf32>
    %cst_67 = arith.constant 0.000000e+00 : f32
    %133 = vector.broadcast %cst_67 : f32 to vector<16x64xf32>
    %134 = arith.maximumf %132, %133 : vector<16x64xf32>
    %c0_68 = arith.constant 0 : index
    %c0_69 = arith.constant 0 : index
    %c0_70 = arith.constant 0 : index
    %135 = vector.load %arg19[%c0_68, %c0_69, %c0_70] : memref<1x64x32xf32, #tpu.memory_space<vmem>>, vector<1x64x32xf32>
    %136 = vector.shape_cast %135 : vector<1x64x32xf32> to vector<64x32xf32>
    %cst_71 = arith.constant dense<0.000000e+00> : vector<16x32xf32>
    %137 = tpu.matmul %134, %136, %cst_71 {dimension_numbers = #tpu.dot_dimension_numbers<[1], [0], [0], [1], [0, 0, 1, 1], [], []>, precision = #tpu.contract_precision<fp32>} : vector<16x64xf32>, vector<64x32xf32>, vector<16x32xf32> -> vector<16x32xf32>
    %c0_72 = arith.constant 0 : index
    %c0_73 = arith.constant 0 : index
    %c0_74 = arith.constant 0 : index
    %138 = vector.load %arg20[%c0_72, %c0_73, %c0_74] : memref<1x1x32xf32, #tpu.memory_space<vmem>>, vector<1x1x32xf32>
    %139 = vector.shape_cast %138 : vector<1x1x32xf32> to vector<1x32xf32>
    %140 = vector.broadcast %139 : vector<1x32xf32> to vector<16x32xf32>
    %141 = arith.addf %137, %140 : vector<16x32xf32>
    %142 = arith.addf %125, %141 : vector<16x32xf32>
    %cst_75 = arith.constant dense<0.000000e+00> : vector<16xf32>
    %143 = vector.multi_reduction <add>, %142, %cst_75 [1] : vector<16x32xf32> to vector<16xf32>
    %144 = vector.shape_cast %143 : vector<16xf32> to vector<16x1xf32>
    %cst_76 = arith.constant 3.200000e+01 : f32
    %145 = vector.broadcast %cst_76 : f32 to vector<16x1xf32>
    %146 = arith.divf %144, %145 : vector<16x1xf32>
    %147 = vector.broadcast %146 : vector<16x1xf32> to vector<16x32xf32>
    %148 = arith.subf %142, %147 : vector<16x32xf32>
    %149 = arith.mulf %148, %148 : vector<16x32xf32>
    %cst_77 = arith.constant dense<0.000000e+00> : vector<16xf32>
    %150 = vector.multi_reduction <add>, %149, %cst_77 [1] : vector<16x32xf32> to vector<16xf32>
    %151 = vector.shape_cast %150 : vector<16xf32> to vector<16x1xf32>
    %cst_78 = arith.constant 3.200000e+01 : f32
    %152 = vector.broadcast %cst_78 : f32 to vector<16x1xf32>
    %153 = arith.divf %151, %152 : vector<16x1xf32>
    %154 = vector.broadcast %146 : vector<16x1xf32> to vector<16x32xf32>
    %155 = arith.subf %142, %154 : vector<16x32xf32>
    %cst_79 = arith.constant 9.99999974E-6 : f32
    %156 = vector.broadcast %cst_79 : f32 to vector<16x1xf32>
    %157 = arith.addf %153, %156 : vector<16x1xf32>
    %158 = math.rsqrt %157 : vector<16x1xf32>
    %159 = vector.broadcast %158 : vector<16x1xf32> to vector<16x32xf32>
    %160 = arith.mulf %155, %159 : vector<16x32xf32>
    %c0_80 = arith.constant 0 : index
    %c0_81 = arith.constant 0 : index
    %c0_82 = arith.constant 0 : index
    %161 = vector.load %arg21[%c0_80, %c0_81, %c0_82] : memref<1x1x32xf32, #tpu.memory_space<vmem>>, vector<1x1x32xf32>
    %162 = vector.shape_cast %161 : vector<1x1x32xf32> to vector<1x32xf32>
    %163 = vector.broadcast %162 : vector<1x32xf32> to vector<16x32xf32>
    %164 = arith.mulf %160, %163 : vector<16x32xf32>
    %c0_83 = arith.constant 0 : index
    %c0_84 = arith.constant 0 : index
    %c0_85 = arith.constant 0 : index
    %165 = vector.load %arg22[%c0_83, %c0_84, %c0_85] : memref<1x1x32xf32, #tpu.memory_space<vmem>>, vector<1x1x32xf32>
    %166 = vector.shape_cast %165 : vector<1x1x32xf32> to vector<1x32xf32>
    %167 = vector.broadcast %166 : vector<1x32xf32> to vector<16x32xf32>
    %168 = arith.addf %164, %167 : vector<16x32xf32>
    %c0_86 = arith.constant 0 : index
    %c0_87 = arith.constant 0 : index
    %169 = vector.load %arg23[%c0_86, %c0_87] : memref<8x16xf32, #tpu.memory_space<vmem>>, vector<8x16xf32>
    %cst_88 = arith.constant dense<0.000000e+00> : vector<8x32xf32>
    %170 = tpu.matmul %169, %168, %cst_88 {dimension_numbers = #tpu.dot_dimension_numbers<[1], [0], [0], [1], [0, 0, 1, 1], [], []>, precision = #tpu.contract_precision<fp32>} : vector<8x16xf32>, vector<16x32xf32>, vector<8x32xf32> -> vector<8x32xf32>
    %cst_89 = arith.constant 0.000000e+00 : f32
    %171 = vector.broadcast %cst_89 : f32 to vector<2x128xf32>
    %172 = vector.extract_strided_slice %170 {offsets = [0, 0], sizes = [2, 32], strides = [1, 1]} : vector<8x32xf32> to vector<2x32xf32>
    %c0_90 = arith.constant 0 : index
    %c0_91 = arith.constant 0 : index
    %c0_92 = arith.constant 0 : index
    %173 = vector.load %arg24[%c0_90, %c0_91, %c0_92] : memref<4x32x128xf32, #tpu.memory_space<vmem>>, vector<1x32x128xf32>
    %174 = vector.shape_cast %173 : vector<1x32x128xf32> to vector<32x128xf32>
    %cst_93 = arith.constant dense<0.000000e+00> : vector<2x128xf32>
    %175 = tpu.matmul %172, %174, %cst_93 {dimension_numbers = #tpu.dot_dimension_numbers<[1], [0], [0], [1], [0, 0, 1, 1], [], []>, precision = #tpu.contract_precision<fp32>} : vector<2x32xf32>, vector<32x128xf32>, vector<2x128xf32> -> vector<2x128xf32>
    %176 = arith.addf %171, %175 : vector<2x128xf32>
    %177 = vector.extract_strided_slice %170 {offsets = [2, 0], sizes = [2, 32], strides = [1, 1]} : vector<8x32xf32> to vector<2x32xf32>
    %c1 = arith.constant 1 : index
    %c0_94 = arith.constant 0 : index
    %c0_95 = arith.constant 0 : index
    %178 = vector.load %arg24[%c1, %c0_94, %c0_95] : memref<4x32x128xf32, #tpu.memory_space<vmem>>, vector<1x32x128xf32>
    %179 = vector.shape_cast %178 : vector<1x32x128xf32> to vector<32x128xf32>
    %cst_96 = arith.constant dense<0.000000e+00> : vector<2x128xf32>
    %180 = tpu.matmul %177, %179, %cst_96 {dimension_numbers = #tpu.dot_dimension_numbers<[1], [0], [0], [1], [0, 0, 1, 1], [], []>, precision = #tpu.contract_precision<fp32>} : vector<2x32xf32>, vector<32x128xf32>, vector<2x128xf32> -> vector<2x128xf32>
    %181 = arith.addf %176, %180 : vector<2x128xf32>
    %182 = vector.extract_strided_slice %170 {offsets = [4, 0], sizes = [2, 32], strides = [1, 1]} : vector<8x32xf32> to vector<2x32xf32>
    %c2 = arith.constant 2 : index
    %c0_97 = arith.constant 0 : index
    %c0_98 = arith.constant 0 : index
    %183 = vector.load %arg24[%c2, %c0_97, %c0_98] : memref<4x32x128xf32, #tpu.memory_space<vmem>>, vector<1x32x128xf32>
    %184 = vector.shape_cast %183 : vector<1x32x128xf32> to vector<32x128xf32>
    %cst_99 = arith.constant dense<0.000000e+00> : vector<2x128xf32>
    %185 = tpu.matmul %182, %184, %cst_99 {dimension_numbers = #tpu.dot_dimension_numbers<[1], [0], [0], [1], [0, 0, 1, 1], [], []>, precision = #tpu.contract_precision<fp32>} : vector<2x32xf32>, vector<32x128xf32>, vector<2x128xf32> -> vector<2x128xf32>
    %186 = arith.addf %181, %185 : vector<2x128xf32>
    %187 = vector.extract_strided_slice %170 {offsets = [6, 0], sizes = [2, 32], strides = [1, 1]} : vector<8x32xf32> to vector<2x32xf32>
    %c3 = arith.constant 3 : index
    %c0_100 = arith.constant 0 : index
    %c0_101 = arith.constant 0 : index
    %188 = vector.load %arg24[%c3, %c0_100, %c0_101] : memref<4x32x128xf32, #tpu.memory_space<vmem>>, vector<1x32x128xf32>
    %189 = vector.shape_cast %188 : vector<1x32x128xf32> to vector<32x128xf32>
    %cst_102 = arith.constant dense<0.000000e+00> : vector<2x128xf32>
    %190 = tpu.matmul %187, %189, %cst_102 {dimension_numbers = #tpu.dot_dimension_numbers<[1], [0], [0], [1], [0, 0, 1, 1], [], []>, precision = #tpu.contract_precision<fp32>} : vector<2x32xf32>, vector<32x128xf32>, vector<2x128xf32> -> vector<2x128xf32>
    %191 = arith.addf %186, %190 : vector<2x128xf32>
    %c0_103 = arith.constant 0 : index
    %c0_104 = arith.constant 0 : index
    %192 = vector.load %arg25[%c0_103, %c0_104] : memref<1x128xf32, #tpu.memory_space<vmem>>, vector<1x128xf32>
    %193 = vector.broadcast %192 : vector<1x128xf32> to vector<2x128xf32>
    %194 = arith.addf %191, %193 : vector<2x128xf32>
    %c0_105 = arith.constant 0 : index
    %c0_106 = arith.constant 0 : index
    %195 = vector.load %arg26[%c0_105, %c0_106] : memref<2x128xf32, #tpu.memory_space<vmem>>, vector<2x128xf32>
    tpu.vector_store %arg26[%c0_105, %c0_106], %194 {strides = array<i32>} : memref<2x128xf32, #tpu.memory_space<vmem>>, vector<2x128xf32>,
    return
  }
}

</mosaic_0001>

<llo_original>
// kernel: tpu_custom_call.1
$region0: #{tpu_custom_call.1}
  #allocation0 [shape = 'u32[]', space=smem, size = 0x4, offset = 0x4, fixed_abs, tag = 'smem constant byte address 0x4 - core index']
  #allocation1 [shape = 'u32[144,128]{1,0:T(1,128)}', space=vmem, size = 0x12000, scoped, tag = 'internal scratch']
  %s0 = inlined_call_operand.vmem [shape: f32[16,165], index: 0, kind: input, shape index: {}]
  %s1 = inlined_call_operand.hbm [shape: f32[2,15], index: 1, kind: input, shape index: {}]
  %s2 = inlined_call_operand.vmem [shape: f32[16,2], index: 2, kind: input, shape index: {}]
  %s3 = inlined_call_operand.vmem [shape: f32[165,32], index: 3, kind: input, shape index: {}]
  %s4 = inlined_call_operand.vmem [shape: f32[15,32], index: 4, kind: input, shape index: {}]
  %s5 = inlined_call_operand.vmem [shape: f32[1,32], index: 5, kind: input, shape index: {}]
  %s6 = inlined_call_operand.vmem [shape: f32[32,32], index: 6, kind: input, shape index: {}]
  %s7 = inlined_call_operand.vmem [shape: f32[1,32], index: 7, kind: input, shape index: {}]
  %s8 = inlined_call_operand.vmem [shape: f32[16,32], index: 8, kind: input, shape index: {}]
  %s9 = inlined_call_operand.vmem [shape: f32[64,16], index: 9, kind: input, shape index: {}]
  %s10 = inlined_call_operand.vmem [shape: f32[4,1,32], index: 10, kind: input, shape index: {}]
  %s11 = inlined_call_operand.vmem [shape: f32[1,32,96], index: 11, kind: input, shape index: {}]
  %s12 = inlined_call_operand.vmem [shape: f32[1,1,96], index: 12, kind: input, shape index: {}]
  %s13 = inlined_call_operand.vmem [shape: f32[1,32,32], index: 13, kind: input, shape index: {}]
  %s14 = inlined_call_operand.vmem [shape: f32[1,1,32], index: 14, kind: input, shape index: {}]
  %s15 = inlined_call_operand.vmem [shape: f32[1,1,32], index: 15, kind: input, shape index: {}]
  %s16 = inlined_call_operand.vmem [shape: f32[1,1,32], index: 16, kind: input, shape index: {}]
  %s17 = inlined_call_operand.vmem [shape: f32[1,32,64], index: 17, kind: input, shape index: {}]
  %s18 = inlined_call_operand.vmem [shape: f32[1,1,64], index: 18, kind: input, shape index: {}]
  %s19 = inlined_call_operand.vmem [shape: f32[1,64,32], index: 19, kind: input, shape index: {}]
  %s20 = inlined_call_operand.vmem [shape: f32[1,1,32], index: 20, kind: input, shape index: {}]
  %s21 = inlined_call_operand.vmem [shape: f32[1,1,32], index: 21, kind: input, shape index: {}]
  %s22 = inlined_call_operand.vmem [shape: f32[1,1,32], index: 22, kind: input, shape index: {}]
  %s23 = inlined_call_operand.vmem [shape: f32[8,16], index: 23, kind: input, shape index: {}]
  %s24 = inlined_call_operand.vmem [shape: f32[4,32,128], index: 24, kind: input, shape index: {}]
  %s25 = inlined_call_operand.vmem [shape: f32[1,128], index: 25, kind: input, shape index: {}]
  %s26 = inlined_call_operand.hbm [shape: f32[2,128], index: 26, kind: output, shape index: {}]
  %s27 = sld [smem:[#allocation0]]
  $region118: #{tpu_custom_call.1} parent=0
    _
  %s29 = ssub.s32 1, %s27
  %s30 = scalar_select 0, %s29, %s27
  $region1: #{tpu_custom_call.1} parent=0
    #allocation2 [shape = 'u8[1024]{0}', space=vmem, size = 0x400, scoped, tag = 'input window, operand 1, single buffered']
    #allocation3 [shape = 's32[1]{0}', space=sflag, size = 0x4, scoped, tag = 'scoped memory for tpu_custom_call.1']
    #allocation4 [shape = 's32[1]{0}', space=sflag, size = 0x4, scoped, tag = 'scoped memory for tpu_custom_call.1']
    #allocation5 [shape = 'u8[1024]{0}', space=vmem, size = 0x400, scoped, tag = 'output window, operand 0, single buffered']
    %31 = vsyncpa [#allocation3], 0
    %32 = vsyncpa [#allocation4], 0
    // Predicated region
    $region2: #{tpu_custom_call.1} parent=1 // pred_check
      _
    $region3: #{tpu_custom_call.1} parent=1 // pred_check_branch
      %34 = sbr.rel (0) target = $region5
    $region4: #{tpu_custom_call.1} parent=1 // pred_region
      _
    $region5: #{tpu_custom_call.1} parent=1 // pred_fallthru
      _
    // Predicated region
    $region6: #{tpu_custom_call.1} parent=1 // pred_check
      _
    $region7: #{tpu_custom_call.1} parent=1 // pred_check_branch
      %36 = sbr.rel (0) target = $region9
    $region8: #{tpu_custom_call.1} parent=1 // pred_region
      %s38 = ssub.s32 32, 32
      %39 = vsyncadd [#allocation3], %s38
      %s41 = sshll.u32 [#allocation2], 4
      %s42 = int_to_ptr.vmem [resolvable:$true] %s41
      %44 = dma.hbm_to_vmem [thread:$0]  %s1, 32, %s42, [#allocation3]
    $region9: #{tpu_custom_call.1} parent=1 // pred_fallthru
      _
    // Predicated region
    $region10: #{tpu_custom_call.1} parent=1 // pred_check
      _
    $region11: #{tpu_custom_call.1} parent=1 // pred_check_branch
      %46 = sbr.rel (0) target = $region13
    $region12: #{tpu_custom_call.1} parent=1 // pred_region
      _
    $region13: #{tpu_custom_call.1} parent=1 // pred_fallthru
      _
    // Predicated region
    $region14: #{tpu_custom_call.1} parent=1 // pred_check
      _
    $region15: #{tpu_custom_call.1} parent=1 // pred_check_branch
      %48 = sbr.rel (0) target = $region17
    $region16: #{tpu_custom_call.1} parent=1 // pred_region
      _
    $region17: #{tpu_custom_call.1} parent=1 // pred_fallthru
      _
    // Predicated region
    $region18: #{tpu_custom_call.1} parent=1 // pred_check
      _
    $region19: #{tpu_custom_call.1} parent=1 // pred_check_branch
      %50 = sbr.rel (0) target = $region21
    $region20: #{tpu_custom_call.1} parent=1 // pred_region
      _
    $region21: #{tpu_custom_call.1} parent=1 // pred_fallthru
      _
    // Predicated region
    $region22: #{tpu_custom_call.1} parent=1 // pred_check
      _
    $region23: #{tpu_custom_call.1} parent=1 // pred_check_branch
      %52 = sbr.rel (0) target = $region25
    $region24: #{tpu_custom_call.1} parent=1 // pred_region
      _
    $region25: #{tpu_custom_call.1} parent=1 // pred_fallthru
      _
    // Predicated region
    $region26: #{tpu_custom_call.1} parent=1 // pred_check
      _
    $region27: #{tpu_custom_call.1} parent=1 // pred_check_branch
      %54 = sbr.rel (0) target = $region29
    $region28: #{tpu_custom_call.1} parent=1 // pred_region
      _
    $region29: #{tpu_custom_call.1} parent=1 // pred_fallthru
      _
    // Predicated region
    $region30: #{tpu_custom_call.1} parent=1 // pred_check
      _
    $region31: #{tpu_custom_call.1} parent=1 // pred_check_branch
      %56 = sbr.rel (0) target = $region33
    $region32: #{tpu_custom_call.1} parent=1 // pred_region
      _
    $region33: #{tpu_custom_call.1} parent=1 // pred_fallthru
      _
    // Predicated region
    $region34: #{tpu_custom_call.1} parent=1 // pred_check
      _
    $region35: #{tpu_custom_call.1} parent=1 // pred_check_branch
      %58 = sbr.rel (0) target = $region37
    $region36: #{tpu_custom_call.1} parent=1 // pred_region
      _
    $region37: #{tpu_custom_call.1} parent=1 // pred_fallthru
      _
    // Predicated region
    $region38: #{tpu_custom_call.1} parent=1 // pred_check
      _
    $region39: #{tpu_custom_call.1} parent=1 // pred_check_branch
      %60 = sbr.rel (0) target = $region41
    $region40: #{tpu_custom_call.1} parent=1 // pred_region
      _
    $region41: #{tpu_custom_call.1} parent=1 // pred_fallthru
      _
    // Predicated region
    $region42: #{tpu_custom_call.1} parent=1 // pred_check
      _
    $region43: #{tpu_custom_call.1} parent=1 // pred_check_branch
      %62 = sbr.rel (0) target = $region45
    $region44: #{tpu_custom_call.1} parent=1 // pred_region
      _
    $region45: #{tpu_custom_call.1} parent=1 // pred_fallthru
      _
    // Predicated region
    $region46: #{tpu_custom_call.1} parent=1 // pred_check
      _
    $region47: #{tpu_custom_call.1} parent=1 // pred_check_branch
      %64 = sbr.rel (0) target = $region49
    $region48: #{tpu_custom_call.1} parent=1 // pred_region
      _
    $region49: #{tpu_custom_call.1} parent=1 // pred_fallthru
      _
    // Predicated region
    $region50: #{tpu_custom_call.1} parent=1 // pred_check
      _
    $region51: #{tpu_custom_call.1} parent=1 // pred_check_branch
      %66 = sbr.rel (0) target = $region53
    $region52: #{tpu_custom_call.1} parent=1 // pred_region
      _
    $region53: #{tpu_custom_call.1} parent=1 // pred_fallthru
      _
    // Predicated region
    $region54: #{tpu_custom_call.1} parent=1 // pred_check
      _
    $region55: #{tpu_custom_call.1} parent=1 // pred_check_branch
      %68 = sbr.rel (0) target = $region57
    $region56: #{tpu_custom_call.1} parent=1 // pred_region
      _
    $region57: #{tpu_custom_call.1} parent=1 // pred_fallthru
      _
    // Predicated region
    $region58: #{tpu_custom_call.1} parent=1 // pred_check
      _
    $region59: #{tpu_custom_call.1} parent=1 // pred_check_branch
      %70 = sbr.rel (0) target = $region61
    $region60: #{tpu_custom_call.1} parent=1 // pred_region
      _
    $region61: #{tpu_custom_call.1} parent=1 // pred_fallthru
      _
    // Predicated region
    $region62: #{tpu_custom_call.1} parent=1 // pred_check
      _
    $region63: #{tpu_custom_call.1} parent=1 // pred_check_branch
      %72 = sbr.rel (0) target = $region65
    $region64: #{tpu_custom_call.1} parent=1 // pred_region
      _
    $region65: #{tpu_custom_call.1} parent=1 // pred_fallthru
      _
    // Predicated region
    $region66: #{tpu_custom_call.1} parent=1 // pred_check
      _
    $region67: #{tpu_custom_call.1} parent=1 // pred_check_branch
      %74 = sbr.rel (0) target = $region69
    $region68: #{tpu_custom_call.1} parent=1 // pred_region
      _
    $region69: #{tpu_custom_call.1} parent=1 // pred_fallthru
      _
    // Predicated region
    $region70: #{tpu_custom_call.1} parent=1 // pred_check
      _
    $region71: #{tpu_custom_call.1} parent=1 // pred_check_branch
      %76 = sbr.rel (0) target = $region73
    $region72: #{tpu_custom_call.1} parent=1 // pred_region
      _
    $region73: #{tpu_custom_call.1} parent=1 // pred_fallthru
      _
    // Predicated region
    $region74: #{tpu_custom_call.1} parent=1 // pred_check
      _
    $region75: #{tpu_custom_call.1} parent=1 // pred_check_branch
      %78 = sbr.rel (0) target = $region77
    $region76: #{tpu_custom_call.1} parent=1 // pred_region
      _
    $region77: #{tpu_custom_call.1} parent=1 // pred_fallthru
      _
    // Predicated region
    $region78: #{tpu_custom_call.1} parent=1 // pred_check
      _
    $region79: #{tpu_custom_call.1} parent=1 // pred_check_branch
      %80 = sbr.rel (0) target = $region81
    $region80: #{tpu_custom_call.1} parent=1 // pred_region
      _
    $region81: #{tpu_custom_call.1} parent=1 // pred_fallthru
      _
    // Predicated region
    $region82: #{tpu_custom_call.1} parent=1 // pred_check
      _
    $region83: #{tpu_custom_call.1} parent=1 // pred_check_branch
      %82 = sbr.rel (0) target = $region85
    $region84: #{tpu_custom_call.1} parent=1 // pred_region
      _
    $region85: #{tpu_custom_call.1} parent=1 // pred_fallthru
      _
    // Predicated region
    $region86: #{tpu_custom_call.1} parent=1 // pred_check
      _
    $region87: #{tpu_custom_call.1} parent=1 // pred_check_branch
      %84 = sbr.rel (0) target = $region89
    $region88: #{tpu_custom_call.1} parent=1 // pred_region
      _
    $region89: #{tpu_custom_call.1} parent=1 // pred_fallthru
      _
    // Predicated region
    $region90: #{tpu_custom_call.1} parent=1 // pred_check
      _
    $region91: #{tpu_custom_call.1} parent=1 // pred_check_branch
      %86 = sbr.rel (0) target = $region93
    $region92: #{tpu_custom_call.1} parent=1 // pred_region
      _
    $region93: #{tpu_custom_call.1} parent=1 // pred_fallthru
      _
    // Predicated region
    $region94: #{tpu_custom_call.1} parent=1 // pred_check
      _
    $region95: #{tpu_custom_call.1} parent=1 // pred_check_branch
      %88 = sbr.rel (0) target = $region97
    $region96: #{tpu_custom_call.1} parent=1 // pred_region
      _
    $region97: #{tpu_custom_call.1} parent=1 // pred_fallthru
      _
    // Predicated region
    $region98: #{tpu_custom_call.1} parent=1 // pred_check
      _
    $region99: #{tpu_custom_call.1} parent=1 // pred_check_branch
      %90 = sbr.rel (0) target = $region101
    $region100: #{tpu_custom_call.1} parent=1 // pred_region
      _
    $region101: #{tpu_custom_call.1} parent=1 // pred_fallthru
      _
    // Predicated region
    $region102: #{tpu_custom_call.1} parent=1 // pred_check
      _
    $region103: #{tpu_custom_call.1} parent=1 // pred_check_branch
      %92 = sbr.rel (0) target = $region105
    $region104: #{tpu_custom_call.1} parent=1 // pred_region
      _
    $region105: #{tpu_custom_call.1} parent=1 // pred_fallthru
      _
    // Predicated region
    $region106: #{tpu_custom_call.1} parent=1 // pred_check
      _
    $region107: #{tpu_custom_call.1} parent=1 // pred_check_branch
      %94 = sbr.rel (0) target = $region109
    $region108: #{tpu_custom_call.1} parent=1 // pred_region
      %95 = dma.done [#allocation3], 32
    $region109: #{tpu_custom_call.1} parent=1 // pred_fallthru
      _
    %v96 = vld [vmem:[#allocation2] sm:$0x3]
    %v97 = vld [vmem:[%s4] sm:$0xff]
    %v98 = vld [vmem:[%s4 + $0x8] sm:$0x7f]
    %vm99 = vcmask 121856
    %v101 = vsel %vm99, %v96, 0
    %vm103 = vcmask 1046528
    %v105 = vsel %vm103, %v98, 0
    %107 = vmatprep.subr.mxu0 0.0
    %v108 = vand.u32 %v97, 4294901760
    %109 = vmatpush1.msra.mxu0 %v108
    %110 = vmatprep.subr.mxu0 0.0
    %v111 = vand.u32 %v105, 4294901760
    %112 = vmatpush1.msra.mxu0 %v111
    %113 = vmatprep.subr.mxu0 0.0
    %114 = vmatpush1.msra.mxu0 0.0
    %115 = vmatprep.subr.mxu0 0.0
    %116 = vmatpush1.msra.mxu0 0.0
    %117 = vmatprep.subr.mxu0 0.0
    %118 = vmatpush1.msra.mxu0 0.0
    %119 = vmatprep.subr.mxu0 0.0
    %120 = vmatpush1.msra.mxu0 0.0
    %121 = vmatprep.subr.mxu0 0.0
    %122 = vmatpush1.msra.mxu0 0.0
    %123 = vmatprep.subr.mxu0 0.0
    %124 = vmatpush1.msra.mxu0 0.0
    %125 = vmatprep.subr.mxu0 0.0
    %126 = vmatpush1.msra.mxu0 0.0
    %127 = vmatprep.subr.mxu0 0.0
    %128 = vmatpush1.msra.mxu0 0.0
    %129 = vmatprep.subr.mxu0 0.0
    %130 = vmatpush1.msra.mxu0 0.0
    %131 = vmatprep.subr.mxu0 0.0
    %132 = vmatpush1.msra.mxu0 0.0
    %133 = vmatprep.subr.mxu0 0.0
    %134 = vmatpush1.msra.mxu0 0.0
    %135 = vmatprep.subr.mxu0 0.0
    %136 = vmatpush1.msra.mxu0 0.0
    %137 = vmatprep.subr.mxu0 0.0
    %138 = vmatpush1.msra.mxu0 0.0
    %139 = vmatprep.subr.mxu0 0.0
    %140 = vmatpush1.msra.mxu0 0.0
    %141 = vmatprep.subr.mxu0 0.0
    %142 = vmatpush1.msra.mxu0 0.0
    %143 = vmatprep.subr.mxu0 0.0
    %144 = vmatpush1.msra.mxu0 0.0
    %145 = vmatprep.subr.mxu0 0.0
    %146 = vmatpush1.msra.mxu0 0.0
    %147 = vmatprep.subr.mxu0 0.0
    %148 = vmatpush1.msra.mxu0 0.0
    %149 = vmatprep.subr.mxu0 0.0
    %150 = vmatpush1.msra.mxu0 0.0
    %151 = vmatprep.subr.mxu0 0.0
    %152 = vmatpush1.msra.mxu0 0.0
    %153 = vmatprep.subr.mxu0 0.0
    %154 = vmatpush1.msra.mxu0 0.0
    %155 = vmatprep.subr.mxu0 0.0
    %156 = vmatpush1.msra.mxu0 0.0
    %157 = vmatprep.subr.mxu0 0.0
    %158 = vmatpush1.msra.mxu0 0.0
    %159 = vmatprep.subr.mxu0 0.0
    %160 = vmatpush1.msra.mxu0 0.0
    %161 = vmatprep.subr.mxu0 0.0
    %162 = vmatpush1.msra.mxu0 0.0
    %163 = vmatprep.subr.mxu0 0.0
    %164 = vmatpush1.msra.mxu0 0.0
    %165 = vmatprep.subr.mxu0 0.0
    %166 = vmatpush1.msra.mxu0 0.0
    %167 = vmatprep.subr.mxu0 0.0
    %168 = vmatpush1.msra.mxu0 0.0
    %169 = vmatprep.subr.mxu0 0.0
    %170 = vmatpush1.msra.mxu0 0.0
    %171 = vmatprep.subr.mxu0 0.0
    %172 = vmatpush1.msra.mxu0 0.0
    %173 = vmatprep.mubr.f32.mxu0 0.0
    %v174 = vand.u32 %v101, 4294901760
    %v175 = vsub.f32 %v101, %v174
    %v176 = vand.u32 %v175, 4294901760
    %v177 = vsub.f32 %v175, %v176
    %v178 = vand.u32 %v177, 4294901760
    %179 = vmatmul.mubr.f32.gmra.mrb[0].mxu0 %v178
    %v180 = vpop.f32.mrb[0].mxu0
    %v181 = vadd.f32 0.0, %v180
    %v182 = vpop.f32.mrb[0].mxu0
    %183 = vdwg.mxu0
    %184 = vmatprep.subr.mxu0 0.0
    %v185 = vand.u32 %v97, 4294901760
    %v186 = vsub.f32 %v97, %v185
    %v187 = vand.u32 %v186, 4294901760
    %v188 = vsub.f32 %v186, %v187
    %v189 = vand.u32 %v188, 4294901760
    %190 = vmatpush1.msra.mxu0 %v189
    %191 = vmatprep.subr.mxu0 0.0
    %v192 = vand.u32 %v105, 4294901760
    %v193 = vsub.f32 %v105, %v192
    %v194 = vand.u32 %v193, 4294901760
    %v195 = vsub.f32 %v193, %v194
    %v196 = vand.u32 %v195, 4294901760
    %197 = vmatpush1.msra.mxu0 %v196
    %198 = vmatprep.subr.mxu0 0.0
    %199 = vmatpush1.msra.mxu0 0.0
    %200 = vmatprep.subr.mxu0 0.0
    %201 = vmatpush1.msra.mxu0 0.0
    %202 = vmatprep.subr.mxu0 0.0
    %203 = vmatpush1.msra.mxu0 0.0
    %204 = vmatprep.subr.mxu0 0.0
    %205 = vmatpush1.msra.mxu0 0.0
    %206 = vmatprep.subr.mxu0 0.0
    %207 = vmatpush1.msra.mxu0 0.0
    %208 = vmatprep.subr.mxu0 0.0
    %209 = vmatpush1.msra.mxu0 0.0
    %210 = vmatprep.subr.mxu0 0.0
    %211 = vmatpush1.msra.mxu0 0.0
    %212 = vmatprep.subr.mxu0 0.0
    %213 = vmatpush1.msra.mxu0 0.0
    %214 = vmatprep.subr.mxu0 0.0
    %215 = vmatpush1.msra.mxu0 0.0
    %216 = vmatprep.subr.mxu0 0.0
    %217 = vmatpush1.msra.mxu0 0.0
    %218 = vmatprep.subr.mxu0 0.0
    %219 = vmatpush1.msra.mxu0 0.0
    %220 = vmatprep.subr.mxu0 0.0
    %221 = vmatpush1.msra.mxu0 0.0
    %222 = vmatprep.subr.mxu0 0.0
    %223 = vmatpush1.msra.mxu0 0.0
    %224 = vmatprep.subr.mxu0 0.0
    %225 = vmatpush1.msra.mxu0 0.0
    %226 = vmatprep.subr.mxu0 0.0
    %227 = vmatpush1.msra.mxu0 0.0
    %228 = vmatprep.subr.mxu0 0.0
    %229 = vmatpush1.msra.mxu0 0.0
    %230 = vmatprep.subr.mxu0 0.0
    %231 = vmatpush1.msra.mxu0 0.0
    %232 = vmatprep.subr.mxu0 0.0
    %233 = vmatpush1.msra.mxu0 0.0
    %234 = vmatprep.subr.mxu0 0.0
    %235 = vmatpush1.msra.mxu0 0.0
    %236 = vmatprep.subr.mxu0 0.0
    %237 = vmatpush1.msra.mxu0 0.0
    %238 = vmatprep.subr.mxu0 0.0
    %239 = vmatpush1.msra.mxu0 0.0
    %240 = vmatprep.subr.mxu0 0.0
    %241 = vmatpush1.msra.mxu0 0.0
    %242 = vmatprep.subr.mxu0 0.0
    %243 = vmatpush1.msra.mxu0 0.0
    %244 = vmatprep.subr.mxu0 0.0
    %245 = vmatpush1.msra.mxu0 0.0
    %246 = vmatprep.subr.mxu0 0.0
    %247 = vmatpush1.msra.mxu0 0.0
    %248 = vmatprep.subr.mxu0 0.0
    %249 = vmatpush1.msra.mxu0 0.0
    %250 = vmatprep.subr.mxu0 0.0
    %251 = vmatpush1.msra.mxu0 0.0
    %252 = vmatprep.subr.mxu0 0.0
    %253 = vmatpush1.msra.mxu0 0.0
    %254 = vmatprep.subr.mxu0 0.0
    %255 = vmatpush1.msra.mxu0 0.0
    %256 = vmatprep.subr.mxu0 0.0
    %257 = vmatpush1.msra.mxu0 0.0
    %258 = vmatprep.mubr.f32.mxu0 0.0
    %v259 = vand.u32 %v101, 4294901760
    %260 = vmatmul.mubr.f32.gmra.mrb[0].mxu0 %v259
    %v261 = vpop.f32.mrb[0].mxu0
    %v262 = vadd.f32 %v181, %v261
    %v263 = vpop.f32.mrb[0].mxu0
    %264 = vdwg.mxu0
    %265 = vmatprep.subr.mxu0 0.0
    %v266 = vand.u32 %v97, 4294901760
    %v267 = vsub.f32 %v97, %v266
    %268 = vmatpush1.msra.mxu0 %v267
    %269 = vmatprep.subr.mxu0 0.0
    %v270 = vand.u32 %v105, 4294901760
    %v271 = vsub.f32 %v105, %v270
    %272 = vmatpush1.msra.mxu0 %v271
    %273 = vmatprep.subr.mxu0 0.0
    %274 = vmatpush1.msra.mxu0 0.0
    %275 = vmatprep.subr.mxu0 0.0
    %276 = vmatpush1.msra.mxu0 0.0
    %277 = vmatprep.subr.mxu0 0.0
    %278 = vmatpush1.msra.mxu0 0.0
    %279 = vmatprep.subr.mxu0 0.0
    %280 = vmatpush1.msra.mxu0 0.0
    %281 = vmatprep.subr.mxu0 0.0
    %282 = vmatpush1.msra.mxu0 0.0
    %283 = vmatprep.subr.mxu0 0.0
    %284 = vmatpush1.msra.mxu0 0.0
    %285 = vmatprep.subr.mxu0 0.0
    %286 = vmatpush1.msra.mxu0 0.0
    %287 = vmatprep.subr.mxu0 0.0
    %288 = vmatpush1.msra.mxu0 0.0
    %289 = vmatprep.subr.mxu0 0.0
    %290 = vmatpush1.msra.mxu0 0.0
    %291 = vmatprep.subr.mxu0 0.0
    %292 = vmatpush1.msra.mxu0 0.0
    %293 = vmatprep.subr.mxu0 0.0
    %294 = vmatpush1.msra.mxu0 0.0
    %295 = vmatprep.subr.mxu0 0.0
    %296 = vmatpush1.msra.mxu0 0.0
    %297 = vmatprep.subr.mxu0 0.0
    %298 = vmatpush1.msra.mxu0 0.0
    %299 = vmatprep.subr.mxu0 0.0
    %300 = vmatpush1.msra.mxu0 0.0
    %301 = vmatprep.subr.mxu0 0.0
    %302 = vmatpush1.msra.mxu0 0.0
    %303 = vmatprep.subr.mxu0 0.0
    %304 = vmatpush1.msra.mxu0 0.0
    %305 = vmatprep.subr.mxu0 0.0
    %306 = vmatpush1.msra.mxu0 0.0
    %307 = vmatprep.subr.mxu0 0.0
    %308 = vmatpush1.msra.mxu0 0.0
    %309 = vmatprep.subr.mxu0 0.0
    %310 = vmatpush1.msra.mxu0 0.0
    %311 = vmatprep.subr.mxu0 0.0
    %312 = vmatpush1.msra.mxu0 0.0
    %313 = vmatprep.subr.mxu0 0.0
    %314 = vmatpush1.msra.mxu0 0.0
    %315 = vmatprep.subr.mxu0 0.0
    %316 = vmatpush1.msra.mxu0 0.0
    %317 = vmatprep.subr.mxu0 0.0
    %318 = vmatpush1.msra.mxu0 0.0
    %319 = vmatprep.subr.mxu0 0.0
    %320 = vmatpush1.msra.mxu0 0.0
    %321 = vmatprep.subr.mxu0 0.0
    %322 = vmatpush1.msra.mxu0 0.0
    %323 = vmatprep.subr.mxu0 0.0
    %324 = vmatpush1.msra.mxu0 0.0
    %325 = vmatprep.subr.mxu0 0.0
    %326 = vmatpush1.msra.mxu0 0.0
    %327 = vmatprep.subr.mxu0 0.0
    %328 = vmatpush1.msra.mxu0 0.0
    %329 = vmatprep.subr.mxu0 0.0
    %330 = vmatpush1.msra.mxu0 0.0
    %331 = vmatprep.subr.mxu0 0.0
    %332 = vmatpush1.msra.mxu0 0.0
    %333 = vmatprep.mubr.f32.mxu0 0.0
    %v334 = vand.u32 %v101, 4294901760
    %v335 = vsub.f32 %v101, %v334
    %336 = vmatmul.mubr.f32.gmra.mrb[0].mxu0 %v335
    %v337 = vpop.f32.mrb[0].mxu0
    %v338 = vadd.f32 %v262, %v337
    %v339 = vpop.f32.mrb[0].mxu0
    %340 = vdwg.mxu0
    %341 = vmatprep.subr.mxu0 0.0
    %v342 = vand.u32 %v97, 4294901760
    %343 = vmatpush1.msra.mxu0 %v342
    %344 = vmatprep.subr.mxu0 0.0
    %v345 = vand.u32 %v105, 4294901760
    %346 = vmatpush1.msra.mxu0 %v345
    %347 = vmatprep.subr.mxu0 0.0
    %348 = vmatpush1.msra.mxu0 0.0
    %349 = vmatprep.subr.mxu0 0.0
    %350 = vmatpush1.msra.mxu0 0.0
    %351 = vmatprep.subr.mxu0 0.0
    %352 = vmatpush1.msra.mxu0 0.0
    %353 = vmatprep.subr.mxu0 0.0
    %354 = vmatpush1.msra.mxu0 0.0
    %355 = vmatprep.subr.mxu0 0.0
    %356 = vmatpush1.msra.mxu0 0.0
    %357 = vmatprep.subr.mxu0 0.0
    %358 = vmatpush1.msra.mxu0 0.0
    %359 = vmatprep.subr.mxu0 0.0
    %360 = vmatpush1.msra.mxu0 0.0
    %361 = vmatprep.subr.mxu0 0.0
    %362 = vmatpush1.msra.mxu0 0.0
    %363 = vmatprep.subr.mxu0 0.0
    %364 = vmatpush1.msra.mxu0 0.0
    %365 = vmatprep.subr.mxu0 0.0
    %366 = vmatpush1.msra.mxu0 0.0
    %367 = vmatprep.subr.mxu0 0.0
    %368 = vmatpush1.msra.mxu0 0.0
    %369 = vmatprep.subr.mxu0 0.0
    %370 = vmatpush1.msra.mxu0 0.0
    %371 = vmatprep.subr.mxu0 0.0
    %372 = vmatpush1.msra.mxu0 0.0
    %373 = vmatprep.subr.mxu0 0.0
    %374 = vmatpush1.msra.mxu0 0.0
    %375 = vmatprep.subr.mxu0 0.0
    %376 = vmatpush1.msra.mxu0 0.0
    %377 = vmatprep.subr.mxu0 0.0
    %378 = vmatpush1.msra.mxu0 0.0
    %379 = vmatprep.subr.mxu0 0.0
    %380 = vmatpush1.msra.mxu0 0.0
    %381 = vmatprep.subr.mxu0 0.0
    %382 = vmatpush1.msra.mxu0 0.0
    %383 = vmatprep.subr.mxu0 0.0
    %384 = vmatpush1.msra.mxu0 0.0
    %385 = vmatprep.subr.mxu0 0.0
    %386 = vmatpush1.msra.mxu0 0.0
    %387 = vmatprep.subr.mxu0 0.0
    %388 = vmatpush1.msra.mxu0 0.0
    %389 = vmatprep.subr.mxu0 0.0
    %390 = vmatpush1.msra.mxu0 0.0
    %391 = vmatprep.subr.mxu0 0.0
    %392 = vmatpush1.msra.mxu0 0.0
    %393 = vmatprep.subr.mxu0 0.0
    %394 = vmatpush1.msra.mxu0 0.0
    %395 = vmatprep.subr.mxu0 0.0
    %396 = vmatpush1.msra.mxu0 0.0
    %397 = vmatprep.subr.mxu0 0.0
    %398 = vmatpush1.msra.mxu0 0.0
    %399 = vmatprep.subr.mxu0 0.0
    %400 = vmatpush1.msra.mxu0 0.0
    %401 = vmatprep.subr.mxu0 0.0
    %402 = vmatpush1.msra.mxu0 0.0
    %403 = vmatprep.subr.mxu0 0.0
    %404 = vmatpush1.msra.mxu0 0.0
    %405 = vmatprep.subr.mxu0 0.0
    %406 = vmatpush1.msra.mxu0 0.0
    %407 = vmatprep.mubr.f32.mxu0 0.0
    %v408 = vand.u32 %v101, 4294901760
    %v409 = vsub.f32 %v101, %v408
    %v410 = vand.u32 %v409, 4294901760
    %411 = vmatmul.mubr.f32.gmra.mrb[0].mxu0 %v410
    %v412 = vpop.f32.mrb[0].mxu0
    %v413 = vadd.f32 %v338, %v412
    %v414 = vpop.f32.mrb[0].mxu0
    %415 = vdwg.mxu0
    %416 = vmatprep.subr.mxu0 0.0
    %v417 = vand.u32 %v97, 4294901760
    %v418 = vsub.f32 %v97, %v417
    %v419 = vand.u32 %v418, 4294901760
    %420 = vmatpush1.msra.mxu0 %v419
    %421 = vmatprep.subr.mxu0 0.0
    %v422 = vand.u32 %v105, 4294901760
    %v423 = vsub.f32 %v105, %v422
    %v424 = vand.u32 %v423, 4294901760
    %425 = vmatpush1.msra.mxu0 %v424
    %426 = vmatprep.subr.mxu0 0.0
    %427 = vmatpush1.msra.mxu0 0.0
    %428 = vmatprep.subr.mxu0 0.0
    %429 = vmatpush1.msra.mxu0 0.0
    %430 = vmatprep.subr.mxu0 0.0
    %431 = vmatpush1.msra.mxu0 0.0
    %432 = vmatprep.subr.mxu0 0.0
    %433 = vmatpush1.msra.mxu0 0.0
    %434 = vmatprep.subr.mxu0 0.0
    %435 = vmatpush1.msra.mxu0 0.0
    %436 = vmatprep.subr.mxu0 0.0
    %437 = vmatpush1.msra.mxu0 0.0
    %438 = vmatprep.subr.mxu0 0.0
    %439 = vmatpush1.msra.mxu0 0.0
    %440 = vmatprep.subr.mxu0 0.0
    %441 = vmatpush1.msra.mxu0 0.0
    %442 = vmatprep.subr.mxu0 0.0
    %443 = vmatpush1.msra.mxu0 0.0
    %444 = vmatprep.subr.mxu0 0.0
    %445 = vmatpush1.msra.mxu0 0.0
    %446 = vmatprep.subr.mxu0 0.0
    %447 = vmatpush1.msra.mxu0 0.0
    %448 = vmatprep.subr.mxu0 0.0
    %449 = vmatpush1.msra.mxu0 0.0
    %450 = vmatprep.subr.mxu0 0.0
    %451 = vmatpush1.msra.mxu0 0.0
    %452 = vmatprep.subr.mxu0 0.0
    %453 = vmatpush1.msra.mxu0 0.0
    %454 = vmatprep.subr.mxu0 0.0
    %455 = vmatpush1.msra.mxu0 0.0
    %456 = vmatprep.subr.mxu0 0.0
    %457 = vmatpush1.msra.mxu0 0.0
    %458 = vmatprep.subr.mxu0 0.0
    %459 = vmatpush1.msra.mxu0 0.0
    %460 = vmatprep.subr.mxu0 0.0
    %461 = vmatpush1.msra.mxu0 0.0
    %462 = vmatprep.subr.mxu0 0.0
    %463 = vmatpush1.msra.mxu0 0.0
    %464 = vmatprep.subr.mxu0 0.0
    %465 = vmatpush1.msra.mxu0 0.0
    %466 = vmatprep.subr.mxu0 0.0
    %467 = vmatpush1.msra.mxu0 0.0
    %468 = vmatprep.subr.mxu0 0.0
    %469 = vmatpush1.msra.mxu0 0.0
    %470 = vmatprep.subr.mxu0 0.0
    %471 = vmatpush1.msra.mxu0 0.0
    %472 = vmatprep.subr.mxu0 0.0
    %473 = vmatpush1.msra.mxu0 0.0
    %474 = vmatprep.subr.mxu0 0.0
    %475 = vmatpush1.msra.mxu0 0.0
    %476 = vmatprep.subr.mxu0 0.0
    %477 = vmatpush1.msra.mxu0 0.0
    %478 = vmatprep.subr.mxu0 0.0
    %479 = vmatpush1.msra.mxu0 0.0
    %480 = vmatprep.subr.mxu0 0.0
    %481 = vmatpush1.msra.mxu0 0.0
    %482 = vmatprep.subr.mxu0 0.0
    %483 = vmatpush1.msra.mxu0 0.0
    %484 = vmatprep.subr.mxu0 0.0
    %485 = vmatpush1.msra.mxu0 0.0
    %486 = vmatprep.mubr.f32.mxu0 0.0
    %v487 = vand.u32 %v101, 4294901760
    %488 = vmatmul.mubr.f32.gmra.mrb[0].mxu0 %v487
    %v489 = vpop.f32.mrb[0].mxu0
    %v490 = vadd.f32 %v413, %v489
    %v491 = vpop.f32.mrb[0].mxu0
    %492 = vdwg.mxu0
    %493 = vmatprep.subr.mxu0 0.0
    %v494 = vand.u32 %v97, 4294901760
    %495 = vmatpush1.msra.mxu0 %v494
    %496 = vmatprep.subr.mxu0 0.0
    %v497 = vand.u32 %v105, 4294901760
    %498 = vmatpush1.msra.mxu0 %v497
    %499 = vmatprep.subr.mxu0 0.0
    %500 = vmatpush1.msra.mxu0 0.0
    %501 = vmatprep.subr.mxu0 0.0
    %502 = vmatpush1.msra.mxu0 0.0
    %503 = vmatprep.subr.mxu0 0.0
    %504 = vmatpush1.msra.mxu0 0.0
    %505 = vmatprep.subr.mxu0 0.0
    %506 = vmatpush1.msra.mxu0 0.0
    %507 = vmatprep.subr.mxu0 0.0
    %508 = vmatpush1.msra.mxu0 0.0
    %509 = vmatprep.subr.mxu0 0.0
    %510 = vmatpush1.msra.mxu0 0.0
    %511 = vmatprep.subr.mxu0 0.0
    %512 = vmatpush1.msra.mxu0 0.0
    %513 = vmatprep.subr.mxu0 0.0
    %514 = vmatpush1.msra.mxu0 0.0
    %515 = vmatprep.subr.mxu0 0.0
    %516 = vmatpush1.msra.mxu0 0.0
    %517 = vmatprep.subr.mxu0 0.0
    %518 = vmatpush1.msra.mxu0 0.0
    %519 = vmatprep.subr.mxu0 0.0
    %520 = vmatpush1.msra.mxu0 0.0
    %521 = vmatprep.subr.mxu0 0.0
    %522 = vmatpush1.msra.mxu0 0.0
    %523 = vmatprep.subr.mxu0 0.0
    %524 = vmatpush1.msra.mxu0 0.0
    %525 = vmatprep.subr.mxu0 0.0
    %526 = vmatpush1.msra.mxu0 0.0
    %527 = vmatprep.subr.mxu0 0.0
    %528 = vmatpush1.msra.mxu0 0.0
    %529 = vmatprep.subr.mxu0 0.0
    %530 = vmatpush1.msra.mxu0 0.0
    %531 = vmatprep.subr.mxu0 0.0
    %532 = vmatpush1.msra.mxu0 0.0
    %533 = vmatprep.subr.mxu0 0.0
    %534 = vmatpush1.msra.mxu0 0.0
    %535 = vmatprep.subr.mxu0 0.0
    %536 = vmatpush1.msra.mxu0 0.0
    %537 = vmatprep.subr.mxu0 0.0
    %538 = vmatpush1.msra.mxu0 0.0
    %539 = vmatprep.subr.mxu0 0.0
    %540 = vmatpush1.msra.mxu0 0.0
    %541 = vmatprep.subr.mxu0 0.0
    %542 = vmatpush1.msra.mxu0 0.0
    %543 = vmatprep.subr.mxu0 0.0
    %544 = vmatpush1.msra.mxu0 0.0
    %545 = vmatprep.subr.mxu0 0.0
    %546 = vmatpush1.msra.mxu0 0.0
    %547 = vmatprep.subr.mxu0 0.0
    %548 = vmatpush1.msra.mxu0 0.0
    %549 = vmatprep.subr.mxu0 0.0
    %550 = vmatpush1.msra.mxu0 0.0
    %551 = vmatprep.subr.mxu0 0.0
    %552 = vmatpush1.msra.mxu0 0.0
    %553 = vmatprep.subr.mxu0 0.0
    %554 = vmatpush1.msra.mxu0 0.0
    %555 = vmatprep.subr.mxu0 0.0
    %556 = vmatpush1.msra.mxu0 0.0
    %557 = vmatprep.subr.mxu0 0.0
    %558 = vmatpush1.msra.mxu0 0.0
    %559 = vmatprep.mubr.f32.mxu0 0.0
    %v560 = vand.u32 %v101, 4294901760
    %561 = vmatmul.mubr.f32.gmra.mrb[0].mxu0 %v560
    %v562 = vpop.f32.mrb[0].mxu0
    %v563 = vadd.f32 %v490, %v562
    %v564 = vpop.f32.mrb[0].mxu0
    %565 = vdwg.mxu0
    %v566 = vld [vmem:[%s0] sm:$0xff]
    %v567 = vld [vmem:[%s0 + $0x8] sm:$0xff]
    %v568 = vld [vmem:[%s0 + $0x10] sm:$0xff]
    %v569 = vld [vmem:[%s0 + $0x18] sm:$0xff]
    %v570 = vld [vmem:[%s3] sm:$0xff]
    %v571 = vld [vmem:[%s3 + $0x8] sm:$0xff]
    %v572 = vld [vmem:[%s3 + $0x10] sm:$0xff]
    %v573 = vld [vmem:[%s3 + $0x18] sm:$0xff]
    %v574 = vld [vmem:[%s3 + $0x20] sm:$0xff]
    %v575 = vld [vmem:[%s3 + $0x28] sm:$0xff]
    %v576 = vld [vmem:[%s3 + $0x30] sm:$0xff]
    %v577 = vld [vmem:[%s3 + $0x38] sm:$0xff]
    %v578 = vld [vmem:[%s3 + $0x40] sm:$0xff]
    %v579 = vld [vmem:[%s3 + $0x48] sm:$0xff]
    %v580 = vld [vmem:[%s3 + $0x50] sm:$0xff]
    %v581 = vld [vmem:[%s3 + $0x58] sm:$0xff]
    %v582 = vld [vmem:[%s3 + $0x60] sm:$0xff]
    %v583 = vld [vmem:[%s3 + $0x68] sm:$0xff]
    %v584 = vld [vmem:[%s3 + $0x70] sm:$0xff]
    %v585 = vld [vmem:[%s3 + $0x78] sm:$0xff]
    %v586 = vld [vmem:[%s3 + $0x80] sm:$0xff]
    %v587 = vld [vmem:[%s3 + $0x88] sm:$0xff]
    %v588 = vld [vmem:[%s3 + $0x90] sm:$0xff]
    %v589 = vld [vmem:[%s3 + $0x98] sm:$0xff]
    %v590 = vld [vmem:[%s3 + $0xa0] sm:$0x1f]
    %v591 = vld [vmem:[%s2] sm:$0xff]
    %v592 = vld [vmem:[%s2 + $0x8] sm:$0xff]
    %vm593 = vcmask 15360
    %v595 = vsel %vm593, %v591, 0
    %v598 = vsel %vm593, %v592, 0
    %vm600 = vcmask 1041408
    %v602 = vsel %vm600, %v563, 0
    %604 = vmatprep.subr.mxu0 0.0
    %v605 = vand.u32 %v602, 4294901760
    %606 = vmatpush1.msra.mxu0 %v605
    %607 = vmatprep.subr.mxu0 0.0
    %608 = vmatpush1.msra.mxu0 0.0
    %609 = vmatprep.subr.mxu0 0.0
    %610 = vmatpush1.msra.mxu0 0.0
    %611 = vmatprep.subr.mxu0 0.0
    %612 = vmatpush1.msra.mxu0 0.0
    %613 = vmatprep.subr.mxu0 0.0
    %614 = vmatpush1.msra.mxu0 0.0
    %615 = vmatprep.subr.mxu0 0.0
    %616 = vmatpush1.msra.mxu0 0.0
    %617 = vmatprep.subr.mxu0 0.0
    %618 = vmatpush1.msra.mxu0 0.0
    %619 = vmatprep.subr.mxu0 0.0
    %620 = vmatpush1.msra.mxu0 0.0
    %621 = vmatprep.subr.mxu0 0.0
    %622 = vmatpush1.msra.mxu0 0.0
    %623 = vmatprep.subr.mxu0 0.0
    %624 = vmatpush1.msra.mxu0 0.0
    %625 = vmatprep.subr.mxu0 0.0
    %626 = vmatpush1.msra.mxu0 0.0
    %627 = vmatprep.subr.mxu0 0.0
    %628 = vmatpush1.msra.mxu0 0.0
    %629 = vmatprep.subr.mxu0 0.0
    %630 = vmatpush1.msra.mxu0 0.0
    %631 = vmatprep.subr.mxu0 0.0
    %632 = vmatpush1.msra.mxu0 0.0
    %633 = vmatprep.subr.mxu0 0.0
    %634 = vmatpush1.msra.mxu0 0.0
    %635 = vmatprep.subr.mxu0 0.0
    %636 = vmatpush1.msra.mxu0 0.0
    %637 = vmatprep.subr.mxu0 0.0
    %638 = vmatpush1.msra.mxu0 0.0
    %639 = vmatprep.subr.mxu0 0.0
    %640 = vmatpush1.msra.mxu0 0.0
    %641 = vmatprep.subr.mxu0 0.0
    %642 = vmatpush1.msra.mxu0 0.0
    %643 = vmatprep.subr.mxu0 0.0
    %644 = vmatpush1.msra.mxu0 0.0
    %645 = vmatprep.subr.mxu0 0.0
    %646 = vmatpush1.msra.mxu0 0.0
    %647 = vmatprep.subr.mxu0 0.0
    %648 = vmatpush1.msra.mxu0 0.0
    %649 = vmatprep.subr.mxu0 0.0
    %650 = vmatpush1.msra.mxu0 0.0
    %651 = vmatprep.subr.mxu0 0.0
    %652 = vmatpush1.msra.mxu0 0.0
    %653 = vmatprep.subr.mxu0 0.0
    %654 = vmatpush1.msra.mxu0 0.0
    %655 = vmatprep.subr.mxu0 0.0
    %656 = vmatpush1.msra.mxu0 0.0
    %657 = vmatprep.subr.mxu0 0.0
    %658 = vmatpush1.msra.mxu0 0.0
    %659 = vmatprep.subr.mxu0 0.0
    %660 = vmatpush1.msra.mxu0 0.0
    %661 = vmatprep.subr.mxu0 0.0
    %662 = vmatpush1.msra.mxu0 0.0
    %663 = vmatprep.subr.mxu0 0.0
    %664 = vmatpush1.msra.mxu0 0.0
    %665 = vmatprep.subr.mxu0 0.0
    %666 = vmatpush1.msra.mxu0 0.0
    %667 = vmatprep.subr.mxu0 0.0
    %668 = vmatpush1.msra.mxu0 0.0
    %669 = vmatprep.mubr.f32.mxu0 0.0
    %v670 = vand.u32 %v595, 4294901760
    %v671 = vsub.f32 %v595, %v670
    %v672 = vand.u32 %v671, 4294901760
    %v673 = vsub.f32 %v671, %v672
    %v674 = vand.u32 %v673, 4294901760
    %675 = vmatmul.mubr.f32.gmra.mrb[0].mxu0 %v674
    %v676 = vpop.f32.mrb[0].mxu0
    %v677 = vadd.f32 0.0, %v676
    %v678 = vpop.f32.mrb[0].mxu0
    %679 = vmatprep.mubr.f32.mxu0 0.0
    %v680 = vand.u32 %v598, 4294901760
    %v681 = vsub.f32 %v598, %v680
    %v682 = vand.u32 %v681, 4294901760
    %v683 = vsub.f32 %v681, %v682
    %v684 = vand.u32 %v683, 4294901760
    %685 = vmatmul.mubr.f32.gmra.mrb[0].mxu0 %v684
    %v686 = vpop.f32.mrb[0].mxu0
    %v687 = vadd.f32 0.0, %v686
    %v688 = vpop.f32.mrb[0].mxu0
    %689 = vdwg.mxu0
    %690 = vmatprep.subr.mxu0 0.0
    %v691 = vand.u32 %v602, 4294901760
    %v692 = vsub.f32 %v602, %v691
    %v693 = vand.u32 %v692, 4294901760
    %v694 = vsub.f32 %v692, %v693
    %v695 = vand.u32 %v694, 4294901760
    %696 = vmatpush1.msra.mxu0 %v695
    %697 = vmatprep.subr.mxu0 0.0
    %698 = vmatpush1.msra.mxu0 0.0
    %699 = vmatprep.subr.mxu0 0.0
    %700 = vmatpush1.msra.mxu0 0.0
    %701 = vmatprep.subr.mxu0 0.0
    %702 = vmatpush1.msra.mxu0 0.0
    %703 = vmatprep.subr.mxu0 0.0
    %704 = vmatpush1.msra.mxu0 0.0
    %705 = vmatprep.subr.mxu0 0.0
    %706 = vmatpush1.msra.mxu0 0.0
    %707 = vmatprep.subr.mxu0 0.0
    %708 = vmatpush1.msra.mxu0 0.0
    %709 = vmatprep.subr.mxu0 0.0
    %710 = vmatpush1.msra.mxu0 0.0
    %711 = vmatprep.subr.mxu0 0.0
    %712 = vmatpush1.msra.mxu0 0.0
    %713 = vmatprep.subr.mxu0 0.0
    %714 = vmatpush1.msra.mxu0 0.0
    %715 = vmatprep.subr.mxu0 0.0
    %716 = vmatpush1.msra.mxu0 0.0
    %717 = vmatprep.subr.mxu0 0.0
    %718 = vmatpush1.msra.mxu0 0.0
    %719 = vmatprep.subr.mxu0 0.0
    %720 = vmatpush1.msra.mxu0 0.0
    %721 = vmatprep.subr.mxu0 0.0
    %722 = vmatpush1.msra.mxu0 0.0
    %723 = vmatprep.subr.mxu0 0.0
    %724 = vmatpush1.msra.mxu0 0.0
    %725 = vmatprep.subr.mxu0 0.0
    %726 = vmatpush1.msra.mxu0 0.0
    %727 = vmatprep.subr.mxu0 0.0
    %728 = vmatpush1.msra.mxu0 0.0
    %729 = vmatprep.subr.mxu0 0.0
    %730 = vmatpush1.msra.mxu0 0.0
    %731 = vmatprep.subr.mxu0 0.0
    %732 = vmatpush1.msra.mxu0 0.0
    %733 = vmatprep.subr.mxu0 0.0
    %734 = vmatpush1.msra.mxu0 0.0
    %735 = vmatprep.subr.mxu0 0.0
    %736 = vmatpush1.msra.mxu0 0.0
    %737 = vmatprep.subr.mxu0 0.0
    %738 = vmatpush1.msra.mxu0 0.0
    %739 = vmatprep.subr.mxu0 0.0
    %740 = vmatpush1.msra.mxu0 0.0
    %741 = vmatprep.subr.mxu0 0.0
    %742 = vmatpush1.msra.mxu0 0.0
    %743 = vmatprep.subr.mxu0 0.0
    %744 = vmatpush1.msra.mxu0 0.0
    %745 = vmatprep.subr.mxu0 0.0
    %746 = vmatpush1.msra.mxu0 0.0
    %747 = vmatprep.subr.mxu0 0.0
    %748 = vmatpush1.msra.mxu0 0.0
    %749 = vmatprep.subr.mxu0 0.0
    %750 = vmatpush1.msra.mxu0 0.0
    %751 = vmatprep.subr.mxu0 0.0
    %752 = vmatpush1.msra.mxu0 0.0
    %753 = vmatprep.subr.mxu0 0.0
    %754 = vmatpush1.msra.mxu0 0.0
    %755 = vmatprep.subr.mxu0 0.0
    %756 = vmatpush1.msra.mxu0 0.0
    %757 = vmatprep.subr.mxu0 0.0
    %758 = vmatpush1.msra.mxu0 0.0
    %759 = vmatprep.mubr.f32.mxu0 0.0
    %v760 = vand.u32 %v595, 4294901760
    %761 = vmatmul.mubr.f32.gmra.mrb[0].mxu0 %v760
    %v762 = vpop.f32.mrb[0].mxu0
    %v763 = vadd.f32 %v677, %v762
    %v764 = vpop.f32.mrb[0].mxu0
    %765 = vmatprep.mubr.f32.mxu0 0.0
    %v766 = vand.u32 %v598, 4294901760
    %767 = vmatmul.mubr.f32.gmra.mrb[0].mxu0 %v766
    %v768 = vpop.f32.mrb[0].mxu0
    %v769 = vadd.f32 %v687, %v768
    %v770 = vpop.f32.mrb[0].mxu0
    %771 = vdwg.mxu0
    %772 = vmatprep.subr.mxu0 0.0
    %v773 = vand.u32 %v602, 4294901760
    %v774 = vsub.f32 %v602, %v773
    %775 = vmatpush1.msra.mxu0 %v774
    %776 = vmatprep.subr.mxu0 0.0
    %777 = vmatpush1.msra.mxu0 0.0
    %778 = vmatprep.subr.mxu0 0.0
    %779 = vmatpush1.msra.mxu0 0.0
    %780 = vmatprep.subr.mxu0 0.0
    %781 = vmatpush1.msra.mxu0 0.0
    %782 = vmatprep.subr.mxu0 0.0
    %783 = vmatpush1.msra.mxu0 0.0
    %784 = vmatprep.subr.mxu0 0.0
    %785 = vmatpush1.msra.mxu0 0.0
    %786 = vmatprep.subr.mxu0 0.0
    %787 = vmatpush1.msra.mxu0 0.0
    %788 = vmatprep.subr.mxu0 0.0
    %789 = vmatpush1.msra.mxu0 0.0
    %790 = vmatprep.subr.mxu0 0.0
    %791 = vmatpush1.msra.mxu0 0.0
    %792 = vmatprep.subr.mxu0 0.0
    %793 = vmatpush1.msra.mxu0 0.0
    %794 = vmatprep.subr.mxu0 0.0
    %795 = vmatpush1.msra.mxu0 0.0
    %796 = vmatprep.subr.mxu0 0.0
    %797 = vmatpush1.msra.mxu0 0.0
    %798 = vmatprep.subr.mxu0 0.0
    %799 = vmatpush1.msra.mxu0 0.0
    %800 = vmatprep.subr.mxu0 0.0
    %801 = vmatpush1.msra.mxu0 0.0
    %802 = vmatprep.subr.mxu0 0.0
    %803 = vmatpush1.msra.mxu0 0.0
    %804 = vmatprep.subr.mxu0 0.0
    %805 = vmatpush1.msra.mxu0 0.0
    %806 = vmatprep.subr.mxu0 0.0
    %807 = vmatpush1.msra.mxu0 0.0
    %808 = vmatprep.subr.mxu0 0.0
    %809 = vmatpush1.msra.mxu0 0.0
    %810 = vmatprep.subr.mxu0 0.0
    %811 = vmatpush1.msra.mxu0 0.0
    %812 = vmatprep.subr.mxu0 0.0
    %813 = vmatpush1.msra.mxu0 0.0
    %814 = vmatprep.subr.mxu0 0.0
    %815 = vmatpush1.msra.mxu0 0.0
    %816 = vmatprep.subr.mxu0 0.0
    %817 = vmatpush1.msra.mxu0 0.0
    %818 = vmatprep.subr.mxu0 0.0
    %819 = vmatpush1.msra.mxu0 0.0
    %820 = vmatprep.subr.mxu0 0.0
    %821 = vmatpush1.msra.mxu0 0.0
    %822 = vmatprep.subr.mxu0 0.0
    %823 = vmatpush1.msra.mxu0 0.0
    %824 = vmatprep.subr.mxu0 0.0
    %825 = vmatpush1.msra.mxu0 0.0
    %826 = vmatprep.subr.mxu0 0.0
    %827 = vmatpush1.msra.mxu0 0.0
    %828 = vmatprep.subr.mxu0 0.0
    %829 = vmatpush1.msra.mxu0 0.0
    %830 = vmatprep.subr.mxu0 0.0
    %831 = vmatpush1.msra.mxu0 0.0
    %832 = vmatprep.subr.mxu0 0.0
    %833 = vmatpush1.msra.mxu0 0.0
    %834 = vmatprep.subr.mxu0 0.0
    %835 = vmatpush1.msra.mxu0 0.0
    %836 = vmatprep.subr.mxu0 0.0
    %837 = vmatpush1.msra.mxu0 0.0
    %838 = vmatprep.mubr.f32.mxu0 0.0
    %v839 = vand.u32 %v595, 4294901760
    %v840 = vsub.f32 %v595, %v839
    %841 = vmatmul.mubr.f32.gmra.mrb[0].mxu0 %v840
    %v842 = vpop.f32.mrb[0].mxu0
    %v843 = vadd.f32 %v763, %v842
    %v844 = vpop.f32.mrb[0].mxu0
    %845 = vmatprep.mubr.f32.mxu0 0.0
    %v846 = vand.u32 %v598, 4294901760
    %v847 = vsub.f32 %v598, %v846
    %848 = vmatmul.mubr.f32.gmra.mrb[0].mxu0 %v847
    %v849 = vpop.f32.mrb[0].mxu0
    %v850 = vadd.f32 %v769, %v849
    %v851 = vpop.f32.mrb[0].mxu0
    %852 = vdwg.mxu0
    %853 = vmatprep.subr.mxu0 0.0
    %v854 = vand.u32 %v602, 4294901760
    %855 = vmatpush1.msra.mxu0 %v854
    %856 = vmatprep.subr.mxu0 0.0
    %857 = vmatpush1.msra.mxu0 0.0
    %858 = vmatprep.subr.mxu0 0.0
    %859 = vmatpush1.msra.mxu0 0.0
    %860 = vmatprep.subr.mxu0 0.0
    %861 = vmatpush1.msra.mxu0 0.0
    %862 = vmatprep.subr.mxu0 0.0
    %863 = vmatpush1.msra.mxu0 0.0
    %864 = vmatprep.subr.mxu0 0.0
    %865 = vmatpush1.msra.mxu0 0.0
    %866 = vmatprep.subr.mxu0 0.0
    %867 = vmatpush1.msra.mxu0 0.0
    %868 = vmatprep.subr.mxu0 0.0
    %869 = vmatpush1.msra.mxu0 0.0
    %870 = vmatprep.subr.mxu0 0.0
    %871 = vmatpush1.msra.mxu0 0.0
    %872 = vmatprep.subr.mxu0 0.0
    %873 = vmatpush1.msra.mxu0 0.0
    %874 = vmatprep.subr.mxu0 0.0
    %875 = vmatpush1.msra.mxu0 0.0
    %876 = vmatprep.subr.mxu0 0.0
    %877 = vmatpush1.msra.mxu0 0.0
    %878 = vmatprep.subr.mxu0 0.0
    %879 = vmatpush1.msra.mxu0 0.0
    %880 = vmatprep.subr.mxu0 0.0
    %881 = vmatpush1.msra.mxu0 0.0
    %882 = vmatprep.subr.mxu0 0.0
    %883 = vmatpush1.msra.mxu0 0.0
    %884 = vmatprep.subr.mxu0 0.0
    %885 = vmatpush1.msra.mxu0 0.0
    %886 = vmatprep.subr.mxu0 0.0
    %887 = vmatpush1.msra.mxu0 0.0
    %888 = vmatprep.subr.mxu0 0.0
    %889 = vmatpush1.msra.mxu0 0.0
    %890 = vmatprep.subr.mxu0 0.0
    %891 = vmatpush1.msra.mxu0 0.0
    %892 = vmatprep.subr.mxu0 0.0
    %893 = vmatpush1.msra.mxu0 0.0
    %894 = vmatprep.subr.mxu0 0.0
    %895 = vmatpush1.msra.mxu0 0.0
    %896 = vmatprep.subr.mxu0 0.0
    %897 = vmatpush1.msra.mxu0 0.0
    %898 = vmatprep.subr.mxu0 0.0
    %899 = vmatpush1.msra.mxu0 0.0
    %900 = vmatprep.subr.mxu0 0.0
    %901 = vmatpush1.msra.mxu0 0.0
    %902 = vmatprep.subr.mxu0 0.0
    %903 = vmatpush1.msra.mxu0 0.0
    %904 = vmatprep.subr.mxu0 0.0
    %905 = vmatpush1.msra.mxu0 0.0
    %906 = vmatprep.subr.mxu0 0.0
    %907 = vmatpush1.msra.mxu0 0.0
    %908 = vmatprep.subr.mxu0 0.0
    %909 = vmatpush1.msra.mxu0 0.0
    %910 = vmatprep.subr.mxu0 0.0
    %911 = vmatpush1.msra.mxu0 0.0
    %912 = vmatprep.subr.mxu0 0.0
    %913 = vmatpush1.msra.mxu0 0.0
    %914 = vmatprep.subr.mxu0 0.0
    %915 = vmatpush1.msra.mxu0 0.0
    %916 = vmatprep.subr.mxu0 0.0
    %917 = vmatpush1.msra.mxu0 0.0
    %918 = vmatprep.mubr.f32.mxu0 0.0
    %v919 = vand.u32 %v595, 4294901760
    %v920 = vsub.f32 %v595, %v919
    %v921 = vand.u32 %v920, 4294901760
    %922 = vmatmul.mubr.f32.gmra.mrb[0].mxu0 %v921
    %v923 = vpop.f32.mrb[0].mxu0
    %v924 = vadd.f32 %v843, %v923
    %v925 = vpop.f32.mrb[0].mxu0
    %926 = vmatprep.mubr.f32.mxu0 0.0
    %v927 = vand.u32 %v598, 4294901760
    %v928 = vsub.f32 %v598, %v927
    %v929 = vand.u32 %v928, 4294901760
    %930 = vmatmul.mubr.f32.gmra.mrb[0].mxu0 %v929
    %v931 = vpop.f32.mrb[0].mxu0
    %v932 = vadd.f32 %v850, %v931
    %v933 = vpop.f32.mrb[0].mxu0
    %934 = vdwg.mxu0
    %935 = vmatprep.subr.mxu0 0.0
    %v936 = vand.u32 %v602, 4294901760
    %v937 = vsub.f32 %v602, %v936
    %v938 = vand.u32 %v937, 4294901760
    %939 = vmatpush1.msra.mxu0 %v938
    %940 = vmatprep.subr.mxu0 0.0
    %941 = vmatpush1.msra.mxu0 0.0
    %942 = vmatprep.subr.mxu0 0.0
    %943 = vmatpush1.msra.mxu0 0.0
    %944 = vmatprep.subr.mxu0 0.0
    %945 = vmatpush1.msra.mxu0 0.0
    %946 = vmatprep.subr.mxu0 0.0
    %947 = vmatpush1.msra.mxu0 0.0
    %948 = vmatprep.subr.mxu0 0.0
    %949 = vmatpush1.msra.mxu0 0.0
    %950 = vmatprep.subr.mxu0 0.0
    %951 = vmatpush1.msra.mxu0 0.0
    %952 = vmatprep.subr.mxu0 0.0
    %953 = vmatpush1.msra.mxu0 0.0
    %954 = vmatprep.subr.mxu0 0.0
    %955 = vmatpush1.msra.mxu0 0.0
    %956 = vmatprep.subr.mxu0 0.0
    %957 = vmatpush1.msra.mxu0 0.0
    %958 = vmatprep.subr.mxu0 0.0
    %959 = vmatpush1.msra.mxu0 0.0
    %960 = vmatprep.subr.mxu0 0.0
    %961 = vmatpush1.msra.mxu0 0.0
    %962 = vmatprep.subr.mxu0 0.0
    %963 = vmatpush1.msra.mxu0 0.0
    %964 = vmatprep.subr.mxu0 0.0
    %965 = vmatpush1.msra.mxu0 0.0
    %966 = vmatprep.subr.mxu0 0.0
    %967 = vmatpush1.msra.mxu0 0.0
    %968 = vmatprep.subr.mxu0 0.0
    %969 = vmatpush1.msra.mxu0 0.0
    %970 = vmatprep.subr.mxu0 0.0
    %971 = vmatpush1.msra.mxu0 0.0
    %972 = vmatprep.subr.mxu0 0.0
    %973 = vmatpush1.msra.mxu0 0.0
    %974 = vmatprep.subr.mxu0 0.0
    %975 = vmatpush1.msra.mxu0 0.0
    %976 = vmatprep.subr.mxu0 0.0
    %977 = vmatpush1.msra.mxu0 0.0
    %978 = vmatprep.subr.mxu0 0.0
    %979 = vmatpush1.msra.mxu0 0.0
    %980 = vmatprep.subr.mxu0 0.0
    %981 = vmatpush1.msra.mxu0 0.0
    %982 = vmatprep.subr.mxu0 0.0
    %983 = vmatpush1.msra.mxu0 0.0
    %984 = vmatprep.subr.mxu0 0.0
    %985 = vmatpush1.msra.mxu0 0.0
    %986 = vmatprep.subr.mxu0 0.0
    %987 = vmatpush1.msra.mxu0 0.0
    %988 = vmatprep.subr.mxu0 0.0
    %989 = vmatpush1.msra.mxu0 0.0
    %990 = vmatprep.subr.mxu0 0.0
    %991 = vmatpush1.msra.mxu0 0.0
    %992 = vmatprep.subr.mxu0 0.0
    %993 = vmatpush1.msra.mxu0 0.0
    %994 = vmatprep.subr.mxu0 0.0
    %995 = vmatpush1.msra.mxu0 0.0
    %996 = vmatprep.subr.mxu0 0.0
    %997 = vmatpush1.msra.mxu0 0.0
    %998 = vmatprep.subr.mxu0 0.0
    %999 = vmatpush1.msra.mxu0 0.0
    %1000 = vmatprep.subr.mxu0 0.0
    %1001 = vmatpush1.msra.mxu0 0.0
    %1002 = vmatprep.mubr.f32.mxu0 0.0
    %v1003 = vand.u32 %v595, 4294901760
    %1004 = vmatmul.mubr.f32.gmra.mrb[0].mxu0 %v1003
    %v1005 = vpop.f32.mrb[0].mxu0
    %v1006 = vadd.f32 %v924, %v1005
    %v1007 = vpop.f32.mrb[0].mxu0
    %1008 = vmatprep.mubr.f32.mxu0 0.0
    %v1009 = vand.u32 %v598, 4294901760
    %1010 = vmatmul.mubr.f32.gmra.mrb[0].mxu0 %v1009
    %v1011 = vpop.f32.mrb[0].mxu0
    %v1012 = vadd.f32 %v932, %v1011
    %v1013 = vpop.f32.mrb[0].mxu0
    %1014 = vdwg.mxu0
    %1015 = vmatprep.subr.mxu0 0.0
    %v1016 = vand.u32 %v602, 4294901760
    %1017 = vmatpush1.msra.mxu0 %v1016
    %1018 = vmatprep.subr.mxu0 0.0
    %1019 = vmatpush1.msra.mxu0 0.0
    %1020 = vmatprep.subr.mxu0 0.0
    %1021 = vmatpush1.msra.mxu0 0.0
    %1022 = vmatprep.subr.mxu0 0.0
    %1023 = vmatpush1.msra.mxu0 0.0
    %1024 = vmatprep.subr.mxu0 0.0
    %1025 = vmatpush1.msra.mxu0 0.0
    %1026 = vmatprep.subr.mxu0 0.0
    %1027 = vmatpush1.msra.mxu0 0.0
    %1028 = vmatprep.subr.mxu0 0.0
    %1029 = vmatpush1.msra.mxu0 0.0
    %1030 = vmatprep.subr.mxu0 0.0
    %1031 = vmatpush1.msra.mxu0 0.0
    %1032 = vmatprep.subr.mxu0 0.0
    %1033 = vmatpush1.msra.mxu0 0.0
    %1034 = vmatprep.subr.mxu0 0.0
    %1035 = vmatpush1.msra.mxu0 0.0
    %1036 = vmatprep.subr.mxu0 0.0
    %1037 = vmatpush1.msra.mxu0 0.0
    %1038 = vmatprep.subr.mxu0 0.0
    %1039 = vmatpush1.msra.mxu0 0.0
    %1040 = vmatprep.subr.mxu0 0.0
    %1041 = vmatpush1.msra.mxu0 0.0
    %1042 = vmatprep.subr.mxu0 0.0
    %1043 = vmatpush1.msra.mxu0 0.0
    %1044 = vmatprep.subr.mxu0 0.0
    %1045 = vmatpush1.msra.mxu0 0.0
    %1046 = vmatprep.subr.mxu0 0.0
    %1047 = vmatpush1.msra.mxu0 0.0
    %1048 = vmatprep.subr.mxu0 0.0
    %1049 = vmatpush1.msra.mxu0 0.0
    %1050 = vmatprep.subr.mxu0 0.0
    %1051 = vmatpush1.msra.mxu0 0.0
    %1052 = vmatprep.subr.mxu0 0.0
    %1053 = vmatpush1.msra.mxu0 0.0
    %1054 = vmatprep.subr.mxu0 0.0
    %1055 = vmatpush1.msra.mxu0 0.0
    %1056 = vmatprep.subr.mxu0 0.0
    %1057 = vmatpush1.msra.mxu0 0.0
    %1058 = vmatprep.subr.mxu0 0.0
    %1059 = vmatpush1.msra.mxu0 0.0
    %1060 = vmatprep.subr.mxu0 0.0
    %1061 = vmatpush1.msra.mxu0 0.0
    %1062 = vmatprep.subr.mxu0 0.0
    %1063 = vmatpush1.msra.mxu0 0.0
    %1064 = vmatprep.subr.mxu0 0.0
    %1065 = vmatpush1.msra.mxu0 0.0
    %1066 = vmatprep.subr.mxu0 0.0
    %1067 = vmatpush1.msra.mxu0 0.0
    %1068 = vmatprep.subr.mxu0 0.0
    %1069 = vmatpush1.msra.mxu0 0.0
    %1070 = vmatprep.subr.mxu0 0.0
    %1071 = vmatpush1.msra.mxu0 0.0
    %1072 = vmatprep.subr.mxu0 0.0
    %1073 = vmatpush1.msra.mxu0 0.0
    %1074 = vmatprep.subr.mxu0 0.0
    %1075 = vmatpush1.msra.mxu0 0.0
    %1076 = vmatprep.subr.mxu0 0.0
    %1077 = vmatpush1.msra.mxu0 0.0
    %1078 = vmatprep.subr.mxu0 0.0
    %1079 = vmatpush1.msra.mxu0 0.0
    %1080 = vmatprep.mubr.f32.mxu0 0.0
    %v1081 = vand.u32 %v595, 4294901760
    %1082 = vmatmul.mubr.f32.gmra.mrb[0].mxu0 %v1081
    %v1083 = vpop.f32.mrb[0].mxu0
    %v1084 = vadd.f32 %v1006, %v1083
    %v1085 = vpop.f32.mrb[0].mxu0
    %1086 = vmatprep.mubr.f32.mxu0 0.0
    %v1087 = vand.u32 %v598, 4294901760
    %1088 = vmatmul.mubr.f32.gmra.mrb[0].mxu0 %v1087
    %v1089 = vpop.f32.mrb[0].mxu0
    %v1090 = vadd.f32 %v1012, %v1089
    %v1091 = vpop.f32.mrb[0].mxu0
    %1092 = vdwg.mxu0
    %vm1093 = vcmask 302080
    %v1095 = vsel %vm1093, %v567, 0
    %v1098 = vsel %vm1093, %v569, 0
    %vm1100 = vcmask 1044480
    %v1102 = vsel %vm1100, %v590, 0
    %1104 = vmatprep.subr.mxu0 0.0
    %v1105 = vand.u32 %v570, 4294901760
    %1106 = vmatpush1.msra.mxu0 %v1105
    %1107 = vmatprep.subr.mxu0 0.0
    %v1108 = vand.u32 %v571, 4294901760
    %1109 = vmatpush1.msra.mxu0 %v1108
    %1110 = vmatprep.subr.mxu0 0.0
    %v1111 = vand.u32 %v572, 4294901760
    %1112 = vmatpush1.msra.mxu0 %v1111
    %1113 = vmatprep.subr.mxu0 0.0
    %v1114 = vand.u32 %v573, 4294901760
    %1115 = vmatpush1.msra.mxu0 %v1114
    %1116 = vmatprep.subr.mxu0 0.0
    %v1117 = vand.u32 %v574, 4294901760
    %1118 = vmatpush1.msra.mxu0 %v1117
    %1119 = vmatprep.subr.mxu0 0.0
    %v1120 = vand.u32 %v575, 4294901760
    %1121 = vmatpush1.msra.mxu0 %v1120
    %1122 = vmatprep.subr.mxu0 0.0
    %v1123 = vand.u32 %v576, 4294901760
    %1124 = vmatpush1.msra.mxu0 %v1123
    %1125 = vmatprep.subr.mxu0 0.0
    %v1126 = vand.u32 %v577, 4294901760
    %1127 = vmatpush1.msra.mxu0 %v1126
    %1128 = vmatprep.subr.mxu0 0.0
    %v1129 = vand.u32 %v578, 4294901760
    %1130 = vmatpush1.msra.mxu0 %v1129
    %1131 = vmatprep.subr.mxu0 0.0
    %v1132 = vand.u32 %v579, 4294901760
    %1133 = vmatpush1.msra.mxu0 %v1132
    %1134 = vmatprep.subr.mxu0 0.0
    %v1135 = vand.u32 %v580, 4294901760
    %1136 = vmatpush1.msra.mxu0 %v1135
    %1137 = vmatprep.subr.mxu0 0.0
    %v1138 = vand.u32 %v581, 4294901760
    %1139 = vmatpush1.msra.mxu0 %v1138
    %1140 = vmatprep.subr.mxu0 0.0
    %v1141 = vand.u32 %v582, 4294901760
    %1142 = vmatpush1.msra.mxu0 %v1141
    %1143 = vmatprep.subr.mxu0 0.0
    %v1144 = vand.u32 %v583, 4294901760
    %1145 = vmatpush1.msra.mxu0 %v1144
    %1146 = vmatprep.subr.mxu0 0.0
    %v1147 = vand.u32 %v584, 4294901760
    %1148 = vmatpush1.msra.mxu0 %v1147
    %1149 = vmatprep.subr.mxu0 0.0
    %v1150 = vand.u32 %v585, 4294901760
    %1151 = vmatpush1.msra.mxu0 %v1150
    %1152 = vmatprep.subr.mxu0 0.0
    %v1153 = vand.u32 %v586, 4294901760
    %1154 = vmatpush1.msra.mxu0 %v1153
    %1155 = vmatprep.subr.mxu0 0.0
    %v1156 = vand.u32 %v587, 4294901760
    %1157 = vmatpush1.msra.mxu0 %v1156
    %1158 = vmatprep.subr.mxu0 0.0
    %v1159 = vand.u32 %v588, 4294901760
    %1160 = vmatpush1.msra.mxu0 %v1159
    %1161 = vmatprep.subr.mxu0 0.0
    %v1162 = vand.u32 %v589, 4294901760
    %1163 = vmatpush1.msra.mxu0 %v1162
    %1164 = vmatprep.subr.mxu0 0.0
    %v1165 = vand.u32 %v1102, 4294901760
    %1166 = vmatpush1.msra.mxu0 %v1165
    %1167 = vmatprep.subr.mxu0 0.0
    %1168 = vmatpush1.msra.mxu0 0.0
    %1169 = vmatprep.subr.mxu0 0.0
    %1170 = vmatpush1.msra.mxu0 0.0
    %1171 = vmatprep.subr.mxu0 0.0
    %1172 = vmatpush1.msra.mxu0 0.0
    %1173 = vmatprep.subr.mxu0 0.0
    %1174 = vmatpush1.msra.mxu0 0.0
    %1175 = vmatprep.subr.mxu0 0.0
    %1176 = vmatpush1.msra.mxu0 0.0
    %1177 = vmatprep.subr.mxu0 0.0
    %1178 = vmatpush1.msra.mxu0 0.0
    %1179 = vmatprep.subr.mxu0 0.0
    %1180 = vmatpush1.msra.mxu0 0.0
    %1181 = vmatprep.subr.mxu0 0.0
    %1182 = vmatpush1.msra.mxu0 0.0
    %1183 = vmatprep.subr.mxu0 0.0
    %1184 = vmatpush1.msra.mxu0 0.0
    %1185 = vmatprep.subr.mxu0 0.0
    %1186 = vmatpush1.msra.mxu0 0.0
    %1187 = vmatprep.subr.mxu0 0.0
    %1188 = vmatpush1.msra.mxu0 0.0
    %v1189 = vand.u32 %v1095, 4294901760
    %v1190 = vsub.f32 %v1095, %v1189
    %v1191 = vand.u32 %v1190, 4294901760
    %v1192 = vsub.f32 %v1190, %v1191
    %v1193 = vand.u32 %v1192, 4294901760
    %1194 = vmatprep.mubr.f32.mxu0 %v1193
    %v1195 = vand.u32 %v566, 4294901760
    %v1196 = vsub.f32 %v566, %v1195
    %v1197 = vand.u32 %v1196, 4294901760
    %v1198 = vsub.f32 %v1196, %v1197
    %v1199 = vand.u32 %v1198, 4294901760
    %1200 = vmatmul.mubr.f32.gmra.mrb[0].mxu0 %v1199
    %v1201 = vpop.f32.mrb[0].mxu0
    %v1202 = vadd.f32 %v1084, %v1201
    %v1203 = vpop.f32.mrb[0].mxu0
    %v1204 = vand.u32 %v1098, 4294901760
    %v1205 = vsub.f32 %v1098, %v1204
    %v1206 = vand.u32 %v1205, 4294901760
    %v1207 = vsub.f32 %v1205, %v1206
    %v1208 = vand.u32 %v1207, 4294901760
    %1209 = vmatprep.mubr.f32.mxu0 %v1208
    %v1210 = vand.u32 %v568, 4294901760
    %v1211 = vsub.f32 %v568, %v1210
    %v1212 = vand.u32 %v1211, 4294901760
    %v1213 = vsub.f32 %v1211, %v1212
    %v1214 = vand.u32 %v1213, 4294901760
    %1215 = vmatmul.mubr.f32.gmra.mrb[0].mxu0 %v1214
    %v1216 = vpop.f32.mrb[0].mxu0
    %v1217 = vadd.f32 %v1090, %v1216
    %v1218 = vpop.f32.mrb[0].mxu0
    %1219 = vdwg.mxu0
    %1220 = vmatprep.subr.mxu0 0.0
    %v1221 = vand.u32 %v570, 4294901760
    %v1222 = vsub.f32 %v570, %v1221
    %v1223 = vand.u32 %v1222, 4294901760
    %v1224 = vsub.f32 %v1222, %v1223
    %v1225 = vand.u32 %v1224, 4294901760
    %1226 = vmatpush1.msra.mxu0 %v1225
    %1227 = vmatprep.subr.mxu0 0.0
    %v1228 = vand.u32 %v571, 4294901760
    %v1229 = vsub.f32 %v571, %v1228
    %v1230 = vand.u32 %v1229, 4294901760
    %v1231 = vsub.f32 %v1229, %v1230
    %v1232 = vand.u32 %v1231, 4294901760
    %1233 = vmatpush1.msra.mxu0 %v1232
    %1234 = vmatprep.subr.mxu0 0.0
    %v1235 = vand.u32 %v572, 4294901760
    %v1236 = vsub.f32 %v572, %v1235
    %v1237 = vand.u32 %v1236, 4294901760
    %v1238 = vsub.f32 %v1236, %v1237
    %v1239 = vand.u32 %v1238, 4294901760
    %1240 = vmatpush1.msra.mxu0 %v1239
    %1241 = vmatprep.subr.mxu0 0.0
    %v1242 = vand.u32 %v573, 4294901760
    %v1243 = vsub.f32 %v573, %v1242
    %v1244 = vand.u32 %v1243, 4294901760
    %v1245 = vsub.f32 %v1243, %v1244
    %v1246 = vand.u32 %v1245, 4294901760
    %1247 = vmatpush1.msra.mxu0 %v1246
    %1248 = vmatprep.subr.mxu0 0.0
    %v1249 = vand.u32 %v574, 4294901760
    %v1250 = vsub.f32 %v574, %v1249
    %v1251 = vand.u32 %v1250, 4294901760
    %v1252 = vsub.f32 %v1250, %v1251
    %v1253 = vand.u32 %v1252, 4294901760
    %1254 = vmatpush1.msra.mxu0 %v1253
    %1255 = vmatprep.subr.mxu0 0.0
    %v1256 = vand.u32 %v575, 4294901760
    %v1257 = vsub.f32 %v575, %v1256
    %v1258 = vand.u32 %v1257, 4294901760
    %v1259 = vsub.f32 %v1257, %v1258
    %v1260 = vand.u32 %v1259, 4294901760
    %1261 = vmatpush1.msra.mxu0 %v1260
    %1262 = vmatprep.subr.mxu0 0.0
    %v1263 = vand.u32 %v576, 4294901760
    %v1264 = vsub.f32 %v576, %v1263
    %v1265 = vand.u32 %v1264, 4294901760
    %v1266 = vsub.f32 %v1264, %v1265
    %v1267 = vand.u32 %v1266, 4294901760
    %1268 = vmatpush1.msra.mxu0 %v1267
    %1269 = vmatprep.subr.mxu0 0.0
    %v1270 = vand.u32 %v577, 4294901760
    %v1271 = vsub.f32 %v577, %v1270
    %v1272 = vand.u32 %v1271, 4294901760
    %v1273 = vsub.f32 %v1271, %v1272
    %v1274 = vand.u32 %v1273, 4294901760
    %1275 = vmatpush1.msra.mxu0 %v1274
    %1276 = vmatprep.subr.mxu0 0.0
    %v1277 = vand.u32 %v578, 4294901760
    %v1278 = vsub.f32 %v578, %v1277
    %v1279 = vand.u32 %v1278, 4294901760
    %v1280 = vsub.f32 %v1278, %v1279
    %v1281 = vand.u32 %v1280, 4294901760
    %1282 = vmatpush1.msra.mxu0 %v1281
    %1283 = vmatprep.subr.mxu0 0.0
    %v1284 = vand.u32 %v579, 4294901760
    %v1285 = vsub.f32 %v579, %v1284
    %v1286 = vand.u32 %v1285, 4294901760
    %v1287 = vsub.f32 %v1285, %v1286
    %v1288 = vand.u32 %v1287, 4294901760
    %1289 = vmatpush1.msra.mxu0 %v1288
    %1290 = vmatprep.subr.mxu0 0.0
    %v1291 = vand.u32 %v580, 4294901760
    %v1292 = vsub.f32 %v580, %v1291
    %v1293 = vand.u32 %v1292, 4294901760
    %v1294 = vsub.f32 %v1292, %v1293
    %v1295 = vand.u32 %v1294, 4294901760
    %1296 = vmatpush1.msra.mxu0 %v1295
    %1297 = vmatprep.subr.mxu0 0.0
    %v1298 = vand.u32 %v581, 4294901760
    %v1299 = vsub.f32 %v581, %v1298
    %v1300 = vand.u32 %v1299, 4294901760
    %v1301 = vsub.f32 %v1299, %v1300
    %v1302 = vand.u32 %v1301, 4294901760
    %1303 = vmatpush1.msra.mxu0 %v1302
    %1304 = vmatprep.subr.mxu0 0.0
    %v1305 = vand.u32 %v582, 4294901760
    %v1306 = vsub.f32 %v582, %v1305
    %v1307 = vand.u32 %v1306, 4294901760
    %v1308 = vsub.f32 %v1306, %v1307
    %v1309 = vand.u32 %v1308, 4294901760
    %1310 = vmatpush1.msra.mxu0 %v1309
    %1311 = vmatprep.subr.mxu0 0.0
    %v1312 = vand.u32 %v583, 4294901760
    %v1313 = vsub.f32 %v583, %v1312
    %v1314 = vand.u32 %v1313, 4294901760
    %v1315 = vsub.f32 %v1313, %v1314
    %v1316 = vand.u32 %v1315, 4294901760
    %1317 = vmatpush1.msra.mxu0 %v1316
    %1318 = vmatprep.subr.mxu0 0.0
    %v1319 = vand.u32 %v584, 4294901760
    %v1320 = vsub.f32 %v584, %v1319
    %v1321 = vand.u32 %v1320, 4294901760
    %v1322 = vsub.f32 %v1320, %v1321
    %v1323 = vand.u32 %v1322, 4294901760
    %1324 = vmatpush1.msra.mxu0 %v1323
    %1325 = vmatprep.subr.mxu0 0.0
    %v1326 = vand.u32 %v585, 4294901760
    %v1327 = vsub.f32 %v585, %v1326
    %v1328 = vand.u32 %v1327, 4294901760
    %v1329 = vsub.f32 %v1327, %v1328
    %v1330 = vand.u32 %v1329, 4294901760
    %1331 = vmatpush1.msra.mxu0 %v1330
    %1332 = vmatprep.subr.mxu0 0.0
    %v1333 = vand.u32 %v586, 4294901760
    %v1334 = vsub.f32 %v586, %v1333
    %v1335 = vand.u32 %v1334, 4294901760
    %v1336 = vsub.f32 %v1334, %v1335
    %v1337 = vand.u32 %v1336, 4294901760
    %1338 = vmatpush1.msra.mxu0 %v1337
    %1339 = vmatprep.subr.mxu0 0.0
    %v1340 = vand.u32 %v587, 4294901760
    %v1341 = vsub.f32 %v587, %v1340
    %v1342 = vand.u32 %v1341, 4294901760
    %v1343 = vsub.f32 %v1341, %v1342
    %v1344 = vand.u32 %v1343, 4294901760
    %1345 = vmatpush1.msra.mxu0 %v1344
    %1346 = vmatprep.subr.mxu0 0.0
    %v1347 = vand.u32 %v588, 4294901760
    %v1348 = vsub.f32 %v588, %v1347
    %v1349 = vand.u32 %v1348, 4294901760
    %v1350 = vsub.f32 %v1348, %v1349
    %v1351 = vand.u32 %v1350, 4294901760
    %1352 = vmatpush1.msra.mxu0 %v1351
    %1353 = vmatprep.subr.mxu0 0.0
    %v1354 = vand.u32 %v589, 4294901760
    %v1355 = vsub.f32 %v589, %v1354
    %v1356 = vand.u32 %v1355, 4294901760
    %v1357 = vsub.f32 %v1355, %v1356
    %v1358 = vand.u32 %v1357, 4294901760
    %1359 = vmatpush1.msra.mxu0 %v1358
    %1360 = vmatprep.subr.mxu0 0.0
    %v1361 = vand.u32 %v1102, 4294901760
    %v1362 = vsub.f32 %v1102, %v1361
    %v1363 = vand.u32 %v1362, 4294901760
    %v1364 = vsub.f32 %v1362, %v1363
    %v1365 = vand.u32 %v1364, 4294901760
    %1366 = vmatpush1.msra.mxu0 %v1365
    %1367 = vmatprep.subr.mxu0 0.0
    %1368 = vmatpush1.msra.mxu0 0.0
    %1369 = vmatprep.subr.mxu0 0.0
    %1370 = vmatpush1.msra.mxu0 0.0
    %1371 = vmatprep.subr.mxu0 0.0
    %1372 = vmatpush1.msra.mxu0 0.0
    %1373 = vmatprep.subr.mxu0 0.0
    %1374 = vmatpush1.msra.mxu0 0.0
    %1375 = vmatprep.subr.mxu0 0.0
    %1376 = vmatpush1.msra.mxu0 0.0
    %1377 = vmatprep.subr.mxu0 0.0
    %1378 = vmatpush1.msra.mxu0 0.0
    %1379 = vmatprep.subr.mxu0 0.0
    %1380 = vmatpush1.msra.mxu0 0.0
    %1381 = vmatprep.subr.mxu0 0.0
    %1382 = vmatpush1.msra.mxu0 0.0
    %1383 = vmatprep.subr.mxu0 0.0
    %1384 = vmatpush1.msra.mxu0 0.0
    %1385 = vmatprep.subr.mxu0 0.0
    %1386 = vmatpush1.msra.mxu0 0.0
    %1387 = vmatprep.subr.mxu0 0.0
    %1388 = vmatpush1.msra.mxu0 0.0
    %v1389 = vand.u32 %v1095, 4294901760
    %1390 = vmatprep.mubr.f32.mxu0 %v1389
    %v1391 = vand.u32 %v566, 4294901760
    %1392 = vmatmul.mubr.f32.gmra.mrb[0].mxu0 %v1391
    %v1393 = vpop.f32.mrb[0].mxu0
    %v1394 = vadd.f32 %v1202, %v1393
    %v1395 = vpop.f32.mrb[0].mxu0
    %v1396 = vand.u32 %v1098, 4294901760
    %1397 = vmatprep.mubr.f32.mxu0 %v1396
    %v1398 = vand.u32 %v568, 4294901760
    %1399 = vmatmul.mubr.f32.gmra.mrb[0].mxu0 %v1398
    %v1400 = vpop.f32.mrb[0].mxu0
    %v1401 = vadd.f32 %v1217, %v1400
    %v1402 = vpop.f32.mrb[0].mxu0
    %1403 = vdwg.mxu0
    %1404 = vmatprep.subr.mxu0 0.0
    %v1405 = vand.u32 %v570, 4294901760
    %v1406 = vsub.f32 %v570, %v1405
    %1407 = vmatpush1.msra.mxu0 %v1406
    %1408 = vmatprep.subr.mxu0 0.0
    %v1409 = vand.u32 %v571, 4294901760
    %v1410 = vsub.f32 %v571, %v1409
    %1411 = vmatpush1.msra.mxu0 %v1410
    %1412 = vmatprep.subr.mxu0 0.0
    %v1413 = vand.u32 %v572, 4294901760
    %v1414 = vsub.f32 %v572, %v1413
    %1415 = vmatpush1.msra.mxu0 %v1414
    %1416 = vmatprep.subr.mxu0 0.0
    %v1417 = vand.u32 %v573, 4294901760
    %v1418 = vsub.f32 %v573, %v1417
    %1419 = vmatpush1.msra.mxu0 %v1418
    %1420 = vmatprep.subr.mxu0 0.0
    %v1421 = vand.u32 %v574, 4294901760
    %v1422 = vsub.f32 %v574, %v1421
    %1423 = vmatpush1.msra.mxu0 %v1422
    %1424 = vmatprep.subr.mxu0 0.0
    %v1425 = vand.u32 %v575, 4294901760
    %v1426 = vsub.f32 %v575, %v1425
    %1427 = vmatpush1.msra.mxu0 %v1426
    %1428 = vmatprep.subr.mxu0 0.0
    %v1429 = vand.u32 %v576, 4294901760
    %v1430 = vsub.f32 %v576, %v1429
    %1431 = vmatpush1.msra.mxu0 %v1430
    %1432 = vmatprep.subr.mxu0 0.0
    %v1433 = vand.u32 %v577, 4294901760
    %v1434 = vsub.f32 %v577, %v1433
    %1435 = vmatpush1.msra.mxu0 %v1434
    %1436 = vmatprep.subr.mxu0 0.0
    %v1437 = vand.u32 %v578, 4294901760
    %v1438 = vsub.f32 %v578, %v1437
    %1439 = vmatpush1.msra.mxu0 %v1438
    %1440 = vmatprep.subr.mxu0 0.0
    %v1441 = vand.u32 %v579, 4294901760
    %v1442 = vsub.f32 %v579, %v1441
    %1443 = vmatpush1.msra.mxu0 %v1442
    %1444 = vmatprep.subr.mxu0 0.0
    %v1445 = vand.u32 %v580, 4294901760
    %v1446 = vsub.f32 %v580, %v1445
    %1447 = vmatpush1.msra.mxu0 %v1446
    %1448 = vmatprep.subr.mxu0 0.0
    %v1449 = vand.u32 %v581, 4294901760
    %v1450 = vsub.f32 %v581, %v1449
    %1451 = vmatpush1.msra.mxu0 %v1450
    %1452 = vmatprep.subr.mxu0 0.0
    %v1453 = vand.u32 %v582, 4294901760
    %v1454 = vsub.f32 %v582, %v1453
    %1455 = vmatpush1.msra.mxu0 %v1454
    %1456 = vmatprep.subr.mxu0 0.0
    %v1457 = vand.u32 %v583, 4294901760
    %v1458 = vsub.f32 %v583, %v1457
    %1459 = vmatpush1.msra.mxu0 %v1458
    %1460 = vmatprep.subr.mxu0 0.0
    %v1461 = vand.u32 %v584, 4294901760
    %v1462 = vsub.f32 %v584, %v1461
    %1463 = vmatpush1.msra.mxu0 %v1462
    %1464 = vmatprep.subr.mxu0 0.0
    %v1465 = vand.u32 %v585, 4294901760
    %v1466 = vsub.f32 %v585, %v1465
    %1467 = vmatpush1.msra.mxu0 %v1466
    %1468 = vmatprep.subr.mxu0 0.0
    %v1469 = vand.u32 %v586, 4294901760
    %v1470 = vsub.f32 %v586, %v1469
    %1471 = vmatpush1.msra.mxu0 %v1470
    %1472 = vmatprep.subr.mxu0 0.0
    %v1473 = vand.u32 %v587, 4294901760
    %v1474 = vsub.f32 %v587, %v1473
    %1475 = vmatpush1.msra.mxu0 %v1474
    %1476 = vmatprep.subr.mxu0 0.0
    %v1477 = vand.u32 %v588, 4294901760
    %v1478 = vsub.f32 %v588, %v1477
    %1479 = vmatpush1.msra.mxu0 %v1478
    %1480 = vmatprep.subr.mxu0 0.0
    %v1481 = vand.u32 %v589, 4294901760
    %v1482 = vsub.f32 %v589, %v1481
    %1483 = vmatpush1.msra.mxu0 %v1482
    %1484 = vmatprep.subr.mxu0 0.0
    %v1485 = vand.u32 %v1102, 4294901760
    %v1486 = vsub.f32 %v1102, %v1485
    %1487 = vmatpush1.msra.mxu0 %v1486
    %1488 = vmatprep.subr.mxu0 0.0
    %1489 = vmatpush1.msra.mxu0 0.0
    %1490 = vmatprep.subr.mxu0 0.0
    %1491 = vmatpush1.msra.mxu0 0.0
    %1492 = vmatprep.subr.mxu0 0.0
    %1493 = vmatpush1.msra.mxu0 0.0
    %1494 = vmatprep.subr.mxu0 0.0
    %1495 = vmatpush1.msra.mxu0 0.0
    %1496 = vmatprep.subr.mxu0 0.0
    %1497 = vmatpush1.msra.mxu0 0.0
    %1498 = vmatprep.subr.mxu0 0.0
    %1499 = vmatpush1.msra.mxu0 0.0
    %1500 = vmatprep.subr.mxu0 0.0
    %1501 = vmatpush1.msra.mxu0 0.0
    %1502 = vmatprep.subr.mxu0 0.0
    %1503 = vmatpush1.msra.mxu0 0.0
    %1504 = vmatprep.subr.mxu0 0.0
    %1505 = vmatpush1.msra.mxu0 0.0
    %1506 = vmatprep.subr.mxu0 0.0
    %1507 = vmatpush1.msra.mxu0 0.0
    %1508 = vmatprep.subr.mxu0 0.0
    %1509 = vmatpush1.msra.mxu0 0.0
    %v1510 = vand.u32 %v1095, 4294901760
    %v1511 = vsub.f32 %v1095, %v1510
    %1512 = vmatprep.mubr.f32.mxu0 %v1511
    %v1513 = vand.u32 %v566, 4294901760
    %v1514 = vsub.f32 %v566, %v1513
    %1515 = vmatmul.mubr.f32.gmra.mrb[0].mxu0 %v1514
    %v1516 = vpop.f32.mrb[0].mxu0
    %v1517 = vadd.f32 %v1394, %v1516
    %v1518 = vpop.f32.mrb[0].mxu0
    %v1519 = vand.u32 %v1098, 4294901760
    %v1520 = vsub.f32 %v1098, %v1519
    %1521 = vmatprep.mubr.f32.mxu0 %v1520
    %v1522 = vand.u32 %v568, 4294901760
    %v1523 = vsub.f32 %v568, %v1522
    %1524 = vmatmul.mubr.f32.gmra.mrb[0].mxu0 %v1523
    %v1525 = vpop.f32.mrb[0].mxu0
    %v1526 = vadd.f32 %v1401, %v1525
    %v1527 = vpop.f32.mrb[0].mxu0
    %1528 = vdwg.mxu0
    %1529 = vmatprep.subr.mxu0 0.0
    %v1530 = vand.u32 %v570, 4294901760
    %1531 = vmatpush1.msra.mxu0 %v1530
    %1532 = vmatprep.subr.mxu0 0.0
    %v1533 = vand.u32 %v571, 4294901760
    %1534 = vmatpush1.msra.mxu0 %v1533
    %1535 = vmatprep.subr.mxu0 0.0
    %v1536 = vand.u32 %v572, 4294901760
    %1537 = vmatpush1.msra.mxu0 %v1536
    %1538 = vmatprep.subr.mxu0 0.0
    %v1539 = vand.u32 %v573, 4294901760
    %1540 = vmatpush1.msra.mxu0 %v1539
    %1541 = vmatprep.subr.mxu0 0.0
    %v1542 = vand.u32 %v574, 4294901760
    %1543 = vmatpush1.msra.mxu0 %v1542
    %1544 = vmatprep.subr.mxu0 0.0
    %v1545 = vand.u32 %v575, 4294901760
    %1546 = vmatpush1.msra.mxu0 %v1545
    %1547 = vmatprep.subr.mxu0 0.0
    %v1548 = vand.u32 %v576, 4294901760
    %1549 = vmatpush1.msra.mxu0 %v1548
    %1550 = vmatprep.subr.mxu0 0.0
    %v1551 = vand.u32 %v577, 4294901760
    %1552 = vmatpush1.msra.mxu0 %v1551
    %1553 = vmatprep.subr.mxu0 0.0
    %v1554 = vand.u32 %v578, 4294901760
    %1555 = vmatpush1.msra.mxu0 %v1554
    %1556 = vmatprep.subr.mxu0 0.0
    %v1557 = vand.u32 %v579, 4294901760
    %1558 = vmatpush1.msra.mxu0 %v1557
    %1559 = vmatprep.subr.mxu0 0.0
    %v1560 = vand.u32 %v580, 4294901760
    %1561 = vmatpush1.msra.mxu0 %v1560
    %1562 = vmatprep.subr.mxu0 0.0
    %v1563 = vand.u32 %v581, 4294901760
    %1564 = vmatpush1.msra.mxu0 %v1563
    %1565 = vmatprep.subr.mxu0 0.0
    %v1566 = vand.u32 %v582, 4294901760
    %1567 = vmatpush1.msra.mxu0 %v1566
    %1568 = vmatprep.subr.mxu0 0.0
    %v1569 = vand.u32 %v583, 4294901760
    %1570 = vmatpush1.msra.mxu0 %v1569
    %1571 = vmatprep.subr.mxu0 0.0
    %v1572 = vand.u32 %v584, 4294901760
    %1573 = vmatpush1.msra.mxu0 %v1572
    %1574 = vmatprep.subr.mxu0 0.0
    %v1575 = vand.u32 %v585, 4294901760
    %1576 = vmatpush1.msra.mxu0 %v1575
    %1577 = vmatprep.subr.mxu0 0.0
    %v1578 = vand.u32 %v586, 4294901760
    %1579 = vmatpush1.msra.mxu0 %v1578
    %1580 = vmatprep.subr.mxu0 0.0
    %v1581 = vand.u32 %v587, 4294901760
    %1582 = vmatpush1.msra.mxu0 %v1581
    %1583 = vmatprep.subr.mxu0 0.0
    %v1584 = vand.u32 %v588, 4294901760
    %1585 = vmatpush1.msra.mxu0 %v1584
    %1586 = vmatprep.subr.mxu0 0.0
    %v1587 = vand.u32 %v589, 4294901760
    %1588 = vmatpush1.msra.mxu0 %v1587
    %1589 = vmatprep.subr.mxu0 0.0
    %v1590 = vand.u32 %v1102, 4294901760
    %1591 = vmatpush1.msra.mxu0 %v1590
    %1592 = vmatprep.subr.mxu0 0.0
    %1593 = vmatpush1.msra.mxu0 0.0
    %1594 = vmatprep.subr.mxu0 0.0
    %1595 = vmatpush1.msra.mxu0 0.0
    %1596 = vmatprep.subr.mxu0 0.0
    %1597 = vmatpush1.msra.mxu0 0.0
    %1598 = vmatprep.subr.mxu0 0.0
    %1599 = vmatpush1.msra.mxu0 0.0
    %1600 = vmatprep.subr.mxu0 0.0
    %1601 = vmatpush1.msra.mxu0 0.0
    %1602 = vmatprep.subr.mxu0 0.0
    %1603 = vmatpush1.msra.mxu0 0.0
    %1604 = vmatprep.subr.mxu0 0.0
    %1605 = vmatpush1.msra.mxu0 0.0
    %1606 = vmatprep.subr.mxu0 0.0
    %1607 = vmatpush1.msra.mxu0 0.0
    %1608 = vmatprep.subr.mxu0 0.0
    %1609 = vmatpush1.msra.mxu0 0.0
    %1610 = vmatprep.subr.mxu0 0.0
    %1611 = vmatpush1.msra.mxu0 0.0
    %1612 = vmatprep.subr.mxu0 0.0
    %1613 = vmatpush1.msra.mxu0 0.0
    %v1614 = vand.u32 %v1095, 4294901760
    %v1615 = vsub.f32 %v1095, %v1614
    %v1616 = vand.u32 %v1615, 4294901760
    %1617 = vmatprep.mubr.f32.mxu0 %v1616
    %v1618 = vand.u32 %v566, 4294901760
    %v1619 = vsub.f32 %v566, %v1618
    %v1620 = vand.u32 %v1619, 4294901760
    %1621 = vmatmul.mubr.f32.gmra.mrb[0].mxu0 %v1620
    %v1622 = vpop.f32.mrb[0].mxu0
    %v1623 = vadd.f32 %v1517, %v1622
    %v1624 = vpop.f32.mrb[0].mxu0
    %v1625 = vand.u32 %v1098, 4294901760
    %v1626 = vsub.f32 %v1098, %v1625
    %v1627 = vand.u32 %v1626, 4294901760
    %1628 = vmatprep.mubr.f32.mxu0 %v1627
    %v1629 = vand.u32 %v568, 4294901760
    %v1630 = vsub.f32 %v568, %v1629
    %v1631 = vand.u32 %v1630, 4294901760
    %1632 = vmatmul.mubr.f32.gmra.mrb[0].mxu0 %v1631
    %v1633 = vpop.f32.mrb[0].mxu0
    %v1634 = vadd.f32 %v1526, %v1633
    %v1635 = vpop.f32.mrb[0].mxu0
    %1636 = vdwg.mxu0
    %1637 = vmatprep.subr.mxu0 0.0
    %v1638 = vand.u32 %v570, 4294901760
    %v1639 = vsub.f32 %v570, %v1638
    %v1640 = vand.u32 %v1639, 4294901760
    %1641 = vmatpush1.msra.mxu0 %v1640
    %1642 = vmatprep.subr.mxu0 0.0
    %v1643 = vand.u32 %v571, 4294901760
    %v1644 = vsub.f32 %v571, %v1643
    %v1645 = vand.u32 %v1644, 4294901760
    %1646 = vmatpush1.msra.mxu0 %v1645
    %1647 = vmatprep.subr.mxu0 0.0
    %v1648 = vand.u32 %v572, 4294901760
    %v1649 = vsub.f32 %v572, %v1648
    %v1650 = vand.u32 %v1649, 4294901760
    %1651 = vmatpush1.msra.mxu0 %v1650
    %1652 = vmatprep.subr.mxu0 0.0
    %v1653 = vand.u32 %v573, 4294901760
    %v1654 = vsub.f32 %v573, %v1653
    %v1655 = vand.u32 %v1654, 4294901760
    %1656 = vmatpush1.msra.mxu0 %v1655
    %1657 = vmatprep.subr.mxu0 0.0
    %v1658 = vand.u32 %v574, 4294901760
    %v1659 = vsub.f32 %v574, %v1658
    %v1660 = vand.u32 %v1659, 4294901760
    %1661 = vmatpush1.msra.mxu0 %v1660
    %1662 = vmatprep.subr.mxu0 0.0
    %v1663 = vand.u32 %v575, 4294901760
    %v1664 = vsub.f32 %v575, %v1663
    %v1665 = vand.u32 %v1664, 4294901760
    %1666 = vmatpush1.msra.mxu0 %v1665
    %1667 = vmatprep.subr.mxu0 0.0
    %v1668 = vand.u32 %v576, 4294901760
    %v1669 = vsub.f32 %v576, %v1668
    %v1670 = vand.u32 %v1669, 4294901760
    %1671 = vmatpush1.msra.mxu0 %v1670
    %1672 = vmatprep.subr.mxu0 0.0
    %v1673 = vand.u32 %v577, 4294901760
    %v1674 = vsub.f32 %v577, %v1673
    %v1675 = vand.u32 %v1674, 4294901760
    %1676 = vmatpush1.msra.mxu0 %v1675
    %1677 = vmatprep.subr.mxu0 0.0
    %v1678 = vand.u32 %v578, 4294901760
    %v1679 = vsub.f32 %v578, %v1678
    %v1680 = vand.u32 %v1679, 4294901760
    %1681 = vmatpush1.msra.mxu0 %v1680
    %1682 = vmatprep.subr.mxu0 0.0
    %v1683 = vand.u32 %v579, 4294901760
    %v1684 = vsub.f32 %v579, %v1683
    %v1685 = vand.u32 %v1684, 4294901760
    %1686 = vmatpush1.msra.mxu0 %v1685
    %1687 = vmatprep.subr.mxu0 0.0
    %v1688 = vand.u32 %v580, 4294901760
    %v1689 = vsub.f32 %v580, %v1688
    %v1690 = vand.u32 %v1689, 4294901760
    %1691 = vmatpush1.msra.mxu0 %v1690
    %1692 = vmatprep.subr.mxu0 0.0
    %v1693 = vand.u32 %v581, 4294901760
    %v1694 = vsub.f32 %v581, %v1693
    %v1695 = vand.u32 %v1694, 4294901760
    %1696 = vmatpush1.msra.mxu0 %v1695
    %1697 = vmatprep.subr.mxu0 0.0
    %v1698 = vand.u32 %v582, 4294901760
    %v1699 = vsub.f32 %v582, %v1698
    %v1700 = vand.u32 %v1699, 4294901760
    %1701 = vmatpush1.msra.mxu0 %v1700
    %1702 = vmatprep.subr.mxu0 0.0
    %v1703 = vand.u32 %v583, 4294901760
    %v1704 = vsub.f32 %v583, %v1703
    %v1705 = vand.u32 %v1704, 4294901760
    %1706 = vmatpush1.msra.mxu0 %v1705
    %1707 = vmatprep.subr.mxu0 0.0
    %v1708 = vand.u32 %v584, 4294901760
    %v1709 = vsub.f32 %v584, %v1708
    %v1710 = vand.u32 %v1709, 4294901760
    %1711 = vmatpush1.msra.mxu0 %v1710
    %1712 = vmatprep.subr.mxu0 0.0
    %v1713 = vand.u32 %v585, 4294901760
    %v1714 = vsub.f32 %v585, %v1713
    %v1715 = vand.u32 %v1714, 4294901760
    %1716 = vmatpush1.msra.mxu0 %v1715
    %1717 = vmatprep.subr.mxu0 0.0
    %v1718 = vand.u32 %v586, 4294901760
    %v1719 = vsub.f32 %v586, %v1718
    %v1720 = vand.u32 %v1719, 4294901760
    %1721 = vmatpush1.msra.mxu0 %v1720
    %1722 = vmatprep.subr.mxu0 0.0
    %v1723 = vand.u32 %v587, 4294901760
    %v1724 = vsub.f32 %v587, %v1723
    %v1725 = vand.u32 %v1724, 4294901760
    %1726 = vmatpush1.msra.mxu0 %v1725
    %1727 = vmatprep.subr.mxu0 0.0
    %v1728 = vand.u32 %v588, 4294901760
    %v1729 = vsub.f32 %v588, %v1728
    %v1730 = vand.u32 %v1729, 4294901760
    %1731 = vmatpush1.msra.mxu0 %v1730
    %1732 = vmatprep.subr.mxu0 0.0
    %v1733 = vand.u32 %v589, 4294901760
    %v1734 = vsub.f32 %v589, %v1733
    %v1735 = vand.u32 %v1734, 4294901760
    %1736 = vmatpush1.msra.mxu0 %v1735
    %1737 = vmatprep.subr.mxu0 0.0
    %v1738 = vand.u32 %v1102, 4294901760
    %v1739 = vsub.f32 %v1102, %v1738
    %v1740 = vand.u32 %v1739, 4294901760
    %1741 = vmatpush1.msra.mxu0 %v1740
    %1742 = vmatprep.subr.mxu0 0.0
    %1743 = vmatpush1.msra.mxu0 0.0
    %1744 = vmatprep.subr.mxu0 0.0
    %1745 = vmatpush1.msra.mxu0 0.0
    %1746 = vmatprep.subr.mxu0 0.0
    %1747 = vmatpush1.msra.mxu0 0.0
    %1748 = vmatprep.subr.mxu0 0.0
    %1749 = vmatpush1.msra.mxu0 0.0
    %1750 = vmatprep.subr.mxu0 0.0
    %1751 = vmatpush1.msra.mxu0 0.0
    %1752 = vmatprep.subr.mxu0 0.0
    %1753 = vmatpush1.msra.mxu0 0.0
    %1754 = vmatprep.subr.mxu0 0.0
    %1755 = vmatpush1.msra.mxu0 0.0
    %1756 = vmatprep.subr.mxu0 0.0
    %1757 = vmatpush1.msra.mxu0 0.0
    %1758 = vmatprep.subr.mxu0 0.0
    %1759 = vmatpush1.msra.mxu0 0.0
    %1760 = vmatprep.subr.mxu0 0.0
    %1761 = vmatpush1.msra.mxu0 0.0
    %1762 = vmatprep.subr.mxu0 0.0
    %1763 = vmatpush1.msra.mxu0 0.0
    %v1764 = vand.u32 %v1095, 4294901760
    %1765 = vmatprep.mubr.f32.mxu0 %v1764
    %v1766 = vand.u32 %v566, 4294901760
    %1767 = vmatmul.mubr.f32.gmra.mrb[0].mxu0 %v1766
    %v1768 = vpop.f32.mrb[0].mxu0
    %v1769 = vadd.f32 %v1623, %v1768
    %v1770 = vpop.f32.mrb[0].mxu0
    %v1771 = vand.u32 %v1098, 4294901760
    %1772 = vmatprep.mubr.f32.mxu0 %v1771
    %v1773 = vand.u32 %v568, 4294901760
    %1774 = vmatmul.mubr.f32.gmra.mrb[0].mxu0 %v1773
    %v1775 = vpop.f32.mrb[0].mxu0
    %v1776 = vadd.f32 %v1634, %v1775
    %v1777 = vpop.f32.mrb[0].mxu0
    %1778 = vdwg.mxu0
    %1779 = vmatprep.subr.mxu0 0.0
    %v1780 = vand.u32 %v570, 4294901760
    %1781 = vmatpush1.msra.mxu0 %v1780
    %1782 = vmatprep.subr.mxu0 0.0
    %v1783 = vand.u32 %v571, 4294901760
    %1784 = vmatpush1.msra.mxu0 %v1783
    %1785 = vmatprep.subr.mxu0 0.0
    %v1786 = vand.u32 %v572, 4294901760
    %1787 = vmatpush1.msra.mxu0 %v1786
    %1788 = vmatprep.subr.mxu0 0.0
    %v1789 = vand.u32 %v573, 4294901760
    %1790 = vmatpush1.msra.mxu0 %v1789
    %1791 = vmatprep.subr.mxu0 0.0
    %v1792 = vand.u32 %v574, 4294901760
    %1793 = vmatpush1.msra.mxu0 %v1792
    %1794 = vmatprep.subr.mxu0 0.0
    %v1795 = vand.u32 %v575, 4294901760
    %1796 = vmatpush1.msra.mxu0 %v1795
    %1797 = vmatprep.subr.mxu0 0.0
    %v1798 = vand.u32 %v576, 4294901760
    %1799 = vmatpush1.msra.mxu0 %v1798
    %1800 = vmatprep.subr.mxu0 0.0
    %v1801 = vand.u32 %v577, 4294901760
    %1802 = vmatpush1.msra.mxu0 %v1801
    %1803 = vmatprep.subr.mxu0 0.0
    %v1804 = vand.u32 %v578, 4294901760
    %1805 = vmatpush1.msra.mxu0 %v1804
    %1806 = vmatprep.subr.mxu0 0.0
    %v1807 = vand.u32 %v579, 4294901760
    %1808 = vmatpush1.msra.mxu0 %v1807
    %1809 = vmatprep.subr.mxu0 0.0
    %v1810 = vand.u32 %v580, 4294901760
    %1811 = vmatpush1.msra.mxu0 %v1810
    %1812 = vmatprep.subr.mxu0 0.0
    %v1813 = vand.u32 %v581, 4294901760
    %1814 = vmatpush1.msra.mxu0 %v1813
    %1815 = vmatprep.subr.mxu0 0.0
    %v1816 = vand.u32 %v582, 4294901760
    %1817 = vmatpush1.msra.mxu0 %v1816
    %1818 = vmatprep.subr.mxu0 0.0
    %v1819 = vand.u32 %v583, 4294901760
    %1820 = vmatpush1.msra.mxu0 %v1819
    %1821 = vmatprep.subr.mxu0 0.0
    %v1822 = vand.u32 %v584, 4294901760
    %1823 = vmatpush1.msra.mxu0 %v1822
    %1824 = vmatprep.subr.mxu0 0.0
    %v1825 = vand.u32 %v585, 4294901760
    %1826 = vmatpush1.msra.mxu0 %v1825
    %1827 = vmatprep.subr.mxu0 0.0
    %v1828 = vand.u32 %v586, 4294901760
    %1829 = vmatpush1.msra.mxu0 %v1828
    %1830 = vmatprep.subr.mxu0 0.0
    %v1831 = vand.u32 %v587, 4294901760
    %1832 = vmatpush1.msra.mxu0 %v1831
    %1833 = vmatprep.subr.mxu0 0.0
    %v1834 = vand.u32 %v588, 4294901760
    %1835 = vmatpush1.msra.mxu0 %v1834
    %1836 = vmatprep.subr.mxu0 0.0
    %v1837 = vand.u32 %v589, 4294901760
    %1838 = vmatpush1.msra.mxu0 %v1837
    %1839 = vmatprep.subr.mxu0 0.0
    %v1840 = vand.u32 %v1102, 4294901760
    %1841 = vmatpush1.msra.mxu0 %v1840
    %1842 = vmatprep.subr.mxu0 0.0
    %1843 = vmatpush1.msra.mxu0 0.0
    %1844 = vmatprep.subr.mxu0 0.0
    %1845 = vmatpush1.msra.mxu0 0.0
    %1846 = vmatprep.subr.mxu0 0.0
    %1847 = vmatpush1.msra.mxu0 0.0
    %1848 = vmatprep.subr.mxu0 0.0
    %1849 = vmatpush1.msra.mxu0 0.0
    %1850 = vmatprep.subr.mxu0 0.0
    %1851 = vmatpush1.msra.mxu0 0.0
    %1852 = vmatprep.subr.mxu0 0.0
    %1853 = vmatpush1.msra.mxu0 0.0
    %1854 = vmatprep.subr.mxu0 0.0
    %1855 = vmatpush1.msra.mxu0 0.0
    %1856 = vmatprep.subr.mxu0 0.0
    %1857 = vmatpush1.msra.mxu0 0.0
    %1858 = vmatprep.subr.mxu0 0.0
    %1859 = vmatpush1.msra.mxu0 0.0
    %1860 = vmatprep.subr.mxu0 0.0
    %1861 = vmatpush1.msra.mxu0 0.0
    %1862 = vmatprep.subr.mxu0 0.0
    %1863 = vmatpush1.msra.mxu0 0.0
    %v1864 = vand.u32 %v1095, 4294901760
    %1865 = vmatprep.mubr.f32.mxu0 %v1864
    %v1866 = vand.u32 %v566, 4294901760
    %1867 = vmatmul.mubr.f32.gmra.mrb[0].mxu0 %v1866
    %v1868 = vpop.f32.mrb[0].mxu0
    %v1869 = vadd.f32 %v1769, %v1868
    %v1870 = vpop.f32.mrb[0].mxu0
    %v1871 = vand.u32 %v1098, 4294901760
    %1872 = vmatprep.mubr.f32.mxu0 %v1871
    %v1873 = vand.u32 %v568, 4294901760
    %1874 = vmatmul.mubr.f32.gmra.mrb[0].mxu0 %v1873
    %v1875 = vpop.f32.mrb[0].mxu0
    %v1876 = vadd.f32 %v1776, %v1875
    %v1877 = vpop.f32.mrb[0].mxu0
    %1878 = vdwg.mxu0
    %v1879 = vld [vmem:[%s5] sm:$0x1]
    %v1881 = vlaneseq
    %v1882 = vshrl.u32 %v1881, 7
    %v1883 = vsub.s32 0, %v1882
    %v1884 = vrot.slane %v1879, %v1883
    %v1886 = vadd.f32 %v1869, %v1884
    %v1887 = vadd.f32 %v1876, %v1884
    %v1888 = vld [vmem:[%s6] sm:$0xff]
    %v1889 = vld [vmem:[%s6 + $0x8] sm:$0xff]
    %v1890 = vld [vmem:[%s6 + $0x10] sm:$0xff]
    %v1891 = vld [vmem:[%s6 + $0x18] sm:$0xff]
    %v1892 = vld [vmem:[%s7] sm:$0x1]
    %v1894 = vlaneseq
    %v1895 = vshrl.u32 %v1894, 7
    %v1896 = vsub.s32 0, %v1895
    %v1897 = vrot.slane %v1892, %v1896
    %vm1899 = vcmask 261120
    %v1901 = vsel %vm1899, %v1886, 0
    %v1904 = vsel %vm1899, %v1887, 0
    %1906 = vmatprep.subr.mxu0 0.0
    %v1907 = vand.u32 %v1888, 4294901760
    %1908 = vmatpush1.msra.mxu0 %v1907
    %1909 = vmatprep.subr.mxu0 0.0
    %v1910 = vand.u32 %v1889, 4294901760
    %1911 = vmatpush1.msra.mxu0 %v1910
    %1912 = vmatprep.subr.mxu0 0.0
    %v1913 = vand.u32 %v1890, 4294901760
    %1914 = vmatpush1.msra.mxu0 %v1913
    %1915 = vmatprep.subr.mxu0 0.0
    %v1916 = vand.u32 %v1891, 4294901760
    %1917 = vmatpush1.msra.mxu0 %v1916
    %1918 = vmatprep.subr.mxu0 0.0
    %1919 = vmatpush1.msra.mxu0 0.0
    %1920 = vmatprep.subr.mxu0 0.0
    %1921 = vmatpush1.msra.mxu0 0.0
    %1922 = vmatprep.subr.mxu0 0.0
    %1923 = vmatpush1.msra.mxu0 0.0
    %1924 = vmatprep.subr.mxu0 0.0
    %1925 = vmatpush1.msra.mxu0 0.0
    %1926 = vmatprep.subr.mxu0 0.0
    %1927 = vmatpush1.msra.mxu0 0.0
    %1928 = vmatprep.subr.mxu0 0.0
    %1929 = vmatpush1.msra.mxu0 0.0
    %1930 = vmatprep.subr.mxu0 0.0
    %1931 = vmatpush1.msra.mxu0 0.0
    %1932 = vmatprep.subr.mxu0 0.0
    %1933 = vmatpush1.msra.mxu0 0.0
    %1934 = vmatprep.subr.mxu0 0.0
    %1935 = vmatpush1.msra.mxu0 0.0
    %1936 = vmatprep.subr.mxu0 0.0
    %1937 = vmatpush1.msra.mxu0 0.0
    %1938 = vmatprep.subr.mxu0 0.0
    %1939 = vmatpush1.msra.mxu0 0.0
    %1940 = vmatprep.subr.mxu0 0.0
    %1941 = vmatpush1.msra.mxu0 0.0
    %1942 = vmatprep.subr.mxu0 0.0
    %1943 = vmatpush1.msra.mxu0 0.0
    %1944 = vmatprep.subr.mxu0 0.0
    %1945 = vmatpush1.msra.mxu0 0.0
    %1946 = vmatprep.subr.mxu0 0.0
    %1947 = vmatpush1.msra.mxu0 0.0
    %1948 = vmatprep.subr.mxu0 0.0
    %1949 = vmatpush1.msra.mxu0 0.0
    %1950 = vmatprep.subr.mxu0 0.0
    %1951 = vmatpush1.msra.mxu0 0.0
    %1952 = vmatprep.subr.mxu0 0.0
    %1953 = vmatpush1.msra.mxu0 0.0
    %1954 = vmatprep.subr.mxu0 0.0
    %1955 = vmatpush1.msra.mxu0 0.0
    %1956 = vmatprep.subr.mxu0 0.0
    %1957 = vmatpush1.msra.mxu0 0.0
    %1958 = vmatprep.subr.mxu0 0.0
    %1959 = vmatpush1.msra.mxu0 0.0
    %1960 = vmatprep.subr.mxu0 0.0
    %1961 = vmatpush1.msra.mxu0 0.0
    %1962 = vmatprep.subr.mxu0 0.0
    %1963 = vmatpush1.msra.mxu0 0.0
    %1964 = vmatprep.subr.mxu0 0.0
    %1965 = vmatpush1.msra.mxu0 0.0
    %1966 = vmatprep.subr.mxu0 0.0
    %1967 = vmatpush1.msra.mxu0 0.0
    %1968 = vmatprep.subr.mxu0 0.0
    %1969 = vmatpush1.msra.mxu0 0.0
    %1970 = vmatprep.subr.mxu0 0.0
    %1971 = vmatpush1.msra.mxu0 0.0
    %1972 = vmatprep.subr.mxu0 0.0
    %1973 = vmatpush1.msra.mxu0 0.0
    %1974 = vmatprep.mubr.f32.mxu0 0.0
    %v1975 = vand.u32 %v1901, 4294901760
    %v1976 = vsub.f32 %v1901, %v1975
    %v1977 = vand.u32 %v1976, 4294901760
    %v1978 = vsub.f32 %v1976, %v1977
    %v1979 = vand.u32 %v1978, 4294901760
    %1980 = vmatmul.mubr.f32.gmra.mrb[0].mxu0 %v1979
    %v1981 = vpop.f32.mrb[0].mxu0
    %v1982 = vadd.f32 %v1897, %v1981
    %v1983 = vpop.f32.mrb[0].mxu0
    %1984 = vmatprep.mubr.f32.mxu0 0.0
    %v1985 = vand.u32 %v1904, 4294901760
    %v1986 = vsub.f32 %v1904, %v1985
    %v1987 = vand.u32 %v1986, 4294901760
    %v1988 = vsub.f32 %v1986, %v1987
    %v1989 = vand.u32 %v1988, 4294901760
    %1990 = vmatmul.mubr.f32.gmra.mrb[0].mxu0 %v1989
    %v1991 = vpop.f32.mrb[0].mxu0
    %v1992 = vadd.f32 %v1897, %v1991
    %v1993 = vpop.f32.mrb[0].mxu0
    %1994 = vdwg.mxu0
    %1995 = vmatprep.subr.mxu0 0.0
    %v1996 = vand.u32 %v1888, 4294901760
    %v1997 = vsub.f32 %v1888, %v1996
    %v1998 = vand.u32 %v1997, 4294901760
    %v1999 = vsub.f32 %v1997, %v1998
    %v2000 = vand.u32 %v1999, 4294901760
    %2001 = vmatpush1.msra.mxu0 %v2000
    %2002 = vmatprep.subr.mxu0 0.0
    %v2003 = vand.u32 %v1889, 4294901760
    %v2004 = vsub.f32 %v1889, %v2003
    %v2005 = vand.u32 %v2004, 4294901760
    %v2006 = vsub.f32 %v2004, %v2005
    %v2007 = vand.u32 %v2006, 4294901760
    %2008 = vmatpush1.msra.mxu0 %v2007
    %2009 = vmatprep.subr.mxu0 0.0
    %v2010 = vand.u32 %v1890, 4294901760
    %v2011 = vsub.f32 %v1890, %v2010
    %v2012 = vand.u32 %v2011, 4294901760
    %v2013 = vsub.f32 %v2011, %v2012
    %v2014 = vand.u32 %v2013, 4294901760
    %2015 = vmatpush1.msra.mxu0 %v2014
    %2016 = vmatprep.subr.mxu0 0.0
    %v2017 = vand.u32 %v1891, 4294901760
    %v2018 = vsub.f32 %v1891, %v2017
    %v2019 = vand.u32 %v2018, 4294901760
    %v2020 = vsub.f32 %v2018, %v2019
    %v2021 = vand.u32 %v2020, 4294901760
    %2022 = vmatpush1.msra.mxu0 %v2021
    %2023 = vmatprep.subr.mxu0 0.0
    %2024 = vmatpush1.msra.mxu0 0.0
    %2025 = vmatprep.subr.mxu0 0.0
    %2026 = vmatpush1.msra.mxu0 0.0
    %2027 = vmatprep.subr.mxu0 0.0
    %2028 = vmatpush1.msra.mxu0 0.0
    %2029 = vmatprep.subr.mxu0 0.0
    %2030 = vmatpush1.msra.mxu0 0.0
    %2031 = vmatprep.subr.mxu0 0.0
    %2032 = vmatpush1.msra.mxu0 0.0
    %2033 = vmatprep.subr.mxu0 0.0
    %2034 = vmatpush1.msra.mxu0 0.0
    %2035 = vmatprep.subr.mxu0 0.0
    %2036 = vmatpush1.msra.mxu0 0.0
    %2037 = vmatprep.subr.mxu0 0.0
    %2038 = vmatpush1.msra.mxu0 0.0
    %2039 = vmatprep.subr.mxu0 0.0
    %2040 = vmatpush1.msra.mxu0 0.0
    %2041 = vmatprep.subr.mxu0 0.0
    %2042 = vmatpush1.msra.mxu0 0.0
    %2043 = vmatprep.subr.mxu0 0.0
    %2044 = vmatpush1.msra.mxu0 0.0
    %2045 = vmatprep.subr.mxu0 0.0
    %2046 = vmatpush1.msra.mxu0 0.0
    %2047 = vmatprep.subr.mxu0 0.0
    %2048 = vmatpush1.msra.mxu0 0.0
    %2049 = vmatprep.subr.mxu0 0.0
    %2050 = vmatpush1.msra.mxu0 0.0
    %2051 = vmatprep.subr.mxu0 0.0
    %2052 = vmatpush1.msra.mxu0 0.0
    %2053 = vmatprep.subr.mxu0 0.0
    %2054 = vmatpush1.msra.mxu0 0.0
    %2055 = vmatprep.subr.mxu0 0.0
    %2056 = vmatpush1.msra.mxu0 0.0
    %2057 = vmatprep.subr.mxu0 0.0
    %2058 = vmatpush1.msra.mxu0 0.0
    %2059 = vmatprep.subr.mxu0 0.0
    %2060 = vmatpush1.msra.mxu0 0.0
    %2061 = vmatprep.subr.mxu0 0.0
    %2062 = vmatpush1.msra.mxu0 0.0
    %2063 = vmatprep.subr.mxu0 0.0
    %2064 = vmatpush1.msra.mxu0 0.0
    %2065 = vmatprep.subr.mxu0 0.0
    %2066 = vmatpush1.msra.mxu0 0.0
    %2067 = vmatprep.subr.mxu0 0.0
    %2068 = vmatpush1.msra.mxu0 0.0
    %2069 = vmatprep.subr.mxu0 0.0
    %2070 = vmatpush1.msra.mxu0 0.0
    %2071 = vmatprep.subr.mxu0 0.0
    %2072 = vmatpush1.msra.mxu0 0.0
    %2073 = vmatprep.subr.mxu0 0.0
    %2074 = vmatpush1.msra.mxu0 0.0
    %2075 = vmatprep.subr.mxu0 0.0
    %2076 = vmatpush1.msra.mxu0 0.0
    %2077 = vmatprep.subr.mxu0 0.0
    %2078 = vmatpush1.msra.mxu0 0.0
    %2079 = vmatprep.mubr.f32.mxu0 0.0
    %v2080 = vand.u32 %v1901, 4294901760
    %2081 = vmatmul.mubr.f32.gmra.mrb[0].mxu0 %v2080
    %v2082 = vpop.f32.mrb[0].mxu0
    %v2083 = vadd.f32 %v1982, %v2082
    %v2084 = vpop.f32.mrb[0].mxu0
    %2085 = vmatprep.mubr.f32.mxu0 0.0
    %v2086 = vand.u32 %v1904, 4294901760
    %2087 = vmatmul.mubr.f32.gmra.mrb[0].mxu0 %v2086
    %v2088 = vpop.f32.mrb[0].mxu0
    %v2089 = vadd.f32 %v1992, %v2088
    %v2090 = vpop.f32.mrb[0].mxu0
    %2091 = vdwg.mxu0
    %2092 = vmatprep.subr.mxu0 0.0
    %v2093 = vand.u32 %v1888, 4294901760
    %v2094 = vsub.f32 %v1888, %v2093
    %2095 = vmatpush1.msra.mxu0 %v2094
    %2096 = vmatprep.subr.mxu0 0.0
    %v2097 = vand.u32 %v1889, 4294901760
    %v2098 = vsub.f32 %v1889, %v2097
    %2099 = vmatpush1.msra.mxu0 %v2098
    %2100 = vmatprep.subr.mxu0 0.0
    %v2101 = vand.u32 %v1890, 4294901760
    %v2102 = vsub.f32 %v1890, %v2101
    %2103 = vmatpush1.msra.mxu0 %v2102
    %2104 = vmatprep.subr.mxu0 0.0
    %v2105 = vand.u32 %v1891, 4294901760
    %v2106 = vsub.f32 %v1891, %v2105
    %2107 = vmatpush1.msra.mxu0 %v2106
    %2108 = vmatprep.subr.mxu0 0.0
    %2109 = vmatpush1.msra.mxu0 0.0
    %2110 = vmatprep.subr.mxu0 0.0
    %2111 = vmatpush1.msra.mxu0 0.0
    %2112 = vmatprep.subr.mxu0 0.0
    %2113 = vmatpush1.msra.mxu0 0.0
    %2114 = vmatprep.subr.mxu0 0.0
    %2115 = vmatpush1.msra.mxu0 0.0
    %2116 = vmatprep.subr.mxu0 0.0
    %2117 = vmatpush1.msra.mxu0 0.0
    %2118 = vmatprep.subr.mxu0 0.0
    %2119 = vmatpush1.msra.mxu0 0.0
    %2120 = vmatprep.subr.mxu0 0.0
    %2121 = vmatpush1.msra.mxu0 0.0
    %2122 = vmatprep.subr.mxu0 0.0
    %2123 = vmatpush1.msra.mxu0 0.0
    %2124 = vmatprep.subr.mxu0 0.0
    %2125 = vmatpush1.msra.mxu0 0.0
    %2126 = vmatprep.subr.mxu0 0.0
    %2127 = vmatpush1.msra.mxu0 0.0
    %2128 = vmatprep.subr.mxu0 0.0
    %2129 = vmatpush1.msra.mxu0 0.0
    %2130 = vmatprep.subr.mxu0 0.0
    %2131 = vmatpush1.msra.mxu0 0.0
    %2132 = vmatprep.subr.mxu0 0.0
    %2133 = vmatpush1.msra.mxu0 0.0
    %2134 = vmatprep.subr.mxu0 0.0
    %2135 = vmatpush1.msra.mxu0 0.0
    %2136 = vmatprep.subr.mxu0 0.0
    %2137 = vmatpush1.msra.mxu0 0.0
    %2138 = vmatprep.subr.mxu0 0.0
    %2139 = vmatpush1.msra.mxu0 0.0
    %2140 = vmatprep.subr.mxu0 0.0
    %2141 = vmatpush1.msra.mxu0 0.0
    %2142 = vmatprep.subr.mxu0 0.0
    %2143 = vmatpush1.msra.mxu0 0.0
    %2144 = vmatprep.subr.mxu0 0.0
    %2145 = vmatpush1.msra.mxu0 0.0
    %2146 = vmatprep.subr.mxu0 0.0
    %2147 = vmatpush1.msra.mxu0 0.0
    %2148 = vmatprep.subr.mxu0 0.0
    %2149 = vmatpush1.msra.mxu0 0.0
    %2150 = vmatprep.subr.mxu0 0.0
    %2151 = vmatpush1.msra.mxu0 0.0
    %2152 = vmatprep.subr.mxu0 0.0
    %2153 = vmatpush1.msra.mxu0 0.0
    %2154 = vmatprep.subr.mxu0 0.0
    %2155 = vmatpush1.msra.mxu0 0.0
    %2156 = vmatprep.subr.mxu0 0.0
    %2157 = vmatpush1.msra.mxu0 0.0
    %2158 = vmatprep.subr.mxu0 0.0
    %2159 = vmatpush1.msra.mxu0 0.0
    %2160 = vmatprep.subr.mxu0 0.0
    %2161 = vmatpush1.msra.mxu0 0.0
    %2162 = vmatprep.subr.mxu0 0.0
    %2163 = vmatpush1.msra.mxu0 0.0
    %2164 = vmatprep.mubr.f32.mxu0 0.0
    %v2165 = vand.u32 %v1901, 4294901760
    %v2166 = vsub.f32 %v1901, %v2165
    %2167 = vmatmul.mubr.f32.gmra.mrb[0].mxu0 %v2166
    %v2168 = vpop.f32.mrb[0].mxu0
    %v2169 = vadd.f32 %v2083, %v2168
    %v2170 = vpop.f32.mrb[0].mxu0
    %2171 = vmatprep.mubr.f32.mxu0 0.0
    %v2172 = vand.u32 %v1904, 4294901760
    %v2173 = vsub.f32 %v1904, %v2172
    %2174 = vmatmul.mubr.f32.gmra.mrb[0].mxu0 %v2173
    %v2175 = vpop.f32.mrb[0].mxu0
    %v2176 = vadd.f32 %v2089, %v2175
    %v2177 = vpop.f32.mrb[0].mxu0
    %2178 = vdwg.mxu0
    %2179 = vmatprep.subr.mxu0 0.0
    %v2180 = vand.u32 %v1888, 4294901760
    %2181 = vmatpush1.msra.mxu0 %v2180
    %2182 = vmatprep.subr.mxu0 0.0
    %v2183 = vand.u32 %v1889, 4294901760
    %2184 = vmatpush1.msra.mxu0 %v2183
    %2185 = vmatprep.subr.mxu0 0.0
    %v2186 = vand.u32 %v1890, 4294901760
    %2187 = vmatpush1.msra.mxu0 %v2186
    %2188 = vmatprep.subr.mxu0 0.0
    %v2189 = vand.u32 %v1891, 4294901760
    %2190 = vmatpush1.msra.mxu0 %v2189
    %2191 = vmatprep.subr.mxu0 0.0
    %2192 = vmatpush1.msra.mxu0 0.0
    %2193 = vmatprep.subr.mxu0 0.0
    %2194 = vmatpush1.msra.mxu0 0.0
    %2195 = vmatprep.subr.mxu0 0.0
    %2196 = vmatpush1.msra.mxu0 0.0
    %2197 = vmatprep.subr.mxu0 0.0
    %2198 = vmatpush1.msra.mxu0 0.0
    %2199 = vmatprep.subr.mxu0 0.0
    %2200 = vmatpush1.msra.mxu0 0.0
    %2201 = vmatprep.subr.mxu0 0.0
    %2202 = vmatpush1.msra.mxu0 0.0
    %2203 = vmatprep.subr.mxu0 0.0
    %2204 = vmatpush1.msra.mxu0 0.0
    %2205 = vmatprep.subr.mxu0 0.0
    %2206 = vmatpush1.msra.mxu0 0.0
    %2207 = vmatprep.subr.mxu0 0.0
    %2208 = vmatpush1.msra.mxu0 0.0
    %2209 = vmatprep.subr.mxu0 0.0
    %2210 = vmatpush1.msra.mxu0 0.0
    %2211 = vmatprep.subr.mxu0 0.0
    %2212 = vmatpush1.msra.mxu0 0.0
    %2213 = vmatprep.subr.mxu0 0.0
    %2214 = vmatpush1.msra.mxu0 0.0
    %2215 = vmatprep.subr.mxu0 0.0
    %2216 = vmatpush1.msra.mxu0 0.0
    %2217 = vmatprep.subr.mxu0 0.0
    %2218 = vmatpush1.msra.mxu0 0.0
    %2219 = vmatprep.subr.mxu0 0.0
    %2220 = vmatpush1.msra.mxu0 0.0
    %2221 = vmatprep.subr.mxu0 0.0
    %2222 = vmatpush1.msra.mxu0 0.0
    %2223 = vmatprep.subr.mxu0 0.0
    %2224 = vmatpush1.msra.mxu0 0.0
    %2225 = vmatprep.subr.mxu0 0.0
    %2226 = vmatpush1.msra.mxu0 0.0
    %2227 = vmatprep.subr.mxu0 0.0
    %2228 = vmatpush1.msra.mxu0 0.0
    %2229 = vmatprep.subr.mxu0 0.0
    %2230 = vmatpush1.msra.mxu0 0.0
    %2231 = vmatprep.subr.mxu0 0.0
    %2232 = vmatpush1.msra.mxu0 0.0
    %2233 = vmatprep.subr.mxu0 0.0
    %2234 = vmatpush1.msra.mxu0 0.0
    %2235 = vmatprep.subr.mxu0 0.0
    %2236 = vmatpush1.msra.mxu0 0.0
    %2237 = vmatprep.subr.mxu0 0.0
    %2238 = vmatpush1.msra.mxu0 0.0
    %2239 = vmatprep.subr.mxu0 0.0
    %2240 = vmatpush1.msra.mxu0 0.0
    %2241 = vmatprep.subr.mxu0 0.0
    %2242 = vmatpush1.msra.mxu0 0.0
    %2243 = vmatprep.subr.mxu0 0.0
    %2244 = vmatpush1.msra.mxu0 0.0
    %2245 = vmatprep.subr.mxu0 0.0
    %2246 = vmatpush1.msra.mxu0 0.0
    %2247 = vmatprep.mubr.f32.mxu0 0.0
    %v2248 = vand.u32 %v1901, 4294901760
    %v2249 = vsub.f32 %v1901, %v2248
    %v2250 = vand.u32 %v2249, 4294901760
    %2251 = vmatmul.mubr.f32.gmra.mrb[0].mxu0 %v2250
    %v2252 = vpop.f32.mrb[0].mxu0
    %v2253 = vadd.f32 %v2169, %v2252
    %v2254 = vpop.f32.mrb[0].mxu0
    %2255 = vmatprep.mubr.f32.mxu0 0.0
    %v2256 = vand.u32 %v1904, 4294901760
    %v2257 = vsub.f32 %v1904, %v2256
    %v2258 = vand.u32 %v2257, 4294901760
    %2259 = vmatmul.mubr.f32.gmra.mrb[0].mxu0 %v2258
    %v2260 = vpop.f32.mrb[0].mxu0
    %v2261 = vadd.f32 %v2176, %v2260
    %v2262 = vpop.f32.mrb[0].mxu0
    %2263 = vdwg.mxu0
    %2264 = vmatprep.subr.mxu0 0.0
    %v2265 = vand.u32 %v1888, 4294901760
    %v2266 = vsub.f32 %v1888, %v2265
    %v2267 = vand.u32 %v2266, 4294901760
    %2268 = vmatpush1.msra.mxu0 %v2267
    %2269 = vmatprep.subr.mxu0 0.0
    %v2270 = vand.u32 %v1889, 4294901760
    %v2271 = vsub.f32 %v1889, %v2270
    %v2272 = vand.u32 %v2271, 4294901760
    %2273 = vmatpush1.msra.mxu0 %v2272
    %2274 = vmatprep.subr.mxu0 0.0
    %v2275 = vand.u32 %v1890, 4294901760
    %v2276 = vsub.f32 %v1890, %v2275
    %v2277 = vand.u32 %v2276, 4294901760
    %2278 = vmatpush1.msra.mxu0 %v2277
    %2279 = vmatprep.subr.mxu0 0.0
    %v2280 = vand.u32 %v1891, 4294901760
    %v2281 = vsub.f32 %v1891, %v2280
    %v2282 = vand.u32 %v2281, 4294901760
    %2283 = vmatpush1.msra.mxu0 %v2282
    %2284 = vmatprep.subr.mxu0 0.0
    %2285 = vmatpush1.msra.mxu0 0.0
    %2286 = vmatprep.subr.mxu0 0.0
    %2287 = vmatpush1.msra.mxu0 0.0
    %2288 = vmatprep.subr.mxu0 0.0
    %2289 = vmatpush1.msra.mxu0 0.0
    %2290 = vmatprep.subr.mxu0 0.0
    %2291 = vmatpush1.msra.mxu0 0.0
    %2292 = vmatprep.subr.mxu0 0.0
    %2293 = vmatpush1.msra.mxu0 0.0
    %2294 = vmatprep.subr.mxu0 0.0
    %2295 = vmatpush1.msra.mxu0 0.0
    %2296 = vmatprep.subr.mxu0 0.0
    %2297 = vmatpush1.msra.mxu0 0.0
    %2298 = vmatprep.subr.mxu0 0.0
    %2299 = vmatpush1.msra.mxu0 0.0
    %2300 = vmatprep.subr.mxu0 0.0
    %2301 = vmatpush1.msra.mxu0 0.0
    %2302 = vmatprep.subr.mxu0 0.0
    %2303 = vmatpush1.msra.mxu0 0.0
    %2304 = vmatprep.subr.mxu0 0.0
    %2305 = vmatpush1.msra.mxu0 0.0
    %2306 = vmatprep.subr.mxu0 0.0
    %2307 = vmatpush1.msra.mxu0 0.0
    %2308 = vmatprep.subr.mxu0 0.0
    %2309 = vmatpush1.msra.mxu0 0.0
    %2310 = vmatprep.subr.mxu0 0.0
    %2311 = vmatpush1.msra.mxu0 0.0
    %2312 = vmatprep.subr.mxu0 0.0
    %2313 = vmatpush1.msra.mxu0 0.0
    %2314 = vmatprep.subr.mxu0 0.0
    %2315 = vmatpush1.msra.mxu0 0.0
    %2316 = vmatprep.subr.mxu0 0.0
    %2317 = vmatpush1.msra.mxu0 0.0
    %2318 = vmatprep.subr.mxu0 0.0
    %2319 = vmatpush1.msra.mxu0 0.0
    %2320 = vmatprep.subr.mxu0 0.0
    %2321 = vmatpush1.msra.mxu0 0.0
    %2322 = vmatprep.subr.mxu0 0.0
    %2323 = vmatpush1.msra.mxu0 0.0
    %2324 = vmatprep.subr.mxu0 0.0
    %2325 = vmatpush1.msra.mxu0 0.0
    %2326 = vmatprep.subr.mxu0 0.0
    %2327 = vmatpush1.msra.mxu0 0.0
    %2328 = vmatprep.subr.mxu0 0.0
    %2329 = vmatpush1.msra.mxu0 0.0
    %2330 = vmatprep.subr.mxu0 0.0
    %2331 = vmatpush1.msra.mxu0 0.0
    %2332 = vmatprep.subr.mxu0 0.0
    %2333 = vmatpush1.msra.mxu0 0.0
    %2334 = vmatprep.subr.mxu0 0.0
    %2335 = vmatpush1.msra.mxu0 0.0
    %2336 = vmatprep.subr.mxu0 0.0
    %2337 = vmatpush1.msra.mxu0 0.0
    %2338 = vmatprep.subr.mxu0 0.0
    %2339 = vmatpush1.msra.mxu0 0.0
    %2340 = vmatprep.mubr.f32.mxu0 0.0
    %v2341 = vand.u32 %v1901, 4294901760
    %2342 = vmatmul.mubr.f32.gmra.mrb[0].mxu0 %v2341
    %v2343 = vpop.f32.mrb[0].mxu0
    %v2344 = vadd.f32 %v2253, %v2343
    %v2345 = vpop.f32.mrb[0].mxu0
    %2346 = vmatprep.mubr.f32.mxu0 0.0
    %v2347 = vand.u32 %v1904, 4294901760
    %2348 = vmatmul.mubr.f32.gmra.mrb[0].mxu0 %v2347
    %v2349 = vpop.f32.mrb[0].mxu0
    %v2350 = vadd.f32 %v2261, %v2349
    %v2351 = vpop.f32.mrb[0].mxu0
    %2352 = vdwg.mxu0
    %2353 = vmatprep.subr.mxu0 0.0
    %v2354 = vand.u32 %v1888, 4294901760
    %2355 = vmatpush1.msra.mxu0 %v2354
    %2356 = vmatprep.subr.mxu0 0.0
    %v2357 = vand.u32 %v1889, 4294901760
    %2358 = vmatpush1.msra.mxu0 %v2357
    %2359 = vmatprep.subr.mxu0 0.0
    %v2360 = vand.u32 %v1890, 4294901760
    %2361 = vmatpush1.msra.mxu0 %v2360
    %2362 = vmatprep.subr.mxu0 0.0
    %v2363 = vand.u32 %v1891, 4294901760
    %2364 = vmatpush1.msra.mxu0 %v2363
    %2365 = vmatprep.subr.mxu0 0.0
    %2366 = vmatpush1.msra.mxu0 0.0
    %2367 = vmatprep.subr.mxu0 0.0
    %2368 = vmatpush1.msra.mxu0 0.0
    %2369 = vmatprep.subr.mxu0 0.0
    %2370 = vmatpush1.msra.mxu0 0.0
    %2371 = vmatprep.subr.mxu0 0.0
    %2372 = vmatpush1.msra.mxu0 0.0
    %2373 = vmatprep.subr.mxu0 0.0
    %2374 = vmatpush1.msra.mxu0 0.0
    %2375 = vmatprep.subr.mxu0 0.0
    %2376 = vmatpush1.msra.mxu0 0.0
    %2377 = vmatprep.subr.mxu0 0.0
    %2378 = vmatpush1.msra.mxu0 0.0
    %2379 = vmatprep.subr.mxu0 0.0
    %2380 = vmatpush1.msra.mxu0 0.0
    %2381 = vmatprep.subr.mxu0 0.0
    %2382 = vmatpush1.msra.mxu0 0.0
    %2383 = vmatprep.subr.mxu0 0.0
    %2384 = vmatpush1.msra.mxu0 0.0
    %2385 = vmatprep.subr.mxu0 0.0
    %2386 = vmatpush1.msra.mxu0 0.0
    %2387 = vmatprep.subr.mxu0 0.0
    %2388 = vmatpush1.msra.mxu0 0.0
    %2389 = vmatprep.subr.mxu0 0.0
    %2390 = vmatpush1.msra.mxu0 0.0
    %2391 = vmatprep.subr.mxu0 0.0
    %2392 = vmatpush1.msra.mxu0 0.0
    %2393 = vmatprep.subr.mxu0 0.0
    %2394 = vmatpush1.msra.mxu0 0.0
    %2395 = vmatprep.subr.mxu0 0.0
    %2396 = vmatpush1.msra.mxu0 0.0
    %2397 = vmatprep.subr.mxu0 0.0
    %2398 = vmatpush1.msra.mxu0 0.0
    %2399 = vmatprep.subr.mxu0 0.0
    %2400 = vmatpush1.msra.mxu0 0.0
    %2401 = vmatprep.subr.mxu0 0.0
    %2402 = vmatpush1.msra.mxu0 0.0
    %2403 = vmatprep.subr.mxu0 0.0
    %2404 = vmatpush1.msra.mxu0 0.0
    %2405 = vmatprep.subr.mxu0 0.0
    %2406 = vmatpush1.msra.mxu0 0.0
    %2407 = vmatprep.subr.mxu0 0.0
    %2408 = vmatpush1.msra.mxu0 0.0
    %2409 = vmatprep.subr.mxu0 0.0
    %2410 = vmatpush1.msra.mxu0 0.0
    %2411 = vmatprep.subr.mxu0 0.0
    %2412 = vmatpush1.msra.mxu0 0.0
    %2413 = vmatprep.subr.mxu0 0.0
    %2414 = vmatpush1.msra.mxu0 0.0
    %2415 = vmatprep.subr.mxu0 0.0
    %2416 = vmatpush1.msra.mxu0 0.0
    %2417 = vmatprep.subr.mxu0 0.0
    %2418 = vmatpush1.msra.mxu0 0.0
    %2419 = vmatprep.subr.mxu0 0.0
    %2420 = vmatpush1.msra.mxu0 0.0
    %2421 = vmatprep.mubr.f32.mxu0 0.0
    %v2422 = vand.u32 %v1901, 4294901760
    %2423 = vmatmul.mubr.f32.gmra.mrb[0].mxu0 %v2422
    %v2424 = vpop.f32.mrb[0].mxu0
    %v2425 = vadd.f32 %v2344, %v2424
    %v2426 = vpop.f32.mrb[0].mxu0
    %2427 = vmatprep.mubr.f32.mxu0 0.0
    %v2428 = vand.u32 %v1904, 4294901760
    %2429 = vmatmul.mubr.f32.gmra.mrb[0].mxu0 %v2428
    %v2430 = vpop.f32.mrb[0].mxu0
    %v2431 = vadd.f32 %v2350, %v2430
    %v2432 = vpop.f32.mrb[0].mxu0
    %2433 = vdwg.mxu0
    %v2434 = vmax.f32 %v2425, 0.0
    %v2435 = vmax.f32 %v2431, 0.0
    %v2436 = vld [vmem:[%s8] sm:$0xff]
    %v2437 = vld [vmem:[%s8 + $0x8] sm:$0xff]
    %v2438 = vadd.f32 %v2434, %v2436
    %v2439 = vadd.f32 %v2435, %v2437
    %v2440 = vld [vmem:[%s10] sm:$0x1]
    %v2441 = vld [vmem:[%s10 + $0x1] sm:$0x1]
    %v2442 = vld [vmem:[%s10 + $0x2] sm:$0x1]
    %v2443 = vld [vmem:[%s10 + $0x3] sm:$0x1]
    %v2444 = vld [vmem:[%s9] sm:$0xff]
    %v2445 = vld [vmem:[%s9 + $0x8] sm:$0xff]
    %v2446 = vld [vmem:[%s9 + $0x10] sm:$0xff]
    %v2447 = vld [vmem:[%s9 + $0x18] sm:$0xff]
    %v2448 = vld [vmem:[%s9 + $0x20] sm:$0xff]
    %v2449 = vld [vmem:[%s9 + $0x28] sm:$0xff]
    %v2450 = vld [vmem:[%s9 + $0x30] sm:$0xff]
    %v2451 = vld [vmem:[%s9 + $0x38] sm:$0xff]
    %v2452 = vld [vmem:[%s11] sm:$0xff]
    %v2453 = vld [vmem:[%s11 + $0x8] sm:$0xff]
    %v2454 = vld [vmem:[%s11 + $0x10] sm:$0xff]
    %v2455 = vld [vmem:[%s11 + $0x18] sm:$0xff]
    %v2456 = vld [vmem:[%s12] sm:$0x1]
    %v2458 = vlaneseq
    %v2459 = vshrl.u32 %v2458, 7
    %v2460 = vsub.s32 0, %v2459
    %v2461 = vrot.slane %v2456, %v2460
    %v2464 = vsel %vm1899, %v2438, 0
    %v2467 = vsel %vm1899, %v2439, 0
    %2469 = vmatprep.subr.mxu0 0.0
    %v2470 = vand.u32 %v2452, 4294901760
    %2471 = vmatpush1.msra.mxu0 %v2470
    %2472 = vmatprep.subr.mxu0 0.0
    %v2473 = vand.u32 %v2453, 4294901760
    %2474 = vmatpush1.msra.mxu0 %v2473
    %2475 = vmatprep.subr.mxu0 0.0
    %v2476 = vand.u32 %v2454, 4294901760
    %2477 = vmatpush1.msra.mxu0 %v2476
    %2478 = vmatprep.subr.mxu0 0.0
    %v2479 = vand.u32 %v2455, 4294901760
    %2480 = vmatpush1.msra.mxu0 %v2479
    %2481 = vmatprep.subr.mxu0 0.0
    %2482 = vmatpush1.msra.mxu0 0.0
    %2483 = vmatprep.subr.mxu0 0.0
    %2484 = vmatpush1.msra.mxu0 0.0
    %2485 = vmatprep.subr.mxu0 0.0
    %2486 = vmatpush1.msra.mxu0 0.0
    %2487 = vmatprep.subr.mxu0 0.0
    %2488 = vmatpush1.msra.mxu0 0.0
    %2489 = vmatprep.subr.mxu0 0.0
    %2490 = vmatpush1.msra.mxu0 0.0
    %2491 = vmatprep.subr.mxu0 0.0
    %2492 = vmatpush1.msra.mxu0 0.0
    %2493 = vmatprep.subr.mxu0 0.0
    %2494 = vmatpush1.msra.mxu0 0.0
    %2495 = vmatprep.subr.mxu0 0.0
    %2496 = vmatpush1.msra.mxu0 0.0
    %2497 = vmatprep.subr.mxu0 0.0
    %2498 = vmatpush1.msra.mxu0 0.0
    %2499 = vmatprep.subr.mxu0 0.0
    %2500 = vmatpush1.msra.mxu0 0.0
    %2501 = vmatprep.subr.mxu0 0.0
    %2502 = vmatpush1.msra.mxu0 0.0
    %2503 = vmatprep.subr.mxu0 0.0
    %2504 = vmatpush1.msra.mxu0 0.0
    %2505 = vmatprep.subr.mxu0 0.0
    %2506 = vmatpush1.msra.mxu0 0.0
    %2507 = vmatprep.subr.mxu0 0.0
    %2508 = vmatpush1.msra.mxu0 0.0
    %2509 = vmatprep.subr.mxu0 0.0
    %2510 = vmatpush1.msra.mxu0 0.0
    %2511 = vmatprep.subr.mxu0 0.0
    %2512 = vmatpush1.msra.mxu0 0.0
    %2513 = vmatprep.subr.mxu0 0.0
    %2514 = vmatpush1.msra.mxu0 0.0
    %2515 = vmatprep.subr.mxu0 0.0
    %2516 = vmatpush1.msra.mxu0 0.0
    %2517 = vmatprep.subr.mxu0 0.0
    %2518 = vmatpush1.msra.mxu0 0.0
    %2519 = vmatprep.subr.mxu0 0.0
    %2520 = vmatpush1.msra.mxu0 0.0
    %2521 = vmatprep.subr.mxu0 0.0
    %2522 = vmatpush1.msra.mxu0 0.0
    %2523 = vmatprep.subr.mxu0 0.0
    %2524 = vmatpush1.msra.mxu0 0.0
    %2525 = vmatprep.subr.mxu0 0.0
    %2526 = vmatpush1.msra.mxu0 0.0
    %2527 = vmatprep.subr.mxu0 0.0
    %2528 = vmatpush1.msra.mxu0 0.0
    %2529 = vmatprep.subr.mxu0 0.0
    %2530 = vmatpush1.msra.mxu0 0.0
    %2531 = vmatprep.subr.mxu0 0.0
    %2532 = vmatpush1.msra.mxu0 0.0
    %2533 = vmatprep.subr.mxu0 0.0
    %2534 = vmatpush1.msra.mxu0 0.0
    %2535 = vmatprep.subr.mxu0 0.0
    %2536 = vmatpush1.msra.mxu0 0.0
    %2537 = vmatprep.mubr.f32.mxu0 0.0
    %v2538 = vand.u32 %v2464, 4294901760
    %v2539 = vsub.f32 %v2464, %v2538
    %v2540 = vand.u32 %v2539, 4294901760
    %v2541 = vsub.f32 %v2539, %v2540
    %v2542 = vand.u32 %v2541, 4294901760
    %2543 = vmatmul.mubr.f32.gmra.mrb[0].mxu0 %v2542
    %v2544 = vpop.f32.mrb[0].mxu0
    %v2545 = vadd.f32 %v2461, %v2544
    %v2546 = vpop.f32.mrb[0].mxu0
    %2547 = vmatprep.mubr.f32.mxu0 0.0
    %v2548 = vand.u32 %v2467, 4294901760
    %v2549 = vsub.f32 %v2467, %v2548
    %v2550 = vand.u32 %v2549, 4294901760
    %v2551 = vsub.f32 %v2549, %v2550
    %v2552 = vand.u32 %v2551, 4294901760
    %2553 = vmatmul.mubr.f32.gmra.mrb[0].mxu0 %v2552
    %v2554 = vpop.f32.mrb[0].mxu0
    %v2555 = vadd.f32 %v2461, %v2554
    %v2556 = vpop.f32.mrb[0].mxu0
    %2557 = vdwg.mxu0
    %2558 = vmatprep.subr.mxu0 0.0
    %v2559 = vand.u32 %v2452, 4294901760
    %v2560 = vsub.f32 %v2452, %v2559
    %v2561 = vand.u32 %v2560, 4294901760
    %v2562 = vsub.f32 %v2560, %v2561
    %v2563 = vand.u32 %v2562, 4294901760
    %2564 = vmatpush1.msra.mxu0 %v2563
    %2565 = vmatprep.subr.mxu0 0.0
    %v2566 = vand.u32 %v2453, 4294901760
    %v2567 = vsub.f32 %v2453, %v2566
    %v2568 = vand.u32 %v2567, 4294901760
    %v2569 = vsub.f32 %v2567, %v2568
    %v2570 = vand.u32 %v2569, 4294901760
    %2571 = vmatpush1.msra.mxu0 %v2570
    %2572 = vmatprep.subr.mxu0 0.0
    %v2573 = vand.u32 %v2454, 4294901760
    %v2574 = vsub.f32 %v2454, %v2573
    %v2575 = vand.u32 %v2574, 4294901760
    %v2576 = vsub.f32 %v2574, %v2575
    %v2577 = vand.u32 %v2576, 4294901760
    %2578 = vmatpush1.msra.mxu0 %v2577
    %2579 = vmatprep.subr.mxu0 0.0
    %v2580 = vand.u32 %v2455, 4294901760
    %v2581 = vsub.f32 %v2455, %v2580
    %v2582 = vand.u32 %v2581, 4294901760
    %v2583 = vsub.f32 %v2581, %v2582
    %v2584 = vand.u32 %v2583, 4294901760
    %2585 = vmatpush1.msra.mxu0 %v2584
    %2586 = vmatprep.subr.mxu0 0.0
    %2587 = vmatpush1.msra.mxu0 0.0
    %2588 = vmatprep.subr.mxu0 0.0
    %2589 = vmatpush1.msra.mxu0 0.0
    %2590 = vmatprep.subr.mxu0 0.0
    %2591 = vmatpush1.msra.mxu0 0.0
    %2592 = vmatprep.subr.mxu0 0.0
    %2593 = vmatpush1.msra.mxu0 0.0
    %2594 = vmatprep.subr.mxu0 0.0
    %2595 = vmatpush1.msra.mxu0 0.0
    %2596 = vmatprep.subr.mxu0 0.0
    %2597 = vmatpush1.msra.mxu0 0.0
    %2598 = vmatprep.subr.mxu0 0.0
    %2599 = vmatpush1.msra.mxu0 0.0
    %2600 = vmatprep.subr.mxu0 0.0
    %2601 = vmatpush1.msra.mxu0 0.0
    %2602 = vmatprep.subr.mxu0 0.0
    %2603 = vmatpush1.msra.mxu0 0.0
    %2604 = vmatprep.subr.mxu0 0.0
    %2605 = vmatpush1.msra.mxu0 0.0
    %2606 = vmatprep.subr.mxu0 0.0
    %2607 = vmatpush1.msra.mxu0 0.0
    %2608 = vmatprep.subr.mxu0 0.0
    %2609 = vmatpush1.msra.mxu0 0.0
    %2610 = vmatprep.subr.mxu0 0.0
    %2611 = vmatpush1.msra.mxu0 0.0
    %2612 = vmatprep.subr.mxu0 0.0
    %2613 = vmatpush1.msra.mxu0 0.0
    %2614 = vmatprep.subr.mxu0 0.0
    %2615 = vmatpush1.msra.mxu0 0.0
    %2616 = vmatprep.subr.mxu0 0.0
    %2617 = vmatpush1.msra.mxu0 0.0
    %2618 = vmatprep.subr.mxu0 0.0
    %2619 = vmatpush1.msra.mxu0 0.0
    %2620 = vmatprep.subr.mxu0 0.0
    %2621 = vmatpush1.msra.mxu0 0.0
    %2622 = vmatprep.subr.mxu0 0.0
    %2623 = vmatpush1.msra.mxu0 0.0
    %2624 = vmatprep.subr.mxu0 0.0
    %2625 = vmatpush1.msra.mxu0 0.0
    %2626 = vmatprep.subr.mxu0 0.0
    %2627 = vmatpush1.msra.mxu0 0.0
    %2628 = vmatprep.subr.mxu0 0.0
    %2629 = vmatpush1.msra.mxu0 0.0
    %2630 = vmatprep.subr.mxu0 0.0
    %2631 = vmatpush1.msra.mxu0 0.0
    %2632 = vmatprep.subr.mxu0 0.0
    %2633 = vmatpush1.msra.mxu0 0.0
    %2634 = vmatprep.subr.mxu0 0.0
    %2635 = vmatpush1.msra.mxu0 0.0
    %2636 = vmatprep.subr.mxu0 0.0
    %2637 = vmatpush1.msra.mxu0 0.0
    %2638 = vmatprep.subr.mxu0 0.0
    %2639 = vmatpush1.msra.mxu0 0.0
    %2640 = vmatprep.subr.mxu0 0.0
    %2641 = vmatpush1.msra.mxu0 0.0
    %2642 = vmatprep.mubr.f32.mxu0 0.0
    %v2643 = vand.u32 %v2464, 4294901760
    %2644 = vmatmul.mubr.f32.gmra.mrb[0].mxu0 %v2643
    %v2645 = vpop.f32.mrb[0].mxu0
    %v2646 = vadd.f32 %v2545, %v2645
    %v2647 = vpop.f32.mrb[0].mxu0
    %2648 = vmatprep.mubr.f32.mxu0 0.0
    %v2649 = vand.u32 %v2467, 4294901760
    %2650 = vmatmul.mubr.f32.gmra.mrb[0].mxu0 %v2649
    %v2651 = vpop.f32.mrb[0].mxu0
    %v2652 = vadd.f32 %v2555, %v2651
    %v2653 = vpop.f32.mrb[0].mxu0
    %2654 = vdwg.mxu0
    %2655 = vmatprep.subr.mxu0 0.0
    %v2656 = vand.u32 %v2452, 4294901760
    %v2657 = vsub.f32 %v2452, %v2656
    %2658 = vmatpush1.msra.mxu0 %v2657
    %2659 = vmatprep.subr.mxu0 0.0
    %v2660 = vand.u32 %v2453, 4294901760
    %v2661 = vsub.f32 %v2453, %v2660
    %2662 = vmatpush1.msra.mxu0 %v2661
    %2663 = vmatprep.subr.mxu0 0.0
    %v2664 = vand.u32 %v2454, 4294901760
    %v2665 = vsub.f32 %v2454, %v2664
    %2666 = vmatpush1.msra.mxu0 %v2665
    %2667 = vmatprep.subr.mxu0 0.0
    %v2668 = vand.u32 %v2455, 4294901760
    %v2669 = vsub.f32 %v2455, %v2668
    %2670 = vmatpush1.msra.mxu0 %v2669
    %2671 = vmatprep.subr.mxu0 0.0
    %2672 = vmatpush1.msra.mxu0 0.0
    %2673 = vmatprep.subr.mxu0 0.0
    %2674 = vmatpush1.msra.mxu0 0.0
    %2675 = vmatprep.subr.mxu0 0.0
    %2676 = vmatpush1.msra.mxu0 0.0
    %2677 = vmatprep.subr.mxu0 0.0
    %2678 = vmatpush1.msra.mxu0 0.0
    %2679 = vmatprep.subr.mxu0 0.0
    %2680 = vmatpush1.msra.mxu0 0.0
    %2681 = vmatprep.subr.mxu0 0.0
    %2682 = vmatpush1.msra.mxu0 0.0
    %2683 = vmatprep.subr.mxu0 0.0
    %2684 = vmatpush1.msra.mxu0 0.0
    %2685 = vmatprep.subr.mxu0 0.0
    %2686 = vmatpush1.msra.mxu0 0.0
    %2687 = vmatprep.subr.mxu0 0.0
    %2688 = vmatpush1.msra.mxu0 0.0
    %2689 = vmatprep.subr.mxu0 0.0
    %2690 = vmatpush1.msra.mxu0 0.0
    %2691 = vmatprep.subr.mxu0 0.0
    %2692 = vmatpush1.msra.mxu0 0.0
    %2693 = vmatprep.subr.mxu0 0.0
    %2694 = vmatpush1.msra.mxu0 0.0
    %2695 = vmatprep.subr.mxu0 0.0
    %2696 = vmatpush1.msra.mxu0 0.0
    %2697 = vmatprep.subr.mxu0 0.0
    %2698 = vmatpush1.msra.mxu0 0.0
    %2699 = vmatprep.subr.mxu0 0.0
    %2700 = vmatpush1.msra.mxu0 0.0
    %2701 = vmatprep.subr.mxu0 0.0
    %2702 = vmatpush1.msra.mxu0 0.0
    %2703 = vmatprep.subr.mxu0 0.0
    %2704 = vmatpush1.msra.mxu0 0.0
    %2705 = vmatprep.subr.mxu0 0.0
    %2706 = vmatpush1.msra.mxu0 0.0
    %2707 = vmatprep.subr.mxu0 0.0
    %2708 = vmatpush1.msra.mxu0 0.0
    %2709 = vmatprep.subr.mxu0 0.0
    %2710 = vmatpush1.msra.mxu0 0.0
    %2711 = vmatprep.subr.mxu0 0.0
    %2712 = vmatpush1.msra.mxu0 0.0
    %2713 = vmatprep.subr.mxu0 0.0
    %2714 = vmatpush1.msra.mxu0 0.0
    %2715 = vmatprep.subr.mxu0 0.0
    %2716 = vmatpush1.msra.mxu0 0.0
    %2717 = vmatprep.subr.mxu0 0.0
    %2718 = vmatpush1.msra.mxu0 0.0
    %2719 = vmatprep.subr.mxu0 0.0
    %2720 = vmatpush1.msra.mxu0 0.0
    %2721 = vmatprep.subr.mxu0 0.0
    %2722 = vmatpush1.msra.mxu0 0.0
    %2723 = vmatprep.subr.mxu0 0.0
    %2724 = vmatpush1.msra.mxu0 0.0
    %2725 = vmatprep.subr.mxu0 0.0
    %2726 = vmatpush1.msra.mxu0 0.0
    %2727 = vmatprep.mubr.f32.mxu0 0.0
    %v2728 = vand.u32 %v2464, 4294901760
    %v2729 = vsub.f32 %v2464, %v2728
    %2730 = vmatmul.mubr.f32.gmra.mrb[0].mxu0 %v2729
    %v2731 = vpop.f32.mrb[0].mxu0
    %v2732 = vadd.f32 %v2646, %v2731
    %v2733 = vpop.f32.mrb[0].mxu0
    %2734 = vmatprep.mubr.f32.mxu0 0.0
    %v2735 = vand.u32 %v2467, 4294901760
    %v2736 = vsub.f32 %v2467, %v2735
    %2737 = vmatmul.mubr.f32.gmra.mrb[0].mxu0 %v2736
    %v2738 = vpop.f32.mrb[0].mxu0
    %v2739 = vadd.f32 %v2652, %v2738
    %v2740 = vpop.f32.mrb[0].mxu0
    %2741 = vdwg.mxu0
    %2742 = vmatprep.subr.mxu0 0.0
    %v2743 = vand.u32 %v2452, 4294901760
    %2744 = vmatpush1.msra.mxu0 %v2743
    %2745 = vmatprep.subr.mxu0 0.0
    %v2746 = vand.u32 %v2453, 4294901760
    %2747 = vmatpush1.msra.mxu0 %v2746
    %2748 = vmatprep.subr.mxu0 0.0
    %v2749 = vand.u32 %v2454, 4294901760
    %2750 = vmatpush1.msra.mxu0 %v2749
    %2751 = vmatprep.subr.mxu0 0.0
    %v2752 = vand.u32 %v2455, 4294901760
    %2753 = vmatpush1.msra.mxu0 %v2752
    %2754 = vmatprep.subr.mxu0 0.0
    %2755 = vmatpush1.msra.mxu0 0.0
    %2756 = vmatprep.subr.mxu0 0.0
    %2757 = vmatpush1.msra.mxu0 0.0
    %2758 = vmatprep.subr.mxu0 0.0
    %2759 = vmatpush1.msra.mxu0 0.0
    %2760 = vmatprep.subr.mxu0 0.0
    %2761 = vmatpush1.msra.mxu0 0.0
    %2762 = vmatprep.subr.mxu0 0.0
    %2763 = vmatpush1.msra.mxu0 0.0
    %2764 = vmatprep.subr.mxu0 0.0
    %2765 = vmatpush1.msra.mxu0 0.0
    %2766 = vmatprep.subr.mxu0 0.0
    %2767 = vmatpush1.msra.mxu0 0.0
    %2768 = vmatprep.subr.mxu0 0.0
    %2769 = vmatpush1.msra.mxu0 0.0
    %2770 = vmatprep.subr.mxu0 0.0
    %2771 = vmatpush1.msra.mxu0 0.0
    %2772 = vmatprep.subr.mxu0 0.0
    %2773 = vmatpush1.msra.mxu0 0.0
    %2774 = vmatprep.subr.mxu0 0.0
    %2775 = vmatpush1.msra.mxu0 0.0
    %2776 = vmatprep.subr.mxu0 0.0
    %2777 = vmatpush1.msra.mxu0 0.0
    %2778 = vmatprep.subr.mxu0 0.0
    %2779 = vmatpush1.msra.mxu0 0.0
    %2780 = vmatprep.subr.mxu0 0.0
    %2781 = vmatpush1.msra.mxu0 0.0
    %2782 = vmatprep.subr.mxu0 0.0
    %2783 = vmatpush1.msra.mxu0 0.0
    %2784 = vmatprep.subr.mxu0 0.0
    %2785 = vmatpush1.msra.mxu0 0.0
    %2786 = vmatprep.subr.mxu0 0.0
    %2787 = vmatpush1.msra.mxu0 0.0
    %2788 = vmatprep.subr.mxu0 0.0
    %2789 = vmatpush1.msra.mxu0 0.0
    %2790 = vmatprep.subr.mxu0 0.0
    %2791 = vmatpush1.msra.mxu0 0.0
    %2792 = vmatprep.subr.mxu0 0.0
    %2793 = vmatpush1.msra.mxu0 0.0
    %2794 = vmatprep.subr.mxu0 0.0
    %2795 = vmatpush1.msra.mxu0 0.0
    %2796 = vmatprep.subr.mxu0 0.0
    %2797 = vmatpush1.msra.mxu0 0.0
    %2798 = vmatprep.subr.mxu0 0.0
    %2799 = vmatpush1.msra.mxu0 0.0
    %2800 = vmatprep.subr.mxu0 0.0
    %2801 = vmatpush1.msra.mxu0 0.0
    %2802 = vmatprep.subr.mxu0 0.0
    %2803 = vmatpush1.msra.mxu0 0.0
    %2804 = vmatprep.subr.mxu0 0.0
    %2805 = vmatpush1.msra.mxu0 0.0
    %2806 = vmatprep.subr.mxu0 0.0
    %2807 = vmatpush1.msra.mxu0 0.0
    %2808 = vmatprep.subr.mxu0 0.0
    %2809 = vmatpush1.msra.mxu0 0.0
    %2810 = vmatprep.mubr.f32.mxu0 0.0
    %v2811 = vand.u32 %v2464, 4294901760
    %v2812 = vsub.f32 %v2464, %v2811
    %v2813 = vand.u32 %v2812, 4294901760
    %2814 = vmatmul.mubr.f32.gmra.mrb[0].mxu0 %v2813
    %v2815 = vpop.f32.mrb[0].mxu0
    %v2816 = vadd.f32 %v2732, %v2815
    %v2817 = vpop.f32.mrb[0].mxu0
    %2818 = vmatprep.mubr.f32.mxu0 0.0
    %v2819 = vand.u32 %v2467, 4294901760
    %v2820 = vsub.f32 %v2467, %v2819
    %v2821 = vand.u32 %v2820, 4294901760
    %2822 = vmatmul.mubr.f32.gmra.mrb[0].mxu0 %v2821
    %v2823 = vpop.f32.mrb[0].mxu0
    %v2824 = vadd.f32 %v2739, %v2823
    %v2825 = vpop.f32.mrb[0].mxu0
    %2826 = vdwg.mxu0
    %2827 = vmatprep.subr.mxu0 0.0
    %v2828 = vand.u32 %v2452, 4294901760
    %v2829 = vsub.f32 %v2452, %v2828
    %v2830 = vand.u32 %v2829, 4294901760
    %2831 = vmatpush1.msra.mxu0 %v2830
    %2832 = vmatprep.subr.mxu0 0.0
    %v2833 = vand.u32 %v2453, 4294901760
    %v2834 = vsub.f32 %v2453, %v2833
    %v2835 = vand.u32 %v2834, 4294901760
    %2836 = vmatpush1.msra.mxu0 %v2835
    %2837 = vmatprep.subr.mxu0 0.0
    %v2838 = vand.u32 %v2454, 4294901760
    %v2839 = vsub.f32 %v2454, %v2838
    %v2840 = vand.u32 %v2839, 4294901760
    %2841 = vmatpush1.msra.mxu0 %v2840
    %2842 = vmatprep.subr.mxu0 0.0
    %v2843 = vand.u32 %v2455, 4294901760
    %v2844 = vsub.f32 %v2455, %v2843
    %v2845 = vand.u32 %v2844, 4294901760
    %2846 = vmatpush1.msra.mxu0 %v2845
    %2847 = vmatprep.subr.mxu0 0.0
    %2848 = vmatpush1.msra.mxu0 0.0
    %2849 = vmatprep.subr.mxu0 0.0
    %2850 = vmatpush1.msra.mxu0 0.0
    %2851 = vmatprep.subr.mxu0 0.0
    %2852 = vmatpush1.msra.mxu0 0.0
    %2853 = vmatprep.subr.mxu0 0.0
    %2854 = vmatpush1.msra.mxu0 0.0
    %2855 = vmatprep.subr.mxu0 0.0
    %2856 = vmatpush1.msra.mxu0 0.0
    %2857 = vmatprep.subr.mxu0 0.0
    %2858 = vmatpush1.msra.mxu0 0.0
    %2859 = vmatprep.subr.mxu0 0.0
    %2860 = vmatpush1.msra.mxu0 0.0
    %2861 = vmatprep.subr.mxu0 0.0
    %2862 = vmatpush1.msra.mxu0 0.0
    %2863 = vmatprep.subr.mxu0 0.0
    %2864 = vmatpush1.msra.mxu0 0.0
    %2865 = vmatprep.subr.mxu0 0.0
    %2866 = vmatpush1.msra.mxu0 0.0
    %2867 = vmatprep.subr.mxu0 0.0
    %2868 = vmatpush1.msra.mxu0 0.0
    %2869 = vmatprep.subr.mxu0 0.0
    %2870 = vmatpush1.msra.mxu0 0.0
    %2871 = vmatprep.subr.mxu0 0.0
    %2872 = vmatpush1.msra.mxu0 0.0
    %2873 = vmatprep.subr.mxu0 0.0
    %2874 = vmatpush1.msra.mxu0 0.0
    %2875 = vmatprep.subr.mxu0 0.0
    %2876 = vmatpush1.msra.mxu0 0.0
    %2877 = vmatprep.subr.mxu0 0.0
    %2878 = vmatpush1.msra.mxu0 0.0
    %2879 = vmatprep.subr.mxu0 0.0
    %2880 = vmatpush1.msra.mxu0 0.0
    %2881 = vmatprep.subr.mxu0 0.0
    %2882 = vmatpush1.msra.mxu0 0.0
    %2883 = vmatprep.subr.mxu0 0.0
    %2884 = vmatpush1.msra.mxu0 0.0
    %2885 = vmatprep.subr.mxu0 0.0
    %2886 = vmatpush1.msra.mxu0 0.0
    %2887 = vmatprep.subr.mxu0 0.0
    %2888 = vmatpush1.msra.mxu0 0.0
    %2889 = vmatprep.subr.mxu0 0.0
    %2890 = vmatpush1.msra.mxu0 0.0
    %2891 = vmatprep.subr.mxu0 0.0
    %2892 = vmatpush1.msra.mxu0 0.0
    %2893 = vmatprep.subr.mxu0 0.0
    %2894 = vmatpush1.msra.mxu0 0.0
    %2895 = vmatprep.subr.mxu0 0.0
    %2896 = vmatpush1.msra.mxu0 0.0
    %2897 = vmatprep.subr.mxu0 0.0
    %2898 = vmatpush1.msra.mxu0 0.0
    %2899 = vmatprep.subr.mxu0 0.0
    %2900 = vmatpush1.msra.mxu0 0.0
    %2901 = vmatprep.subr.mxu0 0.0
    %2902 = vmatpush1.msra.mxu0 0.0
    %2903 = vmatprep.mubr.f32.mxu0 0.0
    %v2904 = vand.u32 %v2464, 4294901760
    %2905 = vmatmul.mubr.f32.gmra.mrb[0].mxu0 %v2904
    %v2906 = vpop.f32.mrb[0].mxu0
    %v2907 = vadd.f32 %v2816, %v2906
    %v2908 = vpop.f32.mrb[0].mxu0
    %2909 = vmatprep.mubr.f32.mxu0 0.0
    %v2910 = vand.u32 %v2467, 4294901760
    %2911 = vmatmul.mubr.f32.gmra.mrb[0].mxu0 %v2910
    %v2912 = vpop.f32.mrb[0].mxu0
    %v2913 = vadd.f32 %v2824, %v2912
    %v2914 = vpop.f32.mrb[0].mxu0
    %2915 = vdwg.mxu0
    %2916 = vmatprep.subr.mxu0 0.0
    %v2917 = vand.u32 %v2452, 4294901760
    %2918 = vmatpush1.msra.mxu0 %v2917
    %2919 = vmatprep.subr.mxu0 0.0
    %v2920 = vand.u32 %v2453, 4294901760
    %2921 = vmatpush1.msra.mxu0 %v2920
    %2922 = vmatprep.subr.mxu0 0.0
    %v2923 = vand.u32 %v2454, 4294901760
    %2924 = vmatpush1.msra.mxu0 %v2923
    %2925 = vmatprep.subr.mxu0 0.0
    %v2926 = vand.u32 %v2455, 4294901760
    %2927 = vmatpush1.msra.mxu0 %v2926
    %2928 = vmatprep.subr.mxu0 0.0
    %2929 = vmatpush1.msra.mxu0 0.0
    %2930 = vmatprep.subr.mxu0 0.0
    %2931 = vmatpush1.msra.mxu0 0.0
    %2932 = vmatprep.subr.mxu0 0.0
    %2933 = vmatpush1.msra.mxu0 0.0
    %2934 = vmatprep.subr.mxu0 0.0
    %2935 = vmatpush1.msra.mxu0 0.0
    %2936 = vmatprep.subr.mxu0 0.0
    %2937 = vmatpush1.msra.mxu0 0.0
    %2938 = vmatprep.subr.mxu0 0.0
    %2939 = vmatpush1.msra.mxu0 0.0
    %2940 = vmatprep.subr.mxu0 0.0
    %2941 = vmatpush1.msra.mxu0 0.0
    %2942 = vmatprep.subr.mxu0 0.0
    %2943 = vmatpush1.msra.mxu0 0.0
    %2944 = vmatprep.subr.mxu0 0.0
    %2945 = vmatpush1.msra.mxu0 0.0
    %2946 = vmatprep.subr.mxu0 0.0
    %2947 = vmatpush1.msra.mxu0 0.0
    %2948 = vmatprep.subr.mxu0 0.0
    %2949 = vmatpush1.msra.mxu0 0.0
    %2950 = vmatprep.subr.mxu0 0.0
    %2951 = vmatpush1.msra.mxu0 0.0
    %2952 = vmatprep.subr.mxu0 0.0
    %2953 = vmatpush1.msra.mxu0 0.0
    %2954 = vmatprep.subr.mxu0 0.0
    %2955 = vmatpush1.msra.mxu0 0.0
    %2956 = vmatprep.subr.mxu0 0.0
    %2957 = vmatpush1.msra.mxu0 0.0
    %2958 = vmatprep.subr.mxu0 0.0
    %2959 = vmatpush1.msra.mxu0 0.0
    %2960 = vmatprep.subr.mxu0 0.0
    %2961 = vmatpush1.msra.mxu0 0.0
    %2962 = vmatprep.subr.mxu0 0.0
    %2963 = vmatpush1.msra.mxu0 0.0
    %2964 = vmatprep.subr.mxu0 0.0
    %2965 = vmatpush1.msra.mxu0 0.0
    %2966 = vmatprep.subr.mxu0 0.0
    %2967 = vmatpush1.msra.mxu0 0.0
    %2968 = vmatprep.subr.mxu0 0.0
    %2969 = vmatpush1.msra.mxu0 0.0
    %2970 = vmatprep.subr.mxu0 0.0
    %2971 = vmatpush1.msra.mxu0 0.0
    %2972 = vmatprep.subr.mxu0 0.0
    %2973 = vmatpush1.msra.mxu0 0.0
    %2974 = vmatprep.subr.mxu0 0.0
    %2975 = vmatpush1.msra.mxu0 0.0
    %2976 = vmatprep.subr.mxu0 0.0
    %2977 = vmatpush1.msra.mxu0 0.0
    %2978 = vmatprep.subr.mxu0 0.0
    %2979 = vmatpush1.msra.mxu0 0.0
    %2980 = vmatprep.subr.mxu0 0.0
    %2981 = vmatpush1.msra.mxu0 0.0
    %2982 = vmatprep.subr.mxu0 0.0
    %2983 = vmatpush1.msra.mxu0 0.0
    %2984 = vmatprep.mubr.f32.mxu0 0.0
    %v2985 = vand.u32 %v2464, 4294901760
    %2986 = vmatmul.mubr.f32.gmra.mrb[0].mxu0 %v2985
    %v2987 = vpop.f32.mrb[0].mxu0
    %v2988 = vadd.f32 %v2907, %v2987
    %v2989 = vpop.f32.mrb[0].mxu0
    %2990 = vmatprep.mubr.f32.mxu0 0.0
    %v2991 = vand.u32 %v2467, 4294901760
    %2992 = vmatmul.mubr.f32.gmra.mrb[0].mxu0 %v2991
    %v2993 = vpop.f32.mrb[0].mxu0
    %v2994 = vadd.f32 %v2913, %v2993
    %v2995 = vpop.f32.mrb[0].mxu0
    %2996 = vdwg.mxu0
    %v2998 = vlaneseq
    %v2999 = vshrl.u32 %v2998, 7
    %v3000 = vsub.s32 0, %v2999
    %v3001 = vrot.slane %v2440, %v3000
    %v3003 = vmul.f32 %v2988, %v3001
    %v3004 = vmul.f32 %v2994, %v3001
    %v3006 = vlaneseq
    %v3007 = vshrl.u32 %v3006, 7
    %v3008 = vsub.s32 0, %v3007
    %v3009 = vrot.slane %v2441, %v3008
    %v3011 = vmul.f32 %v2988, %v3009
    %v3012 = vmul.f32 %v2994, %v3009
    %v3014 = vlaneseq
    %v3015 = vshrl.u32 %v3014, 7
    %v3016 = vsub.s32 0, %v3015
    %v3017 = vrot.slane %v2442, %v3016
    %v3019 = vmul.f32 %v2988, %v3017
    %v3020 = vmul.f32 %v2994, %v3017
    %v3022 = vlaneseq
    %v3023 = vshrl.u32 %v3022, 7
    %v3024 = vsub.s32 0, %v3023
    %v3025 = vrot.slane %v2443, %v3024
    %v3027 = vmul.f32 %v2988, %v3025
    %v3028 = vmul.f32 %v2994, %v3025
    %3031 = vrot.lane.b32.xlu0 %v2988, 96
    %v3032 = vpop.permute.xlu0 %3031
    %3033 = vrot.lane.b32.xlu0 %v2994, 96
    %v3034 = vpop.permute.xlu0 %3033
    %v3036 = vsel %vm1899, %v3003, 0
    %v3039 = vsel %vm1899, %v3004, 0
    %v3042 = vsel %vm1899, %v3011, 0
    %v3045 = vsel %vm1899, %v3012, 0
    %v3048 = vsel %vm1899, %v3019, 0
    %v3051 = vsel %vm1899, %v3020, 0
    %v3054 = vsel %vm1899, %v3027, 0
    %v3057 = vsel %vm1899, %v3028, 0
    %v3059 = vsel %vm1899, %v3032, 0
    %v3061 = vsel %vm1899, %v3034, 0
    %3063 = vmatprep.subr.mxu0 0.0
    %v3064 = vand.u32 %v3059, 4294901760
    %3065 = vmatpush1.xpose.msra.mxu0 %v3064
    %3066 = vmatprep.subr.mxu0 0.0
    %v3067 = vand.u32 %v3061, 4294901760
    %3068 = vmatpush1.xpose.msra.mxu0 %v3067
    %3069 = vmatprep.subr.mxu0 0.0
    %3070 = vmatpush1.xpose.msra.mxu0 0.0
    %3071 = vmatprep.subr.mxu0 0.0
    %3072 = vmatpush1.xpose.msra.mxu0 0.0
    %3073 = vmatprep.subr.mxu0 0.0
    %3074 = vmatpush1.xpose.msra.mxu0 0.0
    %3075 = vmatprep.subr.mxu0 0.0
    %3076 = vmatpush1.xpose.msra.mxu0 0.0
    %3077 = vmatprep.subr.mxu0 0.0
    %3078 = vmatpush1.xpose.msra.mxu0 0.0
    %3079 = vmatprep.subr.mxu0 0.0
    %3080 = vmatpush1.xpose.msra.mxu0 0.0
    %3081 = vmatprep.subr.mxu0 0.0
    %3082 = vmatpush1.xpose.msra.mxu0 0.0
    %3083 = vmatprep.subr.mxu0 0.0
    %3084 = vmatpush1.xpose.msra.mxu0 0.0
    %3085 = vmatprep.subr.mxu0 0.0
    %3086 = vmatpush1.xpose.msra.mxu0 0.0
    %3087 = vmatprep.subr.mxu0 0.0
    %3088 = vmatpush1.xpose.msra.mxu0 0.0
    %3089 = vmatprep.subr.mxu0 0.0
    %3090 = vmatpush1.xpose.msra.mxu0 0.0
    %3091 = vmatprep.subr.mxu0 0.0
    %3092 = vmatpush1.xpose.msra.mxu0 0.0
    %3093 = vmatprep.subr.mxu0 0.0
    %3094 = vmatpush1.xpose.msra.mxu0 0.0
    %3095 = vmatprep.subr.mxu0 0.0
    %3096 = vmatpush1.xpose.msra.mxu0 0.0
    %3097 = vmatprep.subr.mxu0 0.0
    %3098 = vmatpush1.xpose.msra.mxu0 0.0
    %3099 = vmatprep.subr.mxu0 0.0
    %3100 = vmatpush1.xpose.msra.mxu0 0.0
    %3101 = vmatprep.subr.mxu0 0.0
    %3102 = vmatpush1.xpose.msra.mxu0 0.0
    %3103 = vmatprep.subr.mxu0 0.0
    %3104 = vmatpush1.xpose.msra.mxu0 0.0
    %3105 = vmatprep.subr.mxu0 0.0
    %3106 = vmatpush1.xpose.msra.mxu0 0.0
    %3107 = vmatprep.subr.mxu0 0.0
    %3108 = vmatpush1.xpose.msra.mxu0 0.0
    %3109 = vmatprep.subr.mxu0 0.0
    %3110 = vmatpush1.xpose.msra.mxu0 0.0
    %3111 = vmatprep.subr.mxu0 0.0
    %3112 = vmatpush1.xpose.msra.mxu0 0.0
    %3113 = vmatprep.subr.mxu0 0.0
    %3114 = vmatpush1.xpose.msra.mxu0 0.0
    %3115 = vmatprep.subr.mxu0 0.0
    %3116 = vmatpush1.xpose.msra.mxu0 0.0
    %3117 = vmatprep.subr.mxu0 0.0
    %3118 = vmatpush1.xpose.msra.mxu0 0.0
    %3119 = vmatprep.subr.mxu0 0.0
    %3120 = vmatpush1.xpose.msra.mxu0 0.0
    %3121 = vmatprep.subr.mxu0 0.0
    %3122 = vmatpush1.xpose.msra.mxu0 0.0
    %3123 = vmatprep.subr.mxu0 0.0
    %3124 = vmatpush1.xpose.msra.mxu0 0.0
    %3125 = vmatprep.subr.mxu0 0.0
    %3126 = vmatpush1.xpose.msra.mxu0 0.0
    %3127 = vmatprep.subr.mxu0 0.0
    %3128 = vmatpush1.xpose.msra.mxu0 0.0
    %3129 = vmatprep.mubr.f32.mxu0 0.0
    %v3130 = vand.u32 %v3036, 4294901760
    %v3131 = vsub.f32 %v3036, %v3130
    %v3132 = vand.u32 %v3131, 4294901760
    %v3133 = vsub.f32 %v3131, %v3132
    %v3134 = vand.u32 %v3133, 4294901760
    %3135 = vmatmul.mubr.f32.gmra.mrb[0].mxu0 %v3134
    %v3136 = vpop.f32.mrb[0].mxu0
    %v3137 = vadd.f32 0.0, %v3136
    %v3138 = vpop.f32.mrb[0].mxu0
    %3139 = vmatprep.mubr.f32.mxu0 0.0
    %v3140 = vand.u32 %v3039, 4294901760
    %v3141 = vsub.f32 %v3039, %v3140
    %v3142 = vand.u32 %v3141, 4294901760
    %v3143 = vsub.f32 %v3141, %v3142
    %v3144 = vand.u32 %v3143, 4294901760
    %3145 = vmatmul.mubr.f32.gmra.mrb[0].mxu0 %v3144
    %v3146 = vpop.f32.mrb[0].mxu0
    %v3147 = vadd.f32 0.0, %v3146
    %v3148 = vpop.f32.mrb[0].mxu0
    %3149 = vmatprep.mubr.f32.mxu0 0.0
    %v3150 = vand.u32 %v3042, 4294901760
    %v3151 = vsub.f32 %v3042, %v3150
    %v3152 = vand.u32 %v3151, 4294901760
    %v3153 = vsub.f32 %v3151, %v3152
    %v3154 = vand.u32 %v3153, 4294901760
    %3155 = vmatmul.mubr.f32.gmra.mrb[0].mxu0 %v3154
    %v3156 = vpop.f32.mrb[0].mxu0
    %v3157 = vadd.f32 0.0, %v3156
    %v3158 = vpop.f32.mrb[0].mxu0
    %3159 = vmatprep.mubr.f32.mxu0 0.0
    %v3160 = vand.u32 %v3045, 4294901760
    %v3161 = vsub.f32 %v3045, %v3160
    %v3162 = vand.u32 %v3161, 4294901760
    %v3163 = vsub.f32 %v3161, %v3162
    %v3164 = vand.u32 %v3163, 4294901760
    %3165 = vmatmul.mubr.f32.gmra.mrb[0].mxu0 %v3164
    %v3166 = vpop.f32.mrb[0].mxu0
    %v3167 = vadd.f32 0.0, %v3166
    %v3168 = vpop.f32.mrb[0].mxu0
    %3169 = vmatprep.mubr.f32.mxu0 0.0
    %v3170 = vand.u32 %v3048, 4294901760
    %v3171 = vsub.f32 %v3048, %v3170
    %v3172 = vand.u32 %v3171, 4294901760
    %v3173 = vsub.f32 %v3171, %v3172
    %v3174 = vand.u32 %v3173, 4294901760
    %3175 = vmatmul.mubr.f32.gmra.mrb[0].mxu0 %v3174
    %v3176 = vpop.f32.mrb[0].mxu0
    %v3177 = vadd.f32 0.0, %v3176
    %v3178 = vpop.f32.mrb[0].mxu0
    %3179 = vmatprep.mubr.f32.mxu0 0.0
    %v3180 = vand.u32 %v3051, 4294901760
    %v3181 = vsub.f32 %v3051, %v3180
    %v3182 = vand.u32 %v3181, 4294901760
    %v3183 = vsub.f32 %v3181, %v3182
    %v3184 = vand.u32 %v3183, 4294901760
    %3185 = vmatmul.mubr.f32.gmra.mrb[0].mxu0 %v3184
    %v3186 = vpop.f32.mrb[0].mxu0
    %v3187 = vadd.f32 0.0, %v3186
    %v3188 = vpop.f32.mrb[0].mxu0
    %3189 = vmatprep.mubr.f32.mxu0 0.0
    %v3190 = vand.u32 %v3054, 4294901760
    %v3191 = vsub.f32 %v3054, %v3190
    %v3192 = vand.u32 %v3191, 4294901760
    %v3193 = vsub.f32 %v3191, %v3192
    %v3194 = vand.u32 %v3193, 4294901760
    %3195 = vmatmul.mubr.f32.gmra.mrb[0].mxu0 %v3194
    %v3196 = vpop.f32.mrb[0].mxu0
    %v3197 = vadd.f32 0.0, %v3196
    %v3198 = vpop.f32.mrb[0].mxu0
    %3199 = vmatprep.mubr.f32.mxu0 0.0
    %v3200 = vand.u32 %v3057, 4294901760
    %v3201 = vsub.f32 %v3057, %v3200
    %v3202 = vand.u32 %v3201, 4294901760
    %v3203 = vsub.f32 %v3201, %v3202
    %v3204 = vand.u32 %v3203, 4294901760
    %3205 = vmatmul.mubr.f32.gmra.mrb[0].mxu0 %v3204
    %v3206 = vpop.f32.mrb[0].mxu0
    %v3207 = vadd.f32 0.0, %v3206
    %v3208 = vpop.f32.mrb[0].mxu0
    %3209 = vdwg.mxu0
    %3210 = vmatprep.subr.mxu0 0.0
    %v3211 = vand.u32 %v3059, 4294901760
    %v3212 = vsub.f32 %v3059, %v3211
    %v3213 = vand.u32 %v3212, 4294901760
    %v3214 = vsub.f32 %v3212, %v3213
    %v3215 = vand.u32 %v3214, 4294901760
    %3216 = vmatpush1.xpose.msra.mxu0 %v3215
    %3217 = vmatprep.subr.mxu0 0.0
    %v3218 = vand.u32 %v3061, 4294901760
    %v3219 = vsub.f32 %v3061, %v3218
    %v3220 = vand.u32 %v3219, 4294901760
    %v3221 = vsub.f32 %v3219, %v3220
    %v3222 = vand.u32 %v3221, 4294901760
    %3223 = vmatpush1.xpose.msra.mxu0 %v3222
    %3224 = vmatprep.subr.mxu0 0.0
    %3225 = vmatpush1.xpose.msra.mxu0 0.0
    %3226 = vmatprep.subr.mxu0 0.0
    %3227 = vmatpush1.xpose.msra.mxu0 0.0
    %3228 = vmatprep.subr.mxu0 0.0
    %3229 = vmatpush1.xpose.msra.mxu0 0.0
    %3230 = vmatprep.subr.mxu0 0.0
    %3231 = vmatpush1.xpose.msra.mxu0 0.0
    %3232 = vmatprep.subr.mxu0 0.0
    %3233 = vmatpush1.xpose.msra.mxu0 0.0
    %3234 = vmatprep.subr.mxu0 0.0
    %3235 = vmatpush1.xpose.msra.mxu0 0.0
    %3236 = vmatprep.subr.mxu0 0.0
    %3237 = vmatpush1.xpose.msra.mxu0 0.0
    %3238 = vmatprep.subr.mxu0 0.0
    %3239 = vmatpush1.xpose.msra.mxu0 0.0
    %3240 = vmatprep.subr.mxu0 0.0
    %3241 = vmatpush1.xpose.msra.mxu0 0.0
    %3242 = vmatprep.subr.mxu0 0.0
    %3243 = vmatpush1.xpose.msra.mxu0 0.0
    %3244 = vmatprep.subr.mxu0 0.0
    %3245 = vmatpush1.xpose.msra.mxu0 0.0
    %3246 = vmatprep.subr.mxu0 0.0
    %3247 = vmatpush1.xpose.msra.mxu0 0.0
    %3248 = vmatprep.subr.mxu0 0.0
    %3249 = vmatpush1.xpose.msra.mxu0 0.0
    %3250 = vmatprep.subr.mxu0 0.0
    %3251 = vmatpush1.xpose.msra.mxu0 0.0
    %3252 = vmatprep.subr.mxu0 0.0
    %3253 = vmatpush1.xpose.msra.mxu0 0.0
    %3254 = vmatprep.subr.mxu0 0.0
    %3255 = vmatpush1.xpose.msra.mxu0 0.0
    %3256 = vmatprep.subr.mxu0 0.0
    %3257 = vmatpush1.xpose.msra.mxu0 0.0
    %3258 = vmatprep.subr.mxu0 0.0
    %3259 = vmatpush1.xpose.msra.mxu0 0.0
    %3260 = vmatprep.subr.mxu0 0.0
    %3261 = vmatpush1.xpose.msra.mxu0 0.0
    %3262 = vmatprep.subr.mxu0 0.0
    %3263 = vmatpush1.xpose.msra.mxu0 0.0
    %3264 = vmatprep.subr.mxu0 0.0
    %3265 = vmatpush1.xpose.msra.mxu0 0.0
    %3266 = vmatprep.subr.mxu0 0.0
    %3267 = vmatpush1.xpose.msra.mxu0 0.0
    %3268 = vmatprep.subr.mxu0 0.0
    %3269 = vmatpush1.xpose.msra.mxu0 0.0
    %3270 = vmatprep.subr.mxu0 0.0
    %3271 = vmatpush1.xpose.msra.mxu0 0.0
    %3272 = vmatprep.subr.mxu0 0.0
    %3273 = vmatpush1.xpose.msra.mxu0 0.0
    %3274 = vmatprep.subr.mxu0 0.0
    %3275 = vmatpush1.xpose.msra.mxu0 0.0
    %3276 = vmatprep.subr.mxu0 0.0
    %3277 = vmatpush1.xpose.msra.mxu0 0.0
    %3278 = vmatprep.subr.mxu0 0.0
    %3279 = vmatpush1.xpose.msra.mxu0 0.0
    %3280 = vmatprep.subr.mxu0 0.0
    %3281 = vmatpush1.xpose.msra.mxu0 0.0
    %3282 = vmatprep.subr.mxu0 0.0
    %3283 = vmatpush1.xpose.msra.mxu0 0.0
    %3284 = vmatprep.mubr.f32.mxu0 0.0
    %v3285 = vand.u32 %v3036, 4294901760
    %3286 = vmatmul.mubr.f32.gmra.mrb[0].mxu0 %v3285
    %v3287 = vpop.f32.mrb[0].mxu0
    %v3288 = vadd.f32 %v3137, %v3287
    %v3289 = vpop.f32.mrb[0].mxu0
    %3290 = vmatprep.mubr.f32.mxu0 0.0
    %v3291 = vand.u32 %v3039, 4294901760
    %3292 = vmatmul.mubr.f32.gmra.mrb[0].mxu0 %v3291
    %v3293 = vpop.f32.mrb[0].mxu0
    %v3294 = vadd.f32 %v3147, %v3293
    %v3295 = vpop.f32.mrb[0].mxu0
    %3296 = vmatprep.mubr.f32.mxu0 0.0
    %v3297 = vand.u32 %v3042, 4294901760
    %3298 = vmatmul.mubr.f32.gmra.mrb[0].mxu0 %v3297
    %v3299 = vpop.f32.mrb[0].mxu0
    %v3300 = vadd.f32 %v3157, %v3299
    %v3301 = vpop.f32.mrb[0].mxu0
    %3302 = vmatprep.mubr.f32.mxu0 0.0
    %v3303 = vand.u32 %v3045, 4294901760
    %3304 = vmatmul.mubr.f32.gmra.mrb[0].mxu0 %v3303
    %v3305 = vpop.f32.mrb[0].mxu0
    %v3306 = vadd.f32 %v3167, %v3305
    %v3307 = vpop.f32.mrb[0].mxu0
    %3308 = vmatprep.mubr.f32.mxu0 0.0
    %v3309 = vand.u32 %v3048, 4294901760
    %3310 = vmatmul.mubr.f32.gmra.mrb[0].mxu0 %v3309
    %v3311 = vpop.f32.mrb[0].mxu0
    %v3312 = vadd.f32 %v3177, %v3311
    %v3313 = vpop.f32.mrb[0].mxu0
    %3314 = vmatprep.mubr.f32.mxu0 0.0
    %v3315 = vand.u32 %v3051, 4294901760
    %3316 = vmatmul.mubr.f32.gmra.mrb[0].mxu0 %v3315
    %v3317 = vpop.f32.mrb[0].mxu0
    %v3318 = vadd.f32 %v3187, %v3317
    %v3319 = vpop.f32.mrb[0].mxu0
    %3320 = vmatprep.mubr.f32.mxu0 0.0
    %v3321 = vand.u32 %v3054, 4294901760
    %3322 = vmatmul.mubr.f32.gmra.mrb[0].mxu0 %v3321
    %v3323 = vpop.f32.mrb[0].mxu0
    %v3324 = vadd.f32 %v3197, %v3323
    %v3325 = vpop.f32.mrb[0].mxu0
    %3326 = vmatprep.mubr.f32.mxu0 0.0
    %v3327 = vand.u32 %v3057, 4294901760
    %3328 = vmatmul.mubr.f32.gmra.mrb[0].mxu0 %v3327
    %v3329 = vpop.f32.mrb[0].mxu0
    %v3330 = vadd.f32 %v3207, %v3329
    %v3331 = vpop.f32.mrb[0].mxu0
    %3332 = vdwg.mxu0
    %3333 = vmatprep.subr.mxu0 0.0
    %v3334 = vand.u32 %v3059, 4294901760
    %v3335 = vsub.f32 %v3059, %v3334
    %3336 = vmatpush1.xpose.msra.mxu0 %v3335
    %3337 = vmatprep.subr.mxu0 0.0
    %v3338 = vand.u32 %v3061, 4294901760
    %v3339 = vsub.f32 %v3061, %v3338
    %3340 = vmatpush1.xpose.msra.mxu0 %v3339
    %3341 = vmatprep.subr.mxu0 0.0
    %3342 = vmatpush1.xpose.msra.mxu0 0.0
    %3343 = vmatprep.subr.mxu0 0.0
    %3344 = vmatpush1.xpose.msra.mxu0 0.0
    %3345 = vmatprep.subr.mxu0 0.0
    %3346 = vmatpush1.xpose.msra.mxu0 0.0
    %3347 = vmatprep.subr.mxu0 0.0
    %3348 = vmatpush1.xpose.msra.mxu0 0.0
    %3349 = vmatprep.subr.mxu0 0.0
    %3350 = vmatpush1.xpose.msra.mxu0 0.0
    %3351 = vmatprep.subr.mxu0 0.0
    %3352 = vmatpush1.xpose.msra.mxu0 0.0
    %3353 = vmatprep.subr.mxu0 0.0
    %3354 = vmatpush1.xpose.msra.mxu0 0.0
    %3355 = vmatprep.subr.mxu0 0.0
    %3356 = vmatpush1.xpose.msra.mxu0 0.0
    %3357 = vmatprep.subr.mxu0 0.0
    %3358 = vmatpush1.xpose.msra.mxu0 0.0
    %3359 = vmatprep.subr.mxu0 0.0
    %3360 = vmatpush1.xpose.msra.mxu0 0.0
    %3361 = vmatprep.subr.mxu0 0.0
    %3362 = vmatpush1.xpose.msra.mxu0 0.0
    %3363 = vmatprep.subr.mxu0 0.0
    %3364 = vmatpush1.xpose.msra.mxu0 0.0
    %3365 = vmatprep.subr.mxu0 0.0
    %3366 = vmatpush1.xpose.msra.mxu0 0.0
    %3367 = vmatprep.subr.mxu0 0.0
    %3368 = vmatpush1.xpose.msra.mxu0 0.0
    %3369 = vmatprep.subr.mxu0 0.0
    %3370 = vmatpush1.xpose.msra.mxu0 0.0
    %3371 = vmatprep.subr.mxu0 0.0
    %3372 = vmatpush1.xpose.msra.mxu0 0.0
    %3373 = vmatprep.subr.mxu0 0.0
    %3374 = vmatpush1.xpose.msra.mxu0 0.0
    %3375 = vmatprep.subr.mxu0 0.0
    %3376 = vmatpush1.xpose.msra.mxu0 0.0
    %3377 = vmatprep.subr.mxu0 0.0
    %3378 = vmatpush1.xpose.msra.mxu0 0.0
    %3379 = vmatprep.subr.mxu0 0.0
    %3380 = vmatpush1.xpose.msra.mxu0 0.0
    %3381 = vmatprep.subr.mxu0 0.0
    %3382 = vmatpush1.xpose.msra.mxu0 0.0
    %3383 = vmatprep.subr.mxu0 0.0
    %3384 = vmatpush1.xpose.msra.mxu0 0.0
    %3385 = vmatprep.subr.mxu0 0.0
    %3386 = vmatpush1.xpose.msra.mxu0 0.0
    %3387 = vmatprep.subr.mxu0 0.0
    %3388 = vmatpush1.xpose.msra.mxu0 0.0
    %3389 = vmatprep.subr.mxu0 0.0
    %3390 = vmatpush1.xpose.msra.mxu0 0.0
    %3391 = vmatprep.subr.mxu0 0.0
    %3392 = vmatpush1.xpose.msra.mxu0 0.0
    %3393 = vmatprep.subr.mxu0 0.0
    %3394 = vmatpush1.xpose.msra.mxu0 0.0
    %3395 = vmatprep.subr.mxu0 0.0
    %3396 = vmatpush1.xpose.msra.mxu0 0.0
    %3397 = vmatprep.subr.mxu0 0.0
    %3398 = vmatpush1.xpose.msra.mxu0 0.0
    %3399 = vmatprep.subr.mxu0 0.0
    %3400 = vmatpush1.xpose.msra.mxu0 0.0
    %3401 = vmatprep.mubr.f32.mxu0 0.0
    %v3402 = vand.u32 %v3036, 4294901760
    %v3403 = vsub.f32 %v3036, %v3402
    %3404 = vmatmul.mubr.f32.gmra.mrb[0].mxu0 %v3403
    %v3405 = vpop.f32.mrb[0].mxu0
    %v3406 = vadd.f32 %v3288, %v3405
    %v3407 = vpop.f32.mrb[0].mxu0
    %3408 = vmatprep.mubr.f32.mxu0 0.0
    %v3409 = vand.u32 %v3039, 4294901760
    %v3410 = vsub.f32 %v3039, %v3409
    %3411 = vmatmul.mubr.f32.gmra.mrb[0].mxu0 %v3410
    %v3412 = vpop.f32.mrb[0].mxu0
    %v3413 = vadd.f32 %v3294, %v3412
    %v3414 = vpop.f32.mrb[0].mxu0
    %3415 = vmatprep.mubr.f32.mxu0 0.0
    %v3416 = vand.u32 %v3042, 4294901760
    %v3417 = vsub.f32 %v3042, %v3416
    %3418 = vmatmul.mubr.f32.gmra.mrb[0].mxu0 %v3417
    %v3419 = vpop.f32.mrb[0].mxu0
    %v3420 = vadd.f32 %v3300, %v3419
    %v3421 = vpop.f32.mrb[0].mxu0
    %3422 = vmatprep.mubr.f32.mxu0 0.0
    %v3423 = vand.u32 %v3045, 4294901760
    %v3424 = vsub.f32 %v3045, %v3423
    %3425 = vmatmul.mubr.f32.gmra.mrb[0].mxu0 %v3424
    %v3426 = vpop.f32.mrb[0].mxu0
    %v3427 = vadd.f32 %v3306, %v3426
    %v3428 = vpop.f32.mrb[0].mxu0
    %3429 = vmatprep.mubr.f32.mxu0 0.0
    %v3430 = vand.u32 %v3048, 4294901760
    %v3431 = vsub.f32 %v3048, %v3430
    %3432 = vmatmul.mubr.f32.gmra.mrb[0].mxu0 %v3431
    %v3433 = vpop.f32.mrb[0].mxu0
    %v3434 = vadd.f32 %v3312, %v3433
    %v3435 = vpop.f32.mrb[0].mxu0
    %3436 = vmatprep.mubr.f32.mxu0 0.0
    %v3437 = vand.u32 %v3051, 4294901760
    %v3438 = vsub.f32 %v3051, %v3437
    %3439 = vmatmul.mubr.f32.gmra.mrb[0].mxu0 %v3438
    %v3440 = vpop.f32.mrb[0].mxu0
    %v3441 = vadd.f32 %v3318, %v3440
    %v3442 = vpop.f32.mrb[0].mxu0
    %3443 = vmatprep.mubr.f32.mxu0 0.0
    %v3444 = vand.u32 %v3054, 4294901760
    %v3445 = vsub.f32 %v3054, %v3444
    %3446 = vmatmul.mubr.f32.gmra.mrb[0].mxu0 %v3445
    %v3447 = vpop.f32.mrb[0].mxu0
    %v3448 = vadd.f32 %v3324, %v3447
    %v3449 = vpop.f32.mrb[0].mxu0
    %3450 = vmatprep.mubr.f32.mxu0 0.0
    %v3451 = vand.u32 %v3057, 4294901760
    %v3452 = vsub.f32 %v3057, %v3451
    %3453 = vmatmul.mubr.f32.gmra.mrb[0].mxu0 %v3452
    %v3454 = vpop.f32.mrb[0].mxu0
    %v3455 = vadd.f32 %v3330, %v3454
    %v3456 = vpop.f32.mrb[0].mxu0
    %3457 = vdwg.mxu0
    %3458 = vmatprep.subr.mxu0 0.0
    %v3459 = vand.u32 %v3059, 4294901760
    %3460 = vmatpush1.xpose.msra.mxu0 %v3459
    %3461 = vmatprep.subr.mxu0 0.0
    %v3462 = vand.u32 %v3061, 4294901760
    %3463 = vmatpush1.xpose.msra.mxu0 %v3462
    %3464 = vmatprep.subr.mxu0 0.0
    %3465 = vmatpush1.xpose.msra.mxu0 0.0
    %3466 = vmatprep.subr.mxu0 0.0
    %3467 = vmatpush1.xpose.msra.mxu0 0.0
    %3468 = vmatprep.subr.mxu0 0.0
    %3469 = vmatpush1.xpose.msra.mxu0 0.0
    %3470 = vmatprep.subr.mxu0 0.0
    %3471 = vmatpush1.xpose.msra.mxu0 0.0
    %3472 = vmatprep.subr.mxu0 0.0
    %3473 = vmatpush1.xpose.msra.mxu0 0.0
    %3474 = vmatprep.subr.mxu0 0.0
    %3475 = vmatpush1.xpose.msra.mxu0 0.0
    %3476 = vmatprep.subr.mxu0 0.0
    %3477 = vmatpush1.xpose.msra.mxu0 0.0
    %3478 = vmatprep.subr.mxu0 0.0
    %3479 = vmatpush1.xpose.msra.mxu0 0.0
    %3480 = vmatprep.subr.mxu0 0.0
    %3481 = vmatpush1.xpose.msra.mxu0 0.0
    %3482 = vmatprep.subr.mxu0 0.0
    %3483 = vmatpush1.xpose.msra.mxu0 0.0
    %3484 = vmatprep.subr.mxu0 0.0
    %3485 = vmatpush1.xpose.msra.mxu0 0.0
    %3486 = vmatprep.subr.mxu0 0.0
    %3487 = vmatpush1.xpose.msra.mxu0 0.0
    %3488 = vmatprep.subr.mxu0 0.0
    %3489 = vmatpush1.xpose.msra.mxu0 0.0
    %3490 = vmatprep.subr.mxu0 0.0
    %3491 = vmatpush1.xpose.msra.mxu0 0.0
    %3492 = vmatprep.subr.mxu0 0.0
    %3493 = vmatpush1.xpose.msra.mxu0 0.0
    %3494 = vmatprep.subr.mxu0 0.0
    %3495 = vmatpush1.xpose.msra.mxu0 0.0
    %3496 = vmatprep.subr.mxu0 0.0
    %3497 = vmatpush1.xpose.msra.mxu0 0.0
    %3498 = vmatprep.subr.mxu0 0.0
    %3499 = vmatpush1.xpose.msra.mxu0 0.0
    %3500 = vmatprep.subr.mxu0 0.0
    %3501 = vmatpush1.xpose.msra.mxu0 0.0
    %3502 = vmatprep.subr.mxu0 0.0
    %3503 = vmatpush1.xpose.msra.mxu0 0.0
    %3504 = vmatprep.subr.mxu0 0.0
    %3505 = vmatpush1.xpose.msra.mxu0 0.0
    %3506 = vmatprep.subr.mxu0 0.0
    %3507 = vmatpush1.xpose.msra.mxu0 0.0
    %3508 = vmatprep.subr.mxu0 0.0
    %3509 = vmatpush1.xpose.msra.mxu0 0.0
    %3510 = vmatprep.subr.mxu0 0.0
    %3511 = vmatpush1.xpose.msra.mxu0 0.0
    %3512 = vmatprep.subr.mxu0 0.0
    %3513 = vmatpush1.xpose.msra.mxu0 0.0
    %3514 = vmatprep.subr.mxu0 0.0
    %3515 = vmatpush1.xpose.msra.mxu0 0.0
    %3516 = vmatprep.subr.mxu0 0.0
    %3517 = vmatpush1.xpose.msra.mxu0 0.0
    %3518 = vmatprep.subr.mxu0 0.0
    %3519 = vmatpush1.xpose.msra.mxu0 0.0
    %3520 = vmatprep.subr.mxu0 0.0
    %3521 = vmatpush1.xpose.msra.mxu0 0.0
    %3522 = vmatprep.subr.mxu0 0.0
    %3523 = vmatpush1.xpose.msra.mxu0 0.0
    %3524 = vmatprep.mubr.f32.mxu0 0.0
    %v3525 = vand.u32 %v3036, 4294901760
    %v3526 = vsub.f32 %v3036, %v3525
    %v3527 = vand.u32 %v3526, 4294901760
    %3528 = vmatmul.mubr.f32.gmra.mrb[0].mxu0 %v3527
    %v3529 = vpop.f32.mrb[0].mxu0
    %v3530 = vadd.f32 %v3406, %v3529
    %v3531 = vpop.f32.mrb[0].mxu0
    %3532 = vmatprep.mubr.f32.mxu0 0.0
    %v3533 = vand.u32 %v3039, 4294901760
    %v3534 = vsub.f32 %v3039, %v3533
    %v3535 = vand.u32 %v3534, 4294901760
    %3536 = vmatmul.mubr.f32.gmra.mrb[0].mxu0 %v3535
    %v3537 = vpop.f32.mrb[0].mxu0
    %v3538 = vadd.f32 %v3413, %v3537
    %v3539 = vpop.f32.mrb[0].mxu0
    %3540 = vmatprep.mubr.f32.mxu0 0.0
    %v3541 = vand.u32 %v3042, 4294901760
    %v3542 = vsub.f32 %v3042, %v3541
    %v3543 = vand.u32 %v3542, 4294901760
    %3544 = vmatmul.mubr.f32.gmra.mrb[0].mxu0 %v3543
    %v3545 = vpop.f32.mrb[0].mxu0
    %v3546 = vadd.f32 %v3420, %v3545
    %v3547 = vpop.f32.mrb[0].mxu0
    %3548 = vmatprep.mubr.f32.mxu0 0.0
    %v3549 = vand.u32 %v3045, 4294901760
    %v3550 = vsub.f32 %v3045, %v3549
    %v3551 = vand.u32 %v3550, 4294901760
    %3552 = vmatmul.mubr.f32.gmra.mrb[0].mxu0 %v3551
    %v3553 = vpop.f32.mrb[0].mxu0
    %v3554 = vadd.f32 %v3427, %v3553
    %v3555 = vpop.f32.mrb[0].mxu0
    %3556 = vmatprep.mubr.f32.mxu0 0.0
    %v3557 = vand.u32 %v3048, 4294901760
    %v3558 = vsub.f32 %v3048, %v3557
    %v3559 = vand.u32 %v3558, 4294901760
    %3560 = vmatmul.mubr.f32.gmra.mrb[0].mxu0 %v3559
    %v3561 = vpop.f32.mrb[0].mxu0
    %v3562 = vadd.f32 %v3434, %v3561
    %v3563 = vpop.f32.mrb[0].mxu0
    %3564 = vmatprep.mubr.f32.mxu0 0.0
    %v3565 = vand.u32 %v3051, 4294901760
    %v3566 = vsub.f32 %v3051, %v3565
    %v3567 = vand.u32 %v3566, 4294901760
    %3568 = vmatmul.mubr.f32.gmra.mrb[0].mxu0 %v3567
    %v3569 = vpop.f32.mrb[0].mxu0
    %v3570 = vadd.f32 %v3441, %v3569
    %v3571 = vpop.f32.mrb[0].mxu0
    %3572 = vmatprep.mubr.f32.mxu0 0.0
    %v3573 = vand.u32 %v3054, 4294901760
    %v3574 = vsub.f32 %v3054, %v3573
    %v3575 = vand.u32 %v3574, 4294901760
    %3576 = vmatmul.mubr.f32.gmra.mrb[0].mxu0 %v3575
    %v3577 = vpop.f32.mrb[0].mxu0
    %v3578 = vadd.f32 %v3448, %v3577
    %v3579 = vpop.f32.mrb[0].mxu0
    %3580 = vmatprep.mubr.f32.mxu0 0.0
    %v3581 = vand.u32 %v3057, 4294901760
    %v3582 = vsub.f32 %v3057, %v3581
    %v3583 = vand.u32 %v3582, 4294901760
    %3584 = vmatmul.mubr.f32.gmra.mrb[0].mxu0 %v3583
    %v3585 = vpop.f32.mrb[0].mxu0
    %v3586 = vadd.f32 %v3455, %v3585
    %v3587 = vpop.f32.mrb[0].mxu0
    %3588 = vdwg.mxu0
    %3589 = vmatprep.subr.mxu0 0.0
    %v3590 = vand.u32 %v3059, 4294901760
    %v3591 = vsub.f32 %v3059, %v3590
    %v3592 = vand.u32 %v3591, 4294901760
    %3593 = vmatpush1.xpose.msra.mxu0 %v3592
    %3594 = vmatprep.subr.mxu0 0.0
    %v3595 = vand.u32 %v3061, 4294901760
    %v3596 = vsub.f32 %v3061, %v3595
    %v3597 = vand.u32 %v3596, 4294901760
    %3598 = vmatpush1.xpose.msra.mxu0 %v3597
    %3599 = vmatprep.subr.mxu0 0.0
    %3600 = vmatpush1.xpose.msra.mxu0 0.0
    %3601 = vmatprep.subr.mxu0 0.0
    %3602 = vmatpush1.xpose.msra.mxu0 0.0
    %3603 = vmatprep.subr.mxu0 0.0
    %3604 = vmatpush1.xpose.msra.mxu0 0.0
    %3605 = vmatprep.subr.mxu0 0.0
    %3606 = vmatpush1.xpose.msra.mxu0 0.0
    %3607 = vmatprep.subr.mxu0 0.0
    %3608 = vmatpush1.xpose.msra.mxu0 0.0
    %3609 = vmatprep.subr.mxu0 0.0
    %3610 = vmatpush1.xpose.msra.mxu0 0.0
    %3611 = vmatprep.subr.mxu0 0.0
    %3612 = vmatpush1.xpose.msra.mxu0 0.0
    %3613 = vmatprep.subr.mxu0 0.0
    %3614 = vmatpush1.xpose.msra.mxu0 0.0
    %3615 = vmatprep.subr.mxu0 0.0
    %3616 = vmatpush1.xpose.msra.mxu0 0.0
    %3617 = vmatprep.subr.mxu0 0.0
    %3618 = vmatpush1.xpose.msra.mxu0 0.0
    %3619 = vmatprep.subr.mxu0 0.0
    %3620 = vmatpush1.xpose.msra.mxu0 0.0
    %3621 = vmatprep.subr.mxu0 0.0
    %3622 = vmatpush1.xpose.msra.mxu0 0.0
    %3623 = vmatprep.subr.mxu0 0.0
    %3624 = vmatpush1.xpose.msra.mxu0 0.0
    %3625 = vmatprep.subr.mxu0 0.0
    %3626 = vmatpush1.xpose.msra.mxu0 0.0
    %3627 = vmatprep.subr.mxu0 0.0
    %3628 = vmatpush1.xpose.msra.mxu0 0.0
    %3629 = vmatprep.subr.mxu0 0.0
    %3630 = vmatpush1.xpose.msra.mxu0 0.0
    %3631 = vmatprep.subr.mxu0 0.0
    %3632 = vmatpush1.xpose.msra.mxu0 0.0
    %3633 = vmatprep.subr.mxu0 0.0
    %3634 = vmatpush1.xpose.msra.mxu0 0.0
    %3635 = vmatprep.subr.mxu0 0.0
    %3636 = vmatpush1.xpose.msra.mxu0 0.0
    %3637 = vmatprep.subr.mxu0 0.0
    %3638 = vmatpush1.xpose.msra.mxu0 0.0
    %3639 = vmatprep.subr.mxu0 0.0
    %3640 = vmatpush1.xpose.msra.mxu0 0.0
    %3641 = vmatprep.subr.mxu0 0.0
    %3642 = vmatpush1.xpose.msra.mxu0 0.0
    %3643 = vmatprep.subr.mxu0 0.0
    %3644 = vmatpush1.xpose.msra.mxu0 0.0
    %3645 = vmatprep.subr.mxu0 0.0
    %3646 = vmatpush1.xpose.msra.mxu0 0.0
    %3647 = vmatprep.subr.mxu0 0.0
    %3648 = vmatpush1.xpose.msra.mxu0 0.0
    %3649 = vmatprep.subr.mxu0 0.0
    %3650 = vmatpush1.xpose.msra.mxu0 0.0
    %3651 = vmatprep.subr.mxu0 0.0
    %3652 = vmatpush1.xpose.msra.mxu0 0.0
    %3653 = vmatprep.subr.mxu0 0.0
    %3654 = vmatpush1.xpose.msra.mxu0 0.0
    %3655 = vmatprep.subr.mxu0 0.0
    %3656 = vmatpush1.xpose.msra.mxu0 0.0
    %3657 = vmatprep.subr.mxu0 0.0
    %3658 = vmatpush1.xpose.msra.mxu0 0.0
    %3659 = vmatprep.mubr.f32.mxu0 0.0
    %v3660 = vand.u32 %v3036, 4294901760
    %3661 = vmatmul.mubr.f32.gmra.mrb[0].mxu0 %v3660
    %v3662 = vpop.f32.mrb[0].mxu0
    %v3663 = vadd.f32 %v3530, %v3662
    %v3664 = vpop.f32.mrb[0].mxu0
    %3665 = vmatprep.mubr.f32.mxu0 0.0
    %v3666 = vand.u32 %v3039, 4294901760
    %3667 = vmatmul.mubr.f32.gmra.mrb[0].mxu0 %v3666
    %v3668 = vpop.f32.mrb[0].mxu0
    %v3669 = vadd.f32 %v3538, %v3668
    %v3670 = vpop.f32.mrb[0].mxu0
    %3671 = vmatprep.mubr.f32.mxu0 0.0
    %v3672 = vand.u32 %v3042, 4294901760
    %3673 = vmatmul.mubr.f32.gmra.mrb[0].mxu0 %v3672
    %v3674 = vpop.f32.mrb[0].mxu0
    %v3675 = vadd.f32 %v3546, %v3674
    %v3676 = vpop.f32.mrb[0].mxu0
    %3677 = vmatprep.mubr.f32.mxu0 0.0
    %v3678 = vand.u32 %v3045, 4294901760
    %3679 = vmatmul.mubr.f32.gmra.mrb[0].mxu0 %v3678
    %v3680 = vpop.f32.mrb[0].mxu0
    %v3681 = vadd.f32 %v3554, %v3680
    %v3682 = vpop.f32.mrb[0].mxu0
    %3683 = vmatprep.mubr.f32.mxu0 0.0
    %v3684 = vand.u32 %v3048, 4294901760
    %3685 = vmatmul.mubr.f32.gmra.mrb[0].mxu0 %v3684
    %v3686 = vpop.f32.mrb[0].mxu0
    %v3687 = vadd.f32 %v3562, %v3686
    %v3688 = vpop.f32.mrb[0].mxu0
    %3689 = vmatprep.mubr.f32.mxu0 0.0
    %v3690 = vand.u32 %v3051, 4294901760
    %3691 = vmatmul.mubr.f32.gmra.mrb[0].mxu0 %v3690
    %v3692 = vpop.f32.mrb[0].mxu0
    %v3693 = vadd.f32 %v3570, %v3692
    %v3694 = vpop.f32.mrb[0].mxu0
    %3695 = vmatprep.mubr.f32.mxu0 0.0
    %v3696 = vand.u32 %v3054, 4294901760
    %3697 = vmatmul.mubr.f32.gmra.mrb[0].mxu0 %v3696
    %v3698 = vpop.f32.mrb[0].mxu0
    %v3699 = vadd.f32 %v3578, %v3698
    %v3700 = vpop.f32.mrb[0].mxu0
    %3701 = vmatprep.mubr.f32.mxu0 0.0
    %v3702 = vand.u32 %v3057, 4294901760
    %3703 = vmatmul.mubr.f32.gmra.mrb[0].mxu0 %v3702
    %v3704 = vpop.f32.mrb[0].mxu0
    %v3705 = vadd.f32 %v3586, %v3704
    %v3706 = vpop.f32.mrb[0].mxu0
    %3707 = vdwg.mxu0
    %3708 = vmatprep.subr.mxu0 0.0
    %v3709 = vand.u32 %v3059, 4294901760
    %3710 = vmatpush1.xpose.msra.mxu0 %v3709
    %3711 = vmatprep.subr.mxu0 0.0
    %v3712 = vand.u32 %v3061, 4294901760
    %3713 = vmatpush1.xpose.msra.mxu0 %v3712
    %3714 = vmatprep.subr.mxu0 0.0
    %3715 = vmatpush1.xpose.msra.mxu0 0.0
    %3716 = vmatprep.subr.mxu0 0.0
    %3717 = vmatpush1.xpose.msra.mxu0 0.0
    %3718 = vmatprep.subr.mxu0 0.0
    %3719 = vmatpush1.xpose.msra.mxu0 0.0
    %3720 = vmatprep.subr.mxu0 0.0
    %3721 = vmatpush1.xpose.msra.mxu0 0.0
    %3722 = vmatprep.subr.mxu0 0.0
    %3723 = vmatpush1.xpose.msra.mxu0 0.0
    %3724 = vmatprep.subr.mxu0 0.0
    %3725 = vmatpush1.xpose.msra.mxu0 0.0
    %3726 = vmatprep.subr.mxu0 0.0
    %3727 = vmatpush1.xpose.msra.mxu0 0.0
    %3728 = vmatprep.subr.mxu0 0.0
    %3729 = vmatpush1.xpose.msra.mxu0 0.0
    %3730 = vmatprep.subr.mxu0 0.0
    %3731 = vmatpush1.xpose.msra.mxu0 0.0
    %3732 = vmatprep.subr.mxu0 0.0
    %3733 = vmatpush1.xpose.msra.mxu0 0.0
    %3734 = vmatprep.subr.mxu0 0.0
    %3735 = vmatpush1.xpose.msra.mxu0 0.0
    %3736 = vmatprep.subr.mxu0 0.0
    %3737 = vmatpush1.xpose.msra.mxu0 0.0
    %3738 = vmatprep.subr.mxu0 0.0
    %3739 = vmatpush1.xpose.msra.mxu0 0.0
    %3740 = vmatprep.subr.mxu0 0.0
    %3741 = vmatpush1.xpose.msra.mxu0 0.0
    %3742 = vmatprep.subr.mxu0 0.0
    %3743 = vmatpush1.xpose.msra.mxu0 0.0
    %3744 = vmatprep.subr.mxu0 0.0
    %3745 = vmatpush1.xpose.msra.mxu0 0.0
    %3746 = vmatprep.subr.mxu0 0.0
    %3747 = vmatpush1.xpose.msra.mxu0 0.0
    %3748 = vmatprep.subr.mxu0 0.0
    %3749 = vmatpush1.xpose.msra.mxu0 0.0
    %3750 = vmatprep.subr.mxu0 0.0
    %3751 = vmatpush1.xpose.msra.mxu0 0.0
    %3752 = vmatprep.subr.mxu0 0.0
    %3753 = vmatpush1.xpose.msra.mxu0 0.0
    %3754 = vmatprep.subr.mxu0 0.0
    %3755 = vmatpush1.xpose.msra.mxu0 0.0
    %3756 = vmatprep.subr.mxu0 0.0
    %3757 = vmatpush1.xpose.msra.mxu0 0.0
    %3758 = vmatprep.subr.mxu0 0.0
    %3759 = vmatpush1.xpose.msra.mxu0 0.0
    %3760 = vmatprep.subr.mxu0 0.0
    %3761 = vmatpush1.xpose.msra.mxu0 0.0
    %3762 = vmatprep.subr.mxu0 0.0
    %3763 = vmatpush1.xpose.msra.mxu0 0.0
    %3764 = vmatprep.subr.mxu0 0.0
    %3765 = vmatpush1.xpose.msra.mxu0 0.0
    %3766 = vmatprep.subr.mxu0 0.0
    %3767 = vmatpush1.xpose.msra.mxu0 0.0
    %3768 = vmatprep.subr.mxu0 0.0
    %3769 = vmatpush1.xpose.msra.mxu0 0.0
    %3770 = vmatprep.subr.mxu0 0.0
    %3771 = vmatpush1.xpose.msra.mxu0 0.0
    %3772 = vmatprep.subr.mxu0 0.0
    %3773 = vmatpush1.xpose.msra.mxu0 0.0
    %3774 = vmatprep.mubr.f32.mxu0 0.0
    %v3775 = vand.u32 %v3036, 4294901760
    %3776 = vmatmul.mubr.f32.gmra.mrb[0].mxu0 %v3775
    %v3777 = vpop.f32.mrb[0].mxu0
    %v3778 = vadd.f32 %v3663, %v3777
    %v3779 = vpop.f32.mrb[0].mxu0
    %3780 = vmatprep.mubr.f32.mxu0 0.0
    %v3781 = vand.u32 %v3039, 4294901760
    %3782 = vmatmul.mubr.f32.gmra.mrb[0].mxu0 %v3781
    %v3783 = vpop.f32.mrb[0].mxu0
    %v3784 = vadd.f32 %v3669, %v3783
    %v3785 = vpop.f32.mrb[0].mxu0
    %3786 = vmatprep.mubr.f32.mxu0 0.0
    %v3787 = vand.u32 %v3042, 4294901760
    %3788 = vmatmul.mubr.f32.gmra.mrb[0].mxu0 %v3787
    %v3789 = vpop.f32.mrb[0].mxu0
    %v3790 = vadd.f32 %v3675, %v3789
    %v3791 = vpop.f32.mrb[0].mxu0
    %3792 = vmatprep.mubr.f32.mxu0 0.0
    %v3793 = vand.u32 %v3045, 4294901760
    %3794 = vmatmul.mubr.f32.gmra.mrb[0].mxu0 %v3793
    %v3795 = vpop.f32.mrb[0].mxu0
    %v3796 = vadd.f32 %v3681, %v3795
    %v3797 = vpop.f32.mrb[0].mxu0
    %3798 = vmatprep.mubr.f32.mxu0 0.0
    %v3799 = vand.u32 %v3048, 4294901760
    %3800 = vmatmul.mubr.f32.gmra.mrb[0].mxu0 %v3799
    %v3801 = vpop.f32.mrb[0].mxu0
    %v3802 = vadd.f32 %v3687, %v3801
    %v3803 = vpop.f32.mrb[0].mxu0
    %3804 = vmatprep.mubr.f32.mxu0 0.0
    %v3805 = vand.u32 %v3051, 4294901760
    %3806 = vmatmul.mubr.f32.gmra.mrb[0].mxu0 %v3805
    %v3807 = vpop.f32.mrb[0].mxu0
    %v3808 = vadd.f32 %v3693, %v3807
    %v3809 = vpop.f32.mrb[0].mxu0
    %3810 = vmatprep.mubr.f32.mxu0 0.0
    %v3811 = vand.u32 %v3054, 4294901760
    %3812 = vmatmul.mubr.f32.gmra.mrb[0].mxu0 %v3811
    %v3813 = vpop.f32.mrb[0].mxu0
    %v3814 = vadd.f32 %v3699, %v3813
    %v3815 = vpop.f32.mrb[0].mxu0
    %3816 = vmatprep.mubr.f32.mxu0 0.0
    %v3817 = vand.u32 %v3057, 4294901760
    %3818 = vmatmul.mubr.f32.gmra.mrb[0].mxu0 %v3817
    %v3819 = vpop.f32.mrb[0].mxu0
    %v3820 = vadd.f32 %v3705, %v3819
    %v3821 = vpop.f32.mrb[0].mxu0
    %3822 = vdwg.mxu0
    %v3823 = vmul.f32 %v3778, 0.35355338
    %v3824 = vmul.f32 %v3784, 0.35355338
    %v3825 = vmul.f32 %v3790, 0.35355338
    %v3826 = vmul.f32 %v3796, 0.35355338
    %v3827 = vmul.f32 %v3802, 0.35355338
    %v3828 = vmul.f32 %v3808, 0.35355338
    %v3829 = vmul.f32 %v3814, 0.35355338
    %v3830 = vmul.f32 %v3820, 0.35355338
    %v3831 = vadd.f32 %v3823, %v2444
    %v3832 = vadd.f32 %v3824, %v2445
    %v3833 = vadd.f32 %v3825, %v2446
    %v3834 = vadd.f32 %v3826, %v2447
    %v3835 = vadd.f32 %v3827, %v2448
    %v3836 = vadd.f32 %v3828, %v2449
    %v3837 = vadd.f32 %v3829, %v2450
    %v3838 = vadd.f32 %v3830, %v2451
    %vm3839 = vcmask 130048
    %v3840 = vsel %vm3839, %v3831, -inf
    %3841 = vmax.xlane.f32.xlu0 %v3840
    %v3842 = vpop.xlane.xlu0 %3841
    %v3843 = vsel %vm3839, %v3832, -inf
    %3844 = vmax.xlane.f32.xlu0 %v3843
    %v3845 = vpop.xlane.xlu0 %3844
    %v3846 = vsel %vm3839, %v3833, -inf
    %3847 = vmax.xlane.f32.xlu0 %v3846
    %v3848 = vpop.xlane.xlu0 %3847
    %v3849 = vsel %vm3839, %v3834, -inf
    %3850 = vmax.xlane.f32.xlu0 %v3849
    %v3851 = vpop.xlane.xlu0 %3850
    %v3852 = vsel %vm3839, %v3835, -inf
    %3853 = vmax.xlane.f32.xlu0 %v3852
    %v3854 = vpop.xlane.xlu0 %3853
    %v3855 = vsel %vm3839, %v3836, -inf
    %3856 = vmax.xlane.f32.xlu0 %v3855
    %v3857 = vpop.xlane.xlu0 %3856
    %v3858 = vsel %vm3839, %v3837, -inf
    %3859 = vmax.xlane.f32.xlu0 %v3858
    %v3860 = vpop.xlane.xlu0 %3859
    %v3861 = vsel %vm3839, %v3838, -inf
    %3862 = vmax.xlane.f32.xlu0 %v3861
    %v3863 = vpop.xlane.xlu0 %3862
    %v3864 = vsub.f32 %v3831, %v3842
    %v3865 = vsub.f32 %v3832, %v3845
    %v3866 = vsub.f32 %v3833, %v3848
    %v3867 = vsub.f32 %v3834, %v3851
    %v3868 = vsub.f32 %v3835, %v3854
    %v3869 = vsub.f32 %v3836, %v3857
    %v3870 = vsub.f32 %v3837, %v3860
    %v3871 = vsub.f32 %v3838, %v3863
    %v3872 = vmul.f32 %v3864, 1.442695
    %v3873 = vpow.pop %v3872
    %v3874 = vmul.f32 %v3865, 1.442695
    %v3875 = vpow.pop %v3874
    %v3876 = vmul.f32 %v3866, 1.442695
    %v3877 = vpow.pop %v3876
    %v3878 = vmul.f32 %v3867, 1.442695
    %v3879 = vpow.pop %v3878
    %v3880 = vmul.f32 %v3868, 1.442695
    %v3881 = vpow.pop %v3880
    %v3882 = vmul.f32 %v3869, 1.442695
    %v3883 = vpow.pop %v3882
    %v3884 = vmul.f32 %v3870, 1.442695
    %v3885 = vpow.pop %v3884
    %v3886 = vmul.f32 %v3871, 1.442695
    %v3887 = vpow.pop %v3886
    %v3888 = vsel %vm3839, %v3873, 0.0
    %3889 = vadd.xlane.f32.xlu0 %v3888
    %v3890 = vpop.xlane.xlu0 %3889
    %v3891 = vsel %vm3839, %v3875, 0.0
    %3892 = vadd.xlane.f32.xlu0 %v3891
    %v3893 = vpop.xlane.xlu0 %3892
    %v3894 = vsel %vm3839, %v3877, 0.0
    %3895 = vadd.xlane.f32.xlu0 %v3894
    %v3896 = vpop.xlane.xlu0 %3895
    %v3897 = vsel %vm3839, %v3879, 0.0
    %3898 = vadd.xlane.f32.xlu0 %v3897
    %v3899 = vpop.xlane.xlu0 %3898
    %v3900 = vsel %vm3839, %v3881, 0.0
    %3901 = vadd.xlane.f32.xlu0 %v3900
    %v3902 = vpop.xlane.xlu0 %3901
    %v3903 = vsel %vm3839, %v3883, 0.0
    %3904 = vadd.xlane.f32.xlu0 %v3903
    %v3905 = vpop.xlane.xlu0 %3904
    %v3906 = vsel %vm3839, %v3885, 0.0
    %3907 = vadd.xlane.f32.xlu0 %v3906
    %v3908 = vpop.xlane.xlu0 %3907
    %v3909 = vsel %vm3839, %v3887, 0.0
    %3910 = vadd.xlane.f32.xlu0 %v3909
    %v3911 = vpop.xlane.xlu0 %3910
    %v3912 = vrcp.pop %v3890
    %v3913 = vmul.f32 %v3873, %v3912
    %v3914 = vrcp.pop %v3893
    %v3915 = vmul.f32 %v3875, %v3914
    %v3916 = vrcp.pop %v3896
    %v3917 = vmul.f32 %v3877, %v3916
    %v3918 = vrcp.pop %v3899
    %v3919 = vmul.f32 %v3879, %v3918
    %v3920 = vrcp.pop %v3902
    %v3921 = vmul.f32 %v3881, %v3920
    %v3922 = vrcp.pop %v3905
    %v3923 = vmul.f32 %v3883, %v3922
    %v3924 = vrcp.pop %v3908
    %v3925 = vmul.f32 %v3885, %v3924
    %v3926 = vrcp.pop %v3911
    %v3927 = vmul.f32 %v3887, %v3926
    %3928 = vrot.lane.b32.xlu0 %v3001, 64
    %v3929 = vpop.permute.xlu0 %3928
    %v3931 = vmul.f32 %v2988, %v3929
    %v3932 = vmul.f32 %v2994, %v3929
    %3933 = vrot.lane.b32.xlu0 %v3009, 64
    %v3934 = vpop.permute.xlu0 %3933
    %v3936 = vmul.f32 %v2988, %v3934
    %v3937 = vmul.f32 %v2994, %v3934
    %3940 = vrot.lane.b32.xlu0 %v3936, 64
    %v3941 = vpop.permute.xlu0 %3940
    %3942 = vrot.lane.b32.xlu0 %v3937, 64
    %v3943 = vpop.permute.xlu0 %3942
    %v3947 = vsel %vm3839, %v3917, 0
    %v3950 = vsel %vm3839, %v3919, 0
    %3952 = vmatprep.subr.mxu0 0.0
    %v3953 = vand.u32 %v3941, 4294901760
    %3954 = vmatpush1.msra.mxu0 %v3953
    %3955 = vmatprep.subr.mxu0 0.0
    %v3956 = vand.u32 %v3943, 4294901760
    %3957 = vmatpush1.msra.mxu0 %v3956
    %3958 = vmatprep.subr.mxu0 0.0
    %3959 = vmatpush1.msra.mxu0 0.0
    %3960 = vmatprep.subr.mxu0 0.0
    %3961 = vmatpush1.msra.mxu0 0.0
    %3962 = vmatprep.subr.mxu0 0.0
    %3963 = vmatpush1.msra.mxu0 0.0
    %3964 = vmatprep.subr.mxu0 0.0
    %3965 = vmatpush1.msra.mxu0 0.0
    %3966 = vmatprep.subr.mxu0 0.0
    %3967 = vmatpush1.msra.mxu0 0.0
    %3968 = vmatprep.subr.mxu0 0.0
    %3969 = vmatpush1.msra.mxu0 0.0
    %3970 = vmatprep.subr.mxu0 0.0
    %3971 = vmatpush1.msra.mxu0 0.0
    %3972 = vmatprep.subr.mxu0 0.0
    %3973 = vmatpush1.msra.mxu0 0.0
    %3974 = vmatprep.subr.mxu0 0.0
    %3975 = vmatpush1.msra.mxu0 0.0
    %3976 = vmatprep.subr.mxu0 0.0
    %3977 = vmatpush1.msra.mxu0 0.0
    %3978 = vmatprep.subr.mxu0 0.0
    %3979 = vmatpush1.msra.mxu0 0.0
    %3980 = vmatprep.subr.mxu0 0.0
    %3981 = vmatpush1.msra.mxu0 0.0
    %3982 = vmatprep.subr.mxu0 0.0
    %3983 = vmatpush1.msra.mxu0 0.0
    %3984 = vmatprep.subr.mxu0 0.0
    %3985 = vmatpush1.msra.mxu0 0.0
    %3986 = vmatprep.subr.mxu0 0.0
    %3987 = vmatpush1.msra.mxu0 0.0
    %3988 = vmatprep.subr.mxu0 0.0
    %3989 = vmatpush1.msra.mxu0 0.0
    %3990 = vmatprep.subr.mxu0 0.0
    %3991 = vmatpush1.msra.mxu0 0.0
    %3992 = vmatprep.subr.mxu0 0.0
    %3993 = vmatpush1.msra.mxu0 0.0
    %3994 = vmatprep.subr.mxu0 0.0
    %3995 = vmatpush1.msra.mxu0 0.0
    %3996 = vmatprep.subr.mxu0 0.0
    %3997 = vmatpush1.msra.mxu0 0.0
    %3998 = vmatprep.subr.mxu0 0.0
    %3999 = vmatpush1.msra.mxu0 0.0
    %4000 = vmatprep.subr.mxu0 0.0
    %4001 = vmatpush1.msra.mxu0 0.0
    %4002 = vmatprep.subr.mxu0 0.0
    %4003 = vmatpush1.msra.mxu0 0.0
    %4004 = vmatprep.subr.mxu0 0.0
    %4005 = vmatpush1.msra.mxu0 0.0
    %4006 = vmatprep.subr.mxu0 0.0
    %4007 = vmatpush1.msra.mxu0 0.0
    %4008 = vmatprep.subr.mxu0 0.0
    %4009 = vmatpush1.msra.mxu0 0.0
    %4010 = vmatprep.subr.mxu0 0.0
    %4011 = vmatpush1.msra.mxu0 0.0
    %4012 = vmatprep.subr.mxu0 0.0
    %4013 = vmatpush1.msra.mxu0 0.0
    %4014 = vmatprep.subr.mxu0 0.0
    %4015 = vmatpush1.msra.mxu0 0.0
    %4016 = vmatprep.subr.mxu0 0.0
    %4017 = vmatpush1.msra.mxu0 0.0
    %4018 = vmatprep.mubr.f32.mxu0 0.0
    %v4019 = vand.u32 %v3947, 4294901760
    %v4020 = vsub.f32 %v3947, %v4019
    %v4021 = vand.u32 %v4020, 4294901760
    %v4022 = vsub.f32 %v4020, %v4021
    %v4023 = vand.u32 %v4022, 4294901760
    %4024 = vmatmul.mubr.f32.gmra.mrb[0].mxu0 %v4023
    %v4025 = vpop.f32.mrb[0].mxu0
    %v4026 = vadd.f32 0.0, %v4025
    %v4027 = vpop.f32.mrb[0].mxu0
    %4028 = vmatprep.mubr.f32.mxu0 0.0
    %v4029 = vand.u32 %v3950, 4294901760
    %v4030 = vsub.f32 %v3950, %v4029
    %v4031 = vand.u32 %v4030, 4294901760
    %v4032 = vsub.f32 %v4030, %v4031
    %v4033 = vand.u32 %v4032, 4294901760
    %4034 = vmatmul.mubr.f32.gmra.mrb[0].mxu0 %v4033
    %v4035 = vpop.f32.mrb[0].mxu0
    %v4036 = vadd.f32 0.0, %v4035
    %v4037 = vpop.f32.mrb[0].mxu0
    %4038 = vdwg.mxu0
    %4039 = vmatprep.subr.mxu0 0.0
    %v4040 = vand.u32 %v3941, 4294901760
    %v4041 = vsub.f32 %v3941, %v4040
    %v4042 = vand.u32 %v4041, 4294901760
    %v4043 = vsub.f32 %v4041, %v4042
    %v4044 = vand.u32 %v4043, 4294901760
    %4045 = vmatpush1.msra.mxu0 %v4044
    %4046 = vmatprep.subr.mxu0 0.0
    %v4047 = vand.u32 %v3943, 4294901760
    %v4048 = vsub.f32 %v3943, %v4047
    %v4049 = vand.u32 %v4048, 4294901760
    %v4050 = vsub.f32 %v4048, %v4049
    %v4051 = vand.u32 %v4050, 4294901760
    %4052 = vmatpush1.msra.mxu0 %v4051
    %4053 = vmatprep.subr.mxu0 0.0
    %4054 = vmatpush1.msra.mxu0 0.0
    %4055 = vmatprep.subr.mxu0 0.0
    %4056 = vmatpush1.msra.mxu0 0.0
    %4057 = vmatprep.subr.mxu0 0.0
    %4058 = vmatpush1.msra.mxu0 0.0
    %4059 = vmatprep.subr.mxu0 0.0
    %4060 = vmatpush1.msra.mxu0 0.0
    %4061 = vmatprep.subr.mxu0 0.0
    %4062 = vmatpush1.msra.mxu0 0.0
    %4063 = vmatprep.subr.mxu0 0.0
    %4064 = vmatpush1.msra.mxu0 0.0
    %4065 = vmatprep.subr.mxu0 0.0
    %4066 = vmatpush1.msra.mxu0 0.0
    %4067 = vmatprep.subr.mxu0 0.0
    %4068 = vmatpush1.msra.mxu0 0.0
    %4069 = vmatprep.subr.mxu0 0.0
    %4070 = vmatpush1.msra.mxu0 0.0
    %4071 = vmatprep.subr.mxu0 0.0
    %4072 = vmatpush1.msra.mxu0 0.0
    %4073 = vmatprep.subr.mxu0 0.0
    %4074 = vmatpush1.msra.mxu0 0.0
    %4075 = vmatprep.subr.mxu0 0.0
    %4076 = vmatpush1.msra.mxu0 0.0
    %4077 = vmatprep.subr.mxu0 0.0
    %4078 = vmatpush1.msra.mxu0 0.0
    %4079 = vmatprep.subr.mxu0 0.0
    %4080 = vmatpush1.msra.mxu0 0.0
    %4081 = vmatprep.subr.mxu0 0.0
    %4082 = vmatpush1.msra.mxu0 0.0
    %4083 = vmatprep.subr.mxu0 0.0
    %4084 = vmatpush1.msra.mxu0 0.0
    %4085 = vmatprep.subr.mxu0 0.0
    %4086 = vmatpush1.msra.mxu0 0.0
    %4087 = vmatprep.subr.mxu0 0.0
    %4088 = vmatpush1.msra.mxu0 0.0
    %4089 = vmatprep.subr.mxu0 0.0
    %4090 = vmatpush1.msra.mxu0 0.0
    %4091 = vmatprep.subr.mxu0 0.0
    %4092 = vmatpush1.msra.mxu0 0.0
    %4093 = vmatprep.subr.mxu0 0.0
    %4094 = vmatpush1.msra.mxu0 0.0
    %4095 = vmatprep.subr.mxu0 0.0
    %4096 = vmatpush1.msra.mxu0 0.0
    %4097 = vmatprep.subr.mxu0 0.0
    %4098 = vmatpush1.msra.mxu0 0.0
    %4099 = vmatprep.subr.mxu0 0.0
    %4100 = vmatpush1.msra.mxu0 0.0
    %4101 = vmatprep.subr.mxu0 0.0
    %4102 = vmatpush1.msra.mxu0 0.0
    %4103 = vmatprep.subr.mxu0 0.0
    %4104 = vmatpush1.msra.mxu0 0.0
    %4105 = vmatprep.subr.mxu0 0.0
    %4106 = vmatpush1.msra.mxu0 0.0
    %4107 = vmatprep.subr.mxu0 0.0
    %4108 = vmatpush1.msra.mxu0 0.0
    %4109 = vmatprep.subr.mxu0 0.0
    %4110 = vmatpush1.msra.mxu0 0.0
    %4111 = vmatprep.subr.mxu0 0.0
    %4112 = vmatpush1.msra.mxu0 0.0
    %4113 = vmatprep.mubr.f32.mxu0 0.0
    %v4114 = vand.u32 %v3947, 4294901760
    %4115 = vmatmul.mubr.f32.gmra.mrb[0].mxu0 %v4114
    %v4116 = vpop.f32.mrb[0].mxu0
    %v4117 = vadd.f32 %v4026, %v4116
    %v4118 = vpop.f32.mrb[0].mxu0
    %4119 = vmatprep.mubr.f32.mxu0 0.0
    %v4120 = vand.u32 %v3950, 4294901760
    %4121 = vmatmul.mubr.f32.gmra.mrb[0].mxu0 %v4120
    %v4122 = vpop.f32.mrb[0].mxu0
    %v4123 = vadd.f32 %v4036, %v4122
    %v4124 = vpop.f32.mrb[0].mxu0
    %4125 = vdwg.mxu0
    %4126 = vmatprep.subr.mxu0 0.0
    %v4127 = vand.u32 %v3941, 4294901760
    %v4128 = vsub.f32 %v3941, %v4127
    %4129 = vmatpush1.msra.mxu0 %v4128
    %4130 = vmatprep.subr.mxu0 0.0
    %v4131 = vand.u32 %v3943, 4294901760
    %v4132 = vsub.f32 %v3943, %v4131
    %4133 = vmatpush1.msra.mxu0 %v4132
    %4134 = vmatprep.subr.mxu0 0.0
    %4135 = vmatpush1.msra.mxu0 0.0
    %4136 = vmatprep.subr.mxu0 0.0
    %4137 = vmatpush1.msra.mxu0 0.0
    %4138 = vmatprep.subr.mxu0 0.0
    %4139 = vmatpush1.msra.mxu0 0.0
    %4140 = vmatprep.subr.mxu0 0.0
    %4141 = vmatpush1.msra.mxu0 0.0
    %4142 = vmatprep.subr.mxu0 0.0
    %4143 = vmatpush1.msra.mxu0 0.0
    %4144 = vmatprep.subr.mxu0 0.0
    %4145 = vmatpush1.msra.mxu0 0.0
    %4146 = vmatprep.subr.mxu0 0.0
    %4147 = vmatpush1.msra.mxu0 0.0
    %4148 = vmatprep.subr.mxu0 0.0
    %4149 = vmatpush1.msra.mxu0 0.0
    %4150 = vmatprep.subr.mxu0 0.0
    %4151 = vmatpush1.msra.mxu0 0.0
    %4152 = vmatprep.subr.mxu0 0.0
    %4153 = vmatpush1.msra.mxu0 0.0
    %4154 = vmatprep.subr.mxu0 0.0
    %4155 = vmatpush1.msra.mxu0 0.0
    %4156 = vmatprep.subr.mxu0 0.0
    %4157 = vmatpush1.msra.mxu0 0.0
    %4158 = vmatprep.subr.mxu0 0.0
    %4159 = vmatpush1.msra.mxu0 0.0
    %4160 = vmatprep.subr.mxu0 0.0
    %4161 = vmatpush1.msra.mxu0 0.0
    %4162 = vmatprep.subr.mxu0 0.0
    %4163 = vmatpush1.msra.mxu0 0.0
    %4164 = vmatprep.subr.mxu0 0.0
    %4165 = vmatpush1.msra.mxu0 0.0
    %4166 = vmatprep.subr.mxu0 0.0
    %4167 = vmatpush1.msra.mxu0 0.0
    %4168 = vmatprep.subr.mxu0 0.0
    %4169 = vmatpush1.msra.mxu0 0.0
    %4170 = vmatprep.subr.mxu0 0.0
    %4171 = vmatpush1.msra.mxu0 0.0
    %4172 = vmatprep.subr.mxu0 0.0
    %4173 = vmatpush1.msra.mxu0 0.0
    %4174 = vmatprep.subr.mxu0 0.0
    %4175 = vmatpush1.msra.mxu0 0.0
    %4176 = vmatprep.subr.mxu0 0.0
    %4177 = vmatpush1.msra.mxu0 0.0
    %4178 = vmatprep.subr.mxu0 0.0
    %4179 = vmatpush1.msra.mxu0 0.0
    %4180 = vmatprep.subr.mxu0 0.0
    %4181 = vmatpush1.msra.mxu0 0.0
    %4182 = vmatprep.subr.mxu0 0.0
    %4183 = vmatpush1.msra.mxu0 0.0
    %4184 = vmatprep.subr.mxu0 0.0
    %4185 = vmatpush1.msra.mxu0 0.0
    %4186 = vmatprep.subr.mxu0 0.0
    %4187 = vmatpush1.msra.mxu0 0.0
    %4188 = vmatprep.subr.mxu0 0.0
    %4189 = vmatpush1.msra.mxu0 0.0
    %4190 = vmatprep.subr.mxu0 0.0
    %4191 = vmatpush1.msra.mxu0 0.0
    %4192 = vmatprep.subr.mxu0 0.0
    %4193 = vmatpush1.msra.mxu0 0.0
    %4194 = vmatprep.mubr.f32.mxu0 0.0
    %v4195 = vand.u32 %v3947, 4294901760
    %v4196 = vsub.f32 %v3947, %v4195
    %4197 = vmatmul.mubr.f32.gmra.mrb[0].mxu0 %v4196
    %v4198 = vpop.f32.mrb[0].mxu0
    %v4199 = vadd.f32 %v4117, %v4198
    %v4200 = vpop.f32.mrb[0].mxu0
    %4201 = vmatprep.mubr.f32.mxu0 0.0
    %v4202 = vand.u32 %v3950, 4294901760
    %v4203 = vsub.f32 %v3950, %v4202
    %4204 = vmatmul.mubr.f32.gmra.mrb[0].mxu0 %v4203
    %v4205 = vpop.f32.mrb[0].mxu0
    %v4206 = vadd.f32 %v4123, %v4205
    %v4207 = vpop.f32.mrb[0].mxu0
    %4208 = vdwg.mxu0
    %4209 = vmatprep.subr.mxu0 0.0
    %v4210 = vand.u32 %v3941, 4294901760
    %4211 = vmatpush1.msra.mxu0 %v4210
    %4212 = vmatprep.subr.mxu0 0.0
    %v4213 = vand.u32 %v3943, 4294901760
    %4214 = vmatpush1.msra.mxu0 %v4213
    %4215 = vmatprep.subr.mxu0 0.0
    %4216 = vmatpush1.msra.mxu0 0.0
    %4217 = vmatprep.subr.mxu0 0.0
    %4218 = vmatpush1.msra.mxu0 0.0
    %4219 = vmatprep.subr.mxu0 0.0
    %4220 = vmatpush1.msra.mxu0 0.0
    %4221 = vmatprep.subr.mxu0 0.0
    %4222 = vmatpush1.msra.mxu0 0.0
    %4223 = vmatprep.subr.mxu0 0.0
    %4224 = vmatpush1.msra.mxu0 0.0
    %4225 = vmatprep.subr.mxu0 0.0
    %4226 = vmatpush1.msra.mxu0 0.0
    %4227 = vmatprep.subr.mxu0 0.0
    %4228 = vmatpush1.msra.mxu0 0.0
    %4229 = vmatprep.subr.mxu0 0.0
    %4230 = vmatpush1.msra.mxu0 0.0
    %4231 = vmatprep.subr.mxu0 0.0
    %4232 = vmatpush1.msra.mxu0 0.0
    %4233 = vmatprep.subr.mxu0 0.0
    %4234 = vmatpush1.msra.mxu0 0.0
    %4235 = vmatprep.subr.mxu0 0.0
    %4236 = vmatpush1.msra.mxu0 0.0
    %4237 = vmatprep.subr.mxu0 0.0
    %4238 = vmatpush1.msra.mxu0 0.0
    %4239 = vmatprep.subr.mxu0 0.0
    %4240 = vmatpush1.msra.mxu0 0.0
    %4241 = vmatprep.subr.mxu0 0.0
    %4242 = vmatpush1.msra.mxu0 0.0
    %4243 = vmatprep.subr.mxu0 0.0
    %4244 = vmatpush1.msra.mxu0 0.0
    %4245 = vmatprep.subr.mxu0 0.0
    %4246 = vmatpush1.msra.mxu0 0.0
    %4247 = vmatprep.subr.mxu0 0.0
    %4248 = vmatpush1.msra.mxu0 0.0
    %4249 = vmatprep.subr.mxu0 0.0
    %4250 = vmatpush1.msra.mxu0 0.0
    %4251 = vmatprep.subr.mxu0 0.0
    %4252 = vmatpush1.msra.mxu0 0.0
    %4253 = vmatprep.subr.mxu0 0.0
    %4254 = vmatpush1.msra.mxu0 0.0
    %4255 = vmatprep.subr.mxu0 0.0
    %4256 = vmatpush1.msra.mxu0 0.0
    %4257 = vmatprep.subr.mxu0 0.0
    %4258 = vmatpush1.msra.mxu0 0.0
    %4259 = vmatprep.subr.mxu0 0.0
    %4260 = vmatpush1.msra.mxu0 0.0
    %4261 = vmatprep.subr.mxu0 0.0
    %4262 = vmatpush1.msra.mxu0 0.0
    %4263 = vmatprep.subr.mxu0 0.0
    %4264 = vmatpush1.msra.mxu0 0.0
    %4265 = vmatprep.subr.mxu0 0.0
    %4266 = vmatpush1.msra.mxu0 0.0
    %4267 = vmatprep.subr.mxu0 0.0
    %4268 = vmatpush1.msra.mxu0 0.0
    %4269 = vmatprep.subr.mxu0 0.0
    %4270 = vmatpush1.msra.mxu0 0.0
    %4271 = vmatprep.subr.mxu0 0.0
    %4272 = vmatpush1.msra.mxu0 0.0
    %4273 = vmatprep.subr.mxu0 0.0
    %4274 = vmatpush1.msra.mxu0 0.0
    %4275 = vmatprep.mubr.f32.mxu0 0.0
    %v4276 = vand.u32 %v3947, 4294901760
    %v4277 = vsub.f32 %v3947, %v4276
    %v4278 = vand.u32 %v4277, 4294901760
    %4279 = vmatmul.mubr.f32.gmra.mrb[0].mxu0 %v4278
    %v4280 = vpop.f32.mrb[0].mxu0
    %v4281 = vadd.f32 %v4199, %v4280
    %v4282 = vpop.f32.mrb[0].mxu0
    %4283 = vmatprep.mubr.f32.mxu0 0.0
    %v4284 = vand.u32 %v3950, 4294901760
    %v4285 = vsub.f32 %v3950, %v4284
    %v4286 = vand.u32 %v4285, 4294901760
    %4287 = vmatmul.mubr.f32.gmra.mrb[0].mxu0 %v4286
    %v4288 = vpop.f32.mrb[0].mxu0
    %v4289 = vadd.f32 %v4206, %v4288
    %v4290 = vpop.f32.mrb[0].mxu0
    %4291 = vdwg.mxu0
    %4292 = vmatprep.subr.mxu0 0.0
    %v4293 = vand.u32 %v3941, 4294901760
    %v4294 = vsub.f32 %v3941, %v4293
    %v4295 = vand.u32 %v4294, 4294901760
    %4296 = vmatpush1.msra.mxu0 %v4295
    %4297 = vmatprep.subr.mxu0 0.0
    %v4298 = vand.u32 %v3943, 4294901760
    %v4299 = vsub.f32 %v3943, %v4298
    %v4300 = vand.u32 %v4299, 4294901760
    %4301 = vmatpush1.msra.mxu0 %v4300
    %4302 = vmatprep.subr.mxu0 0.0
    %4303 = vmatpush1.msra.mxu0 0.0
    %4304 = vmatprep.subr.mxu0 0.0
    %4305 = vmatpush1.msra.mxu0 0.0
    %4306 = vmatprep.subr.mxu0 0.0
    %4307 = vmatpush1.msra.mxu0 0.0
    %4308 = vmatprep.subr.mxu0 0.0
    %4309 = vmatpush1.msra.mxu0 0.0
    %4310 = vmatprep.subr.mxu0 0.0
    %4311 = vmatpush1.msra.mxu0 0.0
    %4312 = vmatprep.subr.mxu0 0.0
    %4313 = vmatpush1.msra.mxu0 0.0
    %4314 = vmatprep.subr.mxu0 0.0
    %4315 = vmatpush1.msra.mxu0 0.0
    %4316 = vmatprep.subr.mxu0 0.0
    %4317 = vmatpush1.msra.mxu0 0.0
    %4318 = vmatprep.subr.mxu0 0.0
    %4319 = vmatpush1.msra.mxu0 0.0
    %4320 = vmatprep.subr.mxu0 0.0
    %4321 = vmatpush1.msra.mxu0 0.0
    %4322 = vmatprep.subr.mxu0 0.0
    %4323 = vmatpush1.msra.mxu0 0.0
    %4324 = vmatprep.subr.mxu0 0.0
    %4325 = vmatpush1.msra.mxu0 0.0
    %4326 = vmatprep.subr.mxu0 0.0
    %4327 = vmatpush1.msra.mxu0 0.0
    %4328 = vmatprep.subr.mxu0 0.0
    %4329 = vmatpush1.msra.mxu0 0.0
    %4330 = vmatprep.subr.mxu0 0.0
    %4331 = vmatpush1.msra.mxu0 0.0
    %4332 = vmatprep.subr.mxu0 0.0
    %4333 = vmatpush1.msra.mxu0 0.0
    %4334 = vmatprep.subr.mxu0 0.0
    %4335 = vmatpush1.msra.mxu0 0.0
    %4336 = vmatprep.subr.mxu0 0.0
    %4337 = vmatpush1.msra.mxu0 0.0
    %4338 = vmatprep.subr.mxu0 0.0
    %4339 = vmatpush1.msra.mxu0 0.0
    %4340 = vmatprep.subr.mxu0 0.0
    %4341 = vmatpush1.msra.mxu0 0.0
    %4342 = vmatprep.subr.mxu0 0.0
    %4343 = vmatpush1.msra.mxu0 0.0
    %4344 = vmatprep.subr.mxu0 0.0
    %4345 = vmatpush1.msra.mxu0 0.0
    %4346 = vmatprep.subr.mxu0 0.0
    %4347 = vmatpush1.msra.mxu0 0.0
    %4348 = vmatprep.subr.mxu0 0.0
    %4349 = vmatpush1.msra.mxu0 0.0
    %4350 = vmatprep.subr.mxu0 0.0
    %4351 = vmatpush1.msra.mxu0 0.0
    %4352 = vmatprep.subr.mxu0 0.0
    %4353 = vmatpush1.msra.mxu0 0.0
    %4354 = vmatprep.subr.mxu0 0.0
    %4355 = vmatpush1.msra.mxu0 0.0
    %4356 = vmatprep.subr.mxu0 0.0
    %4357 = vmatpush1.msra.mxu0 0.0
    %4358 = vmatprep.subr.mxu0 0.0
    %4359 = vmatpush1.msra.mxu0 0.0
    %4360 = vmatprep.subr.mxu0 0.0
    %4361 = vmatpush1.msra.mxu0 0.0
    %4362 = vmatprep.mubr.f32.mxu0 0.0
    %v4363 = vand.u32 %v3947, 4294901760
    %4364 = vmatmul.mubr.f32.gmra.mrb[0].mxu0 %v4363
    %v4365 = vpop.f32.mrb[0].mxu0
    %v4366 = vadd.f32 %v4281, %v4365
    %v4367 = vpop.f32.mrb[0].mxu0
    %4368 = vmatprep.mubr.f32.mxu0 0.0
    %v4369 = vand.u32 %v3950, 4294901760
    %4370 = vmatmul.mubr.f32.gmra.mrb[0].mxu0 %v4369
    %v4371 = vpop.f32.mrb[0].mxu0
    %v4372 = vadd.f32 %v4289, %v4371
    %v4373 = vpop.f32.mrb[0].mxu0
    %4374 = vdwg.mxu0
    %4375 = vmatprep.subr.mxu0 0.0
    %v4376 = vand.u32 %v3941, 4294901760
    %4377 = vmatpush1.msra.mxu0 %v4376
    %4378 = vmatprep.subr.mxu0 0.0
    %v4379 = vand.u32 %v3943, 4294901760
    %4380 = vmatpush1.msra.mxu0 %v4379
    %4381 = vmatprep.subr.mxu0 0.0
    %4382 = vmatpush1.msra.mxu0 0.0
    %4383 = vmatprep.subr.mxu0 0.0
    %4384 = vmatpush1.msra.mxu0 0.0
    %4385 = vmatprep.subr.mxu0 0.0
    %4386 = vmatpush1.msra.mxu0 0.0
    %4387 = vmatprep.subr.mxu0 0.0
    %4388 = vmatpush1.msra.mxu0 0.0
    %4389 = vmatprep.subr.mxu0 0.0
    %4390 = vmatpush1.msra.mxu0 0.0
    %4391 = vmatprep.subr.mxu0 0.0
    %4392 = vmatpush1.msra.mxu0 0.0
    %4393 = vmatprep.subr.mxu0 0.0
    %4394 = vmatpush1.msra.mxu0 0.0
    %4395 = vmatprep.subr.mxu0 0.0
    %4396 = vmatpush1.msra.mxu0 0.0
    %4397 = vmatprep.subr.mxu0 0.0
    %4398 = vmatpush1.msra.mxu0 0.0
    %4399 = vmatprep.subr.mxu0 0.0
    %4400 = vmatpush1.msra.mxu0 0.0
    %4401 = vmatprep.subr.mxu0 0.0
    %4402 = vmatpush1.msra.mxu0 0.0
    %4403 = vmatprep.subr.mxu0 0.0
    %4404 = vmatpush1.msra.mxu0 0.0
    %4405 = vmatprep.subr.mxu0 0.0
    %4406 = vmatpush1.msra.mxu0 0.0
    %4407 = vmatprep.subr.mxu0 0.0
    %4408 = vmatpush1.msra.mxu0 0.0
    %4409 = vmatprep.subr.mxu0 0.0
    %4410 = vmatpush1.msra.mxu0 0.0
    %4411 = vmatprep.subr.mxu0 0.0
    %4412 = vmatpush1.msra.mxu0 0.0
    %4413 = vmatprep.subr.mxu0 0.0
    %4414 = vmatpush1.msra.mxu0 0.0
    %4415 = vmatprep.subr.mxu0 0.0
    %4416 = vmatpush1.msra.mxu0 0.0
    %4417 = vmatprep.subr.mxu0 0.0
    %4418 = vmatpush1.msra.mxu0 0.0
    %4419 = vmatprep.subr.mxu0 0.0
    %4420 = vmatpush1.msra.mxu0 0.0
    %4421 = vmatprep.subr.mxu0 0.0
    %4422 = vmatpush1.msra.mxu0 0.0
    %4423 = vmatprep.subr.mxu0 0.0
    %4424 = vmatpush1.msra.mxu0 0.0
    %4425 = vmatprep.subr.mxu0 0.0
    %4426 = vmatpush1.msra.mxu0 0.0
    %4427 = vmatprep.subr.mxu0 0.0
    %4428 = vmatpush1.msra.mxu0 0.0
    %4429 = vmatprep.subr.mxu0 0.0
    %4430 = vmatpush1.msra.mxu0 0.0
    %4431 = vmatprep.subr.mxu0 0.0
    %4432 = vmatpush1.msra.mxu0 0.0
    %4433 = vmatprep.subr.mxu0 0.0
    %4434 = vmatpush1.msra.mxu0 0.0
    %4435 = vmatprep.subr.mxu0 0.0
    %4436 = vmatpush1.msra.mxu0 0.0
    %4437 = vmatprep.subr.mxu0 0.0
    %4438 = vmatpush1.msra.mxu0 0.0
    %4439 = vmatprep.subr.mxu0 0.0
    %4440 = vmatpush1.msra.mxu0 0.0
    %4441 = vmatprep.mubr.f32.mxu0 0.0
    %v4442 = vand.u32 %v3947, 4294901760
    %4443 = vmatmul.mubr.f32.gmra.mrb[0].mxu0 %v4442
    %v4444 = vpop.f32.mrb[0].mxu0
    %v4445 = vadd.f32 %v4366, %v4444
    %v4446 = vpop.f32.mrb[0].mxu0
    %4447 = vmatprep.mubr.f32.mxu0 0.0
    %v4448 = vand.u32 %v3950, 4294901760
    %4449 = vmatmul.mubr.f32.gmra.mrb[0].mxu0 %v4448
    %v4450 = vpop.f32.mrb[0].mxu0
    %v4451 = vadd.f32 %v4372, %v4450
    %v4452 = vpop.f32.mrb[0].mxu0
    %4453 = vdwg.mxu0
    %4456 = vrot.lane.b32.xlu0 %v3931, 64
    %v4457 = vpop.permute.xlu0 %4456
    %4458 = vrot.lane.b32.xlu0 %v3932, 64
    %v4459 = vpop.permute.xlu0 %4458
    %v4463 = vsel %vm3839, %v3913, 0
    %v4466 = vsel %vm3839, %v3915, 0
    %4468 = vmatprep.subr.mxu0 0.0
    %v4469 = vand.u32 %v4457, 4294901760
    %4470 = vmatpush1.msra.mxu0 %v4469
    %4471 = vmatprep.subr.mxu0 0.0
    %v4472 = vand.u32 %v4459, 4294901760
    %4473 = vmatpush1.msra.mxu0 %v4472
    %4474 = vmatprep.subr.mxu0 0.0
    %4475 = vmatpush1.msra.mxu0 0.0
    %4476 = vmatprep.subr.mxu0 0.0
    %4477 = vmatpush1.msra.mxu0 0.0
    %4478 = vmatprep.subr.mxu0 0.0
    %4479 = vmatpush1.msra.mxu0 0.0
    %4480 = vmatprep.subr.mxu0 0.0
    %4481 = vmatpush1.msra.mxu0 0.0
    %4482 = vmatprep.subr.mxu0 0.0
    %4483 = vmatpush1.msra.mxu0 0.0
    %4484 = vmatprep.subr.mxu0 0.0
    %4485 = vmatpush1.msra.mxu0 0.0
    %4486 = vmatprep.subr.mxu0 0.0
    %4487 = vmatpush1.msra.mxu0 0.0
    %4488 = vmatprep.subr.mxu0 0.0
    %4489 = vmatpush1.msra.mxu0 0.0
    %4490 = vmatprep.subr.mxu0 0.0
    %4491 = vmatpush1.msra.mxu0 0.0
    %4492 = vmatprep.subr.mxu0 0.0
    %4493 = vmatpush1.msra.mxu0 0.0
    %4494 = vmatprep.subr.mxu0 0.0
    %4495 = vmatpush1.msra.mxu0 0.0
    %4496 = vmatprep.subr.mxu0 0.0
    %4497 = vmatpush1.msra.mxu0 0.0
    %4498 = vmatprep.subr.mxu0 0.0
    %4499 = vmatpush1.msra.mxu0 0.0
    %4500 = vmatprep.subr.mxu0 0.0
    %4501 = vmatpush1.msra.mxu0 0.0
    %4502 = vmatprep.subr.mxu0 0.0
    %4503 = vmatpush1.msra.mxu0 0.0
    %4504 = vmatprep.subr.mxu0 0.0
    %4505 = vmatpush1.msra.mxu0 0.0
    %4506 = vmatprep.subr.mxu0 0.0
    %4507 = vmatpush1.msra.mxu0 0.0
    %4508 = vmatprep.subr.mxu0 0.0
    %4509 = vmatpush1.msra.mxu0 0.0
    %4510 = vmatprep.subr.mxu0 0.0
    %4511 = vmatpush1.msra.mxu0 0.0
    %4512 = vmatprep.subr.mxu0 0.0
    %4513 = vmatpush1.msra.mxu0 0.0
    %4514 = vmatprep.subr.mxu0 0.0
    %4515 = vmatpush1.msra.mxu0 0.0
    %4516 = vmatprep.subr.mxu0 0.0
    %4517 = vmatpush1.msra.mxu0 0.0
    %4518 = vmatprep.subr.mxu0 0.0
    %4519 = vmatpush1.msra.mxu0 0.0
    %4520 = vmatprep.subr.mxu0 0.0
    %4521 = vmatpush1.msra.mxu0 0.0
    %4522 = vmatprep.subr.mxu0 0.0
    %4523 = vmatpush1.msra.mxu0 0.0
    %4524 = vmatprep.subr.mxu0 0.0
    %4525 = vmatpush1.msra.mxu0 0.0
    %4526 = vmatprep.subr.mxu0 0.0
    %4527 = vmatpush1.msra.mxu0 0.0
    %4528 = vmatprep.subr.mxu0 0.0
    %4529 = vmatpush1.msra.mxu0 0.0
    %4530 = vmatprep.subr.mxu0 0.0
    %4531 = vmatpush1.msra.mxu0 0.0
    %4532 = vmatprep.subr.mxu0 0.0
    %4533 = vmatpush1.msra.mxu0 0.0
    %4534 = vmatprep.mubr.f32.mxu0 0.0
    %v4535 = vand.u32 %v4463, 4294901760
    %v4536 = vsub.f32 %v4463, %v4535
    %v4537 = vand.u32 %v4536, 4294901760
    %v4538 = vsub.f32 %v4536, %v4537
    %v4539 = vand.u32 %v4538, 4294901760
    %4540 = vmatmul.mubr.f32.gmra.mrb[0].mxu0 %v4539
    %v4541 = vpop.f32.mrb[0].mxu0
    %v4542 = vadd.f32 %v4445, %v4541
    %v4543 = vpop.f32.mrb[0].mxu0
    %4544 = vmatprep.mubr.f32.mxu0 0.0
    %v4545 = vand.u32 %v4466, 4294901760
    %v4546 = vsub.f32 %v4466, %v4545
    %v4547 = vand.u32 %v4546, 4294901760
    %v4548 = vsub.f32 %v4546, %v4547
    %v4549 = vand.u32 %v4548, 4294901760
    %4550 = vmatmul.mubr.f32.gmra.mrb[0].mxu0 %v4549
    %v4551 = vpop.f32.mrb[0].mxu0
    %v4552 = vadd.f32 %v4451, %v4551
    %v4553 = vpop.f32.mrb[0].mxu0
    %4554 = vdwg.mxu0
    %4555 = vmatprep.subr.mxu0 0.0
    %v4556 = vand.u32 %v4457, 4294901760
    %v4557 = vsub.f32 %v4457, %v4556
    %v4558 = vand.u32 %v4557, 4294901760
    %v4559 = vsub.f32 %v4557, %v4558
    %v4560 = vand.u32 %v4559, 4294901760
    %4561 = vmatpush1.msra.mxu0 %v4560
    %4562 = vmatprep.subr.mxu0 0.0
    %v4563 = vand.u32 %v4459, 4294901760
    %v4564 = vsub.f32 %v4459, %v4563
    %v4565 = vand.u32 %v4564, 4294901760
    %v4566 = vsub.f32 %v4564, %v4565
    %v4567 = vand.u32 %v4566, 4294901760
    %4568 = vmatpush1.msra.mxu0 %v4567
    %4569 = vmatprep.subr.mxu0 0.0
    %4570 = vmatpush1.msra.mxu0 0.0
    %4571 = vmatprep.subr.mxu0 0.0
    %4572 = vmatpush1.msra.mxu0 0.0
    %4573 = vmatprep.subr.mxu0 0.0
    %4574 = vmatpush1.msra.mxu0 0.0
    %4575 = vmatprep.subr.mxu0 0.0
    %4576 = vmatpush1.msra.mxu0 0.0
    %4577 = vmatprep.subr.mxu0 0.0
    %4578 = vmatpush1.msra.mxu0 0.0
    %4579 = vmatprep.subr.mxu0 0.0
    %4580 = vmatpush1.msra.mxu0 0.0
    %4581 = vmatprep.subr.mxu0 0.0
    %4582 = vmatpush1.msra.mxu0 0.0
    %4583 = vmatprep.subr.mxu0 0.0
    %4584 = vmatpush1.msra.mxu0 0.0
    %4585 = vmatprep.subr.mxu0 0.0
    %4586 = vmatpush1.msra.mxu0 0.0
    %4587 = vmatprep.subr.mxu0 0.0
    %4588 = vmatpush1.msra.mxu0 0.0
    %4589 = vmatprep.subr.mxu0 0.0
    %4590 = vmatpush1.msra.mxu0 0.0
    %4591 = vmatprep.subr.mxu0 0.0
    %4592 = vmatpush1.msra.mxu0 0.0
    %4593 = vmatprep.subr.mxu0 0.0
    %4594 = vmatpush1.msra.mxu0 0.0
    %4595 = vmatprep.subr.mxu0 0.0
    %4596 = vmatpush1.msra.mxu0 0.0
    %4597 = vmatprep.subr.mxu0 0.0
    %4598 = vmatpush1.msra.mxu0 0.0
    %4599 = vmatprep.subr.mxu0 0.0
    %4600 = vmatpush1.msra.mxu0 0.0
    %4601 = vmatprep.subr.mxu0 0.0
    %4602 = vmatpush1.msra.mxu0 0.0
    %4603 = vmatprep.subr.mxu0 0.0
    %4604 = vmatpush1.msra.mxu0 0.0
    %4605 = vmatprep.subr.mxu0 0.0
    %4606 = vmatpush1.msra.mxu0 0.0
    %4607 = vmatprep.subr.mxu0 0.0
    %4608 = vmatpush1.msra.mxu0 0.0
    %4609 = vmatprep.subr.mxu0 0.0
    %4610 = vmatpush1.msra.mxu0 0.0
    %4611 = vmatprep.subr.mxu0 0.0
    %4612 = vmatpush1.msra.mxu0 0.0
    %4613 = vmatprep.subr.mxu0 0.0
    %4614 = vmatpush1.msra.mxu0 0.0
    %4615 = vmatprep.subr.mxu0 0.0
    %4616 = vmatpush1.msra.mxu0 0.0
    %4617 = vmatprep.subr.mxu0 0.0
    %4618 = vmatpush1.msra.mxu0 0.0
    %4619 = vmatprep.subr.mxu0 0.0
    %4620 = vmatpush1.msra.mxu0 0.0
    %4621 = vmatprep.subr.mxu0 0.0
    %4622 = vmatpush1.msra.mxu0 0.0
    %4623 = vmatprep.subr.mxu0 0.0
    %4624 = vmatpush1.msra.mxu0 0.0
    %4625 = vmatprep.subr.mxu0 0.0
    %4626 = vmatpush1.msra.mxu0 0.0
    %4627 = vmatprep.subr.mxu0 0.0
    %4628 = vmatpush1.msra.mxu0 0.0
    %4629 = vmatprep.mubr.f32.mxu0 0.0
    %v4630 = vand.u32 %v4463, 4294901760
    %4631 = vmatmul.mubr.f32.gmra.mrb[0].mxu0 %v4630
    %v4632 = vpop.f32.mrb[0].mxu0
    %v4633 = vadd.f32 %v4542, %v4632
    %v4634 = vpop.f32.mrb[0].mxu0
    %4635 = vmatprep.mubr.f32.mxu0 0.0
    %v4636 = vand.u32 %v4466, 4294901760
    %4637 = vmatmul.mubr.f32.gmra.mrb[0].mxu0 %v4636
    %v4638 = vpop.f32.mrb[0].mxu0
    %v4639 = vadd.f32 %v4552, %v4638
    %v4640 = vpop.f32.mrb[0].mxu0
    %4641 = vdwg.mxu0
    %4642 = vmatprep.subr.mxu0 0.0
    %v4643 = vand.u32 %v4457, 4294901760
    %v4644 = vsub.f32 %v4457, %v4643
    %4645 = vmatpush1.msra.mxu0 %v4644
    %4646 = vmatprep.subr.mxu0 0.0
    %v4647 = vand.u32 %v4459, 4294901760
    %v4648 = vsub.f32 %v4459, %v4647
    %4649 = vmatpush1.msra.mxu0 %v4648
    %4650 = vmatprep.subr.mxu0 0.0
    %4651 = vmatpush1.msra.mxu0 0.0
    %4652 = vmatprep.subr.mxu0 0.0
    %4653 = vmatpush1.msra.mxu0 0.0
    %4654 = vmatprep.subr.mxu0 0.0
    %4655 = vmatpush1.msra.mxu0 0.0
    %4656 = vmatprep.subr.mxu0 0.0
    %4657 = vmatpush1.msra.mxu0 0.0
    %4658 = vmatprep.subr.mxu0 0.0
    %4659 = vmatpush1.msra.mxu0 0.0
    %4660 = vmatprep.subr.mxu0 0.0
    %4661 = vmatpush1.msra.mxu0 0.0
    %4662 = vmatprep.subr.mxu0 0.0
    %4663 = vmatpush1.msra.mxu0 0.0
    %4664 = vmatprep.subr.mxu0 0.0
    %4665 = vmatpush1.msra.mxu0 0.0
    %4666 = vmatprep.subr.mxu0 0.0
    %4667 = vmatpush1.msra.mxu0 0.0
    %4668 = vmatprep.subr.mxu0 0.0
    %4669 = vmatpush1.msra.mxu0 0.0
    %4670 = vmatprep.subr.mxu0 0.0
    %4671 = vmatpush1.msra.mxu0 0.0
    %4672 = vmatprep.subr.mxu0 0.0
    %4673 = vmatpush1.msra.mxu0 0.0
    %4674 = vmatprep.subr.mxu0 0.0
    %4675 = vmatpush1.msra.mxu0 0.0
    %4676 = vmatprep.subr.mxu0 0.0
    %4677 = vmatpush1.msra.mxu0 0.0
    %4678 = vmatprep.subr.mxu0 0.0
    %4679 = vmatpush1.msra.mxu0 0.0
    %4680 = vmatprep.subr.mxu0 0.0
    %4681 = vmatpush1.msra.mxu0 0.0
    %4682 = vmatprep.subr.mxu0 0.0
    %4683 = vmatpush1.msra.mxu0 0.0
    %4684 = vmatprep.subr.mxu0 0.0
    %4685 = vmatpush1.msra.mxu0 0.0
    %4686 = vmatprep.subr.mxu0 0.0
    %4687 = vmatpush1.msra.mxu0 0.0
    %4688 = vmatprep.subr.mxu0 0.0
    %4689 = vmatpush1.msra.mxu0 0.0
    %4690 = vmatprep.subr.mxu0 0.0
    %4691 = vmatpush1.msra.mxu0 0.0
    %4692 = vmatprep.subr.mxu0 0.0
    %4693 = vmatpush1.msra.mxu0 0.0
    %4694 = vmatprep.subr.mxu0 0.0
    %4695 = vmatpush1.msra.mxu0 0.0
    %4696 = vmatprep.subr.mxu0 0.0
    %4697 = vmatpush1.msra.mxu0 0.0
    %4698 = vmatprep.subr.mxu0 0.0
    %4699 = vmatpush1.msra.mxu0 0.0
    %4700 = vmatprep.subr.mxu0 0.0
    %4701 = vmatpush1.msra.mxu0 0.0
    %4702 = vmatprep.subr.mxu0 0.0
    %4703 = vmatpush1.msra.mxu0 0.0
    %4704 = vmatprep.subr.mxu0 0.0
    %4705 = vmatpush1.msra.mxu0 0.0
    %4706 = vmatprep.subr.mxu0 0.0
    %4707 = vmatpush1.msra.mxu0 0.0
    %4708 = vmatprep.subr.mxu0 0.0
    %4709 = vmatpush1.msra.mxu0 0.0
    %4710 = vmatprep.mubr.f32.mxu0 0.0
    %v4711 = vand.u32 %v4463, 4294901760
    %v4712 = vsub.f32 %v4463, %v4711
    %4713 = vmatmul.mubr.f32.gmra.mrb[0].mxu0 %v4712
    %v4714 = vpop.f32.mrb[0].mxu0
    %v4715 = vadd.f32 %v4633, %v4714
    %v4716 = vpop.f32.mrb[0].mxu0
    %4717 = vmatprep.mubr.f32.mxu0 0.0
    %v4718 = vand.u32 %v4466, 4294901760
    %v4719 = vsub.f32 %v4466, %v4718
    %4720 = vmatmul.mubr.f32.gmra.mrb[0].mxu0 %v4719
    %v4721 = vpop.f32.mrb[0].mxu0
    %v4722 = vadd.f32 %v4639, %v4721
    %v4723 = vpop.f32.mrb[0].mxu0
    %4724 = vdwg.mxu0
    %4725 = vmatprep.subr.mxu0 0.0
    %v4726 = vand.u32 %v4457, 4294901760
    %4727 = vmatpush1.msra.mxu0 %v4726
    %4728 = vmatprep.subr.mxu0 0.0
    %v4729 = vand.u32 %v4459, 4294901760
    %4730 = vmatpush1.msra.mxu0 %v4729
    %4731 = vmatprep.subr.mxu0 0.0
    %4732 = vmatpush1.msra.mxu0 0.0
    %4733 = vmatprep.subr.mxu0 0.0
    %4734 = vmatpush1.msra.mxu0 0.0
    %4735 = vmatprep.subr.mxu0 0.0
    %4736 = vmatpush1.msra.mxu0 0.0
    %4737 = vmatprep.subr.mxu0 0.0
    %4738 = vmatpush1.msra.mxu0 0.0
    %4739 = vmatprep.subr.mxu0 0.0
    %4740 = vmatpush1.msra.mxu0 0.0
    %4741 = vmatprep.subr.mxu0 0.0
    %4742 = vmatpush1.msra.mxu0 0.0
    %4743 = vmatprep.subr.mxu0 0.0
    %4744 = vmatpush1.msra.mxu0 0.0
    %4745 = vmatprep.subr.mxu0 0.0
    %4746 = vmatpush1.msra.mxu0 0.0
    %4747 = vmatprep.subr.mxu0 0.0
    %4748 = vmatpush1.msra.mxu0 0.0
    %4749 = vmatprep.subr.mxu0 0.0
    %4750 = vmatpush1.msra.mxu0 0.0
    %4751 = vmatprep.subr.mxu0 0.0
    %4752 = vmatpush1.msra.mxu0 0.0
    %4753 = vmatprep.subr.mxu0 0.0
    %4754 = vmatpush1.msra.mxu0 0.0
    %4755 = vmatprep.subr.mxu0 0.0
    %4756 = vmatpush1.msra.mxu0 0.0
    %4757 = vmatprep.subr.mxu0 0.0
    %4758 = vmatpush1.msra.mxu0 0.0
    %4759 = vmatprep.subr.mxu0 0.0
    %4760 = vmatpush1.msra.mxu0 0.0
    %4761 = vmatprep.subr.mxu0 0.0
    %4762 = vmatpush1.msra.mxu0 0.0
    %4763 = vmatprep.subr.mxu0 0.0
    %4764 = vmatpush1.msra.mxu0 0.0
    %4765 = vmatprep.subr.mxu0 0.0
    %4766 = vmatpush1.msra.mxu0 0.0
    %4767 = vmatprep.subr.mxu0 0.0
    %4768 = vmatpush1.msra.mxu0 0.0
    %4769 = vmatprep.subr.mxu0 0.0
    %4770 = vmatpush1.msra.mxu0 0.0
    %4771 = vmatprep.subr.mxu0 0.0
    %4772 = vmatpush1.msra.mxu0 0.0
    %4773 = vmatprep.subr.mxu0 0.0
    %4774 = vmatpush1.msra.mxu0 0.0
    %4775 = vmatprep.subr.mxu0 0.0
    %4776 = vmatpush1.msra.mxu0 0.0
    %4777 = vmatprep.subr.mxu0 0.0
    %4778 = vmatpush1.msra.mxu0 0.0
    %4779 = vmatprep.subr.mxu0 0.0
    %4780 = vmatpush1.msra.mxu0 0.0
    %4781 = vmatprep.subr.mxu0 0.0
    %4782 = vmatpush1.msra.mxu0 0.0
    %4783 = vmatprep.subr.mxu0 0.0
    %4784 = vmatpush1.msra.mxu0 0.0
    %4785 = vmatprep.subr.mxu0 0.0
    %4786 = vmatpush1.msra.mxu0 0.0
    %4787 = vmatprep.subr.mxu0 0.0
    %4788 = vmatpush1.msra.mxu0 0.0
    %4789 = vmatprep.subr.mxu0 0.0
    %4790 = vmatpush1.msra.mxu0 0.0
    %4791 = vmatprep.mubr.f32.mxu0 0.0
    %v4792 = vand.u32 %v4463, 4294901760
    %v4793 = vsub.f32 %v4463, %v4792
    %v4794 = vand.u32 %v4793, 4294901760
    %4795 = vmatmul.mubr.f32.gmra.mrb[0].mxu0 %v4794
    %v4796 = vpop.f32.mrb[0].mxu0
    %v4797 = vadd.f32 %v4715, %v4796
    %v4798 = vpop.f32.mrb[0].mxu0
    %4799 = vmatprep.mubr.f32.mxu0 0.0
    %v4800 = vand.u32 %v4466, 4294901760
    %v4801 = vsub.f32 %v4466, %v4800
    %v4802 = vand.u32 %v4801, 4294901760
    %4803 = vmatmul.mubr.f32.gmra.mrb[0].mxu0 %v4802
    %v4804 = vpop.f32.mrb[0].mxu0
    %v4805 = vadd.f32 %v4722, %v4804
    %v4806 = vpop.f32.mrb[0].mxu0
    %4807 = vdwg.mxu0
    %4808 = vmatprep.subr.mxu0 0.0
    %v4809 = vand.u32 %v4457, 4294901760
    %v4810 = vsub.f32 %v4457, %v4809
    %v4811 = vand.u32 %v4810, 4294901760
    %4812 = vmatpush1.msra.mxu0 %v4811
    %4813 = vmatprep.subr.mxu0 0.0
    %v4814 = vand.u32 %v4459, 4294901760
    %v4815 = vsub.f32 %v4459, %v4814
    %v4816 = vand.u32 %v4815, 4294901760
    %4817 = vmatpush1.msra.mxu0 %v4816
    %4818 = vmatprep.subr.mxu0 0.0
    %4819 = vmatpush1.msra.mxu0 0.0
    %4820 = vmatprep.subr.mxu0 0.0
    %4821 = vmatpush1.msra.mxu0 0.0
    %4822 = vmatprep.subr.mxu0 0.0
    %4823 = vmatpush1.msra.mxu0 0.0
    %4824 = vmatprep.subr.mxu0 0.0
    %4825 = vmatpush1.msra.mxu0 0.0
    %4826 = vmatprep.subr.mxu0 0.0
    %4827 = vmatpush1.msra.mxu0 0.0
    %4828 = vmatprep.subr.mxu0 0.0
    %4829 = vmatpush1.msra.mxu0 0.0
    %4830 = vmatprep.subr.mxu0 0.0
    %4831 = vmatpush1.msra.mxu0 0.0
    %4832 = vmatprep.subr.mxu0 0.0
    %4833 = vmatpush1.msra.mxu0 0.0
    %4834 = vmatprep.subr.mxu0 0.0
    %4835 = vmatpush1.msra.mxu0 0.0
    %4836 = vmatprep.subr.mxu0 0.0
    %4837 = vmatpush1.msra.mxu0 0.0
    %4838 = vmatprep.subr.mxu0 0.0
    %4839 = vmatpush1.msra.mxu0 0.0
    %4840 = vmatprep.subr.mxu0 0.0
    %4841 = vmatpush1.msra.mxu0 0.0
    %4842 = vmatprep.subr.mxu0 0.0
    %4843 = vmatpush1.msra.mxu0 0.0
    %4844 = vmatprep.subr.mxu0 0.0
    %4845 = vmatpush1.msra.mxu0 0.0
    %4846 = vmatprep.subr.mxu0 0.0
    %4847 = vmatpush1.msra.mxu0 0.0
    %4848 = vmatprep.subr.mxu0 0.0
    %4849 = vmatpush1.msra.mxu0 0.0
    %4850 = vmatprep.subr.mxu0 0.0
    %4851 = vmatpush1.msra.mxu0 0.0
    %4852 = vmatprep.subr.mxu0 0.0
    %4853 = vmatpush1.msra.mxu0 0.0
    %4854 = vmatprep.subr.mxu0 0.0
    %4855 = vmatpush1.msra.mxu0 0.0
    %4856 = vmatprep.subr.mxu0 0.0
    %4857 = vmatpush1.msra.mxu0 0.0
    %4858 = vmatprep.subr.mxu0 0.0
    %4859 = vmatpush1.msra.mxu0 0.0
    %4860 = vmatprep.subr.mxu0 0.0
    %4861 = vmatpush1.msra.mxu0 0.0
    %4862 = vmatprep.subr.mxu0 0.0
    %4863 = vmatpush1.msra.mxu0 0.0
    %4864 = vmatprep.subr.mxu0 0.0
    %4865 = vmatpush1.msra.mxu0 0.0
    %4866 = vmatprep.subr.mxu0 0.0
    %4867 = vmatpush1.msra.mxu0 0.0
    %4868 = vmatprep.subr.mxu0 0.0
    %4869 = vmatpush1.msra.mxu0 0.0
    %4870 = vmatprep.subr.mxu0 0.0
    %4871 = vmatpush1.msra.mxu0 0.0
    %4872 = vmatprep.subr.mxu0 0.0
    %4873 = vmatpush1.msra.mxu0 0.0
    %4874 = vmatprep.subr.mxu0 0.0
    %4875 = vmatpush1.msra.mxu0 0.0
    %4876 = vmatprep.subr.mxu0 0.0
    %4877 = vmatpush1.msra.mxu0 0.0
    %4878 = vmatprep.mubr.f32.mxu0 0.0
    %v4879 = vand.u32 %v4463, 4294901760
    %4880 = vmatmul.mubr.f32.gmra.mrb[0].mxu0 %v4879
    %v4881 = vpop.f32.mrb[0].mxu0
    %v4882 = vadd.f32 %v4797, %v4881
    %v4883 = vpop.f32.mrb[0].mxu0
    %4884 = vmatprep.mubr.f32.mxu0 0.0
    %v4885 = vand.u32 %v4466, 4294901760
    %4886 = vmatmul.mubr.f32.gmra.mrb[0].mxu0 %v4885
    %v4887 = vpop.f32.mrb[0].mxu0
    %v4888 = vadd.f32 %v4805, %v4887
    %v4889 = vpop.f32.mrb[0].mxu0
    %4890 = vdwg.mxu0
    %4891 = vmatprep.subr.mxu0 0.0
    %v4892 = vand.u32 %v4457, 4294901760
    %4893 = vmatpush1.msra.mxu0 %v4892
    %4894 = vmatprep.subr.mxu0 0.0
    %v4895 = vand.u32 %v4459, 4294901760
    %4896 = vmatpush1.msra.mxu0 %v4895
    %4897 = vmatprep.subr.mxu0 0.0
    %4898 = vmatpush1.msra.mxu0 0.0
    %4899 = vmatprep.subr.mxu0 0.0
    %4900 = vmatpush1.msra.mxu0 0.0
    %4901 = vmatprep.subr.mxu0 0.0
    %4902 = vmatpush1.msra.mxu0 0.0
    %4903 = vmatprep.subr.mxu0 0.0
    %4904 = vmatpush1.msra.mxu0 0.0
    %4905 = vmatprep.subr.mxu0 0.0
    %4906 = vmatpush1.msra.mxu0 0.0
    %4907 = vmatprep.subr.mxu0 0.0
    %4908 = vmatpush1.msra.mxu0 0.0
    %4909 = vmatprep.subr.mxu0 0.0
    %4910 = vmatpush1.msra.mxu0 0.0
    %4911 = vmatprep.subr.mxu0 0.0
    %4912 = vmatpush1.msra.mxu0 0.0
    %4913 = vmatprep.subr.mxu0 0.0
    %4914 = vmatpush1.msra.mxu0 0.0
    %4915 = vmatprep.subr.mxu0 0.0
    %4916 = vmatpush1.msra.mxu0 0.0
    %4917 = vmatprep.subr.mxu0 0.0
    %4918 = vmatpush1.msra.mxu0 0.0
    %4919 = vmatprep.subr.mxu0 0.0
    %4920 = vmatpush1.msra.mxu0 0.0
    %4921 = vmatprep.subr.mxu0 0.0
    %4922 = vmatpush1.msra.mxu0 0.0
    %4923 = vmatprep.subr.mxu0 0.0
    %4924 = vmatpush1.msra.mxu0 0.0
    %4925 = vmatprep.subr.mxu0 0.0
    %4926 = vmatpush1.msra.mxu0 0.0
    %4927 = vmatprep.subr.mxu0 0.0
    %4928 = vmatpush1.msra.mxu0 0.0
    %4929 = vmatprep.subr.mxu0 0.0
    %4930 = vmatpush1.msra.mxu0 0.0
    %4931 = vmatprep.subr.mxu0 0.0
    %4932 = vmatpush1.msra.mxu0 0.0
    %4933 = vmatprep.subr.mxu0 0.0
    %4934 = vmatpush1.msra.mxu0 0.0
    %4935 = vmatprep.subr.mxu0 0.0
    %4936 = vmatpush1.msra.mxu0 0.0
    %4937 = vmatprep.subr.mxu0 0.0
    %4938 = vmatpush1.msra.mxu0 0.0
    %4939 = vmatprep.subr.mxu0 0.0
    %4940 = vmatpush1.msra.mxu0 0.0
    %4941 = vmatprep.subr.mxu0 0.0
    %4942 = vmatpush1.msra.mxu0 0.0
    %4943 = vmatprep.subr.mxu0 0.0
    %4944 = vmatpush1.msra.mxu0 0.0
    %4945 = vmatprep.subr.mxu0 0.0
    %4946 = vmatpush1.msra.mxu0 0.0
    %4947 = vmatprep.subr.mxu0 0.0
    %4948 = vmatpush1.msra.mxu0 0.0
    %4949 = vmatprep.subr.mxu0 0.0
    %4950 = vmatpush1.msra.mxu0 0.0
    %4951 = vmatprep.subr.mxu0 0.0
    %4952 = vmatpush1.msra.mxu0 0.0
    %4953 = vmatprep.subr.mxu0 0.0
    %4954 = vmatpush1.msra.mxu0 0.0
    %4955 = vmatprep.subr.mxu0 0.0
    %4956 = vmatpush1.msra.mxu0 0.0
    %4957 = vmatprep.mubr.f32.mxu0 0.0
    %v4958 = vand.u32 %v4463, 4294901760
    %4959 = vmatmul.mubr.f32.gmra.mrb[0].mxu0 %v4958
    %v4960 = vpop.f32.mrb[0].mxu0
    %v4961 = vadd.f32 %v4882, %v4960
    %v4962 = vpop.f32.mrb[0].mxu0
    %4963 = vmatprep.mubr.f32.mxu0 0.0
    %v4964 = vand.u32 %v4466, 4294901760
    %4965 = vmatmul.mubr.f32.gmra.mrb[0].mxu0 %v4964
    %v4966 = vpop.f32.mrb[0].mxu0
    %v4967 = vadd.f32 %v4888, %v4966
    %v4968 = vpop.f32.mrb[0].mxu0
    %4969 = vdwg.mxu0
    %4970 = vrot.lane.b32.xlu0 %v3017, 64
    %v4971 = vpop.permute.xlu0 %4970
    %v4973 = vmul.f32 %v2988, %v4971
    %v4974 = vmul.f32 %v2994, %v4971
    %4977 = vrot.lane.b32.xlu0 %v4973, 64
    %v4978 = vpop.permute.xlu0 %4977
    %4979 = vrot.lane.b32.xlu0 %v4974, 64
    %v4980 = vpop.permute.xlu0 %4979
    %v4984 = vsel %vm3839, %v3921, 0
    %v4987 = vsel %vm3839, %v3923, 0
    %4989 = vmatprep.subr.mxu0 0.0
    %v4990 = vand.u32 %v4978, 4294901760
    %4991 = vmatpush1.msra.mxu0 %v4990
    %4992 = vmatprep.subr.mxu0 0.0
    %v4993 = vand.u32 %v4980, 4294901760
    %4994 = vmatpush1.msra.mxu0 %v4993
    %4995 = vmatprep.subr.mxu0 0.0
    %4996 = vmatpush1.msra.mxu0 0.0
    %4997 = vmatprep.subr.mxu0 0.0
    %4998 = vmatpush1.msra.mxu0 0.0
    %4999 = vmatprep.subr.mxu0 0.0
    %5000 = vmatpush1.msra.mxu0 0.0
    %5001 = vmatprep.subr.mxu0 0.0
    %5002 = vmatpush1.msra.mxu0 0.0
    %5003 = vmatprep.subr.mxu0 0.0
    %5004 = vmatpush1.msra.mxu0 0.0
    %5005 = vmatprep.subr.mxu0 0.0
    %5006 = vmatpush1.msra.mxu0 0.0
    %5007 = vmatprep.subr.mxu0 0.0
    %5008 = vmatpush1.msra.mxu0 0.0
    %5009 = vmatprep.subr.mxu0 0.0
    %5010 = vmatpush1.msra.mxu0 0.0
    %5011 = vmatprep.subr.mxu0 0.0
    %5012 = vmatpush1.msra.mxu0 0.0
    %5013 = vmatprep.subr.mxu0 0.0
    %5014 = vmatpush1.msra.mxu0 0.0
    %5015 = vmatprep.subr.mxu0 0.0
    %5016 = vmatpush1.msra.mxu0 0.0
    %5017 = vmatprep.subr.mxu0 0.0
    %5018 = vmatpush1.msra.mxu0 0.0
    %5019 = vmatprep.subr.mxu0 0.0
    %5020 = vmatpush1.msra.mxu0 0.0
    %5021 = vmatprep.subr.mxu0 0.0
    %5022 = vmatpush1.msra.mxu0 0.0
    %5023 = vmatprep.subr.mxu0 0.0
    %5024 = vmatpush1.msra.mxu0 0.0
    %5025 = vmatprep.subr.mxu0 0.0
    %5026 = vmatpush1.msra.mxu0 0.0
    %5027 = vmatprep.subr.mxu0 0.0
    %5028 = vmatpush1.msra.mxu0 0.0
    %5029 = vmatprep.subr.mxu0 0.0
    %5030 = vmatpush1.msra.mxu0 0.0
    %5031 = vmatprep.subr.mxu0 0.0
    %5032 = vmatpush1.msra.mxu0 0.0
    %5033 = vmatprep.subr.mxu0 0.0
    %5034 = vmatpush1.msra.mxu0 0.0
    %5035 = vmatprep.subr.mxu0 0.0
    %5036 = vmatpush1.msra.mxu0 0.0
    %5037 = vmatprep.subr.mxu0 0.0
    %5038 = vmatpush1.msra.mxu0 0.0
    %5039 = vmatprep.subr.mxu0 0.0
    %5040 = vmatpush1.msra.mxu0 0.0
    %5041 = vmatprep.subr.mxu0 0.0
    %5042 = vmatpush1.msra.mxu0 0.0
    %5043 = vmatprep.subr.mxu0 0.0
    %5044 = vmatpush1.msra.mxu0 0.0
    %5045 = vmatprep.subr.mxu0 0.0
    %5046 = vmatpush1.msra.mxu0 0.0
    %5047 = vmatprep.subr.mxu0 0.0
    %5048 = vmatpush1.msra.mxu0 0.0
    %5049 = vmatprep.subr.mxu0 0.0
    %5050 = vmatpush1.msra.mxu0 0.0
    %5051 = vmatprep.subr.mxu0 0.0
    %5052 = vmatpush1.msra.mxu0 0.0
    %5053 = vmatprep.subr.mxu0 0.0
    %5054 = vmatpush1.msra.mxu0 0.0
    %5055 = vmatprep.mubr.f32.mxu0 0.0
    %v5056 = vand.u32 %v4984, 4294901760
    %v5057 = vsub.f32 %v4984, %v5056
    %v5058 = vand.u32 %v5057, 4294901760
    %v5059 = vsub.f32 %v5057, %v5058
    %v5060 = vand.u32 %v5059, 4294901760
    %5061 = vmatmul.mubr.f32.gmra.mrb[0].mxu0 %v5060
    %v5062 = vpop.f32.mrb[0].mxu0
    %v5063 = vadd.f32 0.0, %v5062
    %v5064 = vpop.f32.mrb[0].mxu0
    %5065 = vmatprep.mubr.f32.mxu0 0.0
    %v5066 = vand.u32 %v4987, 4294901760
    %v5067 = vsub.f32 %v4987, %v5066
    %v5068 = vand.u32 %v5067, 4294901760
    %v5069 = vsub.f32 %v5067, %v5068
    %v5070 = vand.u32 %v5069, 4294901760
    %5071 = vmatmul.mubr.f32.gmra.mrb[0].mxu0 %v5070
    %v5072 = vpop.f32.mrb[0].mxu0
    %v5073 = vadd.f32 0.0, %v5072
    %v5074 = vpop.f32.mrb[0].mxu0
    %5075 = vdwg.mxu0
    %5076 = vmatprep.subr.mxu0 0.0
    %v5077 = vand.u32 %v4978, 4294901760
    %v5078 = vsub.f32 %v4978, %v5077
    %v5079 = vand.u32 %v5078, 4294901760
    %v5080 = vsub.f32 %v5078, %v5079
    %v5081 = vand.u32 %v5080, 4294901760
    %5082 = vmatpush1.msra.mxu0 %v5081
    %5083 = vmatprep.subr.mxu0 0.0
    %v5084 = vand.u32 %v4980, 4294901760
    %v5085 = vsub.f32 %v4980, %v5084
    %v5086 = vand.u32 %v5085, 4294901760
    %v5087 = vsub.f32 %v5085, %v5086
    %v5088 = vand.u32 %v5087, 4294901760
    %5089 = vmatpush1.msra.mxu0 %v5088
    %5090 = vmatprep.subr.mxu0 0.0
    %5091 = vmatpush1.msra.mxu0 0.0
    %5092 = vmatprep.subr.mxu0 0.0
    %5093 = vmatpush1.msra.mxu0 0.0
    %5094 = vmatprep.subr.mxu0 0.0
    %5095 = vmatpush1.msra.mxu0 0.0
    %5096 = vmatprep.subr.mxu0 0.0
    %5097 = vmatpush1.msra.mxu0 0.0
    %5098 = vmatprep.subr.mxu0 0.0
    %5099 = vmatpush1.msra.mxu0 0.0
    %5100 = vmatprep.subr.mxu0 0.0
    %5101 = vmatpush1.msra.mxu0 0.0
    %5102 = vmatprep.subr.mxu0 0.0
    %5103 = vmatpush1.msra.mxu0 0.0
    %5104 = vmatprep.subr.mxu0 0.0
    %5105 = vmatpush1.msra.mxu0 0.0
    %5106 = vmatprep.subr.mxu0 0.0
    %5107 = vmatpush1.msra.mxu0 0.0
    %5108 = vmatprep.subr.mxu0 0.0
    %5109 = vmatpush1.msra.mxu0 0.0
    %5110 = vmatprep.subr.mxu0 0.0
    %5111 = vmatpush1.msra.mxu0 0.0
    %5112 = vmatprep.subr.mxu0 0.0
    %5113 = vmatpush1.msra.mxu0 0.0
    %5114 = vmatprep.subr.mxu0 0.0
    %5115 = vmatpush1.msra.mxu0 0.0
    %5116 = vmatprep.subr.mxu0 0.0
    %5117 = vmatpush1.msra.mxu0 0.0
    %5118 = vmatprep.subr.mxu0 0.0
    %5119 = vmatpush1.msra.mxu0 0.0
    %5120 = vmatprep.subr.mxu0 0.0
    %5121 = vmatpush1.msra.mxu0 0.0
    %5122 = vmatprep.subr.mxu0 0.0
    %5123 = vmatpush1.msra.mxu0 0.0
    %5124 = vmatprep.subr.mxu0 0.0
    %5125 = vmatpush1.msra.mxu0 0.0
    %5126 = vmatprep.subr.mxu0 0.0
    %5127 = vmatpush1.msra.mxu0 0.0
    %5128 = vmatprep.subr.mxu0 0.0
    %5129 = vmatpush1.msra.mxu0 0.0
    %5130 = vmatprep.subr.mxu0 0.0
    %5131 = vmatpush1.msra.mxu0 0.0
    %5132 = vmatprep.subr.mxu0 0.0
    %5133 = vmatpush1.msra.mxu0 0.0
    %5134 = vmatprep.subr.mxu0 0.0
    %5135 = vmatpush1.msra.mxu0 0.0
    %5136 = vmatprep.subr.mxu0 0.0
    %5137 = vmatpush1.msra.mxu0 0.0
    %5138 = vmatprep.subr.mxu0 0.0
    %5139 = vmatpush1.msra.mxu0 0.0
    %5140 = vmatprep.subr.mxu0 0.0
    %5141 = vmatpush1.msra.mxu0 0.0
    %5142 = vmatprep.subr.mxu0 0.0
    %5143 = vmatpush1.msra.mxu0 0.0
    %5144 = vmatprep.subr.mxu0 0.0
    %5145 = vmatpush1.msra.mxu0 0.0
    %5146 = vmatprep.subr.mxu0 0.0
    %5147 = vmatpush1.msra.mxu0 0.0
    %5148 = vmatprep.subr.mxu0 0.0
    %5149 = vmatpush1.msra.mxu0 0.0
    %5150 = vmatprep.mubr.f32.mxu0 0.0
    %v5151 = vand.u32 %v4984, 4294901760
    %5152 = vmatmul.mubr.f32.gmra.mrb[0].mxu0 %v5151
    %v5153 = vpop.f32.mrb[0].mxu0
    %v5154 = vadd.f32 %v5063, %v5153
    %v5155 = vpop.f32.mrb[0].mxu0
    %5156 = vmatprep.mubr.f32.mxu0 0.0
    %v5157 = vand.u32 %v4987, 4294901760
    %5158 = vmatmul.mubr.f32.gmra.mrb[0].mxu0 %v5157
    %v5159 = vpop.f32.mrb[0].mxu0
    %v5160 = vadd.f32 %v5073, %v5159
    %v5161 = vpop.f32.mrb[0].mxu0
    %5162 = vdwg.mxu0
    %5163 = vmatprep.subr.mxu0 0.0
    %v5164 = vand.u32 %v4978, 4294901760
    %v5165 = vsub.f32 %v4978, %v5164
    %5166 = vmatpush1.msra.mxu0 %v5165
    %5167 = vmatprep.subr.mxu0 0.0
    %v5168 = vand.u32 %v4980, 4294901760
    %v5169 = vsub.f32 %v4980, %v5168
    %5170 = vmatpush1.msra.mxu0 %v5169
    %5171 = vmatprep.subr.mxu0 0.0
    %5172 = vmatpush1.msra.mxu0 0.0
    %5173 = vmatprep.subr.mxu0 0.0
    %5174 = vmatpush1.msra.mxu0 0.0
    %5175 = vmatprep.subr.mxu0 0.0
    %5176 = vmatpush1.msra.mxu0 0.0
    %5177 = vmatprep.subr.mxu0 0.0
    %5178 = vmatpush1.msra.mxu0 0.0
    %5179 = vmatprep.subr.mxu0 0.0
    %5180 = vmatpush1.msra.mxu0 0.0
    %5181 = vmatprep.subr.mxu0 0.0
    %5182 = vmatpush1.msra.mxu0 0.0
    %5183 = vmatprep.subr.mxu0 0.0
    %5184 = vmatpush1.msra.mxu0 0.0
    %5185 = vmatprep.subr.mxu0 0.0
    %5186 = vmatpush1.msra.mxu0 0.0
    %5187 = vmatprep.subr.mxu0 0.0
    %5188 = vmatpush1.msra.mxu0 0.0
    %5189 = vmatprep.subr.mxu0 0.0
    %5190 = vmatpush1.msra.mxu0 0.0
    %5191 = vmatprep.subr.mxu0 0.0
    %5192 = vmatpush1.msra.mxu0 0.0
    %5193 = vmatprep.subr.mxu0 0.0
    %5194 = vmatpush1.msra.mxu0 0.0
    %5195 = vmatprep.subr.mxu0 0.0
    %5196 = vmatpush1.msra.mxu0 0.0
    %5197 = vmatprep.subr.mxu0 0.0
    %5198 = vmatpush1.msra.mxu0 0.0
    %5199 = vmatprep.subr.mxu0 0.0
    %5200 = vmatpush1.msra.mxu0 0.0
    %5201 = vmatprep.subr.mxu0 0.0
    %5202 = vmatpush1.msra.mxu0 0.0
    %5203 = vmatprep.subr.mxu0 0.0
    %5204 = vmatpush1.msra.mxu0 0.0
    %5205 = vmatprep.subr.mxu0 0.0
    %5206 = vmatpush1.msra.mxu0 0.0
    %5207 = vmatprep.subr.mxu0 0.0
    %5208 = vmatpush1.msra.mxu0 0.0
    %5209 = vmatprep.subr.mxu0 0.0
    %5210 = vmatpush1.msra.mxu0 0.0
    %5211 = vmatprep.subr.mxu0 0.0
    %5212 = vmatpush1.msra.mxu0 0.0
    %5213 = vmatprep.subr.mxu0 0.0
    %5214 = vmatpush1.msra.mxu0 0.0
    %5215 = vmatprep.subr.mxu0 0.0
    %5216 = vmatpush1.msra.mxu0 0.0
    %5217 = vmatprep.subr.mxu0 0.0
    %5218 = vmatpush1.msra.mxu0 0.0
    %5219 = vmatprep.subr.mxu0 0.0
    %5220 = vmatpush1.msra.mxu0 0.0
    %5221 = vmatprep.subr.mxu0 0.0
    %5222 = vmatpush1.msra.mxu0 0.0
    %5223 = vmatprep.subr.mxu0 0.0
    %5224 = vmatpush1.msra.mxu0 0.0
    %5225 = vmatprep.subr.mxu0 0.0
    %5226 = vmatpush1.msra.mxu0 0.0
    %5227 = vmatprep.subr.mxu0 0.0
    %5228 = vmatpush1.msra.mxu0 0.0
    %5229 = vmatprep.subr.mxu0 0.0
    %5230 = vmatpush1.msra.mxu0 0.0
    %5231 = vmatprep.mubr.f32.mxu0 0.0
    %v5232 = vand.u32 %v4984, 4294901760
    %v5233 = vsub.f32 %v4984, %v5232
    %5234 = vmatmul.mubr.f32.gmra.mrb[0].mxu0 %v5233
    %v5235 = vpop.f32.mrb[0].mxu0
    %v5236 = vadd.f32 %v5154, %v5235
    %v5237 = vpop.f32.mrb[0].mxu0
    %5238 = vmatprep.mubr.f32.mxu0 0.0
    %v5239 = vand.u32 %v4987, 4294901760
    %v5240 = vsub.f32 %v4987, %v5239
    %5241 = vmatmul.mubr.f32.gmra.mrb[0].mxu0 %v5240
    %v5242 = vpop.f32.mrb[0].mxu0
    %v5243 = vadd.f32 %v5160, %v5242
    %v5244 = vpop.f32.mrb[0].mxu0
    %5245 = vdwg.mxu0
    %5246 = vmatprep.subr.mxu0 0.0
    %v5247 = vand.u32 %v4978, 4294901760
    %5248 = vmatpush1.msra.mxu0 %v5247
    %5249 = vmatprep.subr.mxu0 0.0
    %v5250 = vand.u32 %v4980, 4294901760
    %5251 = vmatpush1.msra.mxu0 %v5250
    %5252 = vmatprep.subr.mxu0 0.0
    %5253 = vmatpush1.msra.mxu0 0.0
    %5254 = vmatprep.subr.mxu0 0.0
    %5255 = vmatpush1.msra.mxu0 0.0
    %5256 = vmatprep.subr.mxu0 0.0
    %5257 = vmatpush1.msra.mxu0 0.0
    %5258 = vmatprep.subr.mxu0 0.0
    %5259 = vmatpush1.msra.mxu0 0.0
    %5260 = vmatprep.subr.mxu0 0.0
    %5261 = vmatpush1.msra.mxu0 0.0
    %5262 = vmatprep.subr.mxu0 0.0
    %5263 = vmatpush1.msra.mxu0 0.0
    %5264 = vmatprep.subr.mxu0 0.0
    %5265 = vmatpush1.msra.mxu0 0.0
    %5266 = vmatprep.subr.mxu0 0.0
    %5267 = vmatpush1.msra.mxu0 0.0
    %5268 = vmatprep.subr.mxu0 0.0
    %5269 = vmatpush1.msra.mxu0 0.0
    %5270 = vmatprep.subr.mxu0 0.0
    %5271 = vmatpush1.msra.mxu0 0.0
    %5272 = vmatprep.subr.mxu0 0.0
    %5273 = vmatpush1.msra.mxu0 0.0
    %5274 = vmatprep.subr.mxu0 0.0
    %5275 = vmatpush1.msra.mxu0 0.0
    %5276 = vmatprep.subr.mxu0 0.0
    %5277 = vmatpush1.msra.mxu0 0.0
    %5278 = vmatprep.subr.mxu0 0.0
    %5279 = vmatpush1.msra.mxu0 0.0
    %5280 = vmatprep.subr.mxu0 0.0
    %5281 = vmatpush1.msra.mxu0 0.0
    %5282 = vmatprep.subr.mxu0 0.0
    %5283 = vmatpush1.msra.mxu0 0.0
    %5284 = vmatprep.subr.mxu0 0.0
    %5285 = vmatpush1.msra.mxu0 0.0
    %5286 = vmatprep.subr.mxu0 0.0
    %5287 = vmatpush1.msra.mxu0 0.0
    %5288 = vmatprep.subr.mxu0 0.0
    %5289 = vmatpush1.msra.mxu0 0.0
    %5290 = vmatprep.subr.mxu0 0.0
    %5291 = vmatpush1.msra.mxu0 0.0
    %5292 = vmatprep.subr.mxu0 0.0
    %5293 = vmatpush1.msra.mxu0 0.0
    %5294 = vmatprep.subr.mxu0 0.0
    %5295 = vmatpush1.msra.mxu0 0.0
    %5296 = vmatprep.subr.mxu0 0.0
    %5297 = vmatpush1.msra.mxu0 0.0
    %5298 = vmatprep.subr.mxu0 0.0
    %5299 = vmatpush1.msra.mxu0 0.0
    %5300 = vmatprep.subr.mxu0 0.0
    %5301 = vmatpush1.msra.mxu0 0.0
    %5302 = vmatprep.subr.mxu0 0.0
    %5303 = vmatpush1.msra.mxu0 0.0
    %5304 = vmatprep.subr.mxu0 0.0
    %5305 = vmatpush1.msra.mxu0 0.0
    %5306 = vmatprep.subr.mxu0 0.0
    %5307 = vmatpush1.msra.mxu0 0.0
    %5308 = vmatprep.subr.mxu0 0.0
    %5309 = vmatpush1.msra.mxu0 0.0
    %5310 = vmatprep.subr.mxu0 0.0
    %5311 = vmatpush1.msra.mxu0 0.0
    %5312 = vmatprep.mubr.f32.mxu0 0.0
    %v5313 = vand.u32 %v4984, 4294901760
    %v5314 = vsub.f32 %v4984, %v5313
    %v5315 = vand.u32 %v5314, 4294901760
    %5316 = vmatmul.mubr.f32.gmra.mrb[0].mxu0 %v5315
    %v5317 = vpop.f32.mrb[0].mxu0
    %v5318 = vadd.f32 %v5236, %v5317
    %v5319 = vpop.f32.mrb[0].mxu0
    %5320 = vmatprep.mubr.f32.mxu0 0.0
    %v5321 = vand.u32 %v4987, 4294901760
    %v5322 = vsub.f32 %v4987, %v5321
    %v5323 = vand.u32 %v5322, 4294901760
    %5324 = vmatmul.mubr.f32.gmra.mrb[0].mxu0 %v5323
    %v5325 = vpop.f32.mrb[0].mxu0
    %v5326 = vadd.f32 %v5243, %v5325
    %v5327 = vpop.f32.mrb[0].mxu0
    %5328 = vdwg.mxu0
    %5329 = vmatprep.subr.mxu0 0.0
    %v5330 = vand.u32 %v4978, 4294901760
    %v5331 = vsub.f32 %v4978, %v5330
    %v5332 = vand.u32 %v5331, 4294901760
    %5333 = vmatpush1.msra.mxu0 %v5332
    %5334 = vmatprep.subr.mxu0 0.0
    %v5335 = vand.u32 %v4980, 4294901760
    %v5336 = vsub.f32 %v4980, %v5335
    %v5337 = vand.u32 %v5336, 4294901760
    %5338 = vmatpush1.msra.mxu0 %v5337
    %5339 = vmatprep.subr.mxu0 0.0
    %5340 = vmatpush1.msra.mxu0 0.0
    %5341 = vmatprep.subr.mxu0 0.0
    %5342 = vmatpush1.msra.mxu0 0.0
    %5343 = vmatprep.subr.mxu0 0.0
    %5344 = vmatpush1.msra.mxu0 0.0
    %5345 = vmatprep.subr.mxu0 0.0
    %5346 = vmatpush1.msra.mxu0 0.0
    %5347 = vmatprep.subr.mxu0 0.0
    %5348 = vmatpush1.msra.mxu0 0.0
    %5349 = vmatprep.subr.mxu0 0.0
    %5350 = vmatpush1.msra.mxu0 0.0
    %5351 = vmatprep.subr.mxu0 0.0
    %5352 = vmatpush1.msra.mxu0 0.0
    %5353 = vmatprep.subr.mxu0 0.0
    %5354 = vmatpush1.msra.mxu0 0.0
    %5355 = vmatprep.subr.mxu0 0.0
    %5356 = vmatpush1.msra.mxu0 0.0
    %5357 = vmatprep.subr.mxu0 0.0
    %5358 = vmatpush1.msra.mxu0 0.0
    %5359 = vmatprep.subr.mxu0 0.0
    %5360 = vmatpush1.msra.mxu0 0.0
    %5361 = vmatprep.subr.mxu0 0.0
    %5362 = vmatpush1.msra.mxu0 0.0
    %5363 = vmatprep.subr.mxu0 0.0
    %5364 = vmatpush1.msra.mxu0 0.0
    %5365 = vmatprep.subr.mxu0 0.0
    %5366 = vmatpush1.msra.mxu0 0.0
    %5367 = vmatprep.subr.mxu0 0.0
    %5368 = vmatpush1.msra.mxu0 0.0
    %5369 = vmatprep.subr.mxu0 0.0
    %5370 = vmatpush1.msra.mxu0 0.0
    %5371 = vmatprep.subr.mxu0 0.0
    %5372 = vmatpush1.msra.mxu0 0.0
    %5373 = vmatprep.subr.mxu0 0.0
    %5374 = vmatpush1.msra.mxu0 0.0
    %5375 = vmatprep.subr.mxu0 0.0
    %5376 = vmatpush1.msra.mxu0 0.0
    %5377 = vmatprep.subr.mxu0 0.0
    %5378 = vmatpush1.msra.mxu0 0.0
    %5379 = vmatprep.subr.mxu0 0.0
    %5380 = vmatpush1.msra.mxu0 0.0
    %5381 = vmatprep.subr.mxu0 0.0
    %5382 = vmatpush1.msra.mxu0 0.0
    %5383 = vmatprep.subr.mxu0 0.0
    %5384 = vmatpush1.msra.mxu0 0.0
    %5385 = vmatprep.subr.mxu0 0.0
    %5386 = vmatpush1.msra.mxu0 0.0
    %5387 = vmatprep.subr.mxu0 0.0
    %5388 = vmatpush1.msra.mxu0 0.0
    %5389 = vmatprep.subr.mxu0 0.0
    %5390 = vmatpush1.msra.mxu0 0.0
    %5391 = vmatprep.subr.mxu0 0.0
    %5392 = vmatpush1.msra.mxu0 0.0
    %5393 = vmatprep.subr.mxu0 0.0
    %5394 = vmatpush1.msra.mxu0 0.0
    %5395 = vmatprep.subr.mxu0 0.0
    %5396 = vmatpush1.msra.mxu0 0.0
    %5397 = vmatprep.subr.mxu0 0.0
    %5398 = vmatpush1.msra.mxu0 0.0
    %5399 = vmatprep.mubr.f32.mxu0 0.0
    %v5400 = vand.u32 %v4984, 4294901760
    %5401 = vmatmul.mubr.f32.gmra.mrb[0].mxu0 %v5400
    %v5402 = vpop.f32.mrb[0].mxu0
    %v5403 = vadd.f32 %v5318, %v5402
    %v5404 = vpop.f32.mrb[0].mxu0
    %5405 = vmatprep.mubr.f32.mxu0 0.0
    %v5406 = vand.u32 %v4987, 4294901760
    %5407 = vmatmul.mubr.f32.gmra.mrb[0].mxu0 %v5406
    %v5408 = vpop.f32.mrb[0].mxu0
    %v5409 = vadd.f32 %v5326, %v5408
    %v5410 = vpop.f32.mrb[0].mxu0
    %5411 = vdwg.mxu0
    %5412 = vmatprep.subr.mxu0 0.0
    %v5413 = vand.u32 %v4978, 4294901760
    %5414 = vmatpush1.msra.mxu0 %v5413
    %5415 = vmatprep.subr.mxu0 0.0
    %v5416 = vand.u32 %v4980, 4294901760
    %5417 = vmatpush1.msra.mxu0 %v5416
    %5418 = vmatprep.subr.mxu0 0.0
    %5419 = vmatpush1.msra.mxu0 0.0
    %5420 = vmatprep.subr.mxu0 0.0
    %5421 = vmatpush1.msra.mxu0 0.0
    %5422 = vmatprep.subr.mxu0 0.0
    %5423 = vmatpush1.msra.mxu0 0.0
    %5424 = vmatprep.subr.mxu0 0.0
    %5425 = vmatpush1.msra.mxu0 0.0
    %5426 = vmatprep.subr.mxu0 0.0
    %5427 = vmatpush1.msra.mxu0 0.0
    %5428 = vmatprep.subr.mxu0 0.0
    %5429 = vmatpush1.msra.mxu0 0.0
    %5430 = vmatprep.subr.mxu0 0.0
    %5431 = vmatpush1.msra.mxu0 0.0
    %5432 = vmatprep.subr.mxu0 0.0
    %5433 = vmatpush1.msra.mxu0 0.0
    %5434 = vmatprep.subr.mxu0 0.0
    %5435 = vmatpush1.msra.mxu0 0.0
    %5436 = vmatprep.subr.mxu0 0.0
    %5437 = vmatpush1.msra.mxu0 0.0
    %5438 = vmatprep.subr.mxu0 0.0
    %5439 = vmatpush1.msra.mxu0 0.0
    %5440 = vmatprep.subr.mxu0 0.0
    %5441 = vmatpush1.msra.mxu0 0.0
    %5442 = vmatprep.subr.mxu0 0.0
    %5443 = vmatpush1.msra.mxu0 0.0
    %5444 = vmatprep.subr.mxu0 0.0
    %5445 = vmatpush1.msra.mxu0 0.0
    %5446 = vmatprep.subr.mxu0 0.0
    %5447 = vmatpush1.msra.mxu0 0.0
    %5448 = vmatprep.subr.mxu0 0.0
    %5449 = vmatpush1.msra.mxu0 0.0
    %5450 = vmatprep.subr.mxu0 0.0
    %5451 = vmatpush1.msra.mxu0 0.0
    %5452 = vmatprep.subr.mxu0 0.0
    %5453 = vmatpush1.msra.mxu0 0.0
    %5454 = vmatprep.subr.mxu0 0.0
    %5455 = vmatpush1.msra.mxu0 0.0
    %5456 = vmatprep.subr.mxu0 0.0
    %5457 = vmatpush1.msra.mxu0 0.0
    %5458 = vmatprep.subr.mxu0 0.0
    %5459 = vmatpush1.msra.mxu0 0.0
    %5460 = vmatprep.subr.mxu0 0.0
    %5461 = vmatpush1.msra.mxu0 0.0
    %5462 = vmatprep.subr.mxu0 0.0
    %5463 = vmatpush1.msra.mxu0 0.0
    %5464 = vmatprep.subr.mxu0 0.0
    %5465 = vmatpush1.msra.mxu0 0.0
    %5466 = vmatprep.subr.mxu0 0.0
    %5467 = vmatpush1.msra.mxu0 0.0
    %5468 = vmatprep.subr.mxu0 0.0
    %5469 = vmatpush1.msra.mxu0 0.0
    %5470 = vmatprep.subr.mxu0 0.0
    %5471 = vmatpush1.msra.mxu0 0.0
    %5472 = vmatprep.subr.mxu0 0.0
    %5473 = vmatpush1.msra.mxu0 0.0
    %5474 = vmatprep.subr.mxu0 0.0
    %5475 = vmatpush1.msra.mxu0 0.0
    %5476 = vmatprep.subr.mxu0 0.0
    %5477 = vmatpush1.msra.mxu0 0.0
    %5478 = vmatprep.mubr.f32.mxu0 0.0
    %v5479 = vand.u32 %v4984, 4294901760
    %5480 = vmatmul.mubr.f32.gmra.mrb[0].mxu0 %v5479
    %v5481 = vpop.f32.mrb[0].mxu0
    %v5482 = vadd.f32 %v5403, %v5481
    %v5483 = vpop.f32.mrb[0].mxu0
    %5484 = vmatprep.mubr.f32.mxu0 0.0
    %v5485 = vand.u32 %v4987, 4294901760
    %5486 = vmatmul.mubr.f32.gmra.mrb[0].mxu0 %v5485
    %v5487 = vpop.f32.mrb[0].mxu0
    %v5488 = vadd.f32 %v5409, %v5487
    %v5489 = vpop.f32.mrb[0].mxu0
    %5490 = vdwg.mxu0
    %v5491 = vadd.f32 %v4961, %v5482
    %v5492 = vadd.f32 %v4967, %v5488
    %5493 = vrot.lane.b32.xlu0 %v3025, 64
    %v5494 = vpop.permute.xlu0 %5493
    %v5496 = vmul.f32 %v2988, %v5494
    %v5497 = vmul.f32 %v2994, %v5494
    %5500 = vrot.lane.b32.xlu0 %v5496, 64
    %v5501 = vpop.permute.xlu0 %5500
    %5502 = vrot.lane.b32.xlu0 %v5497, 64
    %v5503 = vpop.permute.xlu0 %5502
    %v5507 = vsel %vm3839, %v3925, 0
    %v5510 = vsel %vm3839, %v3927, 0
    %5512 = vmatprep.subr.mxu0 0.0
    %v5513 = vand.u32 %v5501, 4294901760
    %5514 = vmatpush1.msra.mxu0 %v5513
    %5515 = vmatprep.subr.mxu0 0.0
    %v5516 = vand.u32 %v5503, 4294901760
    %5517 = vmatpush1.msra.mxu0 %v5516
    %5518 = vmatprep.subr.mxu0 0.0
    %5519 = vmatpush1.msra.mxu0 0.0
    %5520 = vmatprep.subr.mxu0 0.0
    %5521 = vmatpush1.msra.mxu0 0.0
    %5522 = vmatprep.subr.mxu0 0.0
    %5523 = vmatpush1.msra.mxu0 0.0
    %5524 = vmatprep.subr.mxu0 0.0
    %5525 = vmatpush1.msra.mxu0 0.0
    %5526 = vmatprep.subr.mxu0 0.0
    %5527 = vmatpush1.msra.mxu0 0.0
    %5528 = vmatprep.subr.mxu0 0.0
    %5529 = vmatpush1.msra.mxu0 0.0
    %5530 = vmatprep.subr.mxu0 0.0
    %5531 = vmatpush1.msra.mxu0 0.0
    %5532 = vmatprep.subr.mxu0 0.0
    %5533 = vmatpush1.msra.mxu0 0.0
    %5534 = vmatprep.subr.mxu0 0.0
    %5535 = vmatpush1.msra.mxu0 0.0
    %5536 = vmatprep.subr.mxu0 0.0
    %5537 = vmatpush1.msra.mxu0 0.0
    %5538 = vmatprep.subr.mxu0 0.0
    %5539 = vmatpush1.msra.mxu0 0.0
    %5540 = vmatprep.subr.mxu0 0.0
    %5541 = vmatpush1.msra.mxu0 0.0
    %5542 = vmatprep.subr.mxu0 0.0
    %5543 = vmatpush1.msra.mxu0 0.0
    %5544 = vmatprep.subr.mxu0 0.0
    %5545 = vmatpush1.msra.mxu0 0.0
    %5546 = vmatprep.subr.mxu0 0.0
    %5547 = vmatpush1.msra.mxu0 0.0
    %5548 = vmatprep.subr.mxu0 0.0
    %5549 = vmatpush1.msra.mxu0 0.0
    %5550 = vmatprep.subr.mxu0 0.0
    %5551 = vmatpush1.msra.mxu0 0.0
    %5552 = vmatprep.subr.mxu0 0.0
    %5553 = vmatpush1.msra.mxu0 0.0
    %5554 = vmatprep.subr.mxu0 0.0
    %5555 = vmatpush1.msra.mxu0 0.0
    %5556 = vmatprep.subr.mxu0 0.0
    %5557 = vmatpush1.msra.mxu0 0.0
    %5558 = vmatprep.subr.mxu0 0.0
    %5559 = vmatpush1.msra.mxu0 0.0
    %5560 = vmatprep.subr.mxu0 0.0
    %5561 = vmatpush1.msra.mxu0 0.0
    %5562 = vmatprep.subr.mxu0 0.0
    %5563 = vmatpush1.msra.mxu0 0.0
    %5564 = vmatprep.subr.mxu0 0.0
    %5565 = vmatpush1.msra.mxu0 0.0
    %5566 = vmatprep.subr.mxu0 0.0
    %5567 = vmatpush1.msra.mxu0 0.0
    %5568 = vmatprep.subr.mxu0 0.0
    %5569 = vmatpush1.msra.mxu0 0.0
    %5570 = vmatprep.subr.mxu0 0.0
    %5571 = vmatpush1.msra.mxu0 0.0
    %5572 = vmatprep.subr.mxu0 0.0
    %5573 = vmatpush1.msra.mxu0 0.0
    %5574 = vmatprep.subr.mxu0 0.0
    %5575 = vmatpush1.msra.mxu0 0.0
    %5576 = vmatprep.subr.mxu0 0.0
    %5577 = vmatpush1.msra.mxu0 0.0
    %5578 = vmatprep.mubr.f32.mxu0 0.0
    %v5579 = vand.u32 %v5507, 4294901760
    %v5580 = vsub.f32 %v5507, %v5579
    %v5581 = vand.u32 %v5580, 4294901760
    %v5582 = vsub.f32 %v5580, %v5581
    %v5583 = vand.u32 %v5582, 4294901760
    %5584 = vmatmul.mubr.f32.gmra.mrb[0].mxu0 %v5583
    %v5585 = vpop.f32.mrb[0].mxu0
    %v5586 = vadd.f32 0.0, %v5585
    %v5587 = vpop.f32.mrb[0].mxu0
    %5588 = vmatprep.mubr.f32.mxu0 0.0
    %v5589 = vand.u32 %v5510, 4294901760
    %v5590 = vsub.f32 %v5510, %v5589
    %v5591 = vand.u32 %v5590, 4294901760
    %v5592 = vsub.f32 %v5590, %v5591
    %v5593 = vand.u32 %v5592, 4294901760
    %5594 = vmatmul.mubr.f32.gmra.mrb[0].mxu0 %v5593
    %v5595 = vpop.f32.mrb[0].mxu0
    %v5596 = vadd.f32 0.0, %v5595
    %v5597 = vpop.f32.mrb[0].mxu0
    %5598 = vdwg.mxu0
    %5599 = vmatprep.subr.mxu0 0.0
    %v5600 = vand.u32 %v5501, 4294901760
    %v5601 = vsub.f32 %v5501, %v5600
    %v5602 = vand.u32 %v5601, 4294901760
    %v5603 = vsub.f32 %v5601, %v5602
    %v5604 = vand.u32 %v5603, 4294901760
    %5605 = vmatpush1.msra.mxu0 %v5604
    %5606 = vmatprep.subr.mxu0 0.0
    %v5607 = vand.u32 %v5503, 4294901760
    %v5608 = vsub.f32 %v5503, %v5607
    %v5609 = vand.u32 %v5608, 4294901760
    %v5610 = vsub.f32 %v5608, %v5609
    %v5611 = vand.u32 %v5610, 4294901760
    %5612 = vmatpush1.msra.mxu0 %v5611
    %5613 = vmatprep.subr.mxu0 0.0
    %5614 = vmatpush1.msra.mxu0 0.0
    %5615 = vmatprep.subr.mxu0 0.0
    %5616 = vmatpush1.msra.mxu0 0.0
    %5617 = vmatprep.subr.mxu0 0.0
    %5618 = vmatpush1.msra.mxu0 0.0
    %5619 = vmatprep.subr.mxu0 0.0
    %5620 = vmatpush1.msra.mxu0 0.0
    %5621 = vmatprep.subr.mxu0 0.0
    %5622 = vmatpush1.msra.mxu0 0.0
    %5623 = vmatprep.subr.mxu0 0.0
    %5624 = vmatpush1.msra.mxu0 0.0
    %5625 = vmatprep.subr.mxu0 0.0
    %5626 = vmatpush1.msra.mxu0 0.0
    %5627 = vmatprep.subr.mxu0 0.0
    %5628 = vmatpush1.msra.mxu0 0.0
    %5629 = vmatprep.subr.mxu0 0.0
    %5630 = vmatpush1.msra.mxu0 0.0
    %5631 = vmatprep.subr.mxu0 0.0
    %5632 = vmatpush1.msra.mxu0 0.0
    %5633 = vmatprep.subr.mxu0 0.0
    %5634 = vmatpush1.msra.mxu0 0.0
    %5635 = vmatprep.subr.mxu0 0.0
    %5636 = vmatpush1.msra.mxu0 0.0
    %5637 = vmatprep.subr.mxu0 0.0
    %5638 = vmatpush1.msra.mxu0 0.0
    %5639 = vmatprep.subr.mxu0 0.0
    %5640 = vmatpush1.msra.mxu0 0.0
    %5641 = vmatprep.subr.mxu0 0.0
    %5642 = vmatpush1.msra.mxu0 0.0
    %5643 = vmatprep.subr.mxu0 0.0
    %5644 = vmatpush1.msra.mxu0 0.0
    %5645 = vmatprep.subr.mxu0 0.0
    %5646 = vmatpush1.msra.mxu0 0.0
    %5647 = vmatprep.subr.mxu0 0.0
    %5648 = vmatpush1.msra.mxu0 0.0
    %5649 = vmatprep.subr.mxu0 0.0
    %5650 = vmatpush1.msra.mxu0 0.0
    %5651 = vmatprep.subr.mxu0 0.0
    %5652 = vmatpush1.msra.mxu0 0.0
    %5653 = vmatprep.subr.mxu0 0.0
    %5654 = vmatpush1.msra.mxu0 0.0
    %5655 = vmatprep.subr.mxu0 0.0
    %5656 = vmatpush1.msra.mxu0 0.0
    %5657 = vmatprep.subr.mxu0 0.0
    %5658 = vmatpush1.msra.mxu0 0.0
    %5659 = vmatprep.subr.mxu0 0.0
    %5660 = vmatpush1.msra.mxu0 0.0
    %5661 = vmatprep.subr.mxu0 0.0
    %5662 = vmatpush1.msra.mxu0 0.0
    %5663 = vmatprep.subr.mxu0 0.0
    %5664 = vmatpush1.msra.mxu0 0.0
    %5665 = vmatprep.subr.mxu0 0.0
    %5666 = vmatpush1.msra.mxu0 0.0
    %5667 = vmatprep.subr.mxu0 0.0
    %5668 = vmatpush1.msra.mxu0 0.0
    %5669 = vmatprep.subr.mxu0 0.0
    %5670 = vmatpush1.msra.mxu0 0.0
    %5671 = vmatprep.subr.mxu0 0.0
    %5672 = vmatpush1.msra.mxu0 0.0
    %5673 = vmatprep.mubr.f32.mxu0 0.0
    %v5674 = vand.u32 %v5507, 4294901760
    %5675 = vmatmul.mubr.f32.gmra.mrb[0].mxu0 %v5674
    %v5676 = vpop.f32.mrb[0].mxu0
    %v5677 = vadd.f32 %v5586, %v5676
    %v5678 = vpop.f32.mrb[0].mxu0
    %5679 = vmatprep.mubr.f32.mxu0 0.0
    %v5680 = vand.u32 %v5510, 4294901760
    %5681 = vmatmul.mubr.f32.gmra.mrb[0].mxu0 %v5680
    %v5682 = vpop.f32.mrb[0].mxu0
    %v5683 = vadd.f32 %v5596, %v5682
    %v5684 = vpop.f32.mrb[0].mxu0
    %5685 = vdwg.mxu0
    %5686 = vmatprep.subr.mxu0 0.0
    %v5687 = vand.u32 %v5501, 4294901760
    %v5688 = vsub.f32 %v5501, %v5687
    %5689 = vmatpush1.msra.mxu0 %v5688
    %5690 = vmatprep.subr.mxu0 0.0
    %v5691 = vand.u32 %v5503, 4294901760
    %v5692 = vsub.f32 %v5503, %v5691
    %5693 = vmatpush1.msra.mxu0 %v5692
    %5694 = vmatprep.subr.mxu0 0.0
    %5695 = vmatpush1.msra.mxu0 0.0
    %5696 = vmatprep.subr.mxu0 0.0
    %5697 = vmatpush1.msra.mxu0 0.0
    %5698 = vmatprep.subr.mxu0 0.0
    %5699 = vmatpush1.msra.mxu0 0.0
    %5700 = vmatprep.subr.mxu0 0.0
    %5701 = vmatpush1.msra.mxu0 0.0
    %5702 = vmatprep.subr.mxu0 0.0
    %5703 = vmatpush1.msra.mxu0 0.0
    %5704 = vmatprep.subr.mxu0 0.0
    %5705 = vmatpush1.msra.mxu0 0.0
    %5706 = vmatprep.subr.mxu0 0.0
    %5707 = vmatpush1.msra.mxu0 0.0
    %5708 = vmatprep.subr.mxu0 0.0
    %5709 = vmatpush1.msra.mxu0 0.0
    %5710 = vmatprep.subr.mxu0 0.0
    %5711 = vmatpush1.msra.mxu0 0.0
    %5712 = vmatprep.subr.mxu0 0.0
    %5713 = vmatpush1.msra.mxu0 0.0
    %5714 = vmatprep.subr.mxu0 0.0
    %5715 = vmatpush1.msra.mxu0 0.0
    %5716 = vmatprep.subr.mxu0 0.0
    %5717 = vmatpush1.msra.mxu0 0.0
    %5718 = vmatprep.subr.mxu0 0.0
    %5719 = vmatpush1.msra.mxu0 0.0
    %5720 = vmatprep.subr.mxu0 0.0
    %5721 = vmatpush1.msra.mxu0 0.0
    %5722 = vmatprep.subr.mxu0 0.0
    %5723 = vmatpush1.msra.mxu0 0.0
    %5724 = vmatprep.subr.mxu0 0.0
    %5725 = vmatpush1.msra.mxu0 0.0
    %5726 = vmatprep.subr.mxu0 0.0
    %5727 = vmatpush1.msra.mxu0 0.0
    %5728 = vmatprep.subr.mxu0 0.0
    %5729 = vmatpush1.msra.mxu0 0.0
    %5730 = vmatprep.subr.mxu0 0.0
    %5731 = vmatpush1.msra.mxu0 0.0
    %5732 = vmatprep.subr.mxu0 0.0
    %5733 = vmatpush1.msra.mxu0 0.0
    %5734 = vmatprep.subr.mxu0 0.0
    %5735 = vmatpush1.msra.mxu0 0.0
    %5736 = vmatprep.subr.mxu0 0.0
    %5737 = vmatpush1.msra.mxu0 0.0
    %5738 = vmatprep.subr.mxu0 0.0
    %5739 = vmatpush1.msra.mxu0 0.0
    %5740 = vmatprep.subr.mxu0 0.0
    %5741 = vmatpush1.msra.mxu0 0.0
    %5742 = vmatprep.subr.mxu0 0.0
    %5743 = vmatpush1.msra.mxu0 0.0
    %5744 = vmatprep.subr.mxu0 0.0
    %5745 = vmatpush1.msra.mxu0 0.0
    %5746 = vmatprep.subr.mxu0 0.0
    %5747 = vmatpush1.msra.mxu0 0.0
    %5748 = vmatprep.subr.mxu0 0.0
    %5749 = vmatpush1.msra.mxu0 0.0
    %5750 = vmatprep.subr.mxu0 0.0
    %5751 = vmatpush1.msra.mxu0 0.0
    %5752 = vmatprep.subr.mxu0 0.0
    %5753 = vmatpush1.msra.mxu0 0.0
    %5754 = vmatprep.mubr.f32.mxu0 0.0
    %v5755 = vand.u32 %v5507, 4294901760
    %v5756 = vsub.f32 %v5507, %v5755
    %5757 = vmatmul.mubr.f32.gmra.mrb[0].mxu0 %v5756
    %v5758 = vpop.f32.mrb[0].mxu0
    %v5759 = vadd.f32 %v5677, %v5758
    %v5760 = vpop.f32.mrb[0].mxu0
    %5761 = vmatprep.mubr.f32.mxu0 0.0
    %v5762 = vand.u32 %v5510, 4294901760
    %v5763 = vsub.f32 %v5510, %v5762
    %5764 = vmatmul.mubr.f32.gmra.mrb[0].mxu0 %v5763
    %v5765 = vpop.f32.mrb[0].mxu0
    %v5766 = vadd.f32 %v5683, %v5765
    %v5767 = vpop.f32.mrb[0].mxu0
    %5768 = vdwg.mxu0
    %5769 = vmatprep.subr.mxu0 0.0
    %v5770 = vand.u32 %v5501, 4294901760
    %5771 = vmatpush1.msra.mxu0 %v5770
    %5772 = vmatprep.subr.mxu0 0.0
    %v5773 = vand.u32 %v5503, 4294901760
    %5774 = vmatpush1.msra.mxu0 %v5773
    %5775 = vmatprep.subr.mxu0 0.0
    %5776 = vmatpush1.msra.mxu0 0.0
    %5777 = vmatprep.subr.mxu0 0.0
    %5778 = vmatpush1.msra.mxu0 0.0
    %5779 = vmatprep.subr.mxu0 0.0
    %5780 = vmatpush1.msra.mxu0 0.0
    %5781 = vmatprep.subr.mxu0 0.0
    %5782 = vmatpush1.msra.mxu0 0.0
    %5783 = vmatprep.subr.mxu0 0.0
    %5784 = vmatpush1.msra.mxu0 0.0
    %5785 = vmatprep.subr.mxu0 0.0
    %5786 = vmatpush1.msra.mxu0 0.0
    %5787 = vmatprep.subr.mxu0 0.0
    %5788 = vmatpush1.msra.mxu0 0.0
    %5789 = vmatprep.subr.mxu0 0.0
    %5790 = vmatpush1.msra.mxu0 0.0
    %5791 = vmatprep.subr.mxu0 0.0
    %5792 = vmatpush1.msra.mxu0 0.0
    %5793 = vmatprep.subr.mxu0 0.0
    %5794 = vmatpush1.msra.mxu0 0.0
    %5795 = vmatprep.subr.mxu0 0.0
    %5796 = vmatpush1.msra.mxu0 0.0
    %5797 = vmatprep.subr.mxu0 0.0
    %5798 = vmatpush1.msra.mxu0 0.0
    %5799 = vmatprep.subr.mxu0 0.0
    %5800 = vmatpush1.msra.mxu0 0.0
    %5801 = vmatprep.subr.mxu0 0.0
    %5802 = vmatpush1.msra.mxu0 0.0
    %5803 = vmatprep.subr.mxu0 0.0
    %5804 = vmatpush1.msra.mxu0 0.0
    %5805 = vmatprep.subr.mxu0 0.0
    %5806 = vmatpush1.msra.mxu0 0.0
    %5807 = vmatprep.subr.mxu0 0.0
    %5808 = vmatpush1.msra.mxu0 0.0
    %5809 = vmatprep.subr.mxu0 0.0
    %5810 = vmatpush1.msra.mxu0 0.0
    %5811 = vmatprep.subr.mxu0 0.0
    %5812 = vmatpush1.msra.mxu0 0.0
    %5813 = vmatprep.subr.mxu0 0.0
    %5814 = vmatpush1.msra.mxu0 0.0
    %5815 = vmatprep.subr.mxu0 0.0
    %5816 = vmatpush1.msra.mxu0 0.0
    %5817 = vmatprep.subr.mxu0 0.0
    %5818 = vmatpush1.msra.mxu0 0.0
    %5819 = vmatprep.subr.mxu0 0.0
    %5820 = vmatpush1.msra.mxu0 0.0
    %5821 = vmatprep.subr.mxu0 0.0
    %5822 = vmatpush1.msra.mxu0 0.0
    %5823 = vmatprep.subr.mxu0 0.0
    %5824 = vmatpush1.msra.mxu0 0.0
    %5825 = vmatprep.subr.mxu0 0.0
    %5826 = vmatpush1.msra.mxu0 0.0
    %5827 = vmatprep.subr.mxu0 0.0
    %5828 = vmatpush1.msra.mxu0 0.0
    %5829 = vmatprep.subr.mxu0 0.0
    %5830 = vmatpush1.msra.mxu0 0.0
    %5831 = vmatprep.subr.mxu0 0.0
    %5832 = vmatpush1.msra.mxu0 0.0
    %5833 = vmatprep.subr.mxu0 0.0
    %5834 = vmatpush1.msra.mxu0 0.0
    %5835 = vmatprep.mubr.f32.mxu0 0.0
    %v5836 = vand.u32 %v5507, 4294901760
    %v5837 = vsub.f32 %v5507, %v5836
    %v5838 = vand.u32 %v5837, 4294901760
    %5839 = vmatmul.mubr.f32.gmra.mrb[0].mxu0 %v5838
    %v5840 = vpop.f32.mrb[0].mxu0
    %v5841 = vadd.f32 %v5759, %v5840
    %v5842 = vpop.f32.mrb[0].mxu0
    %5843 = vmatprep.mubr.f32.mxu0 0.0
    %v5844 = vand.u32 %v5510, 4294901760
    %v5845 = vsub.f32 %v5510, %v5844
    %v5846 = vand.u32 %v5845, 4294901760
    %5847 = vmatmul.mubr.f32.gmra.mrb[0].mxu0 %v5846
    %v5848 = vpop.f32.mrb[0].mxu0
    %v5849 = vadd.f32 %v5766, %v5848
    %v5850 = vpop.f32.mrb[0].mxu0
    %5851 = vdwg.mxu0
    %5852 = vmatprep.subr.mxu0 0.0
    %v5853 = vand.u32 %v5501, 4294901760
    %v5854 = vsub.f32 %v5501, %v5853
    %v5855 = vand.u32 %v5854, 4294901760
    %5856 = vmatpush1.msra.mxu0 %v5855
    %5857 = vmatprep.subr.mxu0 0.0
    %v5858 = vand.u32 %v5503, 4294901760
    %v5859 = vsub.f32 %v5503, %v5858
    %v5860 = vand.u32 %v5859, 4294901760
    %5861 = vmatpush1.msra.mxu0 %v5860
    %5862 = vmatprep.subr.mxu0 0.0
    %5863 = vmatpush1.msra.mxu0 0.0
    %5864 = vmatprep.subr.mxu0 0.0
    %5865 = vmatpush1.msra.mxu0 0.0
    %5866 = vmatprep.subr.mxu0 0.0
    %5867 = vmatpush1.msra.mxu0 0.0
    %5868 = vmatprep.subr.mxu0 0.0
    %5869 = vmatpush1.msra.mxu0 0.0
    %5870 = vmatprep.subr.mxu0 0.0
    %5871 = vmatpush1.msra.mxu0 0.0
    %5872 = vmatprep.subr.mxu0 0.0
    %5873 = vmatpush1.msra.mxu0 0.0
    %5874 = vmatprep.subr.mxu0 0.0
    %5875 = vmatpush1.msra.mxu0 0.0
    %5876 = vmatprep.subr.mxu0 0.0
    %5877 = vmatpush1.msra.mxu0 0.0
    %5878 = vmatprep.subr.mxu0 0.0
    %5879 = vmatpush1.msra.mxu0 0.0
    %5880 = vmatprep.subr.mxu0 0.0
    %5881 = vmatpush1.msra.mxu0 0.0
    %5882 = vmatprep.subr.mxu0 0.0
    %5883 = vmatpush1.msra.mxu0 0.0
    %5884 = vmatprep.subr.mxu0 0.0
    %5885 = vmatpush1.msra.mxu0 0.0
    %5886 = vmatprep.subr.mxu0 0.0
    %5887 = vmatpush1.msra.mxu0 0.0
    %5888 = vmatprep.subr.mxu0 0.0
    %5889 = vmatpush1.msra.mxu0 0.0
    %5890 = vmatprep.subr.mxu0 0.0
    %5891 = vmatpush1.msra.mxu0 0.0
    %5892 = vmatprep.subr.mxu0 0.0
    %5893 = vmatpush1.msra.mxu0 0.0
    %5894 = vmatprep.subr.mxu0 0.0
    %5895 = vmatpush1.msra.mxu0 0.0
    %5896 = vmatprep.subr.mxu0 0.0
    %5897 = vmatpush1.msra.mxu0 0.0
    %5898 = vmatprep.subr.mxu0 0.0
    %5899 = vmatpush1.msra.mxu0 0.0
    %5900 = vmatprep.subr.mxu0 0.0
    %5901 = vmatpush1.msra.mxu0 0.0
    %5902 = vmatprep.subr.mxu0 0.0
    %5903 = vmatpush1.msra.mxu0 0.0
    %5904 = vmatprep.subr.mxu0 0.0
    %5905 = vmatpush1.msra.mxu0 0.0
    %5906 = vmatprep.subr.mxu0 0.0
    %5907 = vmatpush1.msra.mxu0 0.0
    %5908 = vmatprep.subr.mxu0 0.0
    %5909 = vmatpush1.msra.mxu0 0.0
    %5910 = vmatprep.subr.mxu0 0.0
    %5911 = vmatpush1.msra.mxu0 0.0
    %5912 = vmatprep.subr.mxu0 0.0
    %5913 = vmatpush1.msra.mxu0 0.0
    %5914 = vmatprep.subr.mxu0 0.0
    %5915 = vmatpush1.msra.mxu0 0.0
    %5916 = vmatprep.subr.mxu0 0.0
    %5917 = vmatpush1.msra.mxu0 0.0
    %5918 = vmatprep.subr.mxu0 0.0
    %5919 = vmatpush1.msra.mxu0 0.0
    %5920 = vmatprep.subr.mxu0 0.0
    %5921 = vmatpush1.msra.mxu0 0.0
    %5922 = vmatprep.mubr.f32.mxu0 0.0
    %v5923 = vand.u32 %v5507, 4294901760
    %5924 = vmatmul.mubr.f32.gmra.mrb[0].mxu0 %v5923
    %v5925 = vpop.f32.mrb[0].mxu0
    %v5926 = vadd.f32 %v5841, %v5925
    %v5927 = vpop.f32.mrb[0].mxu0
    %5928 = vmatprep.mubr.f32.mxu0 0.0
    %v5929 = vand.u32 %v5510, 4294901760
    %5930 = vmatmul.mubr.f32.gmra.mrb[0].mxu0 %v5929
    %v5931 = vpop.f32.mrb[0].mxu0
    %v5932 = vadd.f32 %v5849, %v5931
    %v5933 = vpop.f32.mrb[0].mxu0
    %5934 = vdwg.mxu0
    %5935 = vmatprep.subr.mxu0 0.0
    %v5936 = vand.u32 %v5501, 4294901760
    %5937 = vmatpush1.msra.mxu0 %v5936
    %5938 = vmatprep.subr.mxu0 0.0
    %v5939 = vand.u32 %v5503, 4294901760
    %5940 = vmatpush1.msra.mxu0 %v5939
    %5941 = vmatprep.subr.mxu0 0.0
    %5942 = vmatpush1.msra.mxu0 0.0
    %5943 = vmatprep.subr.mxu0 0.0
    %5944 = vmatpush1.msra.mxu0 0.0
    %5945 = vmatprep.subr.mxu0 0.0
    %5946 = vmatpush1.msra.mxu0 0.0
    %5947 = vmatprep.subr.mxu0 0.0
    %5948 = vmatpush1.msra.mxu0 0.0
    %5949 = vmatprep.subr.mxu0 0.0
    %5950 = vmatpush1.msra.mxu0 0.0
    %5951 = vmatprep.subr.mxu0 0.0
    %5952 = vmatpush1.msra.mxu0 0.0
    %5953 = vmatprep.subr.mxu0 0.0
    %5954 = vmatpush1.msra.mxu0 0.0
    %5955 = vmatprep.subr.mxu0 0.0
    %5956 = vmatpush1.msra.mxu0 0.0
    %5957 = vmatprep.subr.mxu0 0.0
    %5958 = vmatpush1.msra.mxu0 0.0
    %5959 = vmatprep.subr.mxu0 0.0
    %5960 = vmatpush1.msra.mxu0 0.0
    %5961 = vmatprep.subr.mxu0 0.0
    %5962 = vmatpush1.msra.mxu0 0.0
    %5963 = vmatprep.subr.mxu0 0.0
    %5964 = vmatpush1.msra.mxu0 0.0
    %5965 = vmatprep.subr.mxu0 0.0
    %5966 = vmatpush1.msra.mxu0 0.0
    %5967 = vmatprep.subr.mxu0 0.0
    %5968 = vmatpush1.msra.mxu0 0.0
    %5969 = vmatprep.subr.mxu0 0.0
    %5970 = vmatpush1.msra.mxu0 0.0
    %5971 = vmatprep.subr.mxu0 0.0
    %5972 = vmatpush1.msra.mxu0 0.0
    %5973 = vmatprep.subr.mxu0 0.0
    %5974 = vmatpush1.msra.mxu0 0.0
    %5975 = vmatprep.subr.mxu0 0.0
    %5976 = vmatpush1.msra.mxu0 0.0
    %5977 = vmatprep.subr.mxu0 0.0
    %5978 = vmatpush1.msra.mxu0 0.0
    %5979 = vmatprep.subr.mxu0 0.0
    %5980 = vmatpush1.msra.mxu0 0.0
    %5981 = vmatprep.subr.mxu0 0.0
    %5982 = vmatpush1.msra.mxu0 0.0
    %5983 = vmatprep.subr.mxu0 0.0
    %5984 = vmatpush1.msra.mxu0 0.0
    %5985 = vmatprep.subr.mxu0 0.0
    %5986 = vmatpush1.msra.mxu0 0.0
    %5987 = vmatprep.subr.mxu0 0.0
    %5988 = vmatpush1.msra.mxu0 0.0
    %5989 = vmatprep.subr.mxu0 0.0
    %5990 = vmatpush1.msra.mxu0 0.0
    %5991 = vmatprep.subr.mxu0 0.0
    %5992 = vmatpush1.msra.mxu0 0.0
    %5993 = vmatprep.subr.mxu0 0.0
    %5994 = vmatpush1.msra.mxu0 0.0
    %5995 = vmatprep.subr.mxu0 0.0
    %5996 = vmatpush1.msra.mxu0 0.0
    %5997 = vmatprep.subr.mxu0 0.0
    %5998 = vmatpush1.msra.mxu0 0.0
    %5999 = vmatprep.subr.mxu0 0.0
    %6000 = vmatpush1.msra.mxu0 0.0
    %6001 = vmatprep.mubr.f32.mxu0 0.0
    %v6002 = vand.u32 %v5507, 4294901760
    %6003 = vmatmul.mubr.f32.gmra.mrb[0].mxu0 %v6002
    %v6004 = vpop.f32.mrb[0].mxu0
    %v6005 = vadd.f32 %v5926, %v6004
    %v6006 = vpop.f32.mrb[0].mxu0
    %6007 = vmatprep.mubr.f32.mxu0 0.0
    %v6008 = vand.u32 %v5510, 4294901760
    %6009 = vmatmul.mubr.f32.gmra.mrb[0].mxu0 %v6008
    %v6010 = vpop.f32.mrb[0].mxu0
    %v6011 = vadd.f32 %v5932, %v6010
    %v6012 = vpop.f32.mrb[0].mxu0
    %6013 = vdwg.mxu0
    %v6014 = vadd.f32 %v5491, %v6005
    %v6015 = vadd.f32 %v5492, %v6011
    %v6016 = vld [vmem:[%s13] sm:$0xff]
    %v6017 = vld [vmem:[%s13 + $0x8] sm:$0xff]
    %v6018 = vld [vmem:[%s13 + $0x10] sm:$0xff]
    %v6019 = vld [vmem:[%s13 + $0x18] sm:$0xff]
    %v6020 = vld [vmem:[%s14] sm:$0x1]
    %v6022 = vlaneseq
    %v6023 = vshrl.u32 %v6022, 7
    %v6024 = vsub.s32 0, %v6023
    %v6025 = vrot.slane %v6020, %v6024
    %v6028 = vsel %vm1899, %v6014, 0
    %v6031 = vsel %vm1899, %v6015, 0
    %6033 = vmatprep.subr.mxu0 0.0
    %v6034 = vand.u32 %v6016, 4294901760
    %6035 = vmatpush1.msra.mxu0 %v6034
    %6036 = vmatprep.subr.mxu0 0.0
    %v6037 = vand.u32 %v6017, 4294901760
    %6038 = vmatpush1.msra.mxu0 %v6037
    %6039 = vmatprep.subr.mxu0 0.0
    %v6040 = vand.u32 %v6018, 4294901760
    %6041 = vmatpush1.msra.mxu0 %v6040
    %6042 = vmatprep.subr.mxu0 0.0
    %v6043 = vand.u32 %v6019, 4294901760
    %6044 = vmatpush1.msra.mxu0 %v6043
    %6045 = vmatprep.subr.mxu0 0.0
    %6046 = vmatpush1.msra.mxu0 0.0
    %6047 = vmatprep.subr.mxu0 0.0
    %6048 = vmatpush1.msra.mxu0 0.0
    %6049 = vmatprep.subr.mxu0 0.0
    %6050 = vmatpush1.msra.mxu0 0.0
    %6051 = vmatprep.subr.mxu0 0.0
    %6052 = vmatpush1.msra.mxu0 0.0
    %6053 = vmatprep.subr.mxu0 0.0
    %6054 = vmatpush1.msra.mxu0 0.0
    %6055 = vmatprep.subr.mxu0 0.0
    %6056 = vmatpush1.msra.mxu0 0.0
    %6057 = vmatprep.subr.mxu0 0.0
    %6058 = vmatpush1.msra.mxu0 0.0
    %6059 = vmatprep.subr.mxu0 0.0
    %6060 = vmatpush1.msra.mxu0 0.0
    %6061 = vmatprep.subr.mxu0 0.0
    %6062 = vmatpush1.msra.mxu0 0.0
    %6063 = vmatprep.subr.mxu0 0.0
    %6064 = vmatpush1.msra.mxu0 0.0
    %6065 = vmatprep.subr.mxu0 0.0
    %6066 = vmatpush1.msra.mxu0 0.0
    %6067 = vmatprep.subr.mxu0 0.0
    %6068 = vmatpush1.msra.mxu0 0.0
    %6069 = vmatprep.subr.mxu0 0.0
    %6070 = vmatpush1.msra.mxu0 0.0
    %6071 = vmatprep.subr.mxu0 0.0
    %6072 = vmatpush1.msra.mxu0 0.0
    %6073 = vmatprep.subr.mxu0 0.0
    %6074 = vmatpush1.msra.mxu0 0.0
    %6075 = vmatprep.subr.mxu0 0.0
    %6076 = vmatpush1.msra.mxu0 0.0
    %6077 = vmatprep.subr.mxu0 0.0
    %6078 = vmatpush1.msra.mxu0 0.0
    %6079 = vmatprep.subr.mxu0 0.0
    %6080 = vmatpush1.msra.mxu0 0.0
    %6081 = vmatprep.subr.mxu0 0.0
    %6082 = vmatpush1.msra.mxu0 0.0
    %6083 = vmatprep.subr.mxu0 0.0
    %6084 = vmatpush1.msra.mxu0 0.0
    %6085 = vmatprep.subr.mxu0 0.0
    %6086 = vmatpush1.msra.mxu0 0.0
    %6087 = vmatprep.subr.mxu0 0.0
    %6088 = vmatpush1.msra.mxu0 0.0
    %6089 = vmatprep.subr.mxu0 0.0
    %6090 = vmatpush1.msra.mxu0 0.0
    %6091 = vmatprep.subr.mxu0 0.0
    %6092 = vmatpush1.msra.mxu0 0.0
    %6093 = vmatprep.subr.mxu0 0.0
    %6094 = vmatpush1.msra.mxu0 0.0
    %6095 = vmatprep.subr.mxu0 0.0
    %6096 = vmatpush1.msra.mxu0 0.0
    %6097 = vmatprep.subr.mxu0 0.0
    %6098 = vmatpush1.msra.mxu0 0.0
    %6099 = vmatprep.subr.mxu0 0.0
    %6100 = vmatpush1.msra.mxu0 0.0
    %6101 = vmatprep.mubr.f32.mxu0 0.0
    %v6102 = vand.u32 %v6028, 4294901760
    %v6103 = vsub.f32 %v6028, %v6102
    %v6104 = vand.u32 %v6103, 4294901760
    %v6105 = vsub.f32 %v6103, %v6104
    %v6106 = vand.u32 %v6105, 4294901760
    %6107 = vmatmul.mubr.f32.gmra.mrb[0].mxu0 %v6106
    %v6108 = vpop.f32.mrb[0].mxu0
    %v6109 = vadd.f32 %v6025, %v6108
    %v6110 = vpop.f32.mrb[0].mxu0
    %6111 = vmatprep.mubr.f32.mxu0 0.0
    %v6112 = vand.u32 %v6031, 4294901760
    %v6113 = vsub.f32 %v6031, %v6112
    %v6114 = vand.u32 %v6113, 4294901760
    %v6115 = vsub.f32 %v6113, %v6114
    %v6116 = vand.u32 %v6115, 4294901760
    %6117 = vmatmul.mubr.f32.gmra.mrb[0].mxu0 %v6116
    %v6118 = vpop.f32.mrb[0].mxu0
    %v6119 = vadd.f32 %v6025, %v6118
    %v6120 = vpop.f32.mrb[0].mxu0
    %6121 = vdwg.mxu0
    %6122 = vmatprep.subr.mxu0 0.0
    %v6123 = vand.u32 %v6016, 4294901760
    %v6124 = vsub.f32 %v6016, %v6123
    %v6125 = vand.u32 %v6124, 4294901760
    %v6126 = vsub.f32 %v6124, %v6125
    %v6127 = vand.u32 %v6126, 4294901760
    %6128 = vmatpush1.msra.mxu0 %v6127
    %6129 = vmatprep.subr.mxu0 0.0
    %v6130 = vand.u32 %v6017, 4294901760
    %v6131 = vsub.f32 %v6017, %v6130
    %v6132 = vand.u32 %v6131, 4294901760
    %v6133 = vsub.f32 %v6131, %v6132
    %v6134 = vand.u32 %v6133, 4294901760
    %6135 = vmatpush1.msra.mxu0 %v6134
    %6136 = vmatprep.subr.mxu0 0.0
    %v6137 = vand.u32 %v6018, 4294901760
    %v6138 = vsub.f32 %v6018, %v6137
    %v6139 = vand.u32 %v6138, 4294901760
    %v6140 = vsub.f32 %v6138, %v6139
    %v6141 = vand.u32 %v6140, 4294901760
    %6142 = vmatpush1.msra.mxu0 %v6141
    %6143 = vmatprep.subr.mxu0 0.0
    %v6144 = vand.u32 %v6019, 4294901760
    %v6145 = vsub.f32 %v6019, %v6144
    %v6146 = vand.u32 %v6145, 4294901760
    %v6147 = vsub.f32 %v6145, %v6146
    %v6148 = vand.u32 %v6147, 4294901760
    %6149 = vmatpush1.msra.mxu0 %v6148
    %6150 = vmatprep.subr.mxu0 0.0
    %6151 = vmatpush1.msra.mxu0 0.0
    %6152 = vmatprep.subr.mxu0 0.0
    %6153 = vmatpush1.msra.mxu0 0.0
    %6154 = vmatprep.subr.mxu0 0.0
    %6155 = vmatpush1.msra.mxu0 0.0
    %6156 = vmatprep.subr.mxu0 0.0
    %6157 = vmatpush1.msra.mxu0 0.0
    %6158 = vmatprep.subr.mxu0 0.0
    %6159 = vmatpush1.msra.mxu0 0.0
    %6160 = vmatprep.subr.mxu0 0.0
    %6161 = vmatpush1.msra.mxu0 0.0
    %6162 = vmatprep.subr.mxu0 0.0
    %6163 = vmatpush1.msra.mxu0 0.0
    %6164 = vmatprep.subr.mxu0 0.0
    %6165 = vmatpush1.msra.mxu0 0.0
    %6166 = vmatprep.subr.mxu0 0.0
    %6167 = vmatpush1.msra.mxu0 0.0
    %6168 = vmatprep.subr.mxu0 0.0
    %6169 = vmatpush1.msra.mxu0 0.0
    %6170 = vmatprep.subr.mxu0 0.0
    %6171 = vmatpush1.msra.mxu0 0.0
    %6172 = vmatprep.subr.mxu0 0.0
    %6173 = vmatpush1.msra.mxu0 0.0
    %6174 = vmatprep.subr.mxu0 0.0
    %6175 = vmatpush1.msra.mxu0 0.0
    %6176 = vmatprep.subr.mxu0 0.0
    %6177 = vmatpush1.msra.mxu0 0.0
    %6178 = vmatprep.subr.mxu0 0.0
    %6179 = vmatpush1.msra.mxu0 0.0
    %6180 = vmatprep.subr.mxu0 0.0
    %6181 = vmatpush1.msra.mxu0 0.0
    %6182 = vmatprep.subr.mxu0 0.0
    %6183 = vmatpush1.msra.mxu0 0.0
    %6184 = vmatprep.subr.mxu0 0.0
    %6185 = vmatpush1.msra.mxu0 0.0
    %6186 = vmatprep.subr.mxu0 0.0
    %6187 = vmatpush1.msra.mxu0 0.0
    %6188 = vmatprep.subr.mxu0 0.0
    %6189 = vmatpush1.msra.mxu0 0.0
    %6190 = vmatprep.subr.mxu0 0.0
    %6191 = vmatpush1.msra.mxu0 0.0
    %6192 = vmatprep.subr.mxu0 0.0
    %6193 = vmatpush1.msra.mxu0 0.0
    %6194 = vmatprep.subr.mxu0 0.0
    %6195 = vmatpush1.msra.mxu0 0.0
    %6196 = vmatprep.subr.mxu0 0.0
    %6197 = vmatpush1.msra.mxu0 0.0
    %6198 = vmatprep.subr.mxu0 0.0
    %6199 = vmatpush1.msra.mxu0 0.0
    %6200 = vmatprep.subr.mxu0 0.0
    %6201 = vmatpush1.msra.mxu0 0.0
    %6202 = vmatprep.subr.mxu0 0.0
    %6203 = vmatpush1.msra.mxu0 0.0
    %6204 = vmatprep.subr.mxu0 0.0
    %6205 = vmatpush1.msra.mxu0 0.0
    %6206 = vmatprep.mubr.f32.mxu0 0.0
    %v6207 = vand.u32 %v6028, 4294901760
    %6208 = vmatmul.mubr.f32.gmra.mrb[0].mxu0 %v6207
    %v6209 = vpop.f32.mrb[0].mxu0
    %v6210 = vadd.f32 %v6109, %v6209
    %v6211 = vpop.f32.mrb[0].mxu0
    %6212 = vmatprep.mubr.f32.mxu0 0.0
    %v6213 = vand.u32 %v6031, 4294901760
    %6214 = vmatmul.mubr.f32.gmra.mrb[0].mxu0 %v6213
    %v6215 = vpop.f32.mrb[0].mxu0
    %v6216 = vadd.f32 %v6119, %v6215
    %v6217 = vpop.f32.mrb[0].mxu0
    %6218 = vdwg.mxu0
    %6219 = vmatprep.subr.mxu0 0.0
    %v6220 = vand.u32 %v6016, 4294901760
    %v6221 = vsub.f32 %v6016, %v6220
    %6222 = vmatpush1.msra.mxu0 %v6221
    %6223 = vmatprep.subr.mxu0 0.0
    %v6224 = vand.u32 %v6017, 4294901760
    %v6225 = vsub.f32 %v6017, %v6224
    %6226 = vmatpush1.msra.mxu0 %v6225
    %6227 = vmatprep.subr.mxu0 0.0
    %v6228 = vand.u32 %v6018, 4294901760
    %v6229 = vsub.f32 %v6018, %v6228
    %6230 = vmatpush1.msra.mxu0 %v6229
    %6231 = vmatprep.subr.mxu0 0.0
    %v6232 = vand.u32 %v6019, 4294901760
    %v6233 = vsub.f32 %v6019, %v6232
    %6234 = vmatpush1.msra.mxu0 %v6233
    %6235 = vmatprep.subr.mxu0 0.0
    %6236 = vmatpush1.msra.mxu0 0.0
    %6237 = vmatprep.subr.mxu0 0.0
    %6238 = vmatpush1.msra.mxu0 0.0
    %6239 = vmatprep.subr.mxu0 0.0
    %6240 = vmatpush1.msra.mxu0 0.0
    %6241 = vmatprep.subr.mxu0 0.0
    %6242 = vmatpush1.msra.mxu0 0.0
    %6243 = vmatprep.subr.mxu0 0.0
    %6244 = vmatpush1.msra.mxu0 0.0
    %6245 = vmatprep.subr.mxu0 0.0
    %6246 = vmatpush1.msra.mxu0 0.0
    %6247 = vmatprep.subr.mxu0 0.0
    %6248 = vmatpush1.msra.mxu0 0.0
    %6249 = vmatprep.subr.mxu0 0.0
    %6250 = vmatpush1.msra.mxu0 0.0
    %6251 = vmatprep.subr.mxu0 0.0
    %6252 = vmatpush1.msra.mxu0 0.0
    %6253 = vmatprep.subr.mxu0 0.0
    %6254 = vmatpush1.msra.mxu0 0.0
    %6255 = vmatprep.subr.mxu0 0.0
    %6256 = vmatpush1.msra.mxu0 0.0
    %6257 = vmatprep.subr.mxu0 0.0
    %6258 = vmatpush1.msra.mxu0 0.0
    %6259 = vmatprep.subr.mxu0 0.0
    %6260 = vmatpush1.msra.mxu0 0.0
    %6261 = vmatprep.subr.mxu0 0.0
    %6262 = vmatpush1.msra.mxu0 0.0
    %6263 = vmatprep.subr.mxu0 0.0
    %6264 = vmatpush1.msra.mxu0 0.0
    %6265 = vmatprep.subr.mxu0 0.0
    %6266 = vmatpush1.msra.mxu0 0.0
    %6267 = vmatprep.subr.mxu0 0.0
    %6268 = vmatpush1.msra.mxu0 0.0
    %6269 = vmatprep.subr.mxu0 0.0
    %6270 = vmatpush1.msra.mxu0 0.0
    %6271 = vmatprep.subr.mxu0 0.0
    %6272 = vmatpush1.msra.mxu0 0.0
    %6273 = vmatprep.subr.mxu0 0.0
    %6274 = vmatpush1.msra.mxu0 0.0
    %6275 = vmatprep.subr.mxu0 0.0
    %6276 = vmatpush1.msra.mxu0 0.0
    %6277 = vmatprep.subr.mxu0 0.0
    %6278 = vmatpush1.msra.mxu0 0.0
    %6279 = vmatprep.subr.mxu0 0.0
    %6280 = vmatpush1.msra.mxu0 0.0
    %6281 = vmatprep.subr.mxu0 0.0
    %6282 = vmatpush1.msra.mxu0 0.0
    %6283 = vmatprep.subr.mxu0 0.0
    %6284 = vmatpush1.msra.mxu0 0.0
    %6285 = vmatprep.subr.mxu0 0.0
    %6286 = vmatpush1.msra.mxu0 0.0
    %6287 = vmatprep.subr.mxu0 0.0
    %6288 = vmatpush1.msra.mxu0 0.0
    %6289 = vmatprep.subr.mxu0 0.0
    %6290 = vmatpush1.msra.mxu0 0.0
    %6291 = vmatprep.mubr.f32.mxu0 0.0
    %v6292 = vand.u32 %v6028, 4294901760
    %v6293 = vsub.f32 %v6028, %v6292
    %6294 = vmatmul.mubr.f32.gmra.mrb[0].mxu0 %v6293
    %v6295 = vpop.f32.mrb[0].mxu0
    %v6296 = vadd.f32 %v6210, %v6295
    %v6297 = vpop.f32.mrb[0].mxu0
    %6298 = vmatprep.mubr.f32.mxu0 0.0
    %v6299 = vand.u32 %v6031, 4294901760
    %v6300 = vsub.f32 %v6031, %v6299
    %6301 = vmatmul.mubr.f32.gmra.mrb[0].mxu0 %v6300
    %v6302 = vpop.f32.mrb[0].mxu0
    %v6303 = vadd.f32 %v6216, %v6302
    %v6304 = vpop.f32.mrb[0].mxu0
    %6305 = vdwg.mxu0
    %6306 = vmatprep.subr.mxu0 0.0
    %v6307 = vand.u32 %v6016, 4294901760
    %6308 = vmatpush1.msra.mxu0 %v6307
    %6309 = vmatprep.subr.mxu0 0.0
    %v6310 = vand.u32 %v6017, 4294901760
    %6311 = vmatpush1.msra.mxu0 %v6310
    %6312 = vmatprep.subr.mxu0 0.0
    %v6313 = vand.u32 %v6018, 4294901760
    %6314 = vmatpush1.msra.mxu0 %v6313
    %6315 = vmatprep.subr.mxu0 0.0
    %v6316 = vand.u32 %v6019, 4294901760
    %6317 = vmatpush1.msra.mxu0 %v6316
    %6318 = vmatprep.subr.mxu0 0.0
    %6319 = vmatpush1.msra.mxu0 0.0
    %6320 = vmatprep.subr.mxu0 0.0
    %6321 = vmatpush1.msra.mxu0 0.0
    %6322 = vmatprep.subr.mxu0 0.0
    %6323 = vmatpush1.msra.mxu0 0.0
    %6324 = vmatprep.subr.mxu0 0.0
    %6325 = vmatpush1.msra.mxu0 0.0
    %6326 = vmatprep.subr.mxu0 0.0
    %6327 = vmatpush1.msra.mxu0 0.0
    %6328 = vmatprep.subr.mxu0 0.0
    %6329 = vmatpush1.msra.mxu0 0.0
    %6330 = vmatprep.subr.mxu0 0.0
    %6331 = vmatpush1.msra.mxu0 0.0
    %6332 = vmatprep.subr.mxu0 0.0
    %6333 = vmatpush1.msra.mxu0 0.0
    %6334 = vmatprep.subr.mxu0 0.0
    %6335 = vmatpush1.msra.mxu0 0.0
    %6336 = vmatprep.subr.mxu0 0.0
    %6337 = vmatpush1.msra.mxu0 0.0
    %6338 = vmatprep.subr.mxu0 0.0
    %6339 = vmatpush1.msra.mxu0 0.0
    %6340 = vmatprep.subr.mxu0 0.0
    %6341 = vmatpush1.msra.mxu0 0.0
    %6342 = vmatprep.subr.mxu0 0.0
    %6343 = vmatpush1.msra.mxu0 0.0
    %6344 = vmatprep.subr.mxu0 0.0
    %6345 = vmatpush1.msra.mxu0 0.0
    %6346 = vmatprep.subr.mxu0 0.0
    %6347 = vmatpush1.msra.mxu0 0.0
    %6348 = vmatprep.subr.mxu0 0.0
    %6349 = vmatpush1.msra.mxu0 0.0
    %6350 = vmatprep.subr.mxu0 0.0
    %6351 = vmatpush1.msra.mxu0 0.0
    %6352 = vmatprep.subr.mxu0 0.0
    %6353 = vmatpush1.msra.mxu0 0.0
    %6354 = vmatprep.subr.mxu0 0.0
    %6355 = vmatpush1.msra.mxu0 0.0
    %6356 = vmatprep.subr.mxu0 0.0
    %6357 = vmatpush1.msra.mxu0 0.0
    %6358 = vmatprep.subr.mxu0 0.0
    %6359 = vmatpush1.msra.mxu0 0.0
    %6360 = vmatprep.subr.mxu0 0.0
    %6361 = vmatpush1.msra.mxu0 0.0
    %6362 = vmatprep.subr.mxu0 0.0
    %6363 = vmatpush1.msra.mxu0 0.0
    %6364 = vmatprep.subr.mxu0 0.0
    %6365 = vmatpush1.msra.mxu0 0.0
    %6366 = vmatprep.subr.mxu0 0.0
    %6367 = vmatpush1.msra.mxu0 0.0
    %6368 = vmatprep.subr.mxu0 0.0
    %6369 = vmatpush1.msra.mxu0 0.0
    %6370 = vmatprep.subr.mxu0 0.0
    %6371 = vmatpush1.msra.mxu0 0.0
    %6372 = vmatprep.subr.mxu0 0.0
    %6373 = vmatpush1.msra.mxu0 0.0
    %6374 = vmatprep.mubr.f32.mxu0 0.0
    %v6375 = vand.u32 %v6028, 4294901760
    %v6376 = vsub.f32 %v6028, %v6375
    %v6377 = vand.u32 %v6376, 4294901760
    %6378 = vmatmul.mubr.f32.gmra.mrb[0].mxu0 %v6377
    %v6379 = vpop.f32.mrb[0].mxu0
    %v6380 = vadd.f32 %v6296, %v6379
    %v6381 = vpop.f32.mrb[0].mxu0
    %6382 = vmatprep.mubr.f32.mxu0 0.0
    %v6383 = vand.u32 %v6031, 4294901760
    %v6384 = vsub.f32 %v6031, %v6383
    %v6385 = vand.u32 %v6384, 4294901760
    %6386 = vmatmul.mubr.f32.gmra.mrb[0].mxu0 %v6385
    %v6387 = vpop.f32.mrb[0].mxu0
    %v6388 = vadd.f32 %v6303, %v6387
    %v6389 = vpop.f32.mrb[0].mxu0
    %6390 = vdwg.mxu0
    %6391 = vmatprep.subr.mxu0 0.0
    %v6392 = vand.u32 %v6016, 4294901760
    %v6393 = vsub.f32 %v6016, %v6392
    %v6394 = vand.u32 %v6393, 4294901760
    %6395 = vmatpush1.msra.mxu0 %v6394
    %6396 = vmatprep.subr.mxu0 0.0
    %v6397 = vand.u32 %v6017, 4294901760
    %v6398 = vsub.f32 %v6017, %v6397
    %v6399 = vand.u32 %v6398, 4294901760
    %6400 = vmatpush1.msra.mxu0 %v6399
    %6401 = vmatprep.subr.mxu0 0.0
    %v6402 = vand.u32 %v6018, 4294901760
    %v6403 = vsub.f32 %v6018, %v6402
    %v6404 = vand.u32 %v6403, 4294901760
    %6405 = vmatpush1.msra.mxu0 %v6404
    %6406 = vmatprep.subr.mxu0 0.0
    %v6407 = vand.u32 %v6019, 4294901760
    %v6408 = vsub.f32 %v6019, %v6407
    %v6409 = vand.u32 %v6408, 4294901760
    %6410 = vmatpush1.msra.mxu0 %v6409
    %6411 = vmatprep.subr.mxu0 0.0
    %6412 = vmatpush1.msra.mxu0 0.0
    %6413 = vmatprep.subr.mxu0 0.0
    %6414 = vmatpush1.msra.mxu0 0.0
    %6415 = vmatprep.subr.mxu0 0.0
    %6416 = vmatpush1.msra.mxu0 0.0
    %6417 = vmatprep.subr.mxu0 0.0
    %6418 = vmatpush1.msra.mxu0 0.0
    %6419 = vmatprep.subr.mxu0 0.0
    %6420 = vmatpush1.msra.mxu0 0.0
    %6421 = vmatprep.subr.mxu0 0.0
    %6422 = vmatpush1.msra.mxu0 0.0
    %6423 = vmatprep.subr.mxu0 0.0
    %6424 = vmatpush1.msra.mxu0 0.0
    %6425 = vmatprep.subr.mxu0 0.0
    %6426 = vmatpush1.msra.mxu0 0.0
    %6427 = vmatprep.subr.mxu0 0.0
    %6428 = vmatpush1.msra.mxu0 0.0
    %6429 = vmatprep.subr.mxu0 0.0
    %6430 = vmatpush1.msra.mxu0 0.0
    %6431 = vmatprep.subr.mxu0 0.0
    %6432 = vmatpush1.msra.mxu0 0.0
    %6433 = vmatprep.subr.mxu0 0.0
    %6434 = vmatpush1.msra.mxu0 0.0
    %6435 = vmatprep.subr.mxu0 0.0
    %6436 = vmatpush1.msra.mxu0 0.0
    %6437 = vmatprep.subr.mxu0 0.0
    %6438 = vmatpush1.msra.mxu0 0.0
    %6439 = vmatprep.subr.mxu0 0.0
    %6440 = vmatpush1.msra.mxu0 0.0
    %6441 = vmatprep.subr.mxu0 0.0
    %6442 = vmatpush1.msra.mxu0 0.0
    %6443 = vmatprep.subr.mxu0 0.0
    %6444 = vmatpush1.msra.mxu0 0.0
    %6445 = vmatprep.subr.mxu0 0.0
    %6446 = vmatpush1.msra.mxu0 0.0
    %6447 = vmatprep.subr.mxu0 0.0
    %6448 = vmatpush1.msra.mxu0 0.0
    %6449 = vmatprep.subr.mxu0 0.0
    %6450 = vmatpush1.msra.mxu0 0.0
    %6451 = vmatprep.subr.mxu0 0.0
    %6452 = vmatpush1.msra.mxu0 0.0
    %6453 = vmatprep.subr.mxu0 0.0
    %6454 = vmatpush1.msra.mxu0 0.0
    %6455 = vmatprep.subr.mxu0 0.0
    %6456 = vmatpush1.msra.mxu0 0.0
    %6457 = vmatprep.subr.mxu0 0.0
    %6458 = vmatpush1.msra.mxu0 0.0
    %6459 = vmatprep.subr.mxu0 0.0
    %6460 = vmatpush1.msra.mxu0 0.0
    %6461 = vmatprep.subr.mxu0 0.0
    %6462 = vmatpush1.msra.mxu0 0.0
    %6463 = vmatprep.subr.mxu0 0.0
    %6464 = vmatpush1.msra.mxu0 0.0
    %6465 = vmatprep.subr.mxu0 0.0
    %6466 = vmatpush1.msra.mxu0 0.0
    %6467 = vmatprep.mubr.f32.mxu0 0.0
    %v6468 = vand.u32 %v6028, 4294901760
    %6469 = vmatmul.mubr.f32.gmra.mrb[0].mxu0 %v6468
    %v6470 = vpop.f32.mrb[0].mxu0
    %v6471 = vadd.f32 %v6380, %v6470
    %v6472 = vpop.f32.mrb[0].mxu0
    %6473 = vmatprep.mubr.f32.mxu0 0.0
    %v6474 = vand.u32 %v6031, 4294901760
    %6475 = vmatmul.mubr.f32.gmra.mrb[0].mxu0 %v6474
    %v6476 = vpop.f32.mrb[0].mxu0
    %v6477 = vadd.f32 %v6388, %v6476
    %v6478 = vpop.f32.mrb[0].mxu0
    %6479 = vdwg.mxu0
    %6480 = vmatprep.subr.mxu0 0.0
    %v6481 = vand.u32 %v6016, 4294901760
    %6482 = vmatpush1.msra.mxu0 %v6481
    %6483 = vmatprep.subr.mxu0 0.0
    %v6484 = vand.u32 %v6017, 4294901760
    %6485 = vmatpush1.msra.mxu0 %v6484
    %6486 = vmatprep.subr.mxu0 0.0
    %v6487 = vand.u32 %v6018, 4294901760
    %6488 = vmatpush1.msra.mxu0 %v6487
    %6489 = vmatprep.subr.mxu0 0.0
    %v6490 = vand.u32 %v6019, 4294901760
    %6491 = vmatpush1.msra.mxu0 %v6490
    %6492 = vmatprep.subr.mxu0 0.0
    %6493 = vmatpush1.msra.mxu0 0.0
    %6494 = vmatprep.subr.mxu0 0.0
    %6495 = vmatpush1.msra.mxu0 0.0
    %6496 = vmatprep.subr.mxu0 0.0
    %6497 = vmatpush1.msra.mxu0 0.0
    %6498 = vmatprep.subr.mxu0 0.0
    %6499 = vmatpush1.msra.mxu0 0.0
    %6500 = vmatprep.subr.mxu0 0.0
    %6501 = vmatpush1.msra.mxu0 0.0
    %6502 = vmatprep.subr.mxu0 0.0
    %6503 = vmatpush1.msra.mxu0 0.0
    %6504 = vmatprep.subr.mxu0 0.0
    %6505 = vmatpush1.msra.mxu0 0.0
    %6506 = vmatprep.subr.mxu0 0.0
    %6507 = vmatpush1.msra.mxu0 0.0
    %6508 = vmatprep.subr.mxu0 0.0
    %6509 = vmatpush1.msra.mxu0 0.0
    %6510 = vmatprep.subr.mxu0 0.0
    %6511 = vmatpush1.msra.mxu0 0.0
    %6512 = vmatprep.subr.mxu0 0.0
    %6513 = vmatpush1.msra.mxu0 0.0
    %6514 = vmatprep.subr.mxu0 0.0
    %6515 = vmatpush1.msra.mxu0 0.0
    %6516 = vmatprep.subr.mxu0 0.0
    %6517 = vmatpush1.msra.mxu0 0.0
    %6518 = vmatprep.subr.mxu0 0.0
    %6519 = vmatpush1.msra.mxu0 0.0
    %6520 = vmatprep.subr.mxu0 0.0
    %6521 = vmatpush1.msra.mxu0 0.0
    %6522 = vmatprep.subr.mxu0 0.0
    %6523 = vmatpush1.msra.mxu0 0.0
    %6524 = vmatprep.subr.mxu0 0.0
    %6525 = vmatpush1.msra.mxu0 0.0
    %6526 = vmatprep.subr.mxu0 0.0
    %6527 = vmatpush1.msra.mxu0 0.0
    %6528 = vmatprep.subr.mxu0 0.0
    %6529 = vmatpush1.msra.mxu0 0.0
    %6530 = vmatprep.subr.mxu0 0.0
    %6531 = vmatpush1.msra.mxu0 0.0
    %6532 = vmatprep.subr.mxu0 0.0
    %6533 = vmatpush1.msra.mxu0 0.0
    %6534 = vmatprep.subr.mxu0 0.0
    %6535 = vmatpush1.msra.mxu0 0.0
    %6536 = vmatprep.subr.mxu0 0.0
    %6537 = vmatpush1.msra.mxu0 0.0
    %6538 = vmatprep.subr.mxu0 0.0
    %6539 = vmatpush1.msra.mxu0 0.0
    %6540 = vmatprep.subr.mxu0 0.0
    %6541 = vmatpush1.msra.mxu0 0.0
    %6542 = vmatprep.subr.mxu0 0.0
    %6543 = vmatpush1.msra.mxu0 0.0
    %6544 = vmatprep.subr.mxu0 0.0
    %6545 = vmatpush1.msra.mxu0 0.0
    %6546 = vmatprep.subr.mxu0 0.0
    %6547 = vmatpush1.msra.mxu0 0.0
    %6548 = vmatprep.mubr.f32.mxu0 0.0
    %v6549 = vand.u32 %v6028, 4294901760
    %6550 = vmatmul.mubr.f32.gmra.mrb[0].mxu0 %v6549
    %v6551 = vpop.f32.mrb[0].mxu0
    %v6552 = vadd.f32 %v6471, %v6551
    %v6553 = vpop.f32.mrb[0].mxu0
    %6554 = vmatprep.mubr.f32.mxu0 0.0
    %v6555 = vand.u32 %v6031, 4294901760
    %6556 = vmatmul.mubr.f32.gmra.mrb[0].mxu0 %v6555
    %v6557 = vpop.f32.mrb[0].mxu0
    %v6558 = vadd.f32 %v6477, %v6557
    %v6559 = vpop.f32.mrb[0].mxu0
    %6560 = vdwg.mxu0
    %v6561 = vadd.f32 %v2438, %v6552
    %v6562 = vadd.f32 %v2439, %v6558
    %v6563 = vsel %vm1899, %v6561, 0.0
    %6564 = vadd.xlane.f32.xlu0 %v6563
    %v6565 = vpop.xlane.xlu0 %6564
    %v6566 = vsel %vm1899, %v6562, 0.0
    %6567 = vadd.xlane.f32.xlu0 %v6566
    %v6568 = vpop.xlane.xlu0 %6567
    %v6569 = vrcp.pop 32.0
    %v6570 = vmul.f32 %v6565, %v6569
    %v6571 = vmul.f32 %v6568, %v6569
    %v6572 = vsub.f32 %v6561, %v6570
    %v6573 = vsub.f32 %v6562, %v6571
    %v6574 = vmul.f32 %v6572, %v6572
    %v6575 = vmul.f32 %v6573, %v6573
    %v6576 = vsel %vm1899, %v6574, 0.0
    %6577 = vadd.xlane.f32.xlu0 %v6576
    %v6578 = vpop.xlane.xlu0 %6577
    %v6579 = vsel %vm1899, %v6575, 0.0
    %6580 = vadd.xlane.f32.xlu0 %v6579
    %v6581 = vpop.xlane.xlu0 %6580
    %v6582 = vmul.f32 %v6578, %v6569
    %v6583 = vmul.f32 %v6581, %v6569
    %v6584 = vadd.f32 %v6582, 1e-05
    %v6585 = vadd.f32 %v6583, 1e-05
    %v6586 = vrsqrt.pop %v6584
    %v6587 = vrsqrt.pop %v6585
    %v6588 = vmul.f32 %v6572, %v6586
    %v6589 = vmul.f32 %v6573, %v6587
    %v6590 = vld [vmem:[%s15] sm:$0x1]
    %v6592 = vlaneseq
    %v6593 = vshrl.u32 %v6592, 7
    %v6594 = vsub.s32 0, %v6593
    %v6595 = vrot.slane %v6590, %v6594
    %v6597 = vmul.f32 %v6588, %v6595
    %v6598 = vmul.f32 %v6589, %v6595
    %v6599 = vld [vmem:[%s16] sm:$0x1]
    %v6601 = vlaneseq
    %v6602 = vshrl.u32 %v6601, 7
    %v6603 = vsub.s32 0, %v6602
    %v6604 = vrot.slane %v6599, %v6603
    %v6606 = vadd.f32 %v6597, %v6604
    %v6607 = vadd.f32 %v6598, %v6604
    %v6608 = vld [vmem:[%s17] sm:$0xff]
    %v6609 = vld [vmem:[%s17 + $0x8] sm:$0xff]
    %v6610 = vld [vmem:[%s17 + $0x10] sm:$0xff]
    %v6611 = vld [vmem:[%s17 + $0x18] sm:$0xff]
    %v6612 = vld [vmem:[%s18] sm:$0x1]
    %v6614 = vlaneseq
    %v6615 = vshrl.u32 %v6614, 7
    %v6616 = vsub.s32 0, %v6615
    %v6617 = vrot.slane %v6612, %v6616
    %v6620 = vsel %vm1899, %v6606, 0
    %v6623 = vsel %vm1899, %v6607, 0
    %6625 = vmatprep.subr.mxu0 0.0
    %v6626 = vand.u32 %v6608, 4294901760
    %6627 = vmatpush1.msra.mxu0 %v6626
    %6628 = vmatprep.subr.mxu0 0.0
    %v6629 = vand.u32 %v6609, 4294901760
    %6630 = vmatpush1.msra.mxu0 %v6629
    %6631 = vmatprep.subr.mxu0 0.0
    %v6632 = vand.u32 %v6610, 4294901760
    %6633 = vmatpush1.msra.mxu0 %v6632
    %6634 = vmatprep.subr.mxu0 0.0
    %v6635 = vand.u32 %v6611, 4294901760
    %6636 = vmatpush1.msra.mxu0 %v6635
    %6637 = vmatprep.subr.mxu0 0.0
    %6638 = vmatpush1.msra.mxu0 0.0
    %6639 = vmatprep.subr.mxu0 0.0
    %6640 = vmatpush1.msra.mxu0 0.0
    %6641 = vmatprep.subr.mxu0 0.0
    %6642 = vmatpush1.msra.mxu0 0.0
    %6643 = vmatprep.subr.mxu0 0.0
    %6644 = vmatpush1.msra.mxu0 0.0
    %6645 = vmatprep.subr.mxu0 0.0
    %6646 = vmatpush1.msra.mxu0 0.0
    %6647 = vmatprep.subr.mxu0 0.0
    %6648 = vmatpush1.msra.mxu0 0.0
    %6649 = vmatprep.subr.mxu0 0.0
    %6650 = vmatpush1.msra.mxu0 0.0
    %6651 = vmatprep.subr.mxu0 0.0
    %6652 = vmatpush1.msra.mxu0 0.0
    %6653 = vmatprep.subr.mxu0 0.0
    %6654 = vmatpush1.msra.mxu0 0.0
    %6655 = vmatprep.subr.mxu0 0.0
    %6656 = vmatpush1.msra.mxu0 0.0
    %6657 = vmatprep.subr.mxu0 0.0
    %6658 = vmatpush1.msra.mxu0 0.0
    %6659 = vmatprep.subr.mxu0 0.0
    %6660 = vmatpush1.msra.mxu0 0.0
    %6661 = vmatprep.subr.mxu0 0.0
    %6662 = vmatpush1.msra.mxu0 0.0
    %6663 = vmatprep.subr.mxu0 0.0
    %6664 = vmatpush1.msra.mxu0 0.0
    %6665 = vmatprep.subr.mxu0 0.0
    %6666 = vmatpush1.msra.mxu0 0.0
    %6667 = vmatprep.subr.mxu0 0.0
    %6668 = vmatpush1.msra.mxu0 0.0
    %6669 = vmatprep.subr.mxu0 0.0
    %6670 = vmatpush1.msra.mxu0 0.0
    %6671 = vmatprep.subr.mxu0 0.0
    %6672 = vmatpush1.msra.mxu0 0.0
    %6673 = vmatprep.subr.mxu0 0.0
    %6674 = vmatpush1.msra.mxu0 0.0
    %6675 = vmatprep.subr.mxu0 0.0
    %6676 = vmatpush1.msra.mxu0 0.0
    %6677 = vmatprep.subr.mxu0 0.0
    %6678 = vmatpush1.msra.mxu0 0.0
    %6679 = vmatprep.subr.mxu0 0.0
    %6680 = vmatpush1.msra.mxu0 0.0
    %6681 = vmatprep.subr.mxu0 0.0
    %6682 = vmatpush1.msra.mxu0 0.0
    %6683 = vmatprep.subr.mxu0 0.0
    %6684 = vmatpush1.msra.mxu0 0.0
    %6685 = vmatprep.subr.mxu0 0.0
    %6686 = vmatpush1.msra.mxu0 0.0
    %6687 = vmatprep.subr.mxu0 0.0
    %6688 = vmatpush1.msra.mxu0 0.0
    %6689 = vmatprep.subr.mxu0 0.0
    %6690 = vmatpush1.msra.mxu0 0.0
    %6691 = vmatprep.subr.mxu0 0.0
    %6692 = vmatpush1.msra.mxu0 0.0
    %6693 = vmatprep.mubr.f32.mxu0 0.0
    %v6694 = vand.u32 %v6620, 4294901760
    %v6695 = vsub.f32 %v6620, %v6694
    %v6696 = vand.u32 %v6695, 4294901760
    %v6697 = vsub.f32 %v6695, %v6696
    %v6698 = vand.u32 %v6697, 4294901760
    %6699 = vmatmul.mubr.f32.gmra.mrb[0].mxu0 %v6698
    %v6700 = vpop.f32.mrb[0].mxu0
    %v6701 = vadd.f32 %v6617, %v6700
    %v6702 = vpop.f32.mrb[0].mxu0
    %6703 = vmatprep.mubr.f32.mxu0 0.0
    %v6704 = vand.u32 %v6623, 4294901760
    %v6705 = vsub.f32 %v6623, %v6704
    %v6706 = vand.u32 %v6705, 4294901760
    %v6707 = vsub.f32 %v6705, %v6706
    %v6708 = vand.u32 %v6707, 4294901760
    %6709 = vmatmul.mubr.f32.gmra.mrb[0].mxu0 %v6708
    %v6710 = vpop.f32.mrb[0].mxu0
    %v6711 = vadd.f32 %v6617, %v6710
    %v6712 = vpop.f32.mrb[0].mxu0
    %6713 = vdwg.mxu0
    %6714 = vmatprep.subr.mxu0 0.0
    %v6715 = vand.u32 %v6608, 4294901760
    %v6716 = vsub.f32 %v6608, %v6715
    %v6717 = vand.u32 %v6716, 4294901760
    %v6718 = vsub.f32 %v6716, %v6717
    %v6719 = vand.u32 %v6718, 4294901760
    %6720 = vmatpush1.msra.mxu0 %v6719
    %6721 = vmatprep.subr.mxu0 0.0
    %v6722 = vand.u32 %v6609, 4294901760
    %v6723 = vsub.f32 %v6609, %v6722
    %v6724 = vand.u32 %v6723, 4294901760
    %v6725 = vsub.f32 %v6723, %v6724
    %v6726 = vand.u32 %v6725, 4294901760
    %6727 = vmatpush1.msra.mxu0 %v6726
    %6728 = vmatprep.subr.mxu0 0.0
    %v6729 = vand.u32 %v6610, 4294901760
    %v6730 = vsub.f32 %v6610, %v6729
    %v6731 = vand.u32 %v6730, 4294901760
    %v6732 = vsub.f32 %v6730, %v6731
    %v6733 = vand.u32 %v6732, 4294901760
    %6734 = vmatpush1.msra.mxu0 %v6733
    %6735 = vmatprep.subr.mxu0 0.0
    %v6736 = vand.u32 %v6611, 4294901760
    %v6737 = vsub.f32 %v6611, %v6736
    %v6738 = vand.u32 %v6737, 4294901760
    %v6739 = vsub.f32 %v6737, %v6738
    %v6740 = vand.u32 %v6739, 4294901760
    %6741 = vmatpush1.msra.mxu0 %v6740
    %6742 = vmatprep.subr.mxu0 0.0
    %6743 = vmatpush1.msra.mxu0 0.0
    %6744 = vmatprep.subr.mxu0 0.0
    %6745 = vmatpush1.msra.mxu0 0.0
    %6746 = vmatprep.subr.mxu0 0.0
    %6747 = vmatpush1.msra.mxu0 0.0
    %6748 = vmatprep.subr.mxu0 0.0
    %6749 = vmatpush1.msra.mxu0 0.0
    %6750 = vmatprep.subr.mxu0 0.0
    %6751 = vmatpush1.msra.mxu0 0.0
    %6752 = vmatprep.subr.mxu0 0.0
    %6753 = vmatpush1.msra.mxu0 0.0
    %6754 = vmatprep.subr.mxu0 0.0
    %6755 = vmatpush1.msra.mxu0 0.0
    %6756 = vmatprep.subr.mxu0 0.0
    %6757 = vmatpush1.msra.mxu0 0.0
    %6758 = vmatprep.subr.mxu0 0.0
    %6759 = vmatpush1.msra.mxu0 0.0
    %6760 = vmatprep.subr.mxu0 0.0
    %6761 = vmatpush1.msra.mxu0 0.0
    %6762 = vmatprep.subr.mxu0 0.0
    %6763 = vmatpush1.msra.mxu0 0.0
    %6764 = vmatprep.subr.mxu0 0.0
    %6765 = vmatpush1.msra.mxu0 0.0
    %6766 = vmatprep.subr.mxu0 0.0
    %6767 = vmatpush1.msra.mxu0 0.0
    %6768 = vmatprep.subr.mxu0 0.0
    %6769 = vmatpush1.msra.mxu0 0.0
    %6770 = vmatprep.subr.mxu0 0.0
    %6771 = vmatpush1.msra.mxu0 0.0
    %6772 = vmatprep.subr.mxu0 0.0
    %6773 = vmatpush1.msra.mxu0 0.0
    %6774 = vmatprep.subr.mxu0 0.0
    %6775 = vmatpush1.msra.mxu0 0.0
    %6776 = vmatprep.subr.mxu0 0.0
    %6777 = vmatpush1.msra.mxu0 0.0
    %6778 = vmatprep.subr.mxu0 0.0
    %6779 = vmatpush1.msra.mxu0 0.0
    %6780 = vmatprep.subr.mxu0 0.0
    %6781 = vmatpush1.msra.mxu0 0.0
    %6782 = vmatprep.subr.mxu0 0.0
    %6783 = vmatpush1.msra.mxu0 0.0
    %6784 = vmatprep.subr.mxu0 0.0
    %6785 = vmatpush1.msra.mxu0 0.0
    %6786 = vmatprep.subr.mxu0 0.0
    %6787 = vmatpush1.msra.mxu0 0.0
    %6788 = vmatprep.subr.mxu0 0.0
    %6789 = vmatpush1.msra.mxu0 0.0
    %6790 = vmatprep.subr.mxu0 0.0
    %6791 = vmatpush1.msra.mxu0 0.0
    %6792 = vmatprep.subr.mxu0 0.0
    %6793 = vmatpush1.msra.mxu0 0.0
    %6794 = vmatprep.subr.mxu0 0.0
    %6795 = vmatpush1.msra.mxu0 0.0
    %6796 = vmatprep.subr.mxu0 0.0
    %6797 = vmatpush1.msra.mxu0 0.0
    %6798 = vmatprep.mubr.f32.mxu0 0.0
    %v6799 = vand.u32 %v6620, 4294901760
    %6800 = vmatmul.mubr.f32.gmra.mrb[0].mxu0 %v6799
    %v6801 = vpop.f32.mrb[0].mxu0
    %v6802 = vadd.f32 %v6701, %v6801
    %v6803 = vpop.f32.mrb[0].mxu0
    %6804 = vmatprep.mubr.f32.mxu0 0.0
    %v6805 = vand.u32 %v6623, 4294901760
    %6806 = vmatmul.mubr.f32.gmra.mrb[0].mxu0 %v6805
    %v6807 = vpop.f32.mrb[0].mxu0
    %v6808 = vadd.f32 %v6711, %v6807
    %v6809 = vpop.f32.mrb[0].mxu0
    %6810 = vdwg.mxu0
    %6811 = vmatprep.subr.mxu0 0.0
    %v6812 = vand.u32 %v6608, 4294901760
    %v6813 = vsub.f32 %v6608, %v6812
    %6814 = vmatpush1.msra.mxu0 %v6813
    %6815 = vmatprep.subr.mxu0 0.0
    %v6816 = vand.u32 %v6609, 4294901760
    %v6817 = vsub.f32 %v6609, %v6816
    %6818 = vmatpush1.msra.mxu0 %v6817
    %6819 = vmatprep.subr.mxu0 0.0
    %v6820 = vand.u32 %v6610, 4294901760
    %v6821 = vsub.f32 %v6610, %v6820
    %6822 = vmatpush1.msra.mxu0 %v6821
    %6823 = vmatprep.subr.mxu0 0.0
    %v6824 = vand.u32 %v6611, 4294901760
    %v6825 = vsub.f32 %v6611, %v6824
    %6826 = vmatpush1.msra.mxu0 %v6825
    %6827 = vmatprep.subr.mxu0 0.0
    %6828 = vmatpush1.msra.mxu0 0.0
    %6829 = vmatprep.subr.mxu0 0.0
    %6830 = vmatpush1.msra.mxu0 0.0
    %6831 = vmatprep.subr.mxu0 0.0
    %6832 = vmatpush1.msra.mxu0 0.0
    %6833 = vmatprep.subr.mxu0 0.0
    %6834 = vmatpush1.msra.mxu0 0.0
    %6835 = vmatprep.subr.mxu0 0.0
    %6836 = vmatpush1.msra.mxu0 0.0
    %6837 = vmatprep.subr.mxu0 0.0
    %6838 = vmatpush1.msra.mxu0 0.0
    %6839 = vmatprep.subr.mxu0 0.0
    %6840 = vmatpush1.msra.mxu0 0.0
    %6841 = vmatprep.subr.mxu0 0.0
    %6842 = vmatpush1.msra.mxu0 0.0
    %6843 = vmatprep.subr.mxu0 0.0
    %6844 = vmatpush1.msra.mxu0 0.0
    %6845 = vmatprep.subr.mxu0 0.0
    %6846 = vmatpush1.msra.mxu0 0.0
    %6847 = vmatprep.subr.mxu0 0.0
    %6848 = vmatpush1.msra.mxu0 0.0
    %6849 = vmatprep.subr.mxu0 0.0
    %6850 = vmatpush1.msra.mxu0 0.0
    %6851 = vmatprep.subr.mxu0 0.0
    %6852 = vmatpush1.msra.mxu0 0.0
    %6853 = vmatprep.subr.mxu0 0.0
    %6854 = vmatpush1.msra.mxu0 0.0
    %6855 = vmatprep.subr.mxu0 0.0
    %6856 = vmatpush1.msra.mxu0 0.0
    %6857 = vmatprep.subr.mxu0 0.0
    %6858 = vmatpush1.msra.mxu0 0.0
    %6859 = vmatprep.subr.mxu0 0.0
    %6860 = vmatpush1.msra.mxu0 0.0
    %6861 = vmatprep.subr.mxu0 0.0
    %6862 = vmatpush1.msra.mxu0 0.0
    %6863 = vmatprep.subr.mxu0 0.0
    %6864 = vmatpush1.msra.mxu0 0.0
    %6865 = vmatprep.subr.mxu0 0.0
    %6866 = vmatpush1.msra.mxu0 0.0
    %6867 = vmatprep.subr.mxu0 0.0
    %6868 = vmatpush1.msra.mxu0 0.0
    %6869 = vmatprep.subr.mxu0 0.0
    %6870 = vmatpush1.msra.mxu0 0.0
    %6871 = vmatprep.subr.mxu0 0.0
    %6872 = vmatpush1.msra.mxu0 0.0
    %6873 = vmatprep.subr.mxu0 0.0
    %6874 = vmatpush1.msra.mxu0 0.0
    %6875 = vmatprep.subr.mxu0 0.0
    %6876 = vmatpush1.msra.mxu0 0.0
    %6877 = vmatprep.subr.mxu0 0.0
    %6878 = vmatpush1.msra.mxu0 0.0
    %6879 = vmatprep.subr.mxu0 0.0
    %6880 = vmatpush1.msra.mxu0 0.0
    %6881 = vmatprep.subr.mxu0 0.0
    %6882 = vmatpush1.msra.mxu0 0.0
    %6883 = vmatprep.mubr.f32.mxu0 0.0
    %v6884 = vand.u32 %v6620, 4294901760
    %v6885 = vsub.f32 %v6620, %v6884
    %6886 = vmatmul.mubr.f32.gmra.mrb[0].mxu0 %v6885
    %v6887 = vpop.f32.mrb[0].mxu0
    %v6888 = vadd.f32 %v6802, %v6887
    %v6889 = vpop.f32.mrb[0].mxu0
    %6890 = vmatprep.mubr.f32.mxu0 0.0
    %v6891 = vand.u32 %v6623, 4294901760
    %v6892 = vsub.f32 %v6623, %v6891
    %6893 = vmatmul.mubr.f32.gmra.mrb[0].mxu0 %v6892
    %v6894 = vpop.f32.mrb[0].mxu0
    %v6895 = vadd.f32 %v6808, %v6894
    %v6896 = vpop.f32.mrb[0].mxu0
    %6897 = vdwg.mxu0
    %6898 = vmatprep.subr.mxu0 0.0
    %v6899 = vand.u32 %v6608, 4294901760
    %6900 = vmatpush1.msra.mxu0 %v6899
    %6901 = vmatprep.subr.mxu0 0.0
    %v6902 = vand.u32 %v6609, 4294901760
    %6903 = vmatpush1.msra.mxu0 %v6902
    %6904 = vmatprep.subr.mxu0 0.0
    %v6905 = vand.u32 %v6610, 4294901760
    %6906 = vmatpush1.msra.mxu0 %v6905
    %6907 = vmatprep.subr.mxu0 0.0
    %v6908 = vand.u32 %v6611, 4294901760
    %6909 = vmatpush1.msra.mxu0 %v6908
    %6910 = vmatprep.subr.mxu0 0.0
    %6911 = vmatpush1.msra.mxu0 0.0
    %6912 = vmatprep.subr.mxu0 0.0
    %6913 = vmatpush1.msra.mxu0 0.0
    %6914 = vmatprep.subr.mxu0 0.0
    %6915 = vmatpush1.msra.mxu0 0.0
    %6916 = vmatprep.subr.mxu0 0.0
    %6917 = vmatpush1.msra.mxu0 0.0
    %6918 = vmatprep.subr.mxu0 0.0
    %6919 = vmatpush1.msra.mxu0 0.0
    %6920 = vmatprep.subr.mxu0 0.0
    %6921 = vmatpush1.msra.mxu0 0.0
    %6922 = vmatprep.subr.mxu0 0.0
    %6923 = vmatpush1.msra.mxu0 0.0
    %6924 = vmatprep.subr.mxu0 0.0
    %6925 = vmatpush1.msra.mxu0 0.0
    %6926 = vmatprep.subr.mxu0 0.0
    %6927 = vmatpush1.msra.mxu0 0.0
    %6928 = vmatprep.subr.mxu0 0.0
    %6929 = vmatpush1.msra.mxu0 0.0
    %6930 = vmatprep.subr.mxu0 0.0
    %6931 = vmatpush1.msra.mxu0 0.0
    %6932 = vmatprep.subr.mxu0 0.0
    %6933 = vmatpush1.msra.mxu0 0.0
    %6934 = vmatprep.subr.mxu0 0.0
    %6935 = vmatpush1.msra.mxu0 0.0
    %6936 = vmatprep.subr.mxu0 0.0
    %6937 = vmatpush1.msra.mxu0 0.0
    %6938 = vmatprep.subr.mxu0 0.0
    %6939 = vmatpush1.msra.mxu0 0.0
    %6940 = vmatprep.subr.mxu0 0.0
    %6941 = vmatpush1.msra.mxu0 0.0
    %6942 = vmatprep.subr.mxu0 0.0
    %6943 = vmatpush1.msra.mxu0 0.0
    %6944 = vmatprep.subr.mxu0 0.0
    %6945 = vmatpush1.msra.mxu0 0.0
    %6946 = vmatprep.subr.mxu0 0.0
    %6947 = vmatpush1.msra.mxu0 0.0
    %6948 = vmatprep.subr.mxu0 0.0
    %6949 = vmatpush1.msra.mxu0 0.0
    %6950 = vmatprep.subr.mxu0 0.0
    %6951 = vmatpush1.msra.mxu0 0.0
    %6952 = vmatprep.subr.mxu0 0.0
    %6953 = vmatpush1.msra.mxu0 0.0
    %6954 = vmatprep.subr.mxu0 0.0
    %6955 = vmatpush1.msra.mxu0 0.0
    %6956 = vmatprep.subr.mxu0 0.0
    %6957 = vmatpush1.msra.mxu0 0.0
    %6958 = vmatprep.subr.mxu0 0.0
    %6959 = vmatpush1.msra.mxu0 0.0
    %6960 = vmatprep.subr.mxu0 0.0
    %6961 = vmatpush1.msra.mxu0 0.0
    %6962 = vmatprep.subr.mxu0 0.0
    %6963 = vmatpush1.msra.mxu0 0.0
    %6964 = vmatprep.subr.mxu0 0.0
    %6965 = vmatpush1.msra.mxu0 0.0
    %6966 = vmatprep.mubr.f32.mxu0 0.0
    %v6967 = vand.u32 %v6620, 4294901760
    %v6968 = vsub.f32 %v6620, %v6967
    %v6969 = vand.u32 %v6968, 4294901760
    %6970 = vmatmul.mubr.f32.gmra.mrb[0].mxu0 %v6969
    %v6971 = vpop.f32.mrb[0].mxu0
    %v6972 = vadd.f32 %v6888, %v6971
    %v6973 = vpop.f32.mrb[0].mxu0
    %6974 = vmatprep.mubr.f32.mxu0 0.0
    %v6975 = vand.u32 %v6623, 4294901760
    %v6976 = vsub.f32 %v6623, %v6975
    %v6977 = vand.u32 %v6976, 4294901760
    %6978 = vmatmul.mubr.f32.gmra.mrb[0].mxu0 %v6977
    %v6979 = vpop.f32.mrb[0].mxu0
    %v6980 = vadd.f32 %v6895, %v6979
    %v6981 = vpop.f32.mrb[0].mxu0
    %6982 = vdwg.mxu0
    %6983 = vmatprep.subr.mxu0 0.0
    %v6984 = vand.u32 %v6608, 4294901760
    %v6985 = vsub.f32 %v6608, %v6984
    %v6986 = vand.u32 %v6985, 4294901760
    %6987 = vmatpush1.msra.mxu0 %v6986
    %6988 = vmatprep.subr.mxu0 0.0
    %v6989 = vand.u32 %v6609, 4294901760
    %v6990 = vsub.f32 %v6609, %v6989
    %v6991 = vand.u32 %v6990, 4294901760
    %6992 = vmatpush1.msra.mxu0 %v6991
    %6993 = vmatprep.subr.mxu0 0.0
    %v6994 = vand.u32 %v6610, 4294901760
    %v6995 = vsub.f32 %v6610, %v6994
    %v6996 = vand.u32 %v6995, 4294901760
    %6997 = vmatpush1.msra.mxu0 %v6996
    %6998 = vmatprep.subr.mxu0 0.0
    %v6999 = vand.u32 %v6611, 4294901760
    %v7000 = vsub.f32 %v6611, %v6999
    %v7001 = vand.u32 %v7000, 4294901760
    %7002 = vmatpush1.msra.mxu0 %v7001
    %7003 = vmatprep.subr.mxu0 0.0
    %7004 = vmatpush1.msra.mxu0 0.0
    %7005 = vmatprep.subr.mxu0 0.0
    %7006 = vmatpush1.msra.mxu0 0.0
    %7007 = vmatprep.subr.mxu0 0.0
    %7008 = vmatpush1.msra.mxu0 0.0
    %7009 = vmatprep.subr.mxu0 0.0
    %7010 = vmatpush1.msra.mxu0 0.0
    %7011 = vmatprep.subr.mxu0 0.0
    %7012 = vmatpush1.msra.mxu0 0.0
    %7013 = vmatprep.subr.mxu0 0.0
    %7014 = vmatpush1.msra.mxu0 0.0
    %7015 = vmatprep.subr.mxu0 0.0
    %7016 = vmatpush1.msra.mxu0 0.0
    %7017 = vmatprep.subr.mxu0 0.0
    %7018 = vmatpush1.msra.mxu0 0.0
    %7019 = vmatprep.subr.mxu0 0.0
    %7020 = vmatpush1.msra.mxu0 0.0
    %7021 = vmatprep.subr.mxu0 0.0
    %7022 = vmatpush1.msra.mxu0 0.0
    %7023 = vmatprep.subr.mxu0 0.0
    %7024 = vmatpush1.msra.mxu0 0.0
    %7025 = vmatprep.subr.mxu0 0.0
    %7026 = vmatpush1.msra.mxu0 0.0
    %7027 = vmatprep.subr.mxu0 0.0
    %7028 = vmatpush1.msra.mxu0 0.0
    %7029 = vmatprep.subr.mxu0 0.0
    %7030 = vmatpush1.msra.mxu0 0.0
    %7031 = vmatprep.subr.mxu0 0.0
    %7032 = vmatpush1.msra.mxu0 0.0
    %7033 = vmatprep.subr.mxu0 0.0
    %7034 = vmatpush1.msra.mxu0 0.0
    %7035 = vmatprep.subr.mxu0 0.0
    %7036 = vmatpush1.msra.mxu0 0.0
    %7037 = vmatprep.subr.mxu0 0.0
    %7038 = vmatpush1.msra.mxu0 0.0
    %7039 = vmatprep.subr.mxu0 0.0
    %7040 = vmatpush1.msra.mxu0 0.0
    %7041 = vmatprep.subr.mxu0 0.0
    %7042 = vmatpush1.msra.mxu0 0.0
    %7043 = vmatprep.subr.mxu0 0.0
    %7044 = vmatpush1.msra.mxu0 0.0
    %7045 = vmatprep.subr.mxu0 0.0
    %7046 = vmatpush1.msra.mxu0 0.0
    %7047 = vmatprep.subr.mxu0 0.0
    %7048 = vmatpush1.msra.mxu0 0.0
    %7049 = vmatprep.subr.mxu0 0.0
    %7050 = vmatpush1.msra.mxu0 0.0
    %7051 = vmatprep.subr.mxu0 0.0
    %7052 = vmatpush1.msra.mxu0 0.0
    %7053 = vmatprep.subr.mxu0 0.0
    %7054 = vmatpush1.msra.mxu0 0.0
    %7055 = vmatprep.subr.mxu0 0.0
    %7056 = vmatpush1.msra.mxu0 0.0
    %7057 = vmatprep.subr.mxu0 0.0
    %7058 = vmatpush1.msra.mxu0 0.0
    %7059 = vmatprep.mubr.f32.mxu0 0.0
    %v7060 = vand.u32 %v6620, 4294901760
    %7061 = vmatmul.mubr.f32.gmra.mrb[0].mxu0 %v7060
    %v7062 = vpop.f32.mrb[0].mxu0
    %v7063 = vadd.f32 %v6972, %v7062
    %v7064 = vpop.f32.mrb[0].mxu0
    %7065 = vmatprep.mubr.f32.mxu0 0.0
    %v7066 = vand.u32 %v6623, 4294901760
    %7067 = vmatmul.mubr.f32.gmra.mrb[0].mxu0 %v7066
    %v7068 = vpop.f32.mrb[0].mxu0
    %v7069 = vadd.f32 %v6980, %v7068
    %v7070 = vpop.f32.mrb[0].mxu0
    %7071 = vdwg.mxu0
    %7072 = vmatprep.subr.mxu0 0.0
    %v7073 = vand.u32 %v6608, 4294901760
    %7074 = vmatpush1.msra.mxu0 %v7073
    %7075 = vmatprep.subr.mxu0 0.0
    %v7076 = vand.u32 %v6609, 4294901760
    %7077 = vmatpush1.msra.mxu0 %v7076
    %7078 = vmatprep.subr.mxu0 0.0
    %v7079 = vand.u32 %v6610, 4294901760
    %7080 = vmatpush1.msra.mxu0 %v7079
    %7081 = vmatprep.subr.mxu0 0.0
    %v7082 = vand.u32 %v6611, 4294901760
    %7083 = vmatpush1.msra.mxu0 %v7082
    %7084 = vmatprep.subr.mxu0 0.0
    %7085 = vmatpush1.msra.mxu0 0.0
    %7086 = vmatprep.subr.mxu0 0.0
    %7087 = vmatpush1.msra.mxu0 0.0
    %7088 = vmatprep.subr.mxu0 0.0
    %7089 = vmatpush1.msra.mxu0 0.0
    %7090 = vmatprep.subr.mxu0 0.0
    %7091 = vmatpush1.msra.mxu0 0.0
    %7092 = vmatprep.subr.mxu0 0.0
    %7093 = vmatpush1.msra.mxu0 0.0
    %7094 = vmatprep.subr.mxu0 0.0
    %7095 = vmatpush1.msra.mxu0 0.0
    %7096 = vmatprep.subr.mxu0 0.0
    %7097 = vmatpush1.msra.mxu0 0.0
    %7098 = vmatprep.subr.mxu0 0.0
    %7099 = vmatpush1.msra.mxu0 0.0
    %7100 = vmatprep.subr.mxu0 0.0
    %7101 = vmatpush1.msra.mxu0 0.0
    %7102 = vmatprep.subr.mxu0 0.0
    %7103 = vmatpush1.msra.mxu0 0.0
    %7104 = vmatprep.subr.mxu0 0.0
    %7105 = vmatpush1.msra.mxu0 0.0
    %7106 = vmatprep.subr.mxu0 0.0
    %7107 = vmatpush1.msra.mxu0 0.0
    %7108 = vmatprep.subr.mxu0 0.0
    %7109 = vmatpush1.msra.mxu0 0.0
    %7110 = vmatprep.subr.mxu0 0.0
    %7111 = vmatpush1.msra.mxu0 0.0
    %7112 = vmatprep.subr.mxu0 0.0
    %7113 = vmatpush1.msra.mxu0 0.0
    %7114 = vmatprep.subr.mxu0 0.0
    %7115 = vmatpush1.msra.mxu0 0.0
    %7116 = vmatprep.subr.mxu0 0.0
    %7117 = vmatpush1.msra.mxu0 0.0
    %7118 = vmatprep.subr.mxu0 0.0
    %7119 = vmatpush1.msra.mxu0 0.0
    %7120 = vmatprep.subr.mxu0 0.0
    %7121 = vmatpush1.msra.mxu0 0.0
    %7122 = vmatprep.subr.mxu0 0.0
    %7123 = vmatpush1.msra.mxu0 0.0
    %7124 = vmatprep.subr.mxu0 0.0
    %7125 = vmatpush1.msra.mxu0 0.0
    %7126 = vmatprep.subr.mxu0 0.0
    %7127 = vmatpush1.msra.mxu0 0.0
    %7128 = vmatprep.subr.mxu0 0.0
    %7129 = vmatpush1.msra.mxu0 0.0
    %7130 = vmatprep.subr.mxu0 0.0
    %7131 = vmatpush1.msra.mxu0 0.0
    %7132 = vmatprep.subr.mxu0 0.0
    %7133 = vmatpush1.msra.mxu0 0.0
    %7134 = vmatprep.subr.mxu0 0.0
    %7135 = vmatpush1.msra.mxu0 0.0
    %7136 = vmatprep.subr.mxu0 0.0
    %7137 = vmatpush1.msra.mxu0 0.0
    %7138 = vmatprep.subr.mxu0 0.0
    %7139 = vmatpush1.msra.mxu0 0.0
    %7140 = vmatprep.mubr.f32.mxu0 0.0
    %v7141 = vand.u32 %v6620, 4294901760
    %7142 = vmatmul.mubr.f32.gmra.mrb[0].mxu0 %v7141
    %v7143 = vpop.f32.mrb[0].mxu0
    %v7144 = vadd.f32 %v7063, %v7143
    %v7145 = vpop.f32.mrb[0].mxu0
    %7146 = vmatprep.mubr.f32.mxu0 0.0
    %v7147 = vand.u32 %v6623, 4294901760
    %7148 = vmatmul.mubr.f32.gmra.mrb[0].mxu0 %v7147
    %v7149 = vpop.f32.mrb[0].mxu0
    %v7150 = vadd.f32 %v7069, %v7149
    %v7151 = vpop.f32.mrb[0].mxu0
    %7152 = vdwg.mxu0
    %v7153 = vmax.f32 %v7144, 0.0
    %v7154 = vmax.f32 %v7150, 0.0
    %v7155 = vld [vmem:[%s19] sm:$0xff]
    %v7156 = vld [vmem:[%s19 + $0x8] sm:$0xff]
    %v7157 = vld [vmem:[%s19 + $0x10] sm:$0xff]
    %v7158 = vld [vmem:[%s19 + $0x18] sm:$0xff]
    %v7159 = vld [vmem:[%s19 + $0x20] sm:$0xff]
    %v7160 = vld [vmem:[%s19 + $0x28] sm:$0xff]
    %v7161 = vld [vmem:[%s19 + $0x30] sm:$0xff]
    %v7162 = vld [vmem:[%s19 + $0x38] sm:$0xff]
    %v7163 = vld [vmem:[%s20] sm:$0x1]
    %v7165 = vlaneseq
    %v7166 = vshrl.u32 %v7165, 7
    %v7167 = vsub.s32 0, %v7166
    %v7168 = vrot.slane %v7163, %v7167
    %vm7170 = vcmask 523264
    %v7172 = vsel %vm7170, %v7153, 0
    %v7175 = vsel %vm7170, %v7154, 0
    %7177 = vmatprep.subr.mxu0 0.0
    %v7178 = vand.u32 %v7155, 4294901760
    %7179 = vmatpush1.msra.mxu0 %v7178
    %7180 = vmatprep.subr.mxu0 0.0
    %v7181 = vand.u32 %v7156, 4294901760
    %7182 = vmatpush1.msra.mxu0 %v7181
    %7183 = vmatprep.subr.mxu0 0.0
    %v7184 = vand.u32 %v7157, 4294901760
    %7185 = vmatpush1.msra.mxu0 %v7184
    %7186 = vmatprep.subr.mxu0 0.0
    %v7187 = vand.u32 %v7158, 4294901760
    %7188 = vmatpush1.msra.mxu0 %v7187
    %7189 = vmatprep.subr.mxu0 0.0
    %v7190 = vand.u32 %v7159, 4294901760
    %7191 = vmatpush1.msra.mxu0 %v7190
    %7192 = vmatprep.subr.mxu0 0.0
    %v7193 = vand.u32 %v7160, 4294901760
    %7194 = vmatpush1.msra.mxu0 %v7193
    %7195 = vmatprep.subr.mxu0 0.0
    %v7196 = vand.u32 %v7161, 4294901760
    %7197 = vmatpush1.msra.mxu0 %v7196
    %7198 = vmatprep.subr.mxu0 0.0
    %v7199 = vand.u32 %v7162, 4294901760
    %7200 = vmatpush1.msra.mxu0 %v7199
    %7201 = vmatprep.subr.mxu0 0.0
    %7202 = vmatpush1.msra.mxu0 0.0
    %7203 = vmatprep.subr.mxu0 0.0
    %7204 = vmatpush1.msra.mxu0 0.0
    %7205 = vmatprep.subr.mxu0 0.0
    %7206 = vmatpush1.msra.mxu0 0.0
    %7207 = vmatprep.subr.mxu0 0.0
    %7208 = vmatpush1.msra.mxu0 0.0
    %7209 = vmatprep.subr.mxu0 0.0
    %7210 = vmatpush1.msra.mxu0 0.0
    %7211 = vmatprep.subr.mxu0 0.0
    %7212 = vmatpush1.msra.mxu0 0.0
    %7213 = vmatprep.subr.mxu0 0.0
    %7214 = vmatpush1.msra.mxu0 0.0
    %7215 = vmatprep.subr.mxu0 0.0
    %7216 = vmatpush1.msra.mxu0 0.0
    %7217 = vmatprep.subr.mxu0 0.0
    %7218 = vmatpush1.msra.mxu0 0.0
    %7219 = vmatprep.subr.mxu0 0.0
    %7220 = vmatpush1.msra.mxu0 0.0
    %7221 = vmatprep.subr.mxu0 0.0
    %7222 = vmatpush1.msra.mxu0 0.0
    %7223 = vmatprep.subr.mxu0 0.0
    %7224 = vmatpush1.msra.mxu0 0.0
    %7225 = vmatprep.subr.mxu0 0.0
    %7226 = vmatpush1.msra.mxu0 0.0
    %7227 = vmatprep.subr.mxu0 0.0
    %7228 = vmatpush1.msra.mxu0 0.0
    %7229 = vmatprep.subr.mxu0 0.0
    %7230 = vmatpush1.msra.mxu0 0.0
    %7231 = vmatprep.subr.mxu0 0.0
    %7232 = vmatpush1.msra.mxu0 0.0
    %7233 = vmatprep.subr.mxu0 0.0
    %7234 = vmatpush1.msra.mxu0 0.0
    %7235 = vmatprep.subr.mxu0 0.0
    %7236 = vmatpush1.msra.mxu0 0.0
    %7237 = vmatprep.subr.mxu0 0.0
    %7238 = vmatpush1.msra.mxu0 0.0
    %7239 = vmatprep.subr.mxu0 0.0
    %7240 = vmatpush1.msra.mxu0 0.0
    %7241 = vmatprep.subr.mxu0 0.0
    %7242 = vmatpush1.msra.mxu0 0.0
    %7243 = vmatprep.subr.mxu0 0.0
    %7244 = vmatpush1.msra.mxu0 0.0
    %7245 = vmatprep.subr.mxu0 0.0
    %7246 = vmatpush1.msra.mxu0 0.0
    %7247 = vmatprep.subr.mxu0 0.0
    %7248 = vmatpush1.msra.mxu0 0.0
    %7249 = vmatprep.mubr.f32.mxu0 0.0
    %v7250 = vand.u32 %v7172, 4294901760
    %v7251 = vsub.f32 %v7172, %v7250
    %v7252 = vand.u32 %v7251, 4294901760
    %v7253 = vsub.f32 %v7251, %v7252
    %v7254 = vand.u32 %v7253, 4294901760
    %7255 = vmatmul.mubr.f32.gmra.mrb[0].mxu0 %v7254
    %v7256 = vpop.f32.mrb[0].mxu0
    %v7257 = vadd.f32 %v7168, %v7256
    %v7258 = vpop.f32.mrb[0].mxu0
    %7259 = vmatprep.mubr.f32.mxu0 0.0
    %v7260 = vand.u32 %v7175, 4294901760
    %v7261 = vsub.f32 %v7175, %v7260
    %v7262 = vand.u32 %v7261, 4294901760
    %v7263 = vsub.f32 %v7261, %v7262
    %v7264 = vand.u32 %v7263, 4294901760
    %7265 = vmatmul.mubr.f32.gmra.mrb[0].mxu0 %v7264
    %v7266 = vpop.f32.mrb[0].mxu0
    %v7267 = vadd.f32 %v7168, %v7266
    %v7268 = vpop.f32.mrb[0].mxu0
    %7269 = vdwg.mxu0
    %7270 = vmatprep.subr.mxu0 0.0
    %v7271 = vand.u32 %v7155, 4294901760
    %v7272 = vsub.f32 %v7155, %v7271
    %v7273 = vand.u32 %v7272, 4294901760
    %v7274 = vsub.f32 %v7272, %v7273
    %v7275 = vand.u32 %v7274, 4294901760
    %7276 = vmatpush1.msra.mxu0 %v7275
    %7277 = vmatprep.subr.mxu0 0.0
    %v7278 = vand.u32 %v7156, 4294901760
    %v7279 = vsub.f32 %v7156, %v7278
    %v7280 = vand.u32 %v7279, 4294901760
    %v7281 = vsub.f32 %v7279, %v7280
    %v7282 = vand.u32 %v7281, 4294901760
    %7283 = vmatpush1.msra.mxu0 %v7282
    %7284 = vmatprep.subr.mxu0 0.0
    %v7285 = vand.u32 %v7157, 4294901760
    %v7286 = vsub.f32 %v7157, %v7285
    %v7287 = vand.u32 %v7286, 4294901760
    %v7288 = vsub.f32 %v7286, %v7287
    %v7289 = vand.u32 %v7288, 4294901760
    %7290 = vmatpush1.msra.mxu0 %v7289
    %7291 = vmatprep.subr.mxu0 0.0
    %v7292 = vand.u32 %v7158, 4294901760
    %v7293 = vsub.f32 %v7158, %v7292
    %v7294 = vand.u32 %v7293, 4294901760
    %v7295 = vsub.f32 %v7293, %v7294
    %v7296 = vand.u32 %v7295, 4294901760
    %7297 = vmatpush1.msra.mxu0 %v7296
    %7298 = vmatprep.subr.mxu0 0.0
    %v7299 = vand.u32 %v7159, 4294901760
    %v7300 = vsub.f32 %v7159, %v7299
    %v7301 = vand.u32 %v7300, 4294901760
    %v7302 = vsub.f32 %v7300, %v7301
    %v7303 = vand.u32 %v7302, 4294901760
    %7304 = vmatpush1.msra.mxu0 %v7303
    %7305 = vmatprep.subr.mxu0 0.0
    %v7306 = vand.u32 %v7160, 4294901760
    %v7307 = vsub.f32 %v7160, %v7306
    %v7308 = vand.u32 %v7307, 4294901760
    %v7309 = vsub.f32 %v7307, %v7308
    %v7310 = vand.u32 %v7309, 4294901760
    %7311 = vmatpush1.msra.mxu0 %v7310
    %7312 = vmatprep.subr.mxu0 0.0
    %v7313 = vand.u32 %v7161, 4294901760
    %v7314 = vsub.f32 %v7161, %v7313
    %v7315 = vand.u32 %v7314, 4294901760
    %v7316 = vsub.f32 %v7314, %v7315
    %v7317 = vand.u32 %v7316, 4294901760
    %7318 = vmatpush1.msra.mxu0 %v7317
    %7319 = vmatprep.subr.mxu0 0.0
    %v7320 = vand.u32 %v7162, 4294901760
    %v7321 = vsub.f32 %v7162, %v7320
    %v7322 = vand.u32 %v7321, 4294901760
    %v7323 = vsub.f32 %v7321, %v7322
    %v7324 = vand.u32 %v7323, 4294901760
    %7325 = vmatpush1.msra.mxu0 %v7324
    %7326 = vmatprep.subr.mxu0 0.0
    %7327 = vmatpush1.msra.mxu0 0.0
    %7328 = vmatprep.subr.mxu0 0.0
    %7329 = vmatpush1.msra.mxu0 0.0
    %7330 = vmatprep.subr.mxu0 0.0
    %7331 = vmatpush1.msra.mxu0 0.0
    %7332 = vmatprep.subr.mxu0 0.0
    %7333 = vmatpush1.msra.mxu0 0.0
    %7334 = vmatprep.subr.mxu0 0.0
    %7335 = vmatpush1.msra.mxu0 0.0
    %7336 = vmatprep.subr.mxu0 0.0
    %7337 = vmatpush1.msra.mxu0 0.0
    %7338 = vmatprep.subr.mxu0 0.0
    %7339 = vmatpush1.msra.mxu0 0.0
    %7340 = vmatprep.subr.mxu0 0.0
    %7341 = vmatpush1.msra.mxu0 0.0
    %7342 = vmatprep.subr.mxu0 0.0
    %7343 = vmatpush1.msra.mxu0 0.0
    %7344 = vmatprep.subr.mxu0 0.0
    %7345 = vmatpush1.msra.mxu0 0.0
    %7346 = vmatprep.subr.mxu0 0.0
    %7347 = vmatpush1.msra.mxu0 0.0
    %7348 = vmatprep.subr.mxu0 0.0
    %7349 = vmatpush1.msra.mxu0 0.0
    %7350 = vmatprep.subr.mxu0 0.0
    %7351 = vmatpush1.msra.mxu0 0.0
    %7352 = vmatprep.subr.mxu0 0.0
    %7353 = vmatpush1.msra.mxu0 0.0
    %7354 = vmatprep.subr.mxu0 0.0
    %7355 = vmatpush1.msra.mxu0 0.0
    %7356 = vmatprep.subr.mxu0 0.0
    %7357 = vmatpush1.msra.mxu0 0.0
    %7358 = vmatprep.subr.mxu0 0.0
    %7359 = vmatpush1.msra.mxu0 0.0
    %7360 = vmatprep.subr.mxu0 0.0
    %7361 = vmatpush1.msra.mxu0 0.0
    %7362 = vmatprep.subr.mxu0 0.0
    %7363 = vmatpush1.msra.mxu0 0.0
    %7364 = vmatprep.subr.mxu0 0.0
    %7365 = vmatpush1.msra.mxu0 0.0
    %7366 = vmatprep.subr.mxu0 0.0
    %7367 = vmatpush1.msra.mxu0 0.0
    %7368 = vmatprep.subr.mxu0 0.0
    %7369 = vmatpush1.msra.mxu0 0.0
    %7370 = vmatprep.subr.mxu0 0.0
    %7371 = vmatpush1.msra.mxu0 0.0
    %7372 = vmatprep.subr.mxu0 0.0
    %7373 = vmatpush1.msra.mxu0 0.0
    %7374 = vmatprep.mubr.f32.mxu0 0.0
    %v7375 = vand.u32 %v7172, 4294901760
    %7376 = vmatmul.mubr.f32.gmra.mrb[0].mxu0 %v7375
    %v7377 = vpop.f32.mrb[0].mxu0
    %v7378 = vadd.f32 %v7257, %v7377
    %v7379 = vpop.f32.mrb[0].mxu0
    %7380 = vmatprep.mubr.f32.mxu0 0.0
    %v7381 = vand.u32 %v7175, 4294901760
    %7382 = vmatmul.mubr.f32.gmra.mrb[0].mxu0 %v7381
    %v7383 = vpop.f32.mrb[0].mxu0
    %v7384 = vadd.f32 %v7267, %v7383
    %v7385 = vpop.f32.mrb[0].mxu0
    %7386 = vdwg.mxu0
    %7387 = vmatprep.subr.mxu0 0.0
    %v7388 = vand.u32 %v7155, 4294901760
    %v7389 = vsub.f32 %v7155, %v7388
    %7390 = vmatpush1.msra.mxu0 %v7389
    %7391 = vmatprep.subr.mxu0 0.0
    %v7392 = vand.u32 %v7156, 4294901760
    %v7393 = vsub.f32 %v7156, %v7392
    %7394 = vmatpush1.msra.mxu0 %v7393
    %7395 = vmatprep.subr.mxu0 0.0
    %v7396 = vand.u32 %v7157, 4294901760
    %v7397 = vsub.f32 %v7157, %v7396
    %7398 = vmatpush1.msra.mxu0 %v7397
    %7399 = vmatprep.subr.mxu0 0.0
    %v7400 = vand.u32 %v7158, 4294901760
    %v7401 = vsub.f32 %v7158, %v7400
    %7402 = vmatpush1.msra.mxu0 %v7401
    %7403 = vmatprep.subr.mxu0 0.0
    %v7404 = vand.u32 %v7159, 4294901760
    %v7405 = vsub.f32 %v7159, %v7404
    %7406 = vmatpush1.msra.mxu0 %v7405
    %7407 = vmatprep.subr.mxu0 0.0
    %v7408 = vand.u32 %v7160, 4294901760
    %v7409 = vsub.f32 %v7160, %v7408
    %7410 = vmatpush1.msra.mxu0 %v7409
    %7411 = vmatprep.subr.mxu0 0.0
    %v7412 = vand.u32 %v7161, 4294901760
    %v7413 = vsub.f32 %v7161, %v7412
    %7414 = vmatpush1.msra.mxu0 %v7413
    %7415 = vmatprep.subr.mxu0 0.0
    %v7416 = vand.u32 %v7162, 4294901760
    %v7417 = vsub.f32 %v7162, %v7416
    %7418 = vmatpush1.msra.mxu0 %v7417
    %7419 = vmatprep.subr.mxu0 0.0
    %7420 = vmatpush1.msra.mxu0 0.0
    %7421 = vmatprep.subr.mxu0 0.0
    %7422 = vmatpush1.msra.mxu0 0.0
    %7423 = vmatprep.subr.mxu0 0.0
    %7424 = vmatpush1.msra.mxu0 0.0
    %7425 = vmatprep.subr.mxu0 0.0
    %7426 = vmatpush1.msra.mxu0 0.0
    %7427 = vmatprep.subr.mxu0 0.0
    %7428 = vmatpush1.msra.mxu0 0.0
    %7429 = vmatprep.subr.mxu0 0.0
    %7430 = vmatpush1.msra.mxu0 0.0
    %7431 = vmatprep.subr.mxu0 0.0
    %7432 = vmatpush1.msra.mxu0 0.0
    %7433 = vmatprep.subr.mxu0 0.0
    %7434 = vmatpush1.msra.mxu0 0.0
    %7435 = vmatprep.subr.mxu0 0.0
    %7436 = vmatpush1.msra.mxu0 0.0
    %7437 = vmatprep.subr.mxu0 0.0
    %7438 = vmatpush1.msra.mxu0 0.0
    %7439 = vmatprep.subr.mxu0 0.0
    %7440 = vmatpush1.msra.mxu0 0.0
    %7441 = vmatprep.subr.mxu0 0.0
    %7442 = vmatpush1.msra.mxu0 0.0
    %7443 = vmatprep.subr.mxu0 0.0
    %7444 = vmatpush1.msra.mxu0 0.0
    %7445 = vmatprep.subr.mxu0 0.0
    %7446 = vmatpush1.msra.mxu0 0.0
    %7447 = vmatprep.subr.mxu0 0.0
    %7448 = vmatpush1.msra.mxu0 0.0
    %7449 = vmatprep.subr.mxu0 0.0
    %7450 = vmatpush1.msra.mxu0 0.0
    %7451 = vmatprep.subr.mxu0 0.0
    %7452 = vmatpush1.msra.mxu0 0.0
    %7453 = vmatprep.subr.mxu0 0.0
    %7454 = vmatpush1.msra.mxu0 0.0
    %7455 = vmatprep.subr.mxu0 0.0
    %7456 = vmatpush1.msra.mxu0 0.0
    %7457 = vmatprep.subr.mxu0 0.0
    %7458 = vmatpush1.msra.mxu0 0.0
    %7459 = vmatprep.subr.mxu0 0.0
    %7460 = vmatpush1.msra.mxu0 0.0
    %7461 = vmatprep.subr.mxu0 0.0
    %7462 = vmatpush1.msra.mxu0 0.0
    %7463 = vmatprep.subr.mxu0 0.0
    %7464 = vmatpush1.msra.mxu0 0.0
    %7465 = vmatprep.subr.mxu0 0.0
    %7466 = vmatpush1.msra.mxu0 0.0
    %7467 = vmatprep.mubr.f32.mxu0 0.0
    %v7468 = vand.u32 %v7172, 4294901760
    %v7469 = vsub.f32 %v7172, %v7468
    %7470 = vmatmul.mubr.f32.gmra.mrb[0].mxu0 %v7469
    %v7471 = vpop.f32.mrb[0].mxu0
    %v7472 = vadd.f32 %v7378, %v7471
    %v7473 = vpop.f32.mrb[0].mxu0
    %7474 = vmatprep.mubr.f32.mxu0 0.0
    %v7475 = vand.u32 %v7175, 4294901760
    %v7476 = vsub.f32 %v7175, %v7475
    %7477 = vmatmul.mubr.f32.gmra.mrb[0].mxu0 %v7476
    %v7478 = vpop.f32.mrb[0].mxu0
    %v7479 = vadd.f32 %v7384, %v7478
    %v7480 = vpop.f32.mrb[0].mxu0
    %7481 = vdwg.mxu0
    %7482 = vmatprep.subr.mxu0 0.0
    %v7483 = vand.u32 %v7155, 4294901760
    %7484 = vmatpush1.msra.mxu0 %v7483
    %7485 = vmatprep.subr.mxu0 0.0
    %v7486 = vand.u32 %v7156, 4294901760
    %7487 = vmatpush1.msra.mxu0 %v7486
    %7488 = vmatprep.subr.mxu0 0.0
    %v7489 = vand.u32 %v7157, 4294901760
    %7490 = vmatpush1.msra.mxu0 %v7489
    %7491 = vmatprep.subr.mxu0 0.0
    %v7492 = vand.u32 %v7158, 4294901760
    %7493 = vmatpush1.msra.mxu0 %v7492
    %7494 = vmatprep.subr.mxu0 0.0
    %v7495 = vand.u32 %v7159, 4294901760
    %7496 = vmatpush1.msra.mxu0 %v7495
    %7497 = vmatprep.subr.mxu0 0.0
    %v7498 = vand.u32 %v7160, 4294901760
    %7499 = vmatpush1.msra.mxu0 %v7498
    %7500 = vmatprep.subr.mxu0 0.0
    %v7501 = vand.u32 %v7161, 4294901760
    %7502 = vmatpush1.msra.mxu0 %v7501
    %7503 = vmatprep.subr.mxu0 0.0
    %v7504 = vand.u32 %v7162, 4294901760
    %7505 = vmatpush1.msra.mxu0 %v7504
    %7506 = vmatprep.subr.mxu0 0.0
    %7507 = vmatpush1.msra.mxu0 0.0
    %7508 = vmatprep.subr.mxu0 0.0
    %7509 = vmatpush1.msra.mxu0 0.0
    %7510 = vmatprep.subr.mxu0 0.0
    %7511 = vmatpush1.msra.mxu0 0.0
    %7512 = vmatprep.subr.mxu0 0.0
    %7513 = vmatpush1.msra.mxu0 0.0
    %7514 = vmatprep.subr.mxu0 0.0
    %7515 = vmatpush1.msra.mxu0 0.0
    %7516 = vmatprep.subr.mxu0 0.0
    %7517 = vmatpush1.msra.mxu0 0.0
    %7518 = vmatprep.subr.mxu0 0.0
    %7519 = vmatpush1.msra.mxu0 0.0
    %7520 = vmatprep.subr.mxu0 0.0
    %7521 = vmatpush1.msra.mxu0 0.0
    %7522 = vmatprep.subr.mxu0 0.0
    %7523 = vmatpush1.msra.mxu0 0.0
    %7524 = vmatprep.subr.mxu0 0.0
    %7525 = vmatpush1.msra.mxu0 0.0
    %7526 = vmatprep.subr.mxu0 0.0
    %7527 = vmatpush1.msra.mxu0 0.0
    %7528 = vmatprep.subr.mxu0 0.0
    %7529 = vmatpush1.msra.mxu0 0.0
    %7530 = vmatprep.subr.mxu0 0.0
    %7531 = vmatpush1.msra.mxu0 0.0
    %7532 = vmatprep.subr.mxu0 0.0
    %7533 = vmatpush1.msra.mxu0 0.0
    %7534 = vmatprep.subr.mxu0 0.0
    %7535 = vmatpush1.msra.mxu0 0.0
    %7536 = vmatprep.subr.mxu0 0.0
    %7537 = vmatpush1.msra.mxu0 0.0
    %7538 = vmatprep.subr.mxu0 0.0
    %7539 = vmatpush1.msra.mxu0 0.0
    %7540 = vmatprep.subr.mxu0 0.0
    %7541 = vmatpush1.msra.mxu0 0.0
    %7542 = vmatprep.subr.mxu0 0.0
    %7543 = vmatpush1.msra.mxu0 0.0
    %7544 = vmatprep.subr.mxu0 0.0
    %7545 = vmatpush1.msra.mxu0 0.0
    %7546 = vmatprep.subr.mxu0 0.0
    %7547 = vmatpush1.msra.mxu0 0.0
    %7548 = vmatprep.subr.mxu0 0.0
    %7549 = vmatpush1.msra.mxu0 0.0
    %7550 = vmatprep.subr.mxu0 0.0
    %7551 = vmatpush1.msra.mxu0 0.0
    %7552 = vmatprep.subr.mxu0 0.0
    %7553 = vmatpush1.msra.mxu0 0.0
    %7554 = vmatprep.mubr.f32.mxu0 0.0
    %v7555 = vand.u32 %v7172, 4294901760
    %v7556 = vsub.f32 %v7172, %v7555
    %v7557 = vand.u32 %v7556, 4294901760
    %7558 = vmatmul.mubr.f32.gmra.mrb[0].mxu0 %v7557
    %v7559 = vpop.f32.mrb[0].mxu0
    %v7560 = vadd.f32 %v7472, %v7559
    %v7561 = vpop.f32.mrb[0].mxu0
    %7562 = vmatprep.mubr.f32.mxu0 0.0
    %v7563 = vand.u32 %v7175, 4294901760
    %v7564 = vsub.f32 %v7175, %v7563
    %v7565 = vand.u32 %v7564, 4294901760
    %7566 = vmatmul.mubr.f32.gmra.mrb[0].mxu0 %v7565
    %v7567 = vpop.f32.mrb[0].mxu0
    %v7568 = vadd.f32 %v7479, %v7567
    %v7569 = vpop.f32.mrb[0].mxu0
    %7570 = vdwg.mxu0
    %7571 = vmatprep.subr.mxu0 0.0
    %v7572 = vand.u32 %v7155, 4294901760
    %v7573 = vsub.f32 %v7155, %v7572
    %v7574 = vand.u32 %v7573, 4294901760
    %7575 = vmatpush1.msra.mxu0 %v7574
    %7576 = vmatprep.subr.mxu0 0.0
    %v7577 = vand.u32 %v7156, 4294901760
    %v7578 = vsub.f32 %v7156, %v7577
    %v7579 = vand.u32 %v7578, 4294901760
    %7580 = vmatpush1.msra.mxu0 %v7579
    %7581 = vmatprep.subr.mxu0 0.0
    %v7582 = vand.u32 %v7157, 4294901760
    %v7583 = vsub.f32 %v7157, %v7582
    %v7584 = vand.u32 %v7583, 4294901760
    %7585 = vmatpush1.msra.mxu0 %v7584
    %7586 = vmatprep.subr.mxu0 0.0
    %v7587 = vand.u32 %v7158, 4294901760
    %v7588 = vsub.f32 %v7158, %v7587
    %v7589 = vand.u32 %v7588, 4294901760
    %7590 = vmatpush1.msra.mxu0 %v7589
    %7591 = vmatprep.subr.mxu0 0.0
    %v7592 = vand.u32 %v7159, 4294901760
    %v7593 = vsub.f32 %v7159, %v7592
    %v7594 = vand.u32 %v7593, 4294901760
    %7595 = vmatpush1.msra.mxu0 %v7594
    %7596 = vmatprep.subr.mxu0 0.0
    %v7597 = vand.u32 %v7160, 4294901760
    %v7598 = vsub.f32 %v7160, %v7597
    %v7599 = vand.u32 %v7598, 4294901760
    %7600 = vmatpush1.msra.mxu0 %v7599
    %7601 = vmatprep.subr.mxu0 0.0
    %v7602 = vand.u32 %v7161, 4294901760
    %v7603 = vsub.f32 %v7161, %v7602
    %v7604 = vand.u32 %v7603, 4294901760
    %7605 = vmatpush1.msra.mxu0 %v7604
    %7606 = vmatprep.subr.mxu0 0.0
    %v7607 = vand.u32 %v7162, 4294901760
    %v7608 = vsub.f32 %v7162, %v7607
    %v7609 = vand.u32 %v7608, 4294901760
    %7610 = vmatpush1.msra.mxu0 %v7609
    %7611 = vmatprep.subr.mxu0 0.0
    %7612 = vmatpush1.msra.mxu0 0.0
    %7613 = vmatprep.subr.mxu0 0.0
    %7614 = vmatpush1.msra.mxu0 0.0
    %7615 = vmatprep.subr.mxu0 0.0
    %7616 = vmatpush1.msra.mxu0 0.0
    %7617 = vmatprep.subr.mxu0 0.0
    %7618 = vmatpush1.msra.mxu0 0.0
    %7619 = vmatprep.subr.mxu0 0.0
    %7620 = vmatpush1.msra.mxu0 0.0
    %7621 = vmatprep.subr.mxu0 0.0
    %7622 = vmatpush1.msra.mxu0 0.0
    %7623 = vmatprep.subr.mxu0 0.0
    %7624 = vmatpush1.msra.mxu0 0.0
    %7625 = vmatprep.subr.mxu0 0.0
    %7626 = vmatpush1.msra.mxu0 0.0
    %7627 = vmatprep.subr.mxu0 0.0
    %7628 = vmatpush1.msra.mxu0 0.0
    %7629 = vmatprep.subr.mxu0 0.0
    %7630 = vmatpush1.msra.mxu0 0.0
    %7631 = vmatprep.subr.mxu0 0.0
    %7632 = vmatpush1.msra.mxu0 0.0
    %7633 = vmatprep.subr.mxu0 0.0
    %7634 = vmatpush1.msra.mxu0 0.0
    %7635 = vmatprep.subr.mxu0 0.0
    %7636 = vmatpush1.msra.mxu0 0.0
    %7637 = vmatprep.subr.mxu0 0.0
    %7638 = vmatpush1.msra.mxu0 0.0
    %7639 = vmatprep.subr.mxu0 0.0
    %7640 = vmatpush1.msra.mxu0 0.0
    %7641 = vmatprep.subr.mxu0 0.0
    %7642 = vmatpush1.msra.mxu0 0.0
    %7643 = vmatprep.subr.mxu0 0.0
    %7644 = vmatpush1.msra.mxu0 0.0
    %7645 = vmatprep.subr.mxu0 0.0
    %7646 = vmatpush1.msra.mxu0 0.0
    %7647 = vmatprep.subr.mxu0 0.0
    %7648 = vmatpush1.msra.mxu0 0.0
    %7649 = vmatprep.subr.mxu0 0.0
    %7650 = vmatpush1.msra.mxu0 0.0
    %7651 = vmatprep.subr.mxu0 0.0
    %7652 = vmatpush1.msra.mxu0 0.0
    %7653 = vmatprep.subr.mxu0 0.0
    %7654 = vmatpush1.msra.mxu0 0.0
    %7655 = vmatprep.subr.mxu0 0.0
    %7656 = vmatpush1.msra.mxu0 0.0
    %7657 = vmatprep.subr.mxu0 0.0
    %7658 = vmatpush1.msra.mxu0 0.0
    %7659 = vmatprep.mubr.f32.mxu0 0.0
    %v7660 = vand.u32 %v7172, 4294901760
    %7661 = vmatmul.mubr.f32.gmra.mrb[0].mxu0 %v7660
    %v7662 = vpop.f32.mrb[0].mxu0
    %v7663 = vadd.f32 %v7560, %v7662
    %v7664 = vpop.f32.mrb[0].mxu0
    %7665 = vmatprep.mubr.f32.mxu0 0.0
    %v7666 = vand.u32 %v7175, 4294901760
    %7667 = vmatmul.mubr.f32.gmra.mrb[0].mxu0 %v7666
    %v7668 = vpop.f32.mrb[0].mxu0
    %v7669 = vadd.f32 %v7568, %v7668
    %v7670 = vpop.f32.mrb[0].mxu0
    %7671 = vdwg.mxu0
    %7672 = vmatprep.subr.mxu0 0.0
    %v7673 = vand.u32 %v7155, 4294901760
    %7674 = vmatpush1.msra.mxu0 %v7673
    %7675 = vmatprep.subr.mxu0 0.0
    %v7676 = vand.u32 %v7156, 4294901760
    %7677 = vmatpush1.msra.mxu0 %v7676
    %7678 = vmatprep.subr.mxu0 0.0
    %v7679 = vand.u32 %v7157, 4294901760
    %7680 = vmatpush1.msra.mxu0 %v7679
    %7681 = vmatprep.subr.mxu0 0.0
    %v7682 = vand.u32 %v7158, 4294901760
    %7683 = vmatpush1.msra.mxu0 %v7682
    %7684 = vmatprep.subr.mxu0 0.0
    %v7685 = vand.u32 %v7159, 4294901760
    %7686 = vmatpush1.msra.mxu0 %v7685
    %7687 = vmatprep.subr.mxu0 0.0
    %v7688 = vand.u32 %v7160, 4294901760
    %7689 = vmatpush1.msra.mxu0 %v7688
    %7690 = vmatprep.subr.mxu0 0.0
    %v7691 = vand.u32 %v7161, 4294901760
    %7692 = vmatpush1.msra.mxu0 %v7691
    %7693 = vmatprep.subr.mxu0 0.0
    %v7694 = vand.u32 %v7162, 4294901760
    %7695 = vmatpush1.msra.mxu0 %v7694
    %7696 = vmatprep.subr.mxu0 0.0
    %7697 = vmatpush1.msra.mxu0 0.0
    %7698 = vmatprep.subr.mxu0 0.0
    %7699 = vmatpush1.msra.mxu0 0.0
    %7700 = vmatprep.subr.mxu0 0.0
    %7701 = vmatpush1.msra.mxu0 0.0
    %7702 = vmatprep.subr.mxu0 0.0
    %7703 = vmatpush1.msra.mxu0 0.0
    %7704 = vmatprep.subr.mxu0 0.0
    %7705 = vmatpush1.msra.mxu0 0.0
    %7706 = vmatprep.subr.mxu0 0.0
    %7707 = vmatpush1.msra.mxu0 0.0
    %7708 = vmatprep.subr.mxu0 0.0
    %7709 = vmatpush1.msra.mxu0 0.0
    %7710 = vmatprep.subr.mxu0 0.0
    %7711 = vmatpush1.msra.mxu0 0.0
    %7712 = vmatprep.subr.mxu0 0.0
    %7713 = vmatpush1.msra.mxu0 0.0
    %7714 = vmatprep.subr.mxu0 0.0
    %7715 = vmatpush1.msra.mxu0 0.0
    %7716 = vmatprep.subr.mxu0 0.0
    %7717 = vmatpush1.msra.mxu0 0.0
    %7718 = vmatprep.subr.mxu0 0.0
    %7719 = vmatpush1.msra.mxu0 0.0
    %7720 = vmatprep.subr.mxu0 0.0
    %7721 = vmatpush1.msra.mxu0 0.0
    %7722 = vmatprep.subr.mxu0 0.0
    %7723 = vmatpush1.msra.mxu0 0.0
    %7724 = vmatprep.subr.mxu0 0.0
    %7725 = vmatpush1.msra.mxu0 0.0
    %7726 = vmatprep.subr.mxu0 0.0
    %7727 = vmatpush1.msra.mxu0 0.0
    %7728 = vmatprep.subr.mxu0 0.0
    %7729 = vmatpush1.msra.mxu0 0.0
    %7730 = vmatprep.subr.mxu0 0.0
    %7731 = vmatpush1.msra.mxu0 0.0
    %7732 = vmatprep.subr.mxu0 0.0
    %7733 = vmatpush1.msra.mxu0 0.0
    %7734 = vmatprep.subr.mxu0 0.0
    %7735 = vmatpush1.msra.mxu0 0.0
    %7736 = vmatprep.subr.mxu0 0.0
    %7737 = vmatpush1.msra.mxu0 0.0
    %7738 = vmatprep.subr.mxu0 0.0
    %7739 = vmatpush1.msra.mxu0 0.0
    %7740 = vmatprep.subr.mxu0 0.0
    %7741 = vmatpush1.msra.mxu0 0.0
    %7742 = vmatprep.subr.mxu0 0.0
    %7743 = vmatpush1.msra.mxu0 0.0
    %7744 = vmatprep.mubr.f32.mxu0 0.0
    %v7745 = vand.u32 %v7172, 4294901760
    %7746 = vmatmul.mubr.f32.gmra.mrb[0].mxu0 %v7745
    %v7747 = vpop.f32.mrb[0].mxu0
    %v7748 = vadd.f32 %v7663, %v7747
    %v7749 = vpop.f32.mrb[0].mxu0
    %7750 = vmatprep.mubr.f32.mxu0 0.0
    %v7751 = vand.u32 %v7175, 4294901760
    %7752 = vmatmul.mubr.f32.gmra.mrb[0].mxu0 %v7751
    %v7753 = vpop.f32.mrb[0].mxu0
    %v7754 = vadd.f32 %v7669, %v7753
    %v7755 = vpop.f32.mrb[0].mxu0
    %7756 = vdwg.mxu0
    %v7757 = vadd.f32 %v6606, %v7748
    %v7758 = vadd.f32 %v6607, %v7754
    %v7759 = vsel %vm1899, %v7757, 0.0
    %7760 = vadd.xlane.f32.xlu0 %v7759
    %v7761 = vpop.xlane.xlu0 %7760
    %v7762 = vsel %vm1899, %v7758, 0.0
    %7763 = vadd.xlane.f32.xlu0 %v7762
    %v7764 = vpop.xlane.xlu0 %7763
    %v7765 = vmul.f32 %v7761, %v6569
    %v7766 = vmul.f32 %v7764, %v6569
    %v7767 = vsub.f32 %v7757, %v7765
    %v7768 = vsub.f32 %v7758, %v7766
    %v7769 = vmul.f32 %v7767, %v7767
    %v7770 = vmul.f32 %v7768, %v7768
    %v7771 = vsel %vm1899, %v7769, 0.0
    %7772 = vadd.xlane.f32.xlu0 %v7771
    %v7773 = vpop.xlane.xlu0 %7772
    %v7774 = vsel %vm1899, %v7770, 0.0
    %7775 = vadd.xlane.f32.xlu0 %v7774
    %v7776 = vpop.xlane.xlu0 %7775
    %v7777 = vmul.f32 %v7773, %v6569
    %v7778 = vmul.f32 %v7776, %v6569
    %v7779 = vadd.f32 %v7777, 1e-05
    %v7780 = vadd.f32 %v7778, 1e-05
    %v7781 = vrsqrt.pop %v7779
    %v7782 = vrsqrt.pop %v7780
    %v7783 = vmul.f32 %v7767, %v7781
    %v7784 = vmul.f32 %v7768, %v7782
    %v7785 = vld [vmem:[%s21] sm:$0x1]
    %v7787 = vlaneseq
    %v7788 = vshrl.u32 %v7787, 7
    %v7789 = vsub.s32 0, %v7788
    %v7790 = vrot.slane %v7785, %v7789
    %v7792 = vmul.f32 %v7783, %v7790
    %v7793 = vmul.f32 %v7784, %v7790
    %v7794 = vld [vmem:[%s22] sm:$0x1]
    %v7796 = vlaneseq
    %v7797 = vshrl.u32 %v7796, 7
    %v7798 = vsub.s32 0, %v7797
    %v7799 = vrot.slane %v7794, %v7798
    %v7801 = vadd.f32 %v7792, %v7799
    %v7802 = vadd.f32 %v7793, %v7799
    %v7803 = vld [vmem:[%s23] sm:$0xff]
    %v7805 = vsel %vm3839, %v7803, 0
    %7807 = vmatprep.subr.mxu0 0.0
    %v7808 = vand.u32 %v7801, 4294901760
    %7809 = vmatpush1.msra.mxu0 %v7808
    %7810 = vmatprep.subr.mxu0 0.0
    %v7811 = vand.u32 %v7802, 4294901760
    %7812 = vmatpush1.msra.mxu0 %v7811
    %7813 = vmatprep.subr.mxu0 0.0
    %7814 = vmatpush1.msra.mxu0 0.0
    %7815 = vmatprep.subr.mxu0 0.0
    %7816 = vmatpush1.msra.mxu0 0.0
    %7817 = vmatprep.subr.mxu0 0.0
    %7818 = vmatpush1.msra.mxu0 0.0
    %7819 = vmatprep.subr.mxu0 0.0
    %7820 = vmatpush1.msra.mxu0 0.0
    %7821 = vmatprep.subr.mxu0 0.0
    %7822 = vmatpush1.msra.mxu0 0.0
    %7823 = vmatprep.subr.mxu0 0.0
    %7824 = vmatpush1.msra.mxu0 0.0
    %7825 = vmatprep.subr.mxu0 0.0
    %7826 = vmatpush1.msra.mxu0 0.0
    %7827 = vmatprep.subr.mxu0 0.0
    %7828 = vmatpush1.msra.mxu0 0.0
    %7829 = vmatprep.subr.mxu0 0.0
    %7830 = vmatpush1.msra.mxu0 0.0
    %7831 = vmatprep.subr.mxu0 0.0
    %7832 = vmatpush1.msra.mxu0 0.0
    %7833 = vmatprep.subr.mxu0 0.0
    %7834 = vmatpush1.msra.mxu0 0.0
    %7835 = vmatprep.subr.mxu0 0.0
    %7836 = vmatpush1.msra.mxu0 0.0
    %7837 = vmatprep.subr.mxu0 0.0
    %7838 = vmatpush1.msra.mxu0 0.0
    %7839 = vmatprep.subr.mxu0 0.0
    %7840 = vmatpush1.msra.mxu0 0.0
    %7841 = vmatprep.subr.mxu0 0.0
    %7842 = vmatpush1.msra.mxu0 0.0
    %7843 = vmatprep.subr.mxu0 0.0
    %7844 = vmatpush1.msra.mxu0 0.0
    %7845 = vmatprep.subr.mxu0 0.0
    %7846 = vmatpush1.msra.mxu0 0.0
    %7847 = vmatprep.subr.mxu0 0.0
    %7848 = vmatpush1.msra.mxu0 0.0
    %7849 = vmatprep.subr.mxu0 0.0
    %7850 = vmatpush1.msra.mxu0 0.0
    %7851 = vmatprep.subr.mxu0 0.0
    %7852 = vmatpush1.msra.mxu0 0.0
    %7853 = vmatprep.subr.mxu0 0.0
    %7854 = vmatpush1.msra.mxu0 0.0
    %7855 = vmatprep.subr.mxu0 0.0
    %7856 = vmatpush1.msra.mxu0 0.0
    %7857 = vmatprep.subr.mxu0 0.0
    %7858 = vmatpush1.msra.mxu0 0.0
    %7859 = vmatprep.subr.mxu0 0.0
    %7860 = vmatpush1.msra.mxu0 0.0
    %7861 = vmatprep.subr.mxu0 0.0
    %7862 = vmatpush1.msra.mxu0 0.0
    %7863 = vmatprep.subr.mxu0 0.0
    %7864 = vmatpush1.msra.mxu0 0.0
    %7865 = vmatprep.subr.mxu0 0.0
    %7866 = vmatpush1.msra.mxu0 0.0
    %7867 = vmatprep.subr.mxu0 0.0
    %7868 = vmatpush1.msra.mxu0 0.0
    %7869 = vmatprep.subr.mxu0 0.0
    %7870 = vmatpush1.msra.mxu0 0.0
    %7871 = vmatprep.subr.mxu0 0.0
    %7872 = vmatpush1.msra.mxu0 0.0
    %7873 = vmatprep.mubr.f32.mxu0 0.0
    %v7874 = vand.u32 %v7805, 4294901760
    %v7875 = vsub.f32 %v7805, %v7874
    %v7876 = vand.u32 %v7875, 4294901760
    %v7877 = vsub.f32 %v7875, %v7876
    %v7878 = vand.u32 %v7877, 4294901760
    %7879 = vmatmul.mubr.f32.gmra.mrb[0].mxu0 %v7878
    %v7880 = vpop.f32.mrb[0].mxu0
    %v7881 = vadd.f32 0.0, %v7880
    %v7882 = vpop.f32.mrb[0].mxu0
    %7883 = vdwg.mxu0
    %7884 = vmatprep.subr.mxu0 0.0
    %v7885 = vand.u32 %v7801, 4294901760
    %v7886 = vsub.f32 %v7801, %v7885
    %v7887 = vand.u32 %v7886, 4294901760
    %v7888 = vsub.f32 %v7886, %v7887
    %v7889 = vand.u32 %v7888, 4294901760
    %7890 = vmatpush1.msra.mxu0 %v7889
    %7891 = vmatprep.subr.mxu0 0.0
    %v7892 = vand.u32 %v7802, 4294901760
    %v7893 = vsub.f32 %v7802, %v7892
    %v7894 = vand.u32 %v7893, 4294901760
    %v7895 = vsub.f32 %v7893, %v7894
    %v7896 = vand.u32 %v7895, 4294901760
    %7897 = vmatpush1.msra.mxu0 %v7896
    %7898 = vmatprep.subr.mxu0 0.0
    %7899 = vmatpush1.msra.mxu0 0.0
    %7900 = vmatprep.subr.mxu0 0.0
    %7901 = vmatpush1.msra.mxu0 0.0
    %7902 = vmatprep.subr.mxu0 0.0
    %7903 = vmatpush1.msra.mxu0 0.0
    %7904 = vmatprep.subr.mxu0 0.0
    %7905 = vmatpush1.msra.mxu0 0.0
    %7906 = vmatprep.subr.mxu0 0.0
    %7907 = vmatpush1.msra.mxu0 0.0
    %7908 = vmatprep.subr.mxu0 0.0
    %7909 = vmatpush1.msra.mxu0 0.0
    %7910 = vmatprep.subr.mxu0 0.0
    %7911 = vmatpush1.msra.mxu0 0.0
    %7912 = vmatprep.subr.mxu0 0.0
    %7913 = vmatpush1.msra.mxu0 0.0
    %7914 = vmatprep.subr.mxu0 0.0
    %7915 = vmatpush1.msra.mxu0 0.0
    %7916 = vmatprep.subr.mxu0 0.0
    %7917 = vmatpush1.msra.mxu0 0.0
    %7918 = vmatprep.subr.mxu0 0.0
    %7919 = vmatpush1.msra.mxu0 0.0
    %7920 = vmatprep.subr.mxu0 0.0
    %7921 = vmatpush1.msra.mxu0 0.0
    %7922 = vmatprep.subr.mxu0 0.0
    %7923 = vmatpush1.msra.mxu0 0.0
    %7924 = vmatprep.subr.mxu0 0.0
    %7925 = vmatpush1.msra.mxu0 0.0
    %7926 = vmatprep.subr.mxu0 0.0
    %7927 = vmatpush1.msra.mxu0 0.0
    %7928 = vmatprep.subr.mxu0 0.0
    %7929 = vmatpush1.msra.mxu0 0.0
    %7930 = vmatprep.subr.mxu0 0.0
    %7931 = vmatpush1.msra.mxu0 0.0
    %7932 = vmatprep.subr.mxu0 0.0
    %7933 = vmatpush1.msra.mxu0 0.0
    %7934 = vmatprep.subr.mxu0 0.0
    %7935 = vmatpush1.msra.mxu0 0.0
    %7936 = vmatprep.subr.mxu0 0.0
    %7937 = vmatpush1.msra.mxu0 0.0
    %7938 = vmatprep.subr.mxu0 0.0
    %7939 = vmatpush1.msra.mxu0 0.0
    %7940 = vmatprep.subr.mxu0 0.0
    %7941 = vmatpush1.msra.mxu0 0.0
    %7942 = vmatprep.subr.mxu0 0.0
    %7943 = vmatpush1.msra.mxu0 0.0
    %7944 = vmatprep.subr.mxu0 0.0
    %7945 = vmatpush1.msra.mxu0 0.0
    %7946 = vmatprep.subr.mxu0 0.0
    %7947 = vmatpush1.msra.mxu0 0.0
    %7948 = vmatprep.subr.mxu0 0.0
    %7949 = vmatpush1.msra.mxu0 0.0
    %7950 = vmatprep.subr.mxu0 0.0
    %7951 = vmatpush1.msra.mxu0 0.0
    %7952 = vmatprep.subr.mxu0 0.0
    %7953 = vmatpush1.msra.mxu0 0.0
    %7954 = vmatprep.subr.mxu0 0.0
    %7955 = vmatpush1.msra.mxu0 0.0
    %7956 = vmatprep.subr.mxu0 0.0
    %7957 = vmatpush1.msra.mxu0 0.0
    %7958 = vmatprep.mubr.f32.mxu0 0.0
    %v7959 = vand.u32 %v7805, 4294901760
    %7960 = vmatmul.mubr.f32.gmra.mrb[0].mxu0 %v7959
    %v7961 = vpop.f32.mrb[0].mxu0
    %v7962 = vadd.f32 %v7881, %v7961
    %v7963 = vpop.f32.mrb[0].mxu0
    %7964 = vdwg.mxu0
    %7965 = vmatprep.subr.mxu0 0.0
    %v7966 = vand.u32 %v7801, 4294901760
    %v7967 = vsub.f32 %v7801, %v7966
    %7968 = vmatpush1.msra.mxu0 %v7967
    %7969 = vmatprep.subr.mxu0 0.0
    %v7970 = vand.u32 %v7802, 4294901760
    %v7971 = vsub.f32 %v7802, %v7970
    %7972 = vmatpush1.msra.mxu0 %v7971
    %7973 = vmatprep.subr.mxu0 0.0
    %7974 = vmatpush1.msra.mxu0 0.0
    %7975 = vmatprep.subr.mxu0 0.0
    %7976 = vmatpush1.msra.mxu0 0.0
    %7977 = vmatprep.subr.mxu0 0.0
    %7978 = vmatpush1.msra.mxu0 0.0
    %7979 = vmatprep.subr.mxu0 0.0
    %7980 = vmatpush1.msra.mxu0 0.0
    %7981 = vmatprep.subr.mxu0 0.0
    %7982 = vmatpush1.msra.mxu0 0.0
    %7983 = vmatprep.subr.mxu0 0.0
    %7984 = vmatpush1.msra.mxu0 0.0
    %7985 = vmatprep.subr.mxu0 0.0
    %7986 = vmatpush1.msra.mxu0 0.0
    %7987 = vmatprep.subr.mxu0 0.0
    %7988 = vmatpush1.msra.mxu0 0.0
    %7989 = vmatprep.subr.mxu0 0.0
    %7990 = vmatpush1.msra.mxu0 0.0
    %7991 = vmatprep.subr.mxu0 0.0
    %7992 = vmatpush1.msra.mxu0 0.0
    %7993 = vmatprep.subr.mxu0 0.0
    %7994 = vmatpush1.msra.mxu0 0.0
    %7995 = vmatprep.subr.mxu0 0.0
    %7996 = vmatpush1.msra.mxu0 0.0
    %7997 = vmatprep.subr.mxu0 0.0
    %7998 = vmatpush1.msra.mxu0 0.0
    %7999 = vmatprep.subr.mxu0 0.0
    %8000 = vmatpush1.msra.mxu0 0.0
    %8001 = vmatprep.subr.mxu0 0.0
    %8002 = vmatpush1.msra.mxu0 0.0
    %8003 = vmatprep.subr.mxu0 0.0
    %8004 = vmatpush1.msra.mxu0 0.0
    %8005 = vmatprep.subr.mxu0 0.0
    %8006 = vmatpush1.msra.mxu0 0.0
    %8007 = vmatprep.subr.mxu0 0.0
    %8008 = vmatpush1.msra.mxu0 0.0
    %8009 = vmatprep.subr.mxu0 0.0
    %8010 = vmatpush1.msra.mxu0 0.0
    %8011 = vmatprep.subr.mxu0 0.0
    %8012 = vmatpush1.msra.mxu0 0.0
    %8013 = vmatprep.subr.mxu0 0.0
    %8014 = vmatpush1.msra.mxu0 0.0
    %8015 = vmatprep.subr.mxu0 0.0
    %8016 = vmatpush1.msra.mxu0 0.0
    %8017 = vmatprep.subr.mxu0 0.0
    %8018 = vmatpush1.msra.mxu0 0.0
    %8019 = vmatprep.subr.mxu0 0.0
    %8020 = vmatpush1.msra.mxu0 0.0
    %8021 = vmatprep.subr.mxu0 0.0
    %8022 = vmatpush1.msra.mxu0 0.0
    %8023 = vmatprep.subr.mxu0 0.0
    %8024 = vmatpush1.msra.mxu0 0.0
    %8025 = vmatprep.subr.mxu0 0.0
    %8026 = vmatpush1.msra.mxu0 0.0
    %8027 = vmatprep.subr.mxu0 0.0
    %8028 = vmatpush1.msra.mxu0 0.0
    %8029 = vmatprep.subr.mxu0 0.0
    %8030 = vmatpush1.msra.mxu0 0.0
    %8031 = vmatprep.subr.mxu0 0.0
    %8032 = vmatpush1.msra.mxu0 0.0
    %8033 = vmatprep.mubr.f32.mxu0 0.0
    %v8034 = vand.u32 %v7805, 4294901760
    %v8035 = vsub.f32 %v7805, %v8034
    %8036 = vmatmul.mubr.f32.gmra.mrb[0].mxu0 %v8035
    %v8037 = vpop.f32.mrb[0].mxu0
    %v8038 = vadd.f32 %v7962, %v8037
    %v8039 = vpop.f32.mrb[0].mxu0
    %8040 = vdwg.mxu0
    %8041 = vmatprep.subr.mxu0 0.0
    %v8042 = vand.u32 %v7801, 4294901760
    %8043 = vmatpush1.msra.mxu0 %v8042
    %8044 = vmatprep.subr.mxu0 0.0
    %v8045 = vand.u32 %v7802, 4294901760
    %8046 = vmatpush1.msra.mxu0 %v8045
    %8047 = vmatprep.subr.mxu0 0.0
    %8048 = vmatpush1.msra.mxu0 0.0
    %8049 = vmatprep.subr.mxu0 0.0
    %8050 = vmatpush1.msra.mxu0 0.0
    %8051 = vmatprep.subr.mxu0 0.0
    %8052 = vmatpush1.msra.mxu0 0.0
    %8053 = vmatprep.subr.mxu0 0.0
    %8054 = vmatpush1.msra.mxu0 0.0
    %8055 = vmatprep.subr.mxu0 0.0
    %8056 = vmatpush1.msra.mxu0 0.0
    %8057 = vmatprep.subr.mxu0 0.0
    %8058 = vmatpush1.msra.mxu0 0.0
    %8059 = vmatprep.subr.mxu0 0.0
    %8060 = vmatpush1.msra.mxu0 0.0
    %8061 = vmatprep.subr.mxu0 0.0
    %8062 = vmatpush1.msra.mxu0 0.0
    %8063 = vmatprep.subr.mxu0 0.0
    %8064 = vmatpush1.msra.mxu0 0.0
    %8065 = vmatprep.subr.mxu0 0.0
    %8066 = vmatpush1.msra.mxu0 0.0
    %8067 = vmatprep.subr.mxu0 0.0
    %8068 = vmatpush1.msra.mxu0 0.0
    %8069 = vmatprep.subr.mxu0 0.0
    %8070 = vmatpush1.msra.mxu0 0.0
    %8071 = vmatprep.subr.mxu0 0.0
    %8072 = vmatpush1.msra.mxu0 0.0
    %8073 = vmatprep.subr.mxu0 0.0
    %8074 = vmatpush1.msra.mxu0 0.0
    %8075 = vmatprep.subr.mxu0 0.0
    %8076 = vmatpush1.msra.mxu0 0.0
    %8077 = vmatprep.subr.mxu0 0.0
    %8078 = vmatpush1.msra.mxu0 0.0
    %8079 = vmatprep.subr.mxu0 0.0
    %8080 = vmatpush1.msra.mxu0 0.0
    %8081 = vmatprep.subr.mxu0 0.0
    %8082 = vmatpush1.msra.mxu0 0.0
    %8083 = vmatprep.subr.mxu0 0.0
    %8084 = vmatpush1.msra.mxu0 0.0
    %8085 = vmatprep.subr.mxu0 0.0
    %8086 = vmatpush1.msra.mxu0 0.0
    %8087 = vmatprep.subr.mxu0 0.0
    %8088 = vmatpush1.msra.mxu0 0.0
    %8089 = vmatprep.subr.mxu0 0.0
    %8090 = vmatpush1.msra.mxu0 0.0
    %8091 = vmatprep.subr.mxu0 0.0
    %8092 = vmatpush1.msra.mxu0 0.0
    %8093 = vmatprep.subr.mxu0 0.0
    %8094 = vmatpush1.msra.mxu0 0.0
    %8095 = vmatprep.subr.mxu0 0.0
    %8096 = vmatpush1.msra.mxu0 0.0
    %8097 = vmatprep.subr.mxu0 0.0
    %8098 = vmatpush1.msra.mxu0 0.0
    %8099 = vmatprep.subr.mxu0 0.0
    %8100 = vmatpush1.msra.mxu0 0.0
    %8101 = vmatprep.subr.mxu0 0.0
    %8102 = vmatpush1.msra.mxu0 0.0
    %8103 = vmatprep.subr.mxu0 0.0
    %8104 = vmatpush1.msra.mxu0 0.0
    %8105 = vmatprep.subr.mxu0 0.0
    %8106 = vmatpush1.msra.mxu0 0.0
    %8107 = vmatprep.mubr.f32.mxu0 0.0
    %v8108 = vand.u32 %v7805, 4294901760
    %v8109 = vsub.f32 %v7805, %v8108
    %v8110 = vand.u32 %v8109, 4294901760
    %8111 = vmatmul.mubr.f32.gmra.mrb[0].mxu0 %v8110
    %v8112 = vpop.f32.mrb[0].mxu0
    %v8113 = vadd.f32 %v8038, %v8112
    %v8114 = vpop.f32.mrb[0].mxu0
    %8115 = vdwg.mxu0
    %8116 = vmatprep.subr.mxu0 0.0
    %v8117 = vand.u32 %v7801, 4294901760
    %v8118 = vsub.f32 %v7801, %v8117
    %v8119 = vand.u32 %v8118, 4294901760
    %8120 = vmatpush1.msra.mxu0 %v8119
    %8121 = vmatprep.subr.mxu0 0.0
    %v8122 = vand.u32 %v7802, 4294901760
    %v8123 = vsub.f32 %v7802, %v8122
    %v8124 = vand.u32 %v8123, 4294901760
    %8125 = vmatpush1.msra.mxu0 %v8124
    %8126 = vmatprep.subr.mxu0 0.0
    %8127 = vmatpush1.msra.mxu0 0.0
    %8128 = vmatprep.subr.mxu0 0.0
    %8129 = vmatpush1.msra.mxu0 0.0
    %8130 = vmatprep.subr.mxu0 0.0
    %8131 = vmatpush1.msra.mxu0 0.0
    %8132 = vmatprep.subr.mxu0 0.0
    %8133 = vmatpush1.msra.mxu0 0.0
    %8134 = vmatprep.subr.mxu0 0.0
    %8135 = vmatpush1.msra.mxu0 0.0
    %8136 = vmatprep.subr.mxu0 0.0
    %8137 = vmatpush1.msra.mxu0 0.0
    %8138 = vmatprep.subr.mxu0 0.0
    %8139 = vmatpush1.msra.mxu0 0.0
    %8140 = vmatprep.subr.mxu0 0.0
    %8141 = vmatpush1.msra.mxu0 0.0
    %8142 = vmatprep.subr.mxu0 0.0
    %8143 = vmatpush1.msra.mxu0 0.0
    %8144 = vmatprep.subr.mxu0 0.0
    %8145 = vmatpush1.msra.mxu0 0.0
    %8146 = vmatprep.subr.mxu0 0.0
    %8147 = vmatpush1.msra.mxu0 0.0
    %8148 = vmatprep.subr.mxu0 0.0
    %8149 = vmatpush1.msra.mxu0 0.0
    %8150 = vmatprep.subr.mxu0 0.0
    %8151 = vmatpush1.msra.mxu0 0.0
    %8152 = vmatprep.subr.mxu0 0.0
    %8153 = vmatpush1.msra.mxu0 0.0
    %8154 = vmatprep.subr.mxu0 0.0
    %8155 = vmatpush1.msra.mxu0 0.0
    %8156 = vmatprep.subr.mxu0 0.0
    %8157 = vmatpush1.msra.mxu0 0.0
    %8158 = vmatprep.subr.mxu0 0.0
    %8159 = vmatpush1.msra.mxu0 0.0
    %8160 = vmatprep.subr.mxu0 0.0
    %8161 = vmatpush1.msra.mxu0 0.0
    %8162 = vmatprep.subr.mxu0 0.0
    %8163 = vmatpush1.msra.mxu0 0.0
    %8164 = vmatprep.subr.mxu0 0.0
    %8165 = vmatpush1.msra.mxu0 0.0
    %8166 = vmatprep.subr.mxu0 0.0
    %8167 = vmatpush1.msra.mxu0 0.0
    %8168 = vmatprep.subr.mxu0 0.0
    %8169 = vmatpush1.msra.mxu0 0.0
    %8170 = vmatprep.subr.mxu0 0.0
    %8171 = vmatpush1.msra.mxu0 0.0
    %8172 = vmatprep.subr.mxu0 0.0
    %8173 = vmatpush1.msra.mxu0 0.0
    %8174 = vmatprep.subr.mxu0 0.0
    %8175 = vmatpush1.msra.mxu0 0.0
    %8176 = vmatprep.subr.mxu0 0.0
    %8177 = vmatpush1.msra.mxu0 0.0
    %8178 = vmatprep.subr.mxu0 0.0
    %8179 = vmatpush1.msra.mxu0 0.0
    %8180 = vmatprep.subr.mxu0 0.0
    %8181 = vmatpush1.msra.mxu0 0.0
    %8182 = vmatprep.subr.mxu0 0.0
    %8183 = vmatpush1.msra.mxu0 0.0
    %8184 = vmatprep.subr.mxu0 0.0
    %8185 = vmatpush1.msra.mxu0 0.0
    %8186 = vmatprep.mubr.f32.mxu0 0.0
    %v8187 = vand.u32 %v7805, 4294901760
    %8188 = vmatmul.mubr.f32.gmra.mrb[0].mxu0 %v8187
    %v8189 = vpop.f32.mrb[0].mxu0
    %v8190 = vadd.f32 %v8113, %v8189
    %v8191 = vpop.f32.mrb[0].mxu0
    %8192 = vdwg.mxu0
    %8193 = vmatprep.subr.mxu0 0.0
    %v8194 = vand.u32 %v7801, 4294901760
    %8195 = vmatpush1.msra.mxu0 %v8194
    %8196 = vmatprep.subr.mxu0 0.0
    %v8197 = vand.u32 %v7802, 4294901760
    %8198 = vmatpush1.msra.mxu0 %v8197
    %8199 = vmatprep.subr.mxu0 0.0
    %8200 = vmatpush1.msra.mxu0 0.0
    %8201 = vmatprep.subr.mxu0 0.0
    %8202 = vmatpush1.msra.mxu0 0.0
    %8203 = vmatprep.subr.mxu0 0.0
    %8204 = vmatpush1.msra.mxu0 0.0
    %8205 = vmatprep.subr.mxu0 0.0
    %8206 = vmatpush1.msra.mxu0 0.0
    %8207 = vmatprep.subr.mxu0 0.0
    %8208 = vmatpush1.msra.mxu0 0.0
    %8209 = vmatprep.subr.mxu0 0.0
    %8210 = vmatpush1.msra.mxu0 0.0
    %8211 = vmatprep.subr.mxu0 0.0
    %8212 = vmatpush1.msra.mxu0 0.0
    %8213 = vmatprep.subr.mxu0 0.0
    %8214 = vmatpush1.msra.mxu0 0.0
    %8215 = vmatprep.subr.mxu0 0.0
    %8216 = vmatpush1.msra.mxu0 0.0
    %8217 = vmatprep.subr.mxu0 0.0
    %8218 = vmatpush1.msra.mxu0 0.0
    %8219 = vmatprep.subr.mxu0 0.0
    %8220 = vmatpush1.msra.mxu0 0.0
    %8221 = vmatprep.subr.mxu0 0.0
    %8222 = vmatpush1.msra.mxu0 0.0
    %8223 = vmatprep.subr.mxu0 0.0
    %8224 = vmatpush1.msra.mxu0 0.0
    %8225 = vmatprep.subr.mxu0 0.0
    %8226 = vmatpush1.msra.mxu0 0.0
    %8227 = vmatprep.subr.mxu0 0.0
    %8228 = vmatpush1.msra.mxu0 0.0
    %8229 = vmatprep.subr.mxu0 0.0
    %8230 = vmatpush1.msra.mxu0 0.0
    %8231 = vmatprep.subr.mxu0 0.0
    %8232 = vmatpush1.msra.mxu0 0.0
    %8233 = vmatprep.subr.mxu0 0.0
    %8234 = vmatpush1.msra.mxu0 0.0
    %8235 = vmatprep.subr.mxu0 0.0
    %8236 = vmatpush1.msra.mxu0 0.0
    %8237 = vmatprep.subr.mxu0 0.0
    %8238 = vmatpush1.msra.mxu0 0.0
    %8239 = vmatprep.subr.mxu0 0.0
    %8240 = vmatpush1.msra.mxu0 0.0
    %8241 = vmatprep.subr.mxu0 0.0
    %8242 = vmatpush1.msra.mxu0 0.0
    %8243 = vmatprep.subr.mxu0 0.0
    %8244 = vmatpush1.msra.mxu0 0.0
    %8245 = vmatprep.subr.mxu0 0.0
    %8246 = vmatpush1.msra.mxu0 0.0
    %8247 = vmatprep.subr.mxu0 0.0
    %8248 = vmatpush1.msra.mxu0 0.0
    %8249 = vmatprep.subr.mxu0 0.0
    %8250 = vmatpush1.msra.mxu0 0.0
    %8251 = vmatprep.subr.mxu0 0.0
    %8252 = vmatpush1.msra.mxu0 0.0
    %8253 = vmatprep.subr.mxu0 0.0
    %8254 = vmatpush1.msra.mxu0 0.0
    %8255 = vmatprep.subr.mxu0 0.0
    %8256 = vmatpush1.msra.mxu0 0.0
    %8257 = vmatprep.subr.mxu0 0.0
    %8258 = vmatpush1.msra.mxu0 0.0
    %8259 = vmatprep.mubr.f32.mxu0 0.0
    %v8260 = vand.u32 %v7805, 4294901760
    %8261 = vmatmul.mubr.f32.gmra.mrb[0].mxu0 %v8260
    %v8262 = vpop.f32.mrb[0].mxu0
    %v8263 = vadd.f32 %v8190, %v8262
    %v8264 = vpop.f32.mrb[0].mxu0
    %8265 = vdwg.mxu0
    %v8266 = vld [vmem:[%s24] sm:$0xff]
    %v8267 = vld [vmem:[%s24 + $0x8] sm:$0xff]
    %v8268 = vld [vmem:[%s24 + $0x10] sm:$0xff]
    %v8269 = vld [vmem:[%s24 + $0x18] sm:$0xff]
    %s8270 = scalar_lea.vmem %s24, 32
    %v8271 = vld [vmem:[%s8270] sm:$0xff]
    %v8272 = vld [vmem:[%s8270 + $0x8] sm:$0xff]
    %v8273 = vld [vmem:[%s8270 + $0x10] sm:$0xff]
    %v8274 = vld [vmem:[%s8270 + $0x18] sm:$0xff]
    %v8276 = vrot.slane %v8263, 2
    %v8277 = vsel %vm1899, %v8276, 0
    %8279 = vmatprep.subr.mxu0 0.0
    %v8280 = vand.u32 %v8271, 4294901760
    %8281 = vmatpush1.msra.mxu0 %v8280
    %8282 = vmatprep.subr.mxu0 0.0
    %v8283 = vand.u32 %v8272, 4294901760
    %8284 = vmatpush1.msra.mxu0 %v8283
    %8285 = vmatprep.subr.mxu0 0.0
    %v8286 = vand.u32 %v8273, 4294901760
    %8287 = vmatpush1.msra.mxu0 %v8286
    %8288 = vmatprep.subr.mxu0 0.0
    %v8289 = vand.u32 %v8274, 4294901760
    %8290 = vmatpush1.msra.mxu0 %v8289
    %8291 = vmatprep.subr.mxu0 0.0
    %8292 = vmatpush1.msra.mxu0 0.0
    %8293 = vmatprep.subr.mxu0 0.0
    %8294 = vmatpush1.msra.mxu0 0.0
    %8295 = vmatprep.subr.mxu0 0.0
    %8296 = vmatpush1.msra.mxu0 0.0
    %8297 = vmatprep.subr.mxu0 0.0
    %8298 = vmatpush1.msra.mxu0 0.0
    %8299 = vmatprep.subr.mxu0 0.0
    %8300 = vmatpush1.msra.mxu0 0.0
    %8301 = vmatprep.subr.mxu0 0.0
    %8302 = vmatpush1.msra.mxu0 0.0
    %8303 = vmatprep.subr.mxu0 0.0
    %8304 = vmatpush1.msra.mxu0 0.0
    %8305 = vmatprep.subr.mxu0 0.0
    %8306 = vmatpush1.msra.mxu0 0.0
    %8307 = vmatprep.subr.mxu0 0.0
    %8308 = vmatpush1.msra.mxu0 0.0
    %8309 = vmatprep.subr.mxu0 0.0
    %8310 = vmatpush1.msra.mxu0 0.0
    %8311 = vmatprep.subr.mxu0 0.0
    %8312 = vmatpush1.msra.mxu0 0.0
    %8313 = vmatprep.subr.mxu0 0.0
    %8314 = vmatpush1.msra.mxu0 0.0
    %8315 = vmatprep.subr.mxu0 0.0
    %8316 = vmatpush1.msra.mxu0 0.0
    %8317 = vmatprep.subr.mxu0 0.0
    %8318 = vmatpush1.msra.mxu0 0.0
    %8319 = vmatprep.subr.mxu0 0.0
    %8320 = vmatpush1.msra.mxu0 0.0
    %8321 = vmatprep.subr.mxu0 0.0
    %8322 = vmatpush1.msra.mxu0 0.0
    %8323 = vmatprep.subr.mxu0 0.0
    %8324 = vmatpush1.msra.mxu0 0.0
    %8325 = vmatprep.subr.mxu0 0.0
    %8326 = vmatpush1.msra.mxu0 0.0
    %8327 = vmatprep.subr.mxu0 0.0
    %8328 = vmatpush1.msra.mxu0 0.0
    %8329 = vmatprep.subr.mxu0 0.0
    %8330 = vmatpush1.msra.mxu0 0.0
    %8331 = vmatprep.subr.mxu0 0.0
    %8332 = vmatpush1.msra.mxu0 0.0
    %8333 = vmatprep.subr.mxu0 0.0
    %8334 = vmatpush1.msra.mxu0 0.0
    %8335 = vmatprep.subr.mxu0 0.0
    %8336 = vmatpush1.msra.mxu0 0.0
    %8337 = vmatprep.subr.mxu0 0.0
    %8338 = vmatpush1.msra.mxu0 0.0
    %8339 = vmatprep.subr.mxu0 0.0
    %8340 = vmatpush1.msra.mxu0 0.0
    %8341 = vmatprep.subr.mxu0 0.0
    %8342 = vmatpush1.msra.mxu0 0.0
    %8343 = vmatprep.subr.mxu0 0.0
    %8344 = vmatpush1.msra.mxu0 0.0
    %8345 = vmatprep.subr.mxu0 0.0
    %8346 = vmatpush1.msra.mxu0 0.0
    %8347 = vmatprep.mubr.f32.mxu0 0.0
    %v8348 = vand.u32 %v8277, 4294901760
    %v8349 = vsub.f32 %v8277, %v8348
    %v8350 = vand.u32 %v8349, 4294901760
    %v8351 = vsub.f32 %v8349, %v8350
    %v8352 = vand.u32 %v8351, 4294901760
    %8353 = vmatmul.mubr.f32.gmra.mrb[0].mxu0 %v8352
    %v8354 = vpop.f32.mrb[0].mxu0
    %v8355 = vadd.f32 0.0, %v8354
    %v8356 = vpop.f32.mrb[0].mxu0
    %8357 = vdwg.mxu0
    %8358 = vmatprep.subr.mxu0 0.0
    %v8359 = vand.u32 %v8271, 4294901760
    %v8360 = vsub.f32 %v8271, %v8359
    %v8361 = vand.u32 %v8360, 4294901760
    %v8362 = vsub.f32 %v8360, %v8361
    %v8363 = vand.u32 %v8362, 4294901760
    %8364 = vmatpush1.msra.mxu0 %v8363
    %8365 = vmatprep.subr.mxu0 0.0
    %v8366 = vand.u32 %v8272, 4294901760
    %v8367 = vsub.f32 %v8272, %v8366
    %v8368 = vand.u32 %v8367, 4294901760
    %v8369 = vsub.f32 %v8367, %v8368
    %v8370 = vand.u32 %v8369, 4294901760
    %8371 = vmatpush1.msra.mxu0 %v8370
    %8372 = vmatprep.subr.mxu0 0.0
    %v8373 = vand.u32 %v8273, 4294901760
    %v8374 = vsub.f32 %v8273, %v8373
    %v8375 = vand.u32 %v8374, 4294901760
    %v8376 = vsub.f32 %v8374, %v8375
    %v8377 = vand.u32 %v8376, 4294901760
    %8378 = vmatpush1.msra.mxu0 %v8377
    %8379 = vmatprep.subr.mxu0 0.0
    %v8380 = vand.u32 %v8274, 4294901760
    %v8381 = vsub.f32 %v8274, %v8380
    %v8382 = vand.u32 %v8381, 4294901760
    %v8383 = vsub.f32 %v8381, %v8382
    %v8384 = vand.u32 %v8383, 4294901760
    %8385 = vmatpush1.msra.mxu0 %v8384
    %8386 = vmatprep.subr.mxu0 0.0
    %8387 = vmatpush1.msra.mxu0 0.0
    %8388 = vmatprep.subr.mxu0 0.0
    %8389 = vmatpush1.msra.mxu0 0.0
    %8390 = vmatprep.subr.mxu0 0.0
    %8391 = vmatpush1.msra.mxu0 0.0
    %8392 = vmatprep.subr.mxu0 0.0
    %8393 = vmatpush1.msra.mxu0 0.0
    %8394 = vmatprep.subr.mxu0 0.0
    %8395 = vmatpush1.msra.mxu0 0.0
    %8396 = vmatprep.subr.mxu0 0.0
    %8397 = vmatpush1.msra.mxu0 0.0
    %8398 = vmatprep.subr.mxu0 0.0
    %8399 = vmatpush1.msra.mxu0 0.0
    %8400 = vmatprep.subr.mxu0 0.0
    %8401 = vmatpush1.msra.mxu0 0.0
    %8402 = vmatprep.subr.mxu0 0.0
    %8403 = vmatpush1.msra.mxu0 0.0
    %8404 = vmatprep.subr.mxu0 0.0
    %8405 = vmatpush1.msra.mxu0 0.0
    %8406 = vmatprep.subr.mxu0 0.0
    %8407 = vmatpush1.msra.mxu0 0.0
    %8408 = vmatprep.subr.mxu0 0.0
    %8409 = vmatpush1.msra.mxu0 0.0
    %8410 = vmatprep.subr.mxu0 0.0
    %8411 = vmatpush1.msra.mxu0 0.0
    %8412 = vmatprep.subr.mxu0 0.0
    %8413 = vmatpush1.msra.mxu0 0.0
    %8414 = vmatprep.subr.mxu0 0.0
    %8415 = vmatpush1.msra.mxu0 0.0
    %8416 = vmatprep.subr.mxu0 0.0
    %8417 = vmatpush1.msra.mxu0 0.0
    %8418 = vmatprep.subr.mxu0 0.0
    %8419 = vmatpush1.msra.mxu0 0.0
    %8420 = vmatprep.subr.mxu0 0.0
    %8421 = vmatpush1.msra.mxu0 0.0
    %8422 = vmatprep.subr.mxu0 0.0
    %8423 = vmatpush1.msra.mxu0 0.0
    %8424 = vmatprep.subr.mxu0 0.0
    %8425 = vmatpush1.msra.mxu0 0.0
    %8426 = vmatprep.subr.mxu0 0.0
    %8427 = vmatpush1.msra.mxu0 0.0
    %8428 = vmatprep.subr.mxu0 0.0
    %8429 = vmatpush1.msra.mxu0 0.0
    %8430 = vmatprep.subr.mxu0 0.0
    %8431 = vmatpush1.msra.mxu0 0.0
    %8432 = vmatprep.subr.mxu0 0.0
    %8433 = vmatpush1.msra.mxu0 0.0
    %8434 = vmatprep.subr.mxu0 0.0
    %8435 = vmatpush1.msra.mxu0 0.0
    %8436 = vmatprep.subr.mxu0 0.0
    %8437 = vmatpush1.msra.mxu0 0.0
    %8438 = vmatprep.subr.mxu0 0.0
    %8439 = vmatpush1.msra.mxu0 0.0
    %8440 = vmatprep.subr.mxu0 0.0
    %8441 = vmatpush1.msra.mxu0 0.0
    %8442 = vmatprep.mubr.f32.mxu0 0.0
    %v8443 = vand.u32 %v8277, 4294901760
    %8444 = vmatmul.mubr.f32.gmra.mrb[0].mxu0 %v8443
    %v8445 = vpop.f32.mrb[0].mxu0
    %v8446 = vadd.f32 %v8355, %v8445
    %v8447 = vpop.f32.mrb[0].mxu0
    %8448 = vdwg.mxu0
    %8449 = vmatprep.subr.mxu0 0.0
    %v8450 = vand.u32 %v8271, 4294901760
    %v8451 = vsub.f32 %v8271, %v8450
    %8452 = vmatpush1.msra.mxu0 %v8451
    %8453 = vmatprep.subr.mxu0 0.0
    %v8454 = vand.u32 %v8272, 4294901760
    %v8455 = vsub.f32 %v8272, %v8454
    %8456 = vmatpush1.msra.mxu0 %v8455
    %8457 = vmatprep.subr.mxu0 0.0
    %v8458 = vand.u32 %v8273, 4294901760
    %v8459 = vsub.f32 %v8273, %v8458
    %8460 = vmatpush1.msra.mxu0 %v8459
    %8461 = vmatprep.subr.mxu0 0.0
    %v8462 = vand.u32 %v8274, 4294901760
    %v8463 = vsub.f32 %v8274, %v8462
    %8464 = vmatpush1.msra.mxu0 %v8463
    %8465 = vmatprep.subr.mxu0 0.0
    %8466 = vmatpush1.msra.mxu0 0.0
    %8467 = vmatprep.subr.mxu0 0.0
    %8468 = vmatpush1.msra.mxu0 0.0
    %8469 = vmatprep.subr.mxu0 0.0
    %8470 = vmatpush1.msra.mxu0 0.0
    %8471 = vmatprep.subr.mxu0 0.0
    %8472 = vmatpush1.msra.mxu0 0.0
    %8473 = vmatprep.subr.mxu0 0.0
    %8474 = vmatpush1.msra.mxu0 0.0
    %8475 = vmatprep.subr.mxu0 0.0
    %8476 = vmatpush1.msra.mxu0 0.0
    %8477 = vmatprep.subr.mxu0 0.0
    %8478 = vmatpush1.msra.mxu0 0.0
    %8479 = vmatprep.subr.mxu0 0.0
    %8480 = vmatpush1.msra.mxu0 0.0
    %8481 = vmatprep.subr.mxu0 0.0
    %8482 = vmatpush1.msra.mxu0 0.0
    %8483 = vmatprep.subr.mxu0 0.0
    %8484 = vmatpush1.msra.mxu0 0.0
    %8485 = vmatprep.subr.mxu0 0.0
    %8486 = vmatpush1.msra.mxu0 0.0
    %8487 = vmatprep.subr.mxu0 0.0
    %8488 = vmatpush1.msra.mxu0 0.0
    %8489 = vmatprep.subr.mxu0 0.0
    %8490 = vmatpush1.msra.mxu0 0.0
    %8491 = vmatprep.subr.mxu0 0.0
    %8492 = vmatpush1.msra.mxu0 0.0
    %8493 = vmatprep.subr.mxu0 0.0
    %8494 = vmatpush1.msra.mxu0 0.0
    %8495 = vmatprep.subr.mxu0 0.0
    %8496 = vmatpush1.msra.mxu0 0.0
    %8497 = vmatprep.subr.mxu0 0.0
    %8498 = vmatpush1.msra.mxu0 0.0
    %8499 = vmatprep.subr.mxu0 0.0
    %8500 = vmatpush1.msra.mxu0 0.0
    %8501 = vmatprep.subr.mxu0 0.0
    %8502 = vmatpush1.msra.mxu0 0.0
    %8503 = vmatprep.subr.mxu0 0.0
    %8504 = vmatpush1.msra.mxu0 0.0
    %8505 = vmatprep.subr.mxu0 0.0
    %8506 = vmatpush1.msra.mxu0 0.0
    %8507 = vmatprep.subr.mxu0 0.0
    %8508 = vmatpush1.msra.mxu0 0.0
    %8509 = vmatprep.subr.mxu0 0.0
    %8510 = vmatpush1.msra.mxu0 0.0
    %8511 = vmatprep.subr.mxu0 0.0
    %8512 = vmatpush1.msra.mxu0 0.0
    %8513 = vmatprep.subr.mxu0 0.0
    %8514 = vmatpush1.msra.mxu0 0.0
    %8515 = vmatprep.subr.mxu0 0.0
    %8516 = vmatpush1.msra.mxu0 0.0
    %8517 = vmatprep.subr.mxu0 0.0
    %8518 = vmatpush1.msra.mxu0 0.0
    %8519 = vmatprep.subr.mxu0 0.0
    %8520 = vmatpush1.msra.mxu0 0.0
    %8521 = vmatprep.mubr.f32.mxu0 0.0
    %v8522 = vand.u32 %v8277, 4294901760
    %v8523 = vsub.f32 %v8277, %v8522
    %8524 = vmatmul.mubr.f32.gmra.mrb[0].mxu0 %v8523
    %v8525 = vpop.f32.mrb[0].mxu0
    %v8526 = vadd.f32 %v8446, %v8525
    %v8527 = vpop.f32.mrb[0].mxu0
    %8528 = vdwg.mxu0
    %8529 = vmatprep.subr.mxu0 0.0
    %v8530 = vand.u32 %v8271, 4294901760
    %8531 = vmatpush1.msra.mxu0 %v8530
    %8532 = vmatprep.subr.mxu0 0.0
    %v8533 = vand.u32 %v8272, 4294901760
    %8534 = vmatpush1.msra.mxu0 %v8533
    %8535 = vmatprep.subr.mxu0 0.0
    %v8536 = vand.u32 %v8273, 4294901760
    %8537 = vmatpush1.msra.mxu0 %v8536
    %8538 = vmatprep.subr.mxu0 0.0
    %v8539 = vand.u32 %v8274, 4294901760
    %8540 = vmatpush1.msra.mxu0 %v8539
    %8541 = vmatprep.subr.mxu0 0.0
    %8542 = vmatpush1.msra.mxu0 0.0
    %8543 = vmatprep.subr.mxu0 0.0
    %8544 = vmatpush1.msra.mxu0 0.0
    %8545 = vmatprep.subr.mxu0 0.0
    %8546 = vmatpush1.msra.mxu0 0.0
    %8547 = vmatprep.subr.mxu0 0.0
    %8548 = vmatpush1.msra.mxu0 0.0
    %8549 = vmatprep.subr.mxu0 0.0
    %8550 = vmatpush1.msra.mxu0 0.0
    %8551 = vmatprep.subr.mxu0 0.0
    %8552 = vmatpush1.msra.mxu0 0.0
    %8553 = vmatprep.subr.mxu0 0.0
    %8554 = vmatpush1.msra.mxu0 0.0
    %8555 = vmatprep.subr.mxu0 0.0
    %8556 = vmatpush1.msra.mxu0 0.0
    %8557 = vmatprep.subr.mxu0 0.0
    %8558 = vmatpush1.msra.mxu0 0.0
    %8559 = vmatprep.subr.mxu0 0.0
    %8560 = vmatpush1.msra.mxu0 0.0
    %8561 = vmatprep.subr.mxu0 0.0
    %8562 = vmatpush1.msra.mxu0 0.0
    %8563 = vmatprep.subr.mxu0 0.0
    %8564 = vmatpush1.msra.mxu0 0.0
    %8565 = vmatprep.subr.mxu0 0.0
    %8566 = vmatpush1.msra.mxu0 0.0
    %8567 = vmatprep.subr.mxu0 0.0
    %8568 = vmatpush1.msra.mxu0 0.0
    %8569 = vmatprep.subr.mxu0 0.0
    %8570 = vmatpush1.msra.mxu0 0.0
    %8571 = vmatprep.subr.mxu0 0.0
    %8572 = vmatpush1.msra.mxu0 0.0
    %8573 = vmatprep.subr.mxu0 0.0
    %8574 = vmatpush1.msra.mxu0 0.0
    %8575 = vmatprep.subr.mxu0 0.0
    %8576 = vmatpush1.msra.mxu0 0.0
    %8577 = vmatprep.subr.mxu0 0.0
    %8578 = vmatpush1.msra.mxu0 0.0
    %8579 = vmatprep.subr.mxu0 0.0
    %8580 = vmatpush1.msra.mxu0 0.0
    %8581 = vmatprep.subr.mxu0 0.0
    %8582 = vmatpush1.msra.mxu0 0.0
    %8583 = vmatprep.subr.mxu0 0.0
    %8584 = vmatpush1.msra.mxu0 0.0
    %8585 = vmatprep.subr.mxu0 0.0
    %8586 = vmatpush1.msra.mxu0 0.0
    %8587 = vmatprep.subr.mxu0 0.0
    %8588 = vmatpush1.msra.mxu0 0.0
    %8589 = vmatprep.subr.mxu0 0.0
    %8590 = vmatpush1.msra.mxu0 0.0
    %8591 = vmatprep.subr.mxu0 0.0
    %8592 = vmatpush1.msra.mxu0 0.0
    %8593 = vmatprep.subr.mxu0 0.0
    %8594 = vmatpush1.msra.mxu0 0.0
    %8595 = vmatprep.subr.mxu0 0.0
    %8596 = vmatpush1.msra.mxu0 0.0
    %8597 = vmatprep.mubr.f32.mxu0 0.0
    %v8598 = vand.u32 %v8277, 4294901760
    %v8599 = vsub.f32 %v8277, %v8598
    %v8600 = vand.u32 %v8599, 4294901760
    %8601 = vmatmul.mubr.f32.gmra.mrb[0].mxu0 %v8600
    %v8602 = vpop.f32.mrb[0].mxu0
    %v8603 = vadd.f32 %v8526, %v8602
    %v8604 = vpop.f32.mrb[0].mxu0
    %8605 = vdwg.mxu0
    %8606 = vmatprep.subr.mxu0 0.0
    %v8607 = vand.u32 %v8271, 4294901760
    %v8608 = vsub.f32 %v8271, %v8607
    %v8609 = vand.u32 %v8608, 4294901760
    %8610 = vmatpush1.msra.mxu0 %v8609
    %8611 = vmatprep.subr.mxu0 0.0
    %v8612 = vand.u32 %v8272, 4294901760
    %v8613 = vsub.f32 %v8272, %v8612
    %v8614 = vand.u32 %v8613, 4294901760
    %8615 = vmatpush1.msra.mxu0 %v8614
    %8616 = vmatprep.subr.mxu0 0.0
    %v8617 = vand.u32 %v8273, 4294901760
    %v8618 = vsub.f32 %v8273, %v8617
    %v8619 = vand.u32 %v8618, 4294901760
    %8620 = vmatpush1.msra.mxu0 %v8619
    %8621 = vmatprep.subr.mxu0 0.0
    %v8622 = vand.u32 %v8274, 4294901760
    %v8623 = vsub.f32 %v8274, %v8622
    %v8624 = vand.u32 %v8623, 4294901760
    %8625 = vmatpush1.msra.mxu0 %v8624
    %8626 = vmatprep.subr.mxu0 0.0
    %8627 = vmatpush1.msra.mxu0 0.0
    %8628 = vmatprep.subr.mxu0 0.0
    %8629 = vmatpush1.msra.mxu0 0.0
    %8630 = vmatprep.subr.mxu0 0.0
    %8631 = vmatpush1.msra.mxu0 0.0
    %8632 = vmatprep.subr.mxu0 0.0
    %8633 = vmatpush1.msra.mxu0 0.0
    %8634 = vmatprep.subr.mxu0 0.0
    %8635 = vmatpush1.msra.mxu0 0.0
    %8636 = vmatprep.subr.mxu0 0.0
    %8637 = vmatpush1.msra.mxu0 0.0
    %8638 = vmatprep.subr.mxu0 0.0
    %8639 = vmatpush1.msra.mxu0 0.0
    %8640 = vmatprep.subr.mxu0 0.0
    %8641 = vmatpush1.msra.mxu0 0.0
    %8642 = vmatprep.subr.mxu0 0.0
    %8643 = vmatpush1.msra.mxu0 0.0
    %8644 = vmatprep.subr.mxu0 0.0
    %8645 = vmatpush1.msra.mxu0 0.0
    %8646 = vmatprep.subr.mxu0 0.0
    %8647 = vmatpush1.msra.mxu0 0.0
    %8648 = vmatprep.subr.mxu0 0.0
    %8649 = vmatpush1.msra.mxu0 0.0
    %8650 = vmatprep.subr.mxu0 0.0
    %8651 = vmatpush1.msra.mxu0 0.0
    %8652 = vmatprep.subr.mxu0 0.0
    %8653 = vmatpush1.msra.mxu0 0.0
    %8654 = vmatprep.subr.mxu0 0.0
    %8655 = vmatpush1.msra.mxu0 0.0
    %8656 = vmatprep.subr.mxu0 0.0
    %8657 = vmatpush1.msra.mxu0 0.0
    %8658 = vmatprep.subr.mxu0 0.0
    %8659 = vmatpush1.msra.mxu0 0.0
    %8660 = vmatprep.subr.mxu0 0.0
    %8661 = vmatpush1.msra.mxu0 0.0
    %8662 = vmatprep.subr.mxu0 0.0
    %8663 = vmatpush1.msra.mxu0 0.0
    %8664 = vmatprep.subr.mxu0 0.0
    %8665 = vmatpush1.msra.mxu0 0.0
    %8666 = vmatprep.subr.mxu0 0.0
    %8667 = vmatpush1.msra.mxu0 0.0
    %8668 = vmatprep.subr.mxu0 0.0
    %8669 = vmatpush1.msra.mxu0 0.0
    %8670 = vmatprep.subr.mxu0 0.0
    %8671 = vmatpush1.msra.mxu0 0.0
    %8672 = vmatprep.subr.mxu0 0.0
    %8673 = vmatpush1.msra.mxu0 0.0
    %8674 = vmatprep.subr.mxu0 0.0
    %8675 = vmatpush1.msra.mxu0 0.0
    %8676 = vmatprep.subr.mxu0 0.0
    %8677 = vmatpush1.msra.mxu0 0.0
    %8678 = vmatprep.subr.mxu0 0.0
    %8679 = vmatpush1.msra.mxu0 0.0
    %8680 = vmatprep.subr.mxu0 0.0
    %8681 = vmatpush1.msra.mxu0 0.0
    %8682 = vmatprep.mubr.f32.mxu0 0.0
    %v8683 = vand.u32 %v8277, 4294901760
    %8684 = vmatmul.mubr.f32.gmra.mrb[0].mxu0 %v8683
    %v8685 = vpop.f32.mrb[0].mxu0
    %v8686 = vadd.f32 %v8603, %v8685
    %v8687 = vpop.f32.mrb[0].mxu0
    %8688 = vdwg.mxu0
    %8689 = vmatprep.subr.mxu0 0.0
    %v8690 = vand.u32 %v8271, 4294901760
    %8691 = vmatpush1.msra.mxu0 %v8690
    %8692 = vmatprep.subr.mxu0 0.0
    %v8693 = vand.u32 %v8272, 4294901760
    %8694 = vmatpush1.msra.mxu0 %v8693
    %8695 = vmatprep.subr.mxu0 0.0
    %v8696 = vand.u32 %v8273, 4294901760
    %8697 = vmatpush1.msra.mxu0 %v8696
    %8698 = vmatprep.subr.mxu0 0.0
    %v8699 = vand.u32 %v8274, 4294901760
    %8700 = vmatpush1.msra.mxu0 %v8699
    %8701 = vmatprep.subr.mxu0 0.0
    %8702 = vmatpush1.msra.mxu0 0.0
    %8703 = vmatprep.subr.mxu0 0.0
    %8704 = vmatpush1.msra.mxu0 0.0
    %8705 = vmatprep.subr.mxu0 0.0
    %8706 = vmatpush1.msra.mxu0 0.0
    %8707 = vmatprep.subr.mxu0 0.0
    %8708 = vmatpush1.msra.mxu0 0.0
    %8709 = vmatprep.subr.mxu0 0.0
    %8710 = vmatpush1.msra.mxu0 0.0
    %8711 = vmatprep.subr.mxu0 0.0
    %8712 = vmatpush1.msra.mxu0 0.0
    %8713 = vmatprep.subr.mxu0 0.0
    %8714 = vmatpush1.msra.mxu0 0.0
    %8715 = vmatprep.subr.mxu0 0.0
    %8716 = vmatpush1.msra.mxu0 0.0
    %8717 = vmatprep.subr.mxu0 0.0
    %8718 = vmatpush1.msra.mxu0 0.0
    %8719 = vmatprep.subr.mxu0 0.0
    %8720 = vmatpush1.msra.mxu0 0.0
    %8721 = vmatprep.subr.mxu0 0.0
    %8722 = vmatpush1.msra.mxu0 0.0
    %8723 = vmatprep.subr.mxu0 0.0
    %8724 = vmatpush1.msra.mxu0 0.0
    %8725 = vmatprep.subr.mxu0 0.0
    %8726 = vmatpush1.msra.mxu0 0.0
    %8727 = vmatprep.subr.mxu0 0.0
    %8728 = vmatpush1.msra.mxu0 0.0
    %8729 = vmatprep.subr.mxu0 0.0
    %8730 = vmatpush1.msra.mxu0 0.0
    %8731 = vmatprep.subr.mxu0 0.0
    %8732 = vmatpush1.msra.mxu0 0.0
    %8733 = vmatprep.subr.mxu0 0.0
    %8734 = vmatpush1.msra.mxu0 0.0
    %8735 = vmatprep.subr.mxu0 0.0
    %8736 = vmatpush1.msra.mxu0 0.0
    %8737 = vmatprep.subr.mxu0 0.0
    %8738 = vmatpush1.msra.mxu0 0.0
    %8739 = vmatprep.subr.mxu0 0.0
    %8740 = vmatpush1.msra.mxu0 0.0
    %8741 = vmatprep.subr.mxu0 0.0
    %8742 = vmatpush1.msra.mxu0 0.0
    %8743 = vmatprep.subr.mxu0 0.0
    %8744 = vmatpush1.msra.mxu0 0.0
    %8745 = vmatprep.subr.mxu0 0.0
    %8746 = vmatpush1.msra.mxu0 0.0
    %8747 = vmatprep.subr.mxu0 0.0
    %8748 = vmatpush1.msra.mxu0 0.0
    %8749 = vmatprep.subr.mxu0 0.0
    %8750 = vmatpush1.msra.mxu0 0.0
    %8751 = vmatprep.subr.mxu0 0.0
    %8752 = vmatpush1.msra.mxu0 0.0
    %8753 = vmatprep.subr.mxu0 0.0
    %8754 = vmatpush1.msra.mxu0 0.0
    %8755 = vmatprep.subr.mxu0 0.0
    %8756 = vmatpush1.msra.mxu0 0.0
    %8757 = vmatprep.mubr.f32.mxu0 0.0
    %v8758 = vand.u32 %v8277, 4294901760
    %8759 = vmatmul.mubr.f32.gmra.mrb[0].mxu0 %v8758
    %v8760 = vpop.f32.mrb[0].mxu0
    %v8761 = vadd.f32 %v8686, %v8760
    %v8762 = vpop.f32.mrb[0].mxu0
    %8763 = vdwg.mxu0
    %v8764 = vsel %vm1899, %v8263, 0
    %8766 = vmatprep.subr.mxu0 0.0
    %v8767 = vand.u32 %v8266, 4294901760
    %8768 = vmatpush1.msra.mxu0 %v8767
    %8769 = vmatprep.subr.mxu0 0.0
    %v8770 = vand.u32 %v8267, 4294901760
    %8771 = vmatpush1.msra.mxu0 %v8770
    %8772 = vmatprep.subr.mxu0 0.0
    %v8773 = vand.u32 %v8268, 4294901760
    %8774 = vmatpush1.msra.mxu0 %v8773
    %8775 = vmatprep.subr.mxu0 0.0
    %v8776 = vand.u32 %v8269, 4294901760
    %8777 = vmatpush1.msra.mxu0 %v8776
    %8778 = vmatprep.subr.mxu0 0.0
    %8779 = vmatpush1.msra.mxu0 0.0
    %8780 = vmatprep.subr.mxu0 0.0
    %8781 = vmatpush1.msra.mxu0 0.0
    %8782 = vmatprep.subr.mxu0 0.0
    %8783 = vmatpush1.msra.mxu0 0.0
    %8784 = vmatprep.subr.mxu0 0.0
    %8785 = vmatpush1.msra.mxu0 0.0
    %8786 = vmatprep.subr.mxu0 0.0
    %8787 = vmatpush1.msra.mxu0 0.0
    %8788 = vmatprep.subr.mxu0 0.0
    %8789 = vmatpush1.msra.mxu0 0.0
    %8790 = vmatprep.subr.mxu0 0.0
    %8791 = vmatpush1.msra.mxu0 0.0
    %8792 = vmatprep.subr.mxu0 0.0
    %8793 = vmatpush1.msra.mxu0 0.0
    %8794 = vmatprep.subr.mxu0 0.0
    %8795 = vmatpush1.msra.mxu0 0.0
    %8796 = vmatprep.subr.mxu0 0.0
    %8797 = vmatpush1.msra.mxu0 0.0
    %8798 = vmatprep.subr.mxu0 0.0
    %8799 = vmatpush1.msra.mxu0 0.0
    %8800 = vmatprep.subr.mxu0 0.0
    %8801 = vmatpush1.msra.mxu0 0.0
    %8802 = vmatprep.subr.mxu0 0.0
    %8803 = vmatpush1.msra.mxu0 0.0
    %8804 = vmatprep.subr.mxu0 0.0
    %8805 = vmatpush1.msra.mxu0 0.0
    %8806 = vmatprep.subr.mxu0 0.0
    %8807 = vmatpush1.msra.mxu0 0.0
    %8808 = vmatprep.subr.mxu0 0.0
    %8809 = vmatpush1.msra.mxu0 0.0
    %8810 = vmatprep.subr.mxu0 0.0
    %8811 = vmatpush1.msra.mxu0 0.0
    %8812 = vmatprep.subr.mxu0 0.0
    %8813 = vmatpush1.msra.mxu0 0.0
    %8814 = vmatprep.subr.mxu0 0.0
    %8815 = vmatpush1.msra.mxu0 0.0
    %8816 = vmatprep.subr.mxu0 0.0
    %8817 = vmatpush1.msra.mxu0 0.0
    %8818 = vmatprep.subr.mxu0 0.0
    %8819 = vmatpush1.msra.mxu0 0.0
    %8820 = vmatprep.subr.mxu0 0.0
    %8821 = vmatpush1.msra.mxu0 0.0
    %8822 = vmatprep.subr.mxu0 0.0
    %8823 = vmatpush1.msra.mxu0 0.0
    %8824 = vmatprep.subr.mxu0 0.0
    %8825 = vmatpush1.msra.mxu0 0.0
    %8826 = vmatprep.subr.mxu0 0.0
    %8827 = vmatpush1.msra.mxu0 0.0
    %8828 = vmatprep.subr.mxu0 0.0
    %8829 = vmatpush1.msra.mxu0 0.0
    %8830 = vmatprep.subr.mxu0 0.0
    %8831 = vmatpush1.msra.mxu0 0.0
    %8832 = vmatprep.subr.mxu0 0.0
    %8833 = vmatpush1.msra.mxu0 0.0
    %8834 = vmatprep.mubr.f32.mxu0 0.0
    %v8835 = vand.u32 %v8764, 4294901760
    %v8836 = vsub.f32 %v8764, %v8835
    %v8837 = vand.u32 %v8836, 4294901760
    %v8838 = vsub.f32 %v8836, %v8837
    %v8839 = vand.u32 %v8838, 4294901760
    %8840 = vmatmul.mubr.f32.gmra.mrb[0].mxu0 %v8839
    %v8841 = vpop.f32.mrb[0].mxu0
    %v8842 = vadd.f32 %v8761, %v8841
    %v8843 = vpop.f32.mrb[0].mxu0
    %8844 = vdwg.mxu0
    %8845 = vmatprep.subr.mxu0 0.0
    %v8846 = vand.u32 %v8266, 4294901760
    %v8847 = vsub.f32 %v8266, %v8846
    %v8848 = vand.u32 %v8847, 4294901760
    %v8849 = vsub.f32 %v8847, %v8848
    %v8850 = vand.u32 %v8849, 4294901760
    %8851 = vmatpush1.msra.mxu0 %v8850
    %8852 = vmatprep.subr.mxu0 0.0
    %v8853 = vand.u32 %v8267, 4294901760
    %v8854 = vsub.f32 %v8267, %v8853
    %v8855 = vand.u32 %v8854, 4294901760
    %v8856 = vsub.f32 %v8854, %v8855
    %v8857 = vand.u32 %v8856, 4294901760
    %8858 = vmatpush1.msra.mxu0 %v8857
    %8859 = vmatprep.subr.mxu0 0.0
    %v8860 = vand.u32 %v8268, 4294901760
    %v8861 = vsub.f32 %v8268, %v8860
    %v8862 = vand.u32 %v8861, 4294901760
    %v8863 = vsub.f32 %v8861, %v8862
    %v8864 = vand.u32 %v8863, 4294901760
    %8865 = vmatpush1.msra.mxu0 %v8864
    %8866 = vmatprep.subr.mxu0 0.0
    %v8867 = vand.u32 %v8269, 4294901760
    %v8868 = vsub.f32 %v8269, %v8867
    %v8869 = vand.u32 %v8868, 4294901760
    %v8870 = vsub.f32 %v8868, %v8869
    %v8871 = vand.u32 %v8870, 4294901760
    %8872 = vmatpush1.msra.mxu0 %v8871
    %8873 = vmatprep.subr.mxu0 0.0
    %8874 = vmatpush1.msra.mxu0 0.0
    %8875 = vmatprep.subr.mxu0 0.0
    %8876 = vmatpush1.msra.mxu0 0.0
    %8877 = vmatprep.subr.mxu0 0.0
    %8878 = vmatpush1.msra.mxu0 0.0
    %8879 = vmatprep.subr.mxu0 0.0
    %8880 = vmatpush1.msra.mxu0 0.0
    %8881 = vmatprep.subr.mxu0 0.0
    %8882 = vmatpush1.msra.mxu0 0.0
    %8883 = vmatprep.subr.mxu0 0.0
    %8884 = vmatpush1.msra.mxu0 0.0
    %8885 = vmatprep.subr.mxu0 0.0
    %8886 = vmatpush1.msra.mxu0 0.0
    %8887 = vmatprep.subr.mxu0 0.0
    %8888 = vmatpush1.msra.mxu0 0.0
    %8889 = vmatprep.subr.mxu0 0.0
    %8890 = vmatpush1.msra.mxu0 0.0
    %8891 = vmatprep.subr.mxu0 0.0
    %8892 = vmatpush1.msra.mxu0 0.0
    %8893 = vmatprep.subr.mxu0 0.0
    %8894 = vmatpush1.msra.mxu0 0.0
    %8895 = vmatprep.subr.mxu0 0.0
    %8896 = vmatpush1.msra.mxu0 0.0
    %8897 = vmatprep.subr.mxu0 0.0
    %8898 = vmatpush1.msra.mxu0 0.0
    %8899 = vmatprep.subr.mxu0 0.0
    %8900 = vmatpush1.msra.mxu0 0.0
    %8901 = vmatprep.subr.mxu0 0.0
    %8902 = vmatpush1.msra.mxu0 0.0
    %8903 = vmatprep.subr.mxu0 0.0
    %8904 = vmatpush1.msra.mxu0 0.0
    %8905 = vmatprep.subr.mxu0 0.0
    %8906 = vmatpush1.msra.mxu0 0.0
    %8907 = vmatprep.subr.mxu0 0.0
    %8908 = vmatpush1.msra.mxu0 0.0
    %8909 = vmatprep.subr.mxu0 0.0
    %8910 = vmatpush1.msra.mxu0 0.0
    %8911 = vmatprep.subr.mxu0 0.0
    %8912 = vmatpush1.msra.mxu0 0.0
    %8913 = vmatprep.subr.mxu0 0.0
    %8914 = vmatpush1.msra.mxu0 0.0
    %8915 = vmatprep.subr.mxu0 0.0
    %8916 = vmatpush1.msra.mxu0 0.0
    %8917 = vmatprep.subr.mxu0 0.0
    %8918 = vmatpush1.msra.mxu0 0.0
    %8919 = vmatprep.subr.mxu0 0.0
    %8920 = vmatpush1.msra.mxu0 0.0
    %8921 = vmatprep.subr.mxu0 0.0
    %8922 = vmatpush1.msra.mxu0 0.0
    %8923 = vmatprep.subr.mxu0 0.0
    %8924 = vmatpush1.msra.mxu0 0.0
    %8925 = vmatprep.subr.mxu0 0.0
    %8926 = vmatpush1.msra.mxu0 0.0
    %8927 = vmatprep.subr.mxu0 0.0
    %8928 = vmatpush1.msra.mxu0 0.0
    %8929 = vmatprep.mubr.f32.mxu0 0.0
    %v8930 = vand.u32 %v8764, 4294901760
    %8931 = vmatmul.mubr.f32.gmra.mrb[0].mxu0 %v8930
    %v8932 = vpop.f32.mrb[0].mxu0
    %v8933 = vadd.f32 %v8842, %v8932
    %v8934 = vpop.f32.mrb[0].mxu0
    %8935 = vdwg.mxu0
    %8936 = vmatprep.subr.mxu0 0.0
    %v8937 = vand.u32 %v8266, 4294901760
    %v8938 = vsub.f32 %v8266, %v8937
    %8939 = vmatpush1.msra.mxu0 %v8938
    %8940 = vmatprep.subr.mxu0 0.0
    %v8941 = vand.u32 %v8267, 4294901760
    %v8942 = vsub.f32 %v8267, %v8941
    %8943 = vmatpush1.msra.mxu0 %v8942
    %8944 = vmatprep.subr.mxu0 0.0
    %v8945 = vand.u32 %v8268, 4294901760
    %v8946 = vsub.f32 %v8268, %v8945
    %8947 = vmatpush1.msra.mxu0 %v8946
    %8948 = vmatprep.subr.mxu0 0.0
    %v8949 = vand.u32 %v8269, 4294901760
    %v8950 = vsub.f32 %v8269, %v8949
    %8951 = vmatpush1.msra.mxu0 %v8950
    %8952 = vmatprep.subr.mxu0 0.0
    %8953 = vmatpush1.msra.mxu0 0.0
    %8954 = vmatprep.subr.mxu0 0.0
    %8955 = vmatpush1.msra.mxu0 0.0
    %8956 = vmatprep.subr.mxu0 0.0
    %8957 = vmatpush1.msra.mxu0 0.0
    %8958 = vmatprep.subr.mxu0 0.0
    %8959 = vmatpush1.msra.mxu0 0.0
    %8960 = vmatprep.subr.mxu0 0.0
    %8961 = vmatpush1.msra.mxu0 0.0
    %8962 = vmatprep.subr.mxu0 0.0
    %8963 = vmatpush1.msra.mxu0 0.0
    %8964 = vmatprep.subr.mxu0 0.0
    %8965 = vmatpush1.msra.mxu0 0.0
    %8966 = vmatprep.subr.mxu0 0.0
    %8967 = vmatpush1.msra.mxu0 0.0
    %8968 = vmatprep.subr.mxu0 0.0
    %8969 = vmatpush1.msra.mxu0 0.0
    %8970 = vmatprep.subr.mxu0 0.0
    %8971 = vmatpush1.msra.mxu0 0.0
    %8972 = vmatprep.subr.mxu0 0.0
    %8973 = vmatpush1.msra.mxu0 0.0
    %8974 = vmatprep.subr.mxu0 0.0
    %8975 = vmatpush1.msra.mxu0 0.0
    %8976 = vmatprep.subr.mxu0 0.0
    %8977 = vmatpush1.msra.mxu0 0.0
    %8978 = vmatprep.subr.mxu0 0.0
    %8979 = vmatpush1.msra.mxu0 0.0
    %8980 = vmatprep.subr.mxu0 0.0
    %8981 = vmatpush1.msra.mxu0 0.0
    %8982 = vmatprep.subr.mxu0 0.0
    %8983 = vmatpush1.msra.mxu0 0.0
    %8984 = vmatprep.subr.mxu0 0.0
    %8985 = vmatpush1.msra.mxu0 0.0
    %8986 = vmatprep.subr.mxu0 0.0
    %8987 = vmatpush1.msra.mxu0 0.0
    %8988 = vmatprep.subr.mxu0 0.0
    %8989 = vmatpush1.msra.mxu0 0.0
    %8990 = vmatprep.subr.mxu0 0.0
    %8991 = vmatpush1.msra.mxu0 0.0
    %8992 = vmatprep.subr.mxu0 0.0
    %8993 = vmatpush1.msra.mxu0 0.0
    %8994 = vmatprep.subr.mxu0 0.0
    %8995 = vmatpush1.msra.mxu0 0.0
    %8996 = vmatprep.subr.mxu0 0.0
    %8997 = vmatpush1.msra.mxu0 0.0
    %8998 = vmatprep.subr.mxu0 0.0
    %8999 = vmatpush1.msra.mxu0 0.0
    %9000 = vmatprep.subr.mxu0 0.0
    %9001 = vmatpush1.msra.mxu0 0.0
    %9002 = vmatprep.subr.mxu0 0.0
    %9003 = vmatpush1.msra.mxu0 0.0
    %9004 = vmatprep.subr.mxu0 0.0
    %9005 = vmatpush1.msra.mxu0 0.0
    %9006 = vmatprep.subr.mxu0 0.0
    %9007 = vmatpush1.msra.mxu0 0.0
    %9008 = vmatprep.mubr.f32.mxu0 0.0
    %v9009 = vand.u32 %v8764, 4294901760
    %v9010 = vsub.f32 %v8764, %v9009
    %9011 = vmatmul.mubr.f32.gmra.mrb[0].mxu0 %v9010
    %v9012 = vpop.f32.mrb[0].mxu0
    %v9013 = vadd.f32 %v8933, %v9012
    %v9014 = vpop.f32.mrb[0].mxu0
    %9015 = vdwg.mxu0
    %9016 = vmatprep.subr.mxu0 0.0
    %v9017 = vand.u32 %v8266, 4294901760
    %9018 = vmatpush1.msra.mxu0 %v9017
    %9019 = vmatprep.subr.mxu0 0.0
    %v9020 = vand.u32 %v8267, 4294901760
    %9021 = vmatpush1.msra.mxu0 %v9020
    %9022 = vmatprep.subr.mxu0 0.0
    %v9023 = vand.u32 %v8268, 4294901760
    %9024 = vmatpush1.msra.mxu0 %v9023
    %9025 = vmatprep.subr.mxu0 0.0
    %v9026 = vand.u32 %v8269, 4294901760
    %9027 = vmatpush1.msra.mxu0 %v9026
    %9028 = vmatprep.subr.mxu0 0.0
    %9029 = vmatpush1.msra.mxu0 0.0
    %9030 = vmatprep.subr.mxu0 0.0
    %9031 = vmatpush1.msra.mxu0 0.0
    %9032 = vmatprep.subr.mxu0 0.0
    %9033 = vmatpush1.msra.mxu0 0.0
    %9034 = vmatprep.subr.mxu0 0.0
    %9035 = vmatpush1.msra.mxu0 0.0
    %9036 = vmatprep.subr.mxu0 0.0
    %9037 = vmatpush1.msra.mxu0 0.0
    %9038 = vmatprep.subr.mxu0 0.0
    %9039 = vmatpush1.msra.mxu0 0.0
    %9040 = vmatprep.subr.mxu0 0.0
    %9041 = vmatpush1.msra.mxu0 0.0
    %9042 = vmatprep.subr.mxu0 0.0
    %9043 = vmatpush1.msra.mxu0 0.0
    %9044 = vmatprep.subr.mxu0 0.0
    %9045 = vmatpush1.msra.mxu0 0.0
    %9046 = vmatprep.subr.mxu0 0.0
    %9047 = vmatpush1.msra.mxu0 0.0
    %9048 = vmatprep.subr.mxu0 0.0
    %9049 = vmatpush1.msra.mxu0 0.0
    %9050 = vmatprep.subr.mxu0 0.0
    %9051 = vmatpush1.msra.mxu0 0.0
    %9052 = vmatprep.subr.mxu0 0.0
    %9053 = vmatpush1.msra.mxu0 0.0
    %9054 = vmatprep.subr.mxu0 0.0
    %9055 = vmatpush1.msra.mxu0 0.0
    %9056 = vmatprep.subr.mxu0 0.0
    %9057 = vmatpush1.msra.mxu0 0.0
    %9058 = vmatprep.subr.mxu0 0.0
    %9059 = vmatpush1.msra.mxu0 0.0
    %9060 = vmatprep.subr.mxu0 0.0
    %9061 = vmatpush1.msra.mxu0 0.0
    %9062 = vmatprep.subr.mxu0 0.0
    %9063 = vmatpush1.msra.mxu0 0.0
    %9064 = vmatprep.subr.mxu0 0.0
    %9065 = vmatpush1.msra.mxu0 0.0
    %9066 = vmatprep.subr.mxu0 0.0
    %9067 = vmatpush1.msra.mxu0 0.0
    %9068 = vmatprep.subr.mxu0 0.0
    %9069 = vmatpush1.msra.mxu0 0.0
    %9070 = vmatprep.subr.mxu0 0.0
    %9071 = vmatpush1.msra.mxu0 0.0
    %9072 = vmatprep.subr.mxu0 0.0
    %9073 = vmatpush1.msra.mxu0 0.0
    %9074 = vmatprep.subr.mxu0 0.0
    %9075 = vmatpush1.msra.mxu0 0.0
    %9076 = vmatprep.subr.mxu0 0.0
    %9077 = vmatpush1.msra.mxu0 0.0
    %9078 = vmatprep.subr.mxu0 0.0
    %9079 = vmatpush1.msra.mxu0 0.0
    %9080 = vmatprep.subr.mxu0 0.0
    %9081 = vmatpush1.msra.mxu0 0.0
    %9082 = vmatprep.subr.mxu0 0.0
    %9083 = vmatpush1.msra.mxu0 0.0
    %9084 = vmatprep.mubr.f32.mxu0 0.0
    %v9085 = vand.u32 %v8764, 4294901760
    %v9086 = vsub.f32 %v8764, %v9085
    %v9087 = vand.u32 %v9086, 4294901760
    %9088 = vmatmul.mubr.f32.gmra.mrb[0].mxu0 %v9087
    %v9089 = vpop.f32.mrb[0].mxu0
    %v9090 = vadd.f32 %v9013, %v9089
    %v9091 = vpop.f32.mrb[0].mxu0
    %9092 = vdwg.mxu0
    %9093 = vmatprep.subr.mxu0 0.0
    %v9094 = vand.u32 %v8266, 4294901760
    %v9095 = vsub.f32 %v8266, %v9094
    %v9096 = vand.u32 %v9095, 4294901760
    %9097 = vmatpush1.msra.mxu0 %v9096
    %9098 = vmatprep.subr.mxu0 0.0
    %v9099 = vand.u32 %v8267, 4294901760
    %v9100 = vsub.f32 %v8267, %v9099
    %v9101 = vand.u32 %v9100, 4294901760
    %9102 = vmatpush1.msra.mxu0 %v9101
    %9103 = vmatprep.subr.mxu0 0.0
    %v9104 = vand.u32 %v8268, 4294901760
    %v9105 = vsub.f32 %v8268, %v9104
    %v9106 = vand.u32 %v9105, 4294901760
    %9107 = vmatpush1.msra.mxu0 %v9106
    %9108 = vmatprep.subr.mxu0 0.0
    %v9109 = vand.u32 %v8269, 4294901760
    %v9110 = vsub.f32 %v8269, %v9109
    %v9111 = vand.u32 %v9110, 4294901760
    %9112 = vmatpush1.msra.mxu0 %v9111
    %9113 = vmatprep.subr.mxu0 0.0
    %9114 = vmatpush1.msra.mxu0 0.0
    %9115 = vmatprep.subr.mxu0 0.0
    %9116 = vmatpush1.msra.mxu0 0.0
    %9117 = vmatprep.subr.mxu0 0.0
    %9118 = vmatpush1.msra.mxu0 0.0
    %9119 = vmatprep.subr.mxu0 0.0
    %9120 = vmatpush1.msra.mxu0 0.0
    %9121 = vmatprep.subr.mxu0 0.0
    %9122 = vmatpush1.msra.mxu0 0.0
    %9123 = vmatprep.subr.mxu0 0.0
    %9124 = vmatpush1.msra.mxu0 0.0
    %9125 = vmatprep.subr.mxu0 0.0
    %9126 = vmatpush1.msra.mxu0 0.0
    %9127 = vmatprep.subr.mxu0 0.0
    %9128 = vmatpush1.msra.mxu0 0.0
    %9129 = vmatprep.subr.mxu0 0.0
    %9130 = vmatpush1.msra.mxu0 0.0
    %9131 = vmatprep.subr.mxu0 0.0
    %9132 = vmatpush1.msra.mxu0 0.0
    %9133 = vmatprep.subr.mxu0 0.0
    %9134 = vmatpush1.msra.mxu0 0.0
    %9135 = vmatprep.subr.mxu0 0.0
    %9136 = vmatpush1.msra.mxu0 0.0
    %9137 = vmatprep.subr.mxu0 0.0
    %9138 = vmatpush1.msra.mxu0 0.0
    %9139 = vmatprep.subr.mxu0 0.0
    %9140 = vmatpush1.msra.mxu0 0.0
    %9141 = vmatprep.subr.mxu0 0.0
    %9142 = vmatpush1.msra.mxu0 0.0
    %9143 = vmatprep.subr.mxu0 0.0
    %9144 = vmatpush1.msra.mxu0 0.0
    %9145 = vmatprep.subr.mxu0 0.0
    %9146 = vmatpush1.msra.mxu0 0.0
    %9147 = vmatprep.subr.mxu0 0.0
    %9148 = vmatpush1.msra.mxu0 0.0
    %9149 = vmatprep.subr.mxu0 0.0
    %9150 = vmatpush1.msra.mxu0 0.0
    %9151 = vmatprep.subr.mxu0 0.0
    %9152 = vmatpush1.msra.mxu0 0.0
    %9153 = vmatprep.subr.mxu0 0.0
    %9154 = vmatpush1.msra.mxu0 0.0
    %9155 = vmatprep.subr.mxu0 0.0
    %9156 = vmatpush1.msra.mxu0 0.0
    %9157 = vmatprep.subr.mxu0 0.0
    %9158 = vmatpush1.msra.mxu0 0.0
    %9159 = vmatprep.subr.mxu0 0.0
    %9160 = vmatpush1.msra.mxu0 0.0
    %9161 = vmatprep.subr.mxu0 0.0
    %9162 = vmatpush1.msra.mxu0 0.0
    %9163 = vmatprep.subr.mxu0 0.0
    %9164 = vmatpush1.msra.mxu0 0.0
    %9165 = vmatprep.subr.mxu0 0.0
    %9166 = vmatpush1.msra.mxu0 0.0
    %9167 = vmatprep.subr.mxu0 0.0
    %9168 = vmatpush1.msra.mxu0 0.0
    %9169 = vmatprep.mubr.f32.mxu0 0.0
    %v9170 = vand.u32 %v8764, 4294901760
    %9171 = vmatmul.mubr.f32.gmra.mrb[0].mxu0 %v9170
    %v9172 = vpop.f32.mrb[0].mxu0
    %v9173 = vadd.f32 %v9090, %v9172
    %v9174 = vpop.f32.mrb[0].mxu0
    %9175 = vdwg.mxu0
    %9176 = vmatprep.subr.mxu0 0.0
    %v9177 = vand.u32 %v8266, 4294901760
    %9178 = vmatpush1.msra.mxu0 %v9177
    %9179 = vmatprep.subr.mxu0 0.0
    %v9180 = vand.u32 %v8267, 4294901760
    %9181 = vmatpush1.msra.mxu0 %v9180
    %9182 = vmatprep.subr.mxu0 0.0
    %v9183 = vand.u32 %v8268, 4294901760
    %9184 = vmatpush1.msra.mxu0 %v9183
    %9185 = vmatprep.subr.mxu0 0.0
    %v9186 = vand.u32 %v8269, 4294901760
    %9187 = vmatpush1.msra.mxu0 %v9186
    %9188 = vmatprep.subr.mxu0 0.0
    %9189 = vmatpush1.msra.mxu0 0.0
    %9190 = vmatprep.subr.mxu0 0.0
    %9191 = vmatpush1.msra.mxu0 0.0
    %9192 = vmatprep.subr.mxu0 0.0
    %9193 = vmatpush1.msra.mxu0 0.0
    %9194 = vmatprep.subr.mxu0 0.0
    %9195 = vmatpush1.msra.mxu0 0.0
    %9196 = vmatprep.subr.mxu0 0.0
    %9197 = vmatpush1.msra.mxu0 0.0
    %9198 = vmatprep.subr.mxu0 0.0
    %9199 = vmatpush1.msra.mxu0 0.0
    %9200 = vmatprep.subr.mxu0 0.0
    %9201 = vmatpush1.msra.mxu0 0.0
    %9202 = vmatprep.subr.mxu0 0.0
    %9203 = vmatpush1.msra.mxu0 0.0
    %9204 = vmatprep.subr.mxu0 0.0
    %9205 = vmatpush1.msra.mxu0 0.0
    %9206 = vmatprep.subr.mxu0 0.0
    %9207 = vmatpush1.msra.mxu0 0.0
    %9208 = vmatprep.subr.mxu0 0.0
    %9209 = vmatpush1.msra.mxu0 0.0
    %9210 = vmatprep.subr.mxu0 0.0
    %9211 = vmatpush1.msra.mxu0 0.0
    %9212 = vmatprep.subr.mxu0 0.0
    %9213 = vmatpush1.msra.mxu0 0.0
    %9214 = vmatprep.subr.mxu0 0.0
    %9215 = vmatpush1.msra.mxu0 0.0
    %9216 = vmatprep.subr.mxu0 0.0
    %9217 = vmatpush1.msra.mxu0 0.0
    %9218 = vmatprep.subr.mxu0 0.0
    %9219 = vmatpush1.msra.mxu0 0.0
    %9220 = vmatprep.subr.mxu0 0.0
    %9221 = vmatpush1.msra.mxu0 0.0
    %9222 = vmatprep.subr.mxu0 0.0
    %9223 = vmatpush1.msra.mxu0 0.0
    %9224 = vmatprep.subr.mxu0 0.0
    %9225 = vmatpush1.msra.mxu0 0.0
    %9226 = vmatprep.subr.mxu0 0.0
    %9227 = vmatpush1.msra.mxu0 0.0
    %9228 = vmatprep.subr.mxu0 0.0
    %9229 = vmatpush1.msra.mxu0 0.0
    %9230 = vmatprep.subr.mxu0 0.0
    %9231 = vmatpush1.msra.mxu0 0.0
    %9232 = vmatprep.subr.mxu0 0.0
    %9233 = vmatpush1.msra.mxu0 0.0
    %9234 = vmatprep.subr.mxu0 0.0
    %9235 = vmatpush1.msra.mxu0 0.0
    %9236 = vmatprep.subr.mxu0 0.0
    %9237 = vmatpush1.msra.mxu0 0.0
    %9238 = vmatprep.subr.mxu0 0.0
    %9239 = vmatpush1.msra.mxu0 0.0
    %9240 = vmatprep.subr.mxu0 0.0
    %9241 = vmatpush1.msra.mxu0 0.0
    %9242 = vmatprep.subr.mxu0 0.0
    %9243 = vmatpush1.msra.mxu0 0.0
    %9244 = vmatprep.mubr.f32.mxu0 0.0
    %v9245 = vand.u32 %v8764, 4294901760
    %9246 = vmatmul.mubr.f32.gmra.mrb[0].mxu0 %v9245
    %v9247 = vpop.f32.mrb[0].mxu0
    %v9248 = vadd.f32 %v9173, %v9247
    %v9249 = vpop.f32.mrb[0].mxu0
    %9250 = vdwg.mxu0
    %s9251 = scalar_lea.vmem %s24, 64
    %v9252 = vld [vmem:[%s9251] sm:$0xff]
    %v9253 = vld [vmem:[%s9251 + $0x8] sm:$0xff]
    %v9254 = vld [vmem:[%s9251 + $0x10] sm:$0xff]
    %v9255 = vld [vmem:[%s9251 + $0x18] sm:$0xff]
    %v9256 = vrot.slane %v8263, 4
    %v9257 = vsel %vm1899, %v9256, 0
    %9259 = vmatprep.subr.mxu0 0.0
    %v9260 = vand.u32 %v9252, 4294901760
    %9261 = vmatpush1.msra.mxu0 %v9260
    %9262 = vmatprep.subr.mxu0 0.0
    %v9263 = vand.u32 %v9253, 4294901760
    %9264 = vmatpush1.msra.mxu0 %v9263
    %9265 = vmatprep.subr.mxu0 0.0
    %v9266 = vand.u32 %v9254, 4294901760
    %9267 = vmatpush1.msra.mxu0 %v9266
    %9268 = vmatprep.subr.mxu0 0.0
    %v9269 = vand.u32 %v9255, 4294901760
    %9270 = vmatpush1.msra.mxu0 %v9269
    %9271 = vmatprep.subr.mxu0 0.0
    %9272 = vmatpush1.msra.mxu0 0.0
    %9273 = vmatprep.subr.mxu0 0.0
    %9274 = vmatpush1.msra.mxu0 0.0
    %9275 = vmatprep.subr.mxu0 0.0
    %9276 = vmatpush1.msra.mxu0 0.0
    %9277 = vmatprep.subr.mxu0 0.0
    %9278 = vmatpush1.msra.mxu0 0.0
    %9279 = vmatprep.subr.mxu0 0.0
    %9280 = vmatpush1.msra.mxu0 0.0
    %9281 = vmatprep.subr.mxu0 0.0
    %9282 = vmatpush1.msra.mxu0 0.0
    %9283 = vmatprep.subr.mxu0 0.0
    %9284 = vmatpush1.msra.mxu0 0.0
    %9285 = vmatprep.subr.mxu0 0.0
    %9286 = vmatpush1.msra.mxu0 0.0
    %9287 = vmatprep.subr.mxu0 0.0
    %9288 = vmatpush1.msra.mxu0 0.0
    %9289 = vmatprep.subr.mxu0 0.0
    %9290 = vmatpush1.msra.mxu0 0.0
    %9291 = vmatprep.subr.mxu0 0.0
    %9292 = vmatpush1.msra.mxu0 0.0
    %9293 = vmatprep.subr.mxu0 0.0
    %9294 = vmatpush1.msra.mxu0 0.0
    %9295 = vmatprep.subr.mxu0 0.0
    %9296 = vmatpush1.msra.mxu0 0.0
    %9297 = vmatprep.subr.mxu0 0.0
    %9298 = vmatpush1.msra.mxu0 0.0
    %9299 = vmatprep.subr.mxu0 0.0
    %9300 = vmatpush1.msra.mxu0 0.0
    %9301 = vmatprep.subr.mxu0 0.0
    %9302 = vmatpush1.msra.mxu0 0.0
    %9303 = vmatprep.subr.mxu0 0.0
    %9304 = vmatpush1.msra.mxu0 0.0
    %9305 = vmatprep.subr.mxu0 0.0
    %9306 = vmatpush1.msra.mxu0 0.0
    %9307 = vmatprep.subr.mxu0 0.0
    %9308 = vmatpush1.msra.mxu0 0.0
    %9309 = vmatprep.subr.mxu0 0.0
    %9310 = vmatpush1.msra.mxu0 0.0
    %9311 = vmatprep.subr.mxu0 0.0
    %9312 = vmatpush1.msra.mxu0 0.0
    %9313 = vmatprep.subr.mxu0 0.0
    %9314 = vmatpush1.msra.mxu0 0.0
    %9315 = vmatprep.subr.mxu0 0.0
    %9316 = vmatpush1.msra.mxu0 0.0
    %9317 = vmatprep.subr.mxu0 0.0
    %9318 = vmatpush1.msra.mxu0 0.0
    %9319 = vmatprep.subr.mxu0 0.0
    %9320 = vmatpush1.msra.mxu0 0.0
    %9321 = vmatprep.subr.mxu0 0.0
    %9322 = vmatpush1.msra.mxu0 0.0
    %9323 = vmatprep.subr.mxu0 0.0
    %9324 = vmatpush1.msra.mxu0 0.0
    %9325 = vmatprep.subr.mxu0 0.0
    %9326 = vmatpush1.msra.mxu0 0.0
    %9327 = vmatprep.mubr.f32.mxu0 0.0
    %v9328 = vand.u32 %v9257, 4294901760
    %v9329 = vsub.f32 %v9257, %v9328
    %v9330 = vand.u32 %v9329, 4294901760
    %v9331 = vsub.f32 %v9329, %v9330
    %v9332 = vand.u32 %v9331, 4294901760
    %9333 = vmatmul.mubr.f32.gmra.mrb[0].mxu0 %v9332
    %v9334 = vpop.f32.mrb[0].mxu0
    %v9335 = vadd.f32 0.0, %v9334
    %v9336 = vpop.f32.mrb[0].mxu0
    %9337 = vdwg.mxu0
    %9338 = vmatprep.subr.mxu0 0.0
    %v9339 = vand.u32 %v9252, 4294901760
    %v9340 = vsub.f32 %v9252, %v9339
    %v9341 = vand.u32 %v9340, 4294901760
    %v9342 = vsub.f32 %v9340, %v9341
    %v9343 = vand.u32 %v9342, 4294901760
    %9344 = vmatpush1.msra.mxu0 %v9343
    %9345 = vmatprep.subr.mxu0 0.0
    %v9346 = vand.u32 %v9253, 4294901760
    %v9347 = vsub.f32 %v9253, %v9346
    %v9348 = vand.u32 %v9347, 4294901760
    %v9349 = vsub.f32 %v9347, %v9348
    %v9350 = vand.u32 %v9349, 4294901760
    %9351 = vmatpush1.msra.mxu0 %v9350
    %9352 = vmatprep.subr.mxu0 0.0
    %v9353 = vand.u32 %v9254, 4294901760
    %v9354 = vsub.f32 %v9254, %v9353
    %v9355 = vand.u32 %v9354, 4294901760
    %v9356 = vsub.f32 %v9354, %v9355
    %v9357 = vand.u32 %v9356, 4294901760
    %9358 = vmatpush1.msra.mxu0 %v9357
    %9359 = vmatprep.subr.mxu0 0.0
    %v9360 = vand.u32 %v9255, 4294901760
    %v9361 = vsub.f32 %v9255, %v9360
    %v9362 = vand.u32 %v9361, 4294901760
    %v9363 = vsub.f32 %v9361, %v9362
    %v9364 = vand.u32 %v9363, 4294901760
    %9365 = vmatpush1.msra.mxu0 %v9364
    %9366 = vmatprep.subr.mxu0 0.0
    %9367 = vmatpush1.msra.mxu0 0.0
    %9368 = vmatprep.subr.mxu0 0.0
    %9369 = vmatpush1.msra.mxu0 0.0
    %9370 = vmatprep.subr.mxu0 0.0
    %9371 = vmatpush1.msra.mxu0 0.0
    %9372 = vmatprep.subr.mxu0 0.0
    %9373 = vmatpush1.msra.mxu0 0.0
    %9374 = vmatprep.subr.mxu0 0.0
    %9375 = vmatpush1.msra.mxu0 0.0
    %9376 = vmatprep.subr.mxu0 0.0
    %9377 = vmatpush1.msra.mxu0 0.0
    %9378 = vmatprep.subr.mxu0 0.0
    %9379 = vmatpush1.msra.mxu0 0.0
    %9380 = vmatprep.subr.mxu0 0.0
    %9381 = vmatpush1.msra.mxu0 0.0
    %9382 = vmatprep.subr.mxu0 0.0
    %9383 = vmatpush1.msra.mxu0 0.0
    %9384 = vmatprep.subr.mxu0 0.0
    %9385 = vmatpush1.msra.mxu0 0.0
    %9386 = vmatprep.subr.mxu0 0.0
    %9387 = vmatpush1.msra.mxu0 0.0
    %9388 = vmatprep.subr.mxu0 0.0
    %9389 = vmatpush1.msra.mxu0 0.0
    %9390 = vmatprep.subr.mxu0 0.0
    %9391 = vmatpush1.msra.mxu0 0.0
    %9392 = vmatprep.subr.mxu0 0.0
    %9393 = vmatpush1.msra.mxu0 0.0
    %9394 = vmatprep.subr.mxu0 0.0
    %9395 = vmatpush1.msra.mxu0 0.0
    %9396 = vmatprep.subr.mxu0 0.0
    %9397 = vmatpush1.msra.mxu0 0.0
    %9398 = vmatprep.subr.mxu0 0.0
    %9399 = vmatpush1.msra.mxu0 0.0
    %9400 = vmatprep.subr.mxu0 0.0
    %9401 = vmatpush1.msra.mxu0 0.0
    %9402 = vmatprep.subr.mxu0 0.0
    %9403 = vmatpush1.msra.mxu0 0.0
    %9404 = vmatprep.subr.mxu0 0.0
    %9405 = vmatpush1.msra.mxu0 0.0
    %9406 = vmatprep.subr.mxu0 0.0
    %9407 = vmatpush1.msra.mxu0 0.0
    %9408 = vmatprep.subr.mxu0 0.0
    %9409 = vmatpush1.msra.mxu0 0.0
    %9410 = vmatprep.subr.mxu0 0.0
    %9411 = vmatpush1.msra.mxu0 0.0
    %9412 = vmatprep.subr.mxu0 0.0
    %9413 = vmatpush1.msra.mxu0 0.0
    %9414 = vmatprep.subr.mxu0 0.0
    %9415 = vmatpush1.msra.mxu0 0.0
    %9416 = vmatprep.subr.mxu0 0.0
    %9417 = vmatpush1.msra.mxu0 0.0
    %9418 = vmatprep.subr.mxu0 0.0
    %9419 = vmatpush1.msra.mxu0 0.0
    %9420 = vmatprep.subr.mxu0 0.0
    %9421 = vmatpush1.msra.mxu0 0.0
    %9422 = vmatprep.mubr.f32.mxu0 0.0
    %v9423 = vand.u32 %v9257, 4294901760
    %9424 = vmatmul.mubr.f32.gmra.mrb[0].mxu0 %v9423
    %v9425 = vpop.f32.mrb[0].mxu0
    %v9426 = vadd.f32 %v9335, %v9425
    %v9427 = vpop.f32.mrb[0].mxu0
    %9428 = vdwg.mxu0
    %9429 = vmatprep.subr.mxu0 0.0
    %v9430 = vand.u32 %v9252, 4294901760
    %v9431 = vsub.f32 %v9252, %v9430
    %9432 = vmatpush1.msra.mxu0 %v9431
    %9433 = vmatprep.subr.mxu0 0.0
    %v9434 = vand.u32 %v9253, 4294901760
    %v9435 = vsub.f32 %v9253, %v9434
    %9436 = vmatpush1.msra.mxu0 %v9435
    %9437 = vmatprep.subr.mxu0 0.0
    %v9438 = vand.u32 %v9254, 4294901760
    %v9439 = vsub.f32 %v9254, %v9438
    %9440 = vmatpush1.msra.mxu0 %v9439
    %9441 = vmatprep.subr.mxu0 0.0
    %v9442 = vand.u32 %v9255, 4294901760
    %v9443 = vsub.f32 %v9255, %v9442
    %9444 = vmatpush1.msra.mxu0 %v9443
    %9445 = vmatprep.subr.mxu0 0.0
    %9446 = vmatpush1.msra.mxu0 0.0
    %9447 = vmatprep.subr.mxu0 0.0
    %9448 = vmatpush1.msra.mxu0 0.0
    %9449 = vmatprep.subr.mxu0 0.0
    %9450 = vmatpush1.msra.mxu0 0.0
    %9451 = vmatprep.subr.mxu0 0.0
    %9452 = vmatpush1.msra.mxu0 0.0
    %9453 = vmatprep.subr.mxu0 0.0
    %9454 = vmatpush1.msra.mxu0 0.0
    %9455 = vmatprep.subr.mxu0 0.0
    %9456 = vmatpush1.msra.mxu0 0.0
    %9457 = vmatprep.subr.mxu0 0.0
    %9458 = vmatpush1.msra.mxu0 0.0
    %9459 = vmatprep.subr.mxu0 0.0
    %9460 = vmatpush1.msra.mxu0 0.0
    %9461 = vmatprep.subr.mxu0 0.0
    %9462 = vmatpush1.msra.mxu0 0.0
    %9463 = vmatprep.subr.mxu0 0.0
    %9464 = vmatpush1.msra.mxu0 0.0
    %9465 = vmatprep.subr.mxu0 0.0
    %9466 = vmatpush1.msra.mxu0 0.0
    %9467 = vmatprep.subr.mxu0 0.0
    %9468 = vmatpush1.msra.mxu0 0.0
    %9469 = vmatprep.subr.mxu0 0.0
    %9470 = vmatpush1.msra.mxu0 0.0
    %9471 = vmatprep.subr.mxu0 0.0
    %9472 = vmatpush1.msra.mxu0 0.0
    %9473 = vmatprep.subr.mxu0 0.0
    %9474 = vmatpush1.msra.mxu0 0.0
    %9475 = vmatprep.subr.mxu0 0.0
    %9476 = vmatpush1.msra.mxu0 0.0
    %9477 = vmatprep.subr.mxu0 0.0
    %9478 = vmatpush1.msra.mxu0 0.0
    %9479 = vmatprep.subr.mxu0 0.0
    %9480 = vmatpush1.msra.mxu0 0.0
    %9481 = vmatprep.subr.mxu0 0.0
    %9482 = vmatpush1.msra.mxu0 0.0
    %9483 = vmatprep.subr.mxu0 0.0
    %9484 = vmatpush1.msra.mxu0 0.0
    %9485 = vmatprep.subr.mxu0 0.0
    %9486 = vmatpush1.msra.mxu0 0.0
    %9487 = vmatprep.subr.mxu0 0.0
    %9488 = vmatpush1.msra.mxu0 0.0
    %9489 = vmatprep.subr.mxu0 0.0
    %9490 = vmatpush1.msra.mxu0 0.0
    %9491 = vmatprep.subr.mxu0 0.0
    %9492 = vmatpush1.msra.mxu0 0.0
    %9493 = vmatprep.subr.mxu0 0.0
    %9494 = vmatpush1.msra.mxu0 0.0
    %9495 = vmatprep.subr.mxu0 0.0
    %9496 = vmatpush1.msra.mxu0 0.0
    %9497 = vmatprep.subr.mxu0 0.0
    %9498 = vmatpush1.msra.mxu0 0.0
    %9499 = vmatprep.subr.mxu0 0.0
    %9500 = vmatpush1.msra.mxu0 0.0
    %9501 = vmatprep.mubr.f32.mxu0 0.0
    %v9502 = vand.u32 %v9257, 4294901760
    %v9503 = vsub.f32 %v9257, %v9502
    %9504 = vmatmul.mubr.f32.gmra.mrb[0].mxu0 %v9503
    %v9505 = vpop.f32.mrb[0].mxu0
    %v9506 = vadd.f32 %v9426, %v9505
    %v9507 = vpop.f32.mrb[0].mxu0
    %9508 = vdwg.mxu0
    %9509 = vmatprep.subr.mxu0 0.0
    %v9510 = vand.u32 %v9252, 4294901760
    %9511 = vmatpush1.msra.mxu0 %v9510
    %9512 = vmatprep.subr.mxu0 0.0
    %v9513 = vand.u32 %v9253, 4294901760
    %9514 = vmatpush1.msra.mxu0 %v9513
    %9515 = vmatprep.subr.mxu0 0.0
    %v9516 = vand.u32 %v9254, 4294901760
    %9517 = vmatpush1.msra.mxu0 %v9516
    %9518 = vmatprep.subr.mxu0 0.0
    %v9519 = vand.u32 %v9255, 4294901760
    %9520 = vmatpush1.msra.mxu0 %v9519
    %9521 = vmatprep.subr.mxu0 0.0
    %9522 = vmatpush1.msra.mxu0 0.0
    %9523 = vmatprep.subr.mxu0 0.0
    %9524 = vmatpush1.msra.mxu0 0.0
    %9525 = vmatprep.subr.mxu0 0.0
    %9526 = vmatpush1.msra.mxu0 0.0
    %9527 = vmatprep.subr.mxu0 0.0
    %9528 = vmatpush1.msra.mxu0 0.0
    %9529 = vmatprep.subr.mxu0 0.0
    %9530 = vmatpush1.msra.mxu0 0.0
    %9531 = vmatprep.subr.mxu0 0.0
    %9532 = vmatpush1.msra.mxu0 0.0
    %9533 = vmatprep.subr.mxu0 0.0
    %9534 = vmatpush1.msra.mxu0 0.0
    %9535 = vmatprep.subr.mxu0 0.0
    %9536 = vmatpush1.msra.mxu0 0.0
    %9537 = vmatprep.subr.mxu0 0.0
    %9538 = vmatpush1.msra.mxu0 0.0
    %9539 = vmatprep.subr.mxu0 0.0
    %9540 = vmatpush1.msra.mxu0 0.0
    %9541 = vmatprep.subr.mxu0 0.0
    %9542 = vmatpush1.msra.mxu0 0.0
    %9543 = vmatprep.subr.mxu0 0.0
    %9544 = vmatpush1.msra.mxu0 0.0
    %9545 = vmatprep.subr.mxu0 0.0
    %9546 = vmatpush1.msra.mxu0 0.0
    %9547 = vmatprep.subr.mxu0 0.0
    %9548 = vmatpush1.msra.mxu0 0.0
    %9549 = vmatprep.subr.mxu0 0.0
    %9550 = vmatpush1.msra.mxu0 0.0
    %9551 = vmatprep.subr.mxu0 0.0
    %9552 = vmatpush1.msra.mxu0 0.0
    %9553 = vmatprep.subr.mxu0 0.0
    %9554 = vmatpush1.msra.mxu0 0.0
    %9555 = vmatprep.subr.mxu0 0.0
    %9556 = vmatpush1.msra.mxu0 0.0
    %9557 = vmatprep.subr.mxu0 0.0
    %9558 = vmatpush1.msra.mxu0 0.0
    %9559 = vmatprep.subr.mxu0 0.0
    %9560 = vmatpush1.msra.mxu0 0.0
    %9561 = vmatprep.subr.mxu0 0.0
    %9562 = vmatpush1.msra.mxu0 0.0
    %9563 = vmatprep.subr.mxu0 0.0
    %9564 = vmatpush1.msra.mxu0 0.0
    %9565 = vmatprep.subr.mxu0 0.0
    %9566 = vmatpush1.msra.mxu0 0.0
    %9567 = vmatprep.subr.mxu0 0.0
    %9568 = vmatpush1.msra.mxu0 0.0
    %9569 = vmatprep.subr.mxu0 0.0
    %9570 = vmatpush1.msra.mxu0 0.0
    %9571 = vmatprep.subr.mxu0 0.0
    %9572 = vmatpush1.msra.mxu0 0.0
    %9573 = vmatprep.subr.mxu0 0.0
    %9574 = vmatpush1.msra.mxu0 0.0
    %9575 = vmatprep.subr.mxu0 0.0
    %9576 = vmatpush1.msra.mxu0 0.0
    %9577 = vmatprep.mubr.f32.mxu0 0.0
    %v9578 = vand.u32 %v9257, 4294901760
    %v9579 = vsub.f32 %v9257, %v9578
    %v9580 = vand.u32 %v9579, 4294901760
    %9581 = vmatmul.mubr.f32.gmra.mrb[0].mxu0 %v9580
    %v9582 = vpop.f32.mrb[0].mxu0
    %v9583 = vadd.f32 %v9506, %v9582
    %v9584 = vpop.f32.mrb[0].mxu0
    %9585 = vdwg.mxu0
    %9586 = vmatprep.subr.mxu0 0.0
    %v9587 = vand.u32 %v9252, 4294901760
    %v9588 = vsub.f32 %v9252, %v9587
    %v9589 = vand.u32 %v9588, 4294901760
    %9590 = vmatpush1.msra.mxu0 %v9589
    %9591 = vmatprep.subr.mxu0 0.0
    %v9592 = vand.u32 %v9253, 4294901760
    %v9593 = vsub.f32 %v9253, %v9592
    %v9594 = vand.u32 %v9593, 4294901760
    %9595 = vmatpush1.msra.mxu0 %v9594
    %9596 = vmatprep.subr.mxu0 0.0
    %v9597 = vand.u32 %v9254, 4294901760
    %v9598 = vsub.f32 %v9254, %v9597
    %v9599 = vand.u32 %v9598, 4294901760
    %9600 = vmatpush1.msra.mxu0 %v9599
    %9601 = vmatprep.subr.mxu0 0.0
    %v9602 = vand.u32 %v9255, 4294901760
    %v9603 = vsub.f32 %v9255, %v9602
    %v9604 = vand.u32 %v9603, 4294901760
    %9605 = vmatpush1.msra.mxu0 %v9604
    %9606 = vmatprep.subr.mxu0 0.0
    %9607 = vmatpush1.msra.mxu0 0.0
    %9608 = vmatprep.subr.mxu0 0.0
    %9609 = vmatpush1.msra.mxu0 0.0
    %9610 = vmatprep.subr.mxu0 0.0
    %9611 = vmatpush1.msra.mxu0 0.0
    %9612 = vmatprep.subr.mxu0 0.0
    %9613 = vmatpush1.msra.mxu0 0.0
    %9614 = vmatprep.subr.mxu0 0.0
    %9615 = vmatpush1.msra.mxu0 0.0
    %9616 = vmatprep.subr.mxu0 0.0
    %9617 = vmatpush1.msra.mxu0 0.0
    %9618 = vmatprep.subr.mxu0 0.0
    %9619 = vmatpush1.msra.mxu0 0.0
    %9620 = vmatprep.subr.mxu0 0.0
    %9621 = vmatpush1.msra.mxu0 0.0
    %9622 = vmatprep.subr.mxu0 0.0
    %9623 = vmatpush1.msra.mxu0 0.0
    %9624 = vmatprep.subr.mxu0 0.0
    %9625 = vmatpush1.msra.mxu0 0.0
    %9626 = vmatprep.subr.mxu0 0.0
    %9627 = vmatpush1.msra.mxu0 0.0
    %9628 = vmatprep.subr.mxu0 0.0
    %9629 = vmatpush1.msra.mxu0 0.0
    %9630 = vmatprep.subr.mxu0 0.0
    %9631 = vmatpush1.msra.mxu0 0.0
    %9632 = vmatprep.subr.mxu0 0.0
    %9633 = vmatpush1.msra.mxu0 0.0
    %9634 = vmatprep.subr.mxu0 0.0
    %9635 = vmatpush1.msra.mxu0 0.0
    %9636 = vmatprep.subr.mxu0 0.0
    %9637 = vmatpush1.msra.mxu0 0.0
    %9638 = vmatprep.subr.mxu0 0.0
    %9639 = vmatpush1.msra.mxu0 0.0
    %9640 = vmatprep.subr.mxu0 0.0
    %9641 = vmatpush1.msra.mxu0 0.0
    %9642 = vmatprep.subr.mxu0 0.0
    %9643 = vmatpush1.msra.mxu0 0.0
    %9644 = vmatprep.subr.mxu0 0.0
    %9645 = vmatpush1.msra.mxu0 0.0
    %9646 = vmatprep.subr.mxu0 0.0
    %9647 = vmatpush1.msra.mxu0 0.0
    %9648 = vmatprep.subr.mxu0 0.0
    %9649 = vmatpush1.msra.mxu0 0.0
    %9650 = vmatprep.subr.mxu0 0.0
    %9651 = vmatpush1.msra.mxu0 0.0
    %9652 = vmatprep.subr.mxu0 0.0
    %9653 = vmatpush1.msra.mxu0 0.0
    %9654 = vmatprep.subr.mxu0 0.0
    %9655 = vmatpush1.msra.mxu0 0.0
    %9656 = vmatprep.subr.mxu0 0.0
    %9657 = vmatpush1.msra.mxu0 0.0
    %9658 = vmatprep.subr.mxu0 0.0
    %9659 = vmatpush1.msra.mxu0 0.0
    %9660 = vmatprep.subr.mxu0 0.0
    %9661 = vmatpush1.msra.mxu0 0.0
    %9662 = vmatprep.mubr.f32.mxu0 0.0
    %v9663 = vand.u32 %v9257, 4294901760
    %9664 = vmatmul.mubr.f32.gmra.mrb[0].mxu0 %v9663
    %v9665 = vpop.f32.mrb[0].mxu0
    %v9666 = vadd.f32 %v9583, %v9665
    %v9667 = vpop.f32.mrb[0].mxu0
    %9668 = vdwg.mxu0
    %9669 = vmatprep.subr.mxu0 0.0
    %v9670 = vand.u32 %v9252, 4294901760
    %9671 = vmatpush1.msra.mxu0 %v9670
    %9672 = vmatprep.subr.mxu0 0.0
    %v9673 = vand.u32 %v9253, 4294901760
    %9674 = vmatpush1.msra.mxu0 %v9673
    %9675 = vmatprep.subr.mxu0 0.0
    %v9676 = vand.u32 %v9254, 4294901760
    %9677 = vmatpush1.msra.mxu0 %v9676
    %9678 = vmatprep.subr.mxu0 0.0
    %v9679 = vand.u32 %v9255, 4294901760
    %9680 = vmatpush1.msra.mxu0 %v9679
    %9681 = vmatprep.subr.mxu0 0.0
    %9682 = vmatpush1.msra.mxu0 0.0
    %9683 = vmatprep.subr.mxu0 0.0
    %9684 = vmatpush1.msra.mxu0 0.0
    %9685 = vmatprep.subr.mxu0 0.0
    %9686 = vmatpush1.msra.mxu0 0.0
    %9687 = vmatprep.subr.mxu0 0.0
    %9688 = vmatpush1.msra.mxu0 0.0
    %9689 = vmatprep.subr.mxu0 0.0
    %9690 = vmatpush1.msra.mxu0 0.0
    %9691 = vmatprep.subr.mxu0 0.0
    %9692 = vmatpush1.msra.mxu0 0.0
    %9693 = vmatprep.subr.mxu0 0.0
    %9694 = vmatpush1.msra.mxu0 0.0
    %9695 = vmatprep.subr.mxu0 0.0
    %9696 = vmatpush1.msra.mxu0 0.0
    %9697 = vmatprep.subr.mxu0 0.0
    %9698 = vmatpush1.msra.mxu0 0.0
    %9699 = vmatprep.subr.mxu0 0.0
    %9700 = vmatpush1.msra.mxu0 0.0
    %9701 = vmatprep.subr.mxu0 0.0
    %9702 = vmatpush1.msra.mxu0 0.0
    %9703 = vmatprep.subr.mxu0 0.0
    %9704 = vmatpush1.msra.mxu0 0.0
    %9705 = vmatprep.subr.mxu0 0.0
    %9706 = vmatpush1.msra.mxu0 0.0
    %9707 = vmatprep.subr.mxu0 0.0
    %9708 = vmatpush1.msra.mxu0 0.0
    %9709 = vmatprep.subr.mxu0 0.0
    %9710 = vmatpush1.msra.mxu0 0.0
    %9711 = vmatprep.subr.mxu0 0.0
    %9712 = vmatpush1.msra.mxu0 0.0
    %9713 = vmatprep.subr.mxu0 0.0
    %9714 = vmatpush1.msra.mxu0 0.0
    %9715 = vmatprep.subr.mxu0 0.0
    %9716 = vmatpush1.msra.mxu0 0.0
    %9717 = vmatprep.subr.mxu0 0.0
    %9718 = vmatpush1.msra.mxu0 0.0
    %9719 = vmatprep.subr.mxu0 0.0
    %9720 = vmatpush1.msra.mxu0 0.0
    %9721 = vmatprep.subr.mxu0 0.0
    %9722 = vmatpush1.msra.mxu0 0.0
    %9723 = vmatprep.subr.mxu0 0.0
    %9724 = vmatpush1.msra.mxu0 0.0
    %9725 = vmatprep.subr.mxu0 0.0
    %9726 = vmatpush1.msra.mxu0 0.0
    %9727 = vmatprep.subr.mxu0 0.0
    %9728 = vmatpush1.msra.mxu0 0.0
    %9729 = vmatprep.subr.mxu0 0.0
    %9730 = vmatpush1.msra.mxu0 0.0
    %9731 = vmatprep.subr.mxu0 0.0
    %9732 = vmatpush1.msra.mxu0 0.0
    %9733 = vmatprep.subr.mxu0 0.0
    %9734 = vmatpush1.msra.mxu0 0.0
    %9735 = vmatprep.subr.mxu0 0.0
    %9736 = vmatpush1.msra.mxu0 0.0
    %9737 = vmatprep.mubr.f32.mxu0 0.0
    %v9738 = vand.u32 %v9257, 4294901760
    %9739 = vmatmul.mubr.f32.gmra.mrb[0].mxu0 %v9738
    %v9740 = vpop.f32.mrb[0].mxu0
    %v9741 = vadd.f32 %v9666, %v9740
    %v9742 = vpop.f32.mrb[0].mxu0
    %9743 = vdwg.mxu0
    %v9744 = vadd.f32 %v9248, %v9741
    %s9745 = scalar_lea.vmem %s24, 96
    %v9746 = vld [vmem:[%s9745] sm:$0xff]
    %v9747 = vld [vmem:[%s9745 + $0x8] sm:$0xff]
    %v9748 = vld [vmem:[%s9745 + $0x10] sm:$0xff]
    %v9749 = vld [vmem:[%s9745 + $0x18] sm:$0xff]
    %v9750 = vrot.slane %v8263, 6
    %v9751 = vsel %vm1899, %v9750, 0
    %9753 = vmatprep.subr.mxu0 0.0
    %v9754 = vand.u32 %v9746, 4294901760
    %9755 = vmatpush1.msra.mxu0 %v9754
    %9756 = vmatprep.subr.mxu0 0.0
    %v9757 = vand.u32 %v9747, 4294901760
    %9758 = vmatpush1.msra.mxu0 %v9757
    %9759 = vmatprep.subr.mxu0 0.0
    %v9760 = vand.u32 %v9748, 4294901760
    %9761 = vmatpush1.msra.mxu0 %v9760
    %9762 = vmatprep.subr.mxu0 0.0
    %v9763 = vand.u32 %v9749, 4294901760
    %9764 = vmatpush1.msra.mxu0 %v9763
    %9765 = vmatprep.subr.mxu0 0.0
    %9766 = vmatpush1.msra.mxu0 0.0
    %9767 = vmatprep.subr.mxu0 0.0
    %9768 = vmatpush1.msra.mxu0 0.0
    %9769 = vmatprep.subr.mxu0 0.0
    %9770 = vmatpush1.msra.mxu0 0.0
    %9771 = vmatprep.subr.mxu0 0.0
    %9772 = vmatpush1.msra.mxu0 0.0
    %9773 = vmatprep.subr.mxu0 0.0
    %9774 = vmatpush1.msra.mxu0 0.0
    %9775 = vmatprep.subr.mxu0 0.0
    %9776 = vmatpush1.msra.mxu0 0.0
    %9777 = vmatprep.subr.mxu0 0.0
    %9778 = vmatpush1.msra.mxu0 0.0
    %9779 = vmatprep.subr.mxu0 0.0
    %9780 = vmatpush1.msra.mxu0 0.0
    %9781 = vmatprep.subr.mxu0 0.0
    %9782 = vmatpush1.msra.mxu0 0.0
    %9783 = vmatprep.subr.mxu0 0.0
    %9784 = vmatpush1.msra.mxu0 0.0
    %9785 = vmatprep.subr.mxu0 0.0
    %9786 = vmatpush1.msra.mxu0 0.0
    %9787 = vmatprep.subr.mxu0 0.0
    %9788 = vmatpush1.msra.mxu0 0.0
    %9789 = vmatprep.subr.mxu0 0.0
    %9790 = vmatpush1.msra.mxu0 0.0
    %9791 = vmatprep.subr.mxu0 0.0
    %9792 = vmatpush1.msra.mxu0 0.0
    %9793 = vmatprep.subr.mxu0 0.0
    %9794 = vmatpush1.msra.mxu0 0.0
    %9795 = vmatprep.subr.mxu0 0.0
    %9796 = vmatpush1.msra.mxu0 0.0
    %9797 = vmatprep.subr.mxu0 0.0
    %9798 = vmatpush1.msra.mxu0 0.0
    %9799 = vmatprep.subr.mxu0 0.0
    %9800 = vmatpush1.msra.mxu0 0.0
    %9801 = vmatprep.subr.mxu0 0.0
    %9802 = vmatpush1.msra.mxu0 0.0
    %9803 = vmatprep.subr.mxu0 0.0
    %9804 = vmatpush1.msra.mxu0 0.0
    %9805 = vmatprep.subr.mxu0 0.0
    %9806 = vmatpush1.msra.mxu0 0.0
    %9807 = vmatprep.subr.mxu0 0.0
    %9808 = vmatpush1.msra.mxu0 0.0
    %9809 = vmatprep.subr.mxu0 0.0
    %9810 = vmatpush1.msra.mxu0 0.0
    %9811 = vmatprep.subr.mxu0 0.0
    %9812 = vmatpush1.msra.mxu0 0.0
    %9813 = vmatprep.subr.mxu0 0.0
    %9814 = vmatpush1.msra.mxu0 0.0
    %9815 = vmatprep.subr.mxu0 0.0
    %9816 = vmatpush1.msra.mxu0 0.0
    %9817 = vmatprep.subr.mxu0 0.0
    %9818 = vmatpush1.msra.mxu0 0.0
    %9819 = vmatprep.subr.mxu0 0.0
    %9820 = vmatpush1.msra.mxu0 0.0
    %9821 = vmatprep.mubr.f32.mxu0 0.0
    %v9822 = vand.u32 %v9751, 4294901760
    %v9823 = vsub.f32 %v9751, %v9822
    %v9824 = vand.u32 %v9823, 4294901760
    %v9825 = vsub.f32 %v9823, %v9824
    %v9826 = vand.u32 %v9825, 4294901760
    %9827 = vmatmul.mubr.f32.gmra.mrb[0].mxu0 %v9826
    %v9828 = vpop.f32.mrb[0].mxu0
    %v9829 = vadd.f32 0.0, %v9828
    %v9830 = vpop.f32.mrb[0].mxu0
    %9831 = vdwg.mxu0
    %9832 = vmatprep.subr.mxu0 0.0
    %v9833 = vand.u32 %v9746, 4294901760
    %v9834 = vsub.f32 %v9746, %v9833
    %v9835 = vand.u32 %v9834, 4294901760
    %v9836 = vsub.f32 %v9834, %v9835
    %v9837 = vand.u32 %v9836, 4294901760
    %9838 = vmatpush1.msra.mxu0 %v9837
    %9839 = vmatprep.subr.mxu0 0.0
    %v9840 = vand.u32 %v9747, 4294901760
    %v9841 = vsub.f32 %v9747, %v9840
    %v9842 = vand.u32 %v9841, 4294901760
    %v9843 = vsub.f32 %v9841, %v9842
    %v9844 = vand.u32 %v9843, 4294901760
    %9845 = vmatpush1.msra.mxu0 %v9844
    %9846 = vmatprep.subr.mxu0 0.0
    %v9847 = vand.u32 %v9748, 4294901760
    %v9848 = vsub.f32 %v9748, %v9847
    %v9849 = vand.u32 %v9848, 4294901760
    %v9850 = vsub.f32 %v9848, %v9849
    %v9851 = vand.u32 %v9850, 4294901760
    %9852 = vmatpush1.msra.mxu0 %v9851
    %9853 = vmatprep.subr.mxu0 0.0
    %v9854 = vand.u32 %v9749, 4294901760
    %v9855 = vsub.f32 %v9749, %v9854
    %v9856 = vand.u32 %v9855, 4294901760
    %v9857 = vsub.f32 %v9855, %v9856
    %v9858 = vand.u32 %v9857, 4294901760
    %9859 = vmatpush1.msra.mxu0 %v9858
    %9860 = vmatprep.subr.mxu0 0.0
    %9861 = vmatpush1.msra.mxu0 0.0
    %9862 = vmatprep.subr.mxu0 0.0
    %9863 = vmatpush1.msra.mxu0 0.0
    %9864 = vmatprep.subr.mxu0 0.0
    %9865 = vmatpush1.msra.mxu0 0.0
    %9866 = vmatprep.subr.mxu0 0.0
    %9867 = vmatpush1.msra.mxu0 0.0
    %9868 = vmatprep.subr.mxu0 0.0
    %9869 = vmatpush1.msra.mxu0 0.0
    %9870 = vmatprep.subr.mxu0 0.0
    %9871 = vmatpush1.msra.mxu0 0.0
    %9872 = vmatprep.subr.mxu0 0.0
    %9873 = vmatpush1.msra.mxu0 0.0
    %9874 = vmatprep.subr.mxu0 0.0
    %9875 = vmatpush1.msra.mxu0 0.0
    %9876 = vmatprep.subr.mxu0 0.0
    %9877 = vmatpush1.msra.mxu0 0.0
    %9878 = vmatprep.subr.mxu0 0.0
    %9879 = vmatpush1.msra.mxu0 0.0
    %9880 = vmatprep.subr.mxu0 0.0
    %9881 = vmatpush1.msra.mxu0 0.0
    %9882 = vmatprep.subr.mxu0 0.0
    %9883 = vmatpush1.msra.mxu0 0.0
    %9884 = vmatprep.subr.mxu0 0.0
    %9885 = vmatpush1.msra.mxu0 0.0
    %9886 = vmatprep.subr.mxu0 0.0
    %9887 = vmatpush1.msra.mxu0 0.0
    %9888 = vmatprep.subr.mxu0 0.0
    %9889 = vmatpush1.msra.mxu0 0.0
    %9890 = vmatprep.subr.mxu0 0.0
    %9891 = vmatpush1.msra.mxu0 0.0
    %9892 = vmatprep.subr.mxu0 0.0
    %9893 = vmatpush1.msra.mxu0 0.0
    %9894 = vmatprep.subr.mxu0 0.0
    %9895 = vmatpush1.msra.mxu0 0.0
    %9896 = vmatprep.subr.mxu0 0.0
    %9897 = vmatpush1.msra.mxu0 0.0
    %9898 = vmatprep.subr.mxu0 0.0
    %9899 = vmatpush1.msra.mxu0 0.0
    %9900 = vmatprep.subr.mxu0 0.0
    %9901 = vmatpush1.msra.mxu0 0.0
    %9902 = vmatprep.subr.mxu0 0.0
    %9903 = vmatpush1.msra.mxu0 0.0
    %9904 = vmatprep.subr.mxu0 0.0
    %9905 = vmatpush1.msra.mxu0 0.0
    %9906 = vmatprep.subr.mxu0 0.0
    %9907 = vmatpush1.msra.mxu0 0.0
    %9908 = vmatprep.subr.mxu0 0.0
    %9909 = vmatpush1.msra.mxu0 0.0
    %9910 = vmatprep.subr.mxu0 0.0
    %9911 = vmatpush1.msra.mxu0 0.0
    %9912 = vmatprep.subr.mxu0 0.0
    %9913 = vmatpush1.msra.mxu0 0.0
    %9914 = vmatprep.subr.mxu0 0.0
    %9915 = vmatpush1.msra.mxu0 0.0
    %9916 = vmatprep.mubr.f32.mxu0 0.0
    %v9917 = vand.u32 %v9751, 4294901760
    %9918 = vmatmul.mubr.f32.gmra.mrb[0].mxu0 %v9917
    %v9919 = vpop.f32.mrb[0].mxu0
    %v9920 = vadd.f32 %v9829, %v9919
    %v9921 = vpop.f32.mrb[0].mxu0
    %9922 = vdwg.mxu0
    %9923 = vmatprep.subr.mxu0 0.0
    %v9924 = vand.u32 %v9746, 4294901760
    %v9925 = vsub.f32 %v9746, %v9924
    %9926 = vmatpush1.msra.mxu0 %v9925
    %9927 = vmatprep.subr.mxu0 0.0
    %v9928 = vand.u32 %v9747, 4294901760
    %v9929 = vsub.f32 %v9747, %v9928
    %9930 = vmatpush1.msra.mxu0 %v9929
    %9931 = vmatprep.subr.mxu0 0.0
    %v9932 = vand.u32 %v9748, 4294901760
    %v9933 = vsub.f32 %v9748, %v9932
    %9934 = vmatpush1.msra.mxu0 %v9933
    %9935 = vmatprep.subr.mxu0 0.0
    %v9936 = vand.u32 %v9749, 4294901760
    %v9937 = vsub.f32 %v9749, %v9936
    %9938 = vmatpush1.msra.mxu0 %v9937
    %9939 = vmatprep.subr.mxu0 0.0
    %9940 = vmatpush1.msra.mxu0 0.0
    %9941 = vmatprep.subr.mxu0 0.0
    %9942 = vmatpush1.msra.mxu0 0.0
    %9943 = vmatprep.subr.mxu0 0.0
    %9944 = vmatpush1.msra.mxu0 0.0
    %9945 = vmatprep.subr.mxu0 0.0
    %9946 = vmatpush1.msra.mxu0 0.0
    %9947 = vmatprep.subr.mxu0 0.0
    %9948 = vmatpush1.msra.mxu0 0.0
    %9949 = vmatprep.subr.mxu0 0.0
    %9950 = vmatpush1.msra.mxu0 0.0
    %9951 = vmatprep.subr.mxu0 0.0
    %9952 = vmatpush1.msra.mxu0 0.0
    %9953 = vmatprep.subr.mxu0 0.0
    %9954 = vmatpush1.msra.mxu0 0.0
    %9955 = vmatprep.subr.mxu0 0.0
    %9956 = vmatpush1.msra.mxu0 0.0
    %9957 = vmatprep.subr.mxu0 0.0
    %9958 = vmatpush1.msra.mxu0 0.0
    %9959 = vmatprep.subr.mxu0 0.0
    %9960 = vmatpush1.msra.mxu0 0.0
    %9961 = vmatprep.subr.mxu0 0.0
    %9962 = vmatpush1.msra.mxu0 0.0
    %9963 = vmatprep.subr.mxu0 0.0
    %9964 = vmatpush1.msra.mxu0 0.0
    %9965 = vmatprep.subr.mxu0 0.0
    %9966 = vmatpush1.msra.mxu0 0.0
    %9967 = vmatprep.subr.mxu0 0.0
    %9968 = vmatpush1.msra.mxu0 0.0
    %9969 = vmatprep.subr.mxu0 0.0
    %9970 = vmatpush1.msra.mxu0 0.0
    %9971 = vmatprep.subr.mxu0 0.0
    %9972 = vmatpush1.msra.mxu0 0.0
    %9973 = vmatprep.subr.mxu0 0.0
    %9974 = vmatpush1.msra.mxu0 0.0
    %9975 = vmatprep.subr.mxu0 0.0
    %9976 = vmatpush1.msra.mxu0 0.0
    %9977 = vmatprep.subr.mxu0 0.0
    %9978 = vmatpush1.msra.mxu0 0.0
    %9979 = vmatprep.subr.mxu0 0.0
    %9980 = vmatpush1.msra.mxu0 0.0
    %9981 = vmatprep.subr.mxu0 0.0
    %9982 = vmatpush1.msra.mxu0 0.0
    %9983 = vmatprep.subr.mxu0 0.0
    %9984 = vmatpush1.msra.mxu0 0.0
    %9985 = vmatprep.subr.mxu0 0.0
    %9986 = vmatpush1.msra.mxu0 0.0
    %9987 = vmatprep.subr.mxu0 0.0
    %9988 = vmatpush1.msra.mxu0 0.0
    %9989 = vmatprep.subr.mxu0 0.0
    %9990 = vmatpush1.msra.mxu0 0.0
    %9991 = vmatprep.subr.mxu0 0.0
    %9992 = vmatpush1.msra.mxu0 0.0
    %9993 = vmatprep.subr.mxu0 0.0
    %9994 = vmatpush1.msra.mxu0 0.0
    %9995 = vmatprep.mubr.f32.mxu0 0.0
    %v9996 = vand.u32 %v9751, 4294901760
    %v9997 = vsub.f32 %v9751, %v9996
    %9998 = vmatmul.mubr.f32.gmra.mrb[0].mxu0 %v9997
    %v9999 = vpop.f32.mrb[0].mxu0
    %v10000 = vadd.f32 %v9920, %v9999
    %v10001 = vpop.f32.mrb[0].mxu0
    %10002 = vdwg.mxu0
    %10003 = vmatprep.subr.mxu0 0.0
    %v10004 = vand.u32 %v9746, 4294901760
    %10005 = vmatpush1.msra.mxu0 %v10004
    %10006 = vmatprep.subr.mxu0 0.0
    %v10007 = vand.u32 %v9747, 4294901760
    %10008 = vmatpush1.msra.mxu0 %v10007
    %10009 = vmatprep.subr.mxu0 0.0
    %v10010 = vand.u32 %v9748, 4294901760
    %10011 = vmatpush1.msra.mxu0 %v10010
    %10012 = vmatprep.subr.mxu0 0.0
    %v10013 = vand.u32 %v9749, 4294901760
    %10014 = vmatpush1.msra.mxu0 %v10013
    %10015 = vmatprep.subr.mxu0 0.0
    %10016 = vmatpush1.msra.mxu0 0.0
    %10017 = vmatprep.subr.mxu0 0.0
    %10018 = vmatpush1.msra.mxu0 0.0
    %10019 = vmatprep.subr.mxu0 0.0
    %10020 = vmatpush1.msra.mxu0 0.0
    %10021 = vmatprep.subr.mxu0 0.0
    %10022 = vmatpush1.msra.mxu0 0.0
    %10023 = vmatprep.subr.mxu0 0.0
    %10024 = vmatpush1.msra.mxu0 0.0
    %10025 = vmatprep.subr.mxu0 0.0
    %10026 = vmatpush1.msra.mxu0 0.0
    %10027 = vmatprep.subr.mxu0 0.0
    %10028 = vmatpush1.msra.mxu0 0.0
    %10029 = vmatprep.subr.mxu0 0.0
    %10030 = vmatpush1.msra.mxu0 0.0
    %10031 = vmatprep.subr.mxu0 0.0
    %10032 = vmatpush1.msra.mxu0 0.0
    %10033 = vmatprep.subr.mxu0 0.0
    %10034 = vmatpush1.msra.mxu0 0.0
    %10035 = vmatprep.subr.mxu0 0.0
    %10036 = vmatpush1.msra.mxu0 0.0
    %10037 = vmatprep.subr.mxu0 0.0
    %10038 = vmatpush1.msra.mxu0 0.0
    %10039 = vmatprep.subr.mxu0 0.0
    %10040 = vmatpush1.msra.mxu0 0.0
    %10041 = vmatprep.subr.mxu0 0.0
    %10042 = vmatpush1.msra.mxu0 0.0
    %10043 = vmatprep.subr.mxu0 0.0
    %10044 = vmatpush1.msra.mxu0 0.0
    %10045 = vmatprep.subr.mxu0 0.0
    %10046 = vmatpush1.msra.mxu0 0.0
    %10047 = vmatprep.subr.mxu0 0.0
    %10048 = vmatpush1.msra.mxu0 0.0
    %10049 = vmatprep.subr.mxu0 0.0
    %10050 = vmatpush1.msra.mxu0 0.0
    %10051 = vmatprep.subr.mxu0 0.0
    %10052 = vmatpush1.msra.mxu0 0.0
    %10053 = vmatprep.subr.mxu0 0.0
    %10054 = vmatpush1.msra.mxu0 0.0
    %10055 = vmatprep.subr.mxu0 0.0
    %10056 = vmatpush1.msra.mxu0 0.0
    %10057 = vmatprep.subr.mxu0 0.0
    %10058 = vmatpush1.msra.mxu0 0.0
    %10059 = vmatprep.subr.mxu0 0.0
    %10060 = vmatpush1.msra.mxu0 0.0
    %10061 = vmatprep.subr.mxu0 0.0
    %10062 = vmatpush1.msra.mxu0 0.0
    %10063 = vmatprep.subr.mxu0 0.0
    %10064 = vmatpush1.msra.mxu0 0.0
    %10065 = vmatprep.subr.mxu0 0.0
    %10066 = vmatpush1.msra.mxu0 0.0
    %10067 = vmatprep.subr.mxu0 0.0
    %10068 = vmatpush1.msra.mxu0 0.0
    %10069 = vmatprep.subr.mxu0 0.0
    %10070 = vmatpush1.msra.mxu0 0.0
    %10071 = vmatprep.mubr.f32.mxu0 0.0
    %v10072 = vand.u32 %v9751, 4294901760
    %v10073 = vsub.f32 %v9751, %v10072
    %v10074 = vand.u32 %v10073, 4294901760
    %10075 = vmatmul.mubr.f32.gmra.mrb[0].mxu0 %v10074
    %v10076 = vpop.f32.mrb[0].mxu0
    %v10077 = vadd.f32 %v10000, %v10076
    %v10078 = vpop.f32.mrb[0].mxu0
    %10079 = vdwg.mxu0
    %10080 = vmatprep.subr.mxu0 0.0
    %v10081 = vand.u32 %v9746, 4294901760
    %v10082 = vsub.f32 %v9746, %v10081
    %v10083 = vand.u32 %v10082, 4294901760
    %10084 = vmatpush1.msra.mxu0 %v10083
    %10085 = vmatprep.subr.mxu0 0.0
    %v10086 = vand.u32 %v9747, 4294901760
    %v10087 = vsub.f32 %v9747, %v10086
    %v10088 = vand.u32 %v10087, 4294901760
    %10089 = vmatpush1.msra.mxu0 %v10088
    %10090 = vmatprep.subr.mxu0 0.0
    %v10091 = vand.u32 %v9748, 4294901760
    %v10092 = vsub.f32 %v9748, %v10091
    %v10093 = vand.u32 %v10092, 4294901760
    %10094 = vmatpush1.msra.mxu0 %v10093
    %10095 = vmatprep.subr.mxu0 0.0
    %v10096 = vand.u32 %v9749, 4294901760
    %v10097 = vsub.f32 %v9749, %v10096
    %v10098 = vand.u32 %v10097, 4294901760
    %10099 = vmatpush1.msra.mxu0 %v10098
    %10100 = vmatprep.subr.mxu0 0.0
    %10101 = vmatpush1.msra.mxu0 0.0
    %10102 = vmatprep.subr.mxu0 0.0
    %10103 = vmatpush1.msra.mxu0 0.0
    %10104 = vmatprep.subr.mxu0 0.0
    %10105 = vmatpush1.msra.mxu0 0.0
    %10106 = vmatprep.subr.mxu0 0.0
    %10107 = vmatpush1.msra.mxu0 0.0
    %10108 = vmatprep.subr.mxu0 0.0
    %10109 = vmatpush1.msra.mxu0 0.0
    %10110 = vmatprep.subr.mxu0 0.0
    %10111 = vmatpush1.msra.mxu0 0.0
    %10112 = vmatprep.subr.mxu0 0.0
    %10113 = vmatpush1.msra.mxu0 0.0
    %10114 = vmatprep.subr.mxu0 0.0
    %10115 = vmatpush1.msra.mxu0 0.0
    %10116 = vmatprep.subr.mxu0 0.0
    %10117 = vmatpush1.msra.mxu0 0.0
    %10118 = vmatprep.subr.mxu0 0.0
    %10119 = vmatpush1.msra.mxu0 0.0
    %10120 = vmatprep.subr.mxu0 0.0
    %10121 = vmatpush1.msra.mxu0 0.0
    %10122 = vmatprep.subr.mxu0 0.0
    %10123 = vmatpush1.msra.mxu0 0.0
    %10124 = vmatprep.subr.mxu0 0.0
    %10125 = vmatpush1.msra.mxu0 0.0
    %10126 = vmatprep.subr.mxu0 0.0
    %10127 = vmatpush1.msra.mxu0 0.0
    %10128 = vmatprep.subr.mxu0 0.0
    %10129 = vmatpush1.msra.mxu0 0.0
    %10130 = vmatprep.subr.mxu0 0.0
    %10131 = vmatpush1.msra.mxu0 0.0
    %10132 = vmatprep.subr.mxu0 0.0
    %10133 = vmatpush1.msra.mxu0 0.0
    %10134 = vmatprep.subr.mxu0 0.0
    %10135 = vmatpush1.msra.mxu0 0.0
    %10136 = vmatprep.subr.mxu0 0.0
    %10137 = vmatpush1.msra.mxu0 0.0
    %10138 = vmatprep.subr.mxu0 0.0
    %10139 = vmatpush1.msra.mxu0 0.0
    %10140 = vmatprep.subr.mxu0 0.0
    %10141 = vmatpush1.msra.mxu0 0.0
    %10142 = vmatprep.subr.mxu0 0.0
    %10143 = vmatpush1.msra.mxu0 0.0
    %10144 = vmatprep.subr.mxu0 0.0
    %10145 = vmatpush1.msra.mxu0 0.0
    %10146 = vmatprep.subr.mxu0 0.0
    %10147 = vmatpush1.msra.mxu0 0.0
    %10148 = vmatprep.subr.mxu0 0.0
    %10149 = vmatpush1.msra.mxu0 0.0
    %10150 = vmatprep.subr.mxu0 0.0
    %10151 = vmatpush1.msra.mxu0 0.0
    %10152 = vmatprep.subr.mxu0 0.0
    %10153 = vmatpush1.msra.mxu0 0.0
    %10154 = vmatprep.subr.mxu0 0.0
    %10155 = vmatpush1.msra.mxu0 0.0
    %10156 = vmatprep.mubr.f32.mxu0 0.0
    %v10157 = vand.u32 %v9751, 4294901760
    %10158 = vmatmul.mubr.f32.gmra.mrb[0].mxu0 %v10157
    %v10159 = vpop.f32.mrb[0].mxu0
    %v10160 = vadd.f32 %v10077, %v10159
    %v10161 = vpop.f32.mrb[0].mxu0
    %10162 = vdwg.mxu0
    %10163 = vmatprep.subr.mxu0 0.0
    %v10164 = vand.u32 %v9746, 4294901760
    %10165 = vmatpush1.msra.mxu0 %v10164
    %10166 = vmatprep.subr.mxu0 0.0
    %v10167 = vand.u32 %v9747, 4294901760
    %10168 = vmatpush1.msra.mxu0 %v10167
    %10169 = vmatprep.subr.mxu0 0.0
    %v10170 = vand.u32 %v9748, 4294901760
    %10171 = vmatpush1.msra.mxu0 %v10170
    %10172 = vmatprep.subr.mxu0 0.0
    %v10173 = vand.u32 %v9749, 4294901760
    %10174 = vmatpush1.msra.mxu0 %v10173
    %10175 = vmatprep.subr.mxu0 0.0
    %10176 = vmatpush1.msra.mxu0 0.0
    %10177 = vmatprep.subr.mxu0 0.0
    %10178 = vmatpush1.msra.mxu0 0.0
    %10179 = vmatprep.subr.mxu0 0.0
    %10180 = vmatpush1.msra.mxu0 0.0
    %10181 = vmatprep.subr.mxu0 0.0
    %10182 = vmatpush1.msra.mxu0 0.0
    %10183 = vmatprep.subr.mxu0 0.0
    %10184 = vmatpush1.msra.mxu0 0.0
    %10185 = vmatprep.subr.mxu0 0.0
    %10186 = vmatpush1.msra.mxu0 0.0
    %10187 = vmatprep.subr.mxu0 0.0
    %10188 = vmatpush1.msra.mxu0 0.0
    %10189 = vmatprep.subr.mxu0 0.0
    %10190 = vmatpush1.msra.mxu0 0.0
    %10191 = vmatprep.subr.mxu0 0.0
    %10192 = vmatpush1.msra.mxu0 0.0
    %10193 = vmatprep.subr.mxu0 0.0
    %10194 = vmatpush1.msra.mxu0 0.0
    %10195 = vmatprep.subr.mxu0 0.0
    %10196 = vmatpush1.msra.mxu0 0.0
    %10197 = vmatprep.subr.mxu0 0.0
    %10198 = vmatpush1.msra.mxu0 0.0
    %10199 = vmatprep.subr.mxu0 0.0
    %10200 = vmatpush1.msra.mxu0 0.0
    %10201 = vmatprep.subr.mxu0 0.0
    %10202 = vmatpush1.msra.mxu0 0.0
    %10203 = vmatprep.subr.mxu0 0.0
    %10204 = vmatpush1.msra.mxu0 0.0
    %10205 = vmatprep.subr.mxu0 0.0
    %10206 = vmatpush1.msra.mxu0 0.0
    %10207 = vmatprep.subr.mxu0 0.0
    %10208 = vmatpush1.msra.mxu0 0.0
    %10209 = vmatprep.subr.mxu0 0.0
    %10210 = vmatpush1.msra.mxu0 0.0
    %10211 = vmatprep.subr.mxu0 0.0
    %10212 = vmatpush1.msra.mxu0 0.0
    %10213 = vmatprep.subr.mxu0 0.0
    %10214 = vmatpush1.msra.mxu0 0.0
    %10215 = vmatprep.subr.mxu0 0.0
    %10216 = vmatpush1.msra.mxu0 0.0
    %10217 = vmatprep.subr.mxu0 0.0
    %10218 = vmatpush1.msra.mxu0 0.0
    %10219 = vmatprep.subr.mxu0 0.0
    %10220 = vmatpush1.msra.mxu0 0.0
    %10221 = vmatprep.subr.mxu0 0.0
    %10222 = vmatpush1.msra.mxu0 0.0
    %10223 = vmatprep.subr.mxu0 0.0
    %10224 = vmatpush1.msra.mxu0 0.0
    %10225 = vmatprep.subr.mxu0 0.0
    %10226 = vmatpush1.msra.mxu0 0.0
    %10227 = vmatprep.subr.mxu0 0.0
    %10228 = vmatpush1.msra.mxu0 0.0
    %10229 = vmatprep.subr.mxu0 0.0
    %10230 = vmatpush1.msra.mxu0 0.0
    %10231 = vmatprep.mubr.f32.mxu0 0.0
    %v10232 = vand.u32 %v9751, 4294901760
    %10233 = vmatmul.mubr.f32.gmra.mrb[0].mxu0 %v10232
    %v10234 = vpop.f32.mrb[0].mxu0
    %v10235 = vadd.f32 %v10160, %v10234
    %v10236 = vpop.f32.mrb[0].mxu0
    %10237 = vdwg.mxu0
    %v10238 = vadd.f32 %v9744, %v10235
    %v10239 = vld [vmem:[%s25] sm:$0x1]
    %v10241 = vlaneseq
    %v10242 = vshrl.u32 %v10241, 7
    %v10243 = vsub.s32 0, %v10242
    %v10244 = vrot.slane %v10239, %v10243
    %v10246 = vadd.f32 %v10238, %v10244
    %10247 = vst [vmem:[#allocation5] sm:$0x3] %v10246
    // Predicated region
    $region110: #{tpu_custom_call.1} parent=1 // pred_check
      _
    $region111: #{tpu_custom_call.1} parent=1 // pred_check_branch
      %10249 = sbr.rel (0) target = $region113
    $region112: #{tpu_custom_call.1} parent=1 // pred_region
      %s10251 = ssub.s32 32, 32
      %10252 = vsyncadd [#allocation4], %s10251
      %s10254 = sshll.u32 [#allocation5], 4
      %s10255 = int_to_ptr.vmem [resolvable:$true] %s10254
      %10257 = dma.vmem_to_hbm [thread:$0]  %s10255, 32, %s26, [#allocation4]
    $region113: #{tpu_custom_call.1} parent=1 // pred_fallthru
      _
    // Predicated region
    $region114: #{tpu_custom_call.1} parent=1 // pred_check
      _
    $region115: #{tpu_custom_call.1} parent=1 // pred_check_branch
      %10259 = sbr.rel (0) target = $region117
    $region116: #{tpu_custom_call.1} parent=1 // pred_region
      %10260 = dma.done [#allocation4], 32
    $region117: #{tpu_custom_call.1} parent=1 // pred_fallthru
      _
    %10261 = vsyncpa [#allocation3], 1
    %10262 = vsyncpa [#allocation4], 1

</llo_original>
